<compile_context>
chip_gen: v6e
topology: v6e:2x2x1
jax: 0.10.0
libtpu: 0.0.40
codegen_flags: <defaults>
</compile_context>

<pallas_src>
import functools

import numpy as np
import jax
import jax.numpy as jnp
from jax.experimental import pallas as pl
from jax.experimental.pallas import tpu as pltpu


def _round_up(n, m):
    return ((n + m - 1) // m) * m


def _fused_transformer_kernel(D, H, W, chans,
                              x_ref, w1_ref, b1_ref, w2_ref, b2_ref,
                              w3_ref, b3_ref, mask_ref, o_ref,
                              act_ref, col_ref):
    """One grid step = one batch element, all three conv+ReLU stages.

    x_ref    : (Cin, D, H, W)          unpadded NCDHW input slab
    w{i}_ref : (3, Cout_i, 9*Cin_i)    per-kd folded weights (kh,kw,Cin cols)
    b{i}_ref : (Cout_i, 1)
    mask_ref : (1, MP)                 1.0 at valid output positions of the
                                       flat padded frame, 0.0 at halo garbage
    o_ref    : (Cout_3, MP)            lane-dense flat output frame
    act_ref  : VMEM (Cmax, L)          flat padded activation frame (reused
                                       for the input and both intermediates)
    col_ref  : VMEM (9*Cmax, MP)       per-kd transposed im2col buffer
    """
    f32 = jnp.float32
    HP, WP = H + 2, W + 2
    MP = (D + 2) * HP * WP          # flat padded frame length
    SHIFT = HP * WP + WP + 1        # flat(1,1,1): output frame -> padded frame
    c0, c1, c2, c3 = chans

    # Zero the activation frame: establishes the zero halo + guard bands.
    # Must run every grid step (scratch persists across steps and per-core).
    act_ref[...] = jnp.zeros(act_ref.shape, f32)

    # Scatter the unpadded input into the centred interior of the flat frame:
    # act[c, flat(d+1, h+1, w+1)] = x[c, d, h, w].
    for d in range(D):
        for h in range(H):
            base = (d + 1) * HP * WP + (h + 1) * WP + 1
            act_ref[0:c0, base:base + W] = x_ref[:, d, h, :]

    mask = mask_ref[...]            # (1, MP)

    def conv_relu(w_ref, b_ref, cin, cout):
        # Per-kd fold: 9 (kh,kw) taps -> contraction dim, one MXU call per kd.
        acc = None
        for kd in range(3):
            for kh in range(3):
                for kw in range(3):
                    j = kh * 3 + kw
                    off = (kd * HP + kh) * WP + kw      # flat(kd, kh, kw)
                    # Lane-dense row-block store: (cin, MP) window of the flat
                    # activation frame into rows [j*cin, (j+1)*cin) of col.
                    col_ref[j * cin:(j + 1) * cin, :] = \
                        act_ref[0:cin, off:off + MP]
            part = jnp.dot(w_ref[kd], col_ref[0:9 * cin, :],
                           preferred_element_type=f32)   # (cout, MP)
            acc = part if acc is None else acc + part
        return jnp.maximum(acc + b_ref[...], 0.0)        # (cout, MP)

    # Stage 1: Cin -> C1.  Masked store re-centres the valid outputs into the
    # padded frame for stage 2 (garbage positions are forced back to zero).
    y1 = conv_relu(w1_ref, b1_ref, c0, c1)
    act_ref[0:c1, SHIFT:SHIFT + MP] = y1 * mask
    # Stage 2: C1 -> C2.
    y2 = conv_relu(w2_ref, b2_ref, c1, c2)
    act_ref[0:c2, SHIFT:SHIFT + MP] = y2 * mask
    # Stage 3: C2 -> C3.  Single lane-dense store; wrapper slices the valid box.
    y3 = conv_relu(w3_ref, b3_ref, c2, c3)
    o_ref[...] = y3


def _fold_weight(w):
    """(Cout, Cin, kd, kh, kw) -> (3[kd], Cout, 9*Cin), columns ordered (kh, kw, Cin)."""
    cout, cin = w.shape[0], w.shape[1]
    return jnp.transpose(w, (2, 0, 3, 4, 1)).reshape(3, cout, 9 * cin)


def transformer_forward(params, x):
    """x: (B, Cin, D, H, W) float32 (NCDHW, like the PyTorch module).
    Returns (B, Cout, D, H, W) = relu(conv1c(relu(conv1b(relu(conv1a(x))))))."""
    w1, b1 = params["conv3d_1a"]
    w2, b2 = params["conv3d_1b"]
    w3, b3 = params["conv3d_1c"]

    B, c0, D, H, W = x.shape
    c1, c2, c3 = w1.shape[0], w2.shape[0], w3.shape[0]
    cmx = max(c0, c1, c2, c3)

    DP, HP, WP = D + 2, H + 2, W + 2
    MP = DP * HP * WP                       # flat padded frame length
    OFFMAX = 2 * HP * WP + 2 * WP + 2       # flat(2, 2, 2): max tap offset
    L = _round_up(MP + OFFMAX, 128)         # activation frame + guard band

    w1f, w2f, w3f = _fold_weight(w1), _fold_weight(w2), _fold_weight(w3)
    b1f, b2f, b3f = b1.reshape(c1, 1), b2.reshape(c2, 1), b3.reshape(c3, 1)

    # Validity mask over the flat output frame: position p = flat(d, h, w) is a
    # real output iff d < D, h < H, w < W (the "corner box").
    idx = np.arange(MP)
    di, rem = idx // (HP * WP), idx % (HP * WP)
    hi, wi = rem // WP, rem % WP
    mask = jnp.asarray(((di < D) & (hi < H) & (wi < W))
                       .astype(np.float32)[None, :])

    kernel = functools.partial(_fused_transformer_kernel,
                               D, H, W, (c0, c1, c2, c3))

    out_flat = pl.pallas_call(
        kernel,
        out_shape=jax.ShapeDtypeStruct((B, c3, MP), jnp.float32),
        grid_spec=pltpu.PrefetchScalarGridSpec(
            num_scalar_prefetch=0,
            grid=(B,),
            in_specs=[
                # Input fetched from HBM exactly once per batch element.
                pl.BlockSpec((None, c0, D, H, W), lambda b: (b, 0, 0, 0, 0)),
                # Resident weights / biases / mask (constant block index).
                pl.BlockSpec((3, c1, 9 * c0), lambda b: (0, 0, 0)),
                pl.BlockSpec((c1, 1), lambda b: (0, 0)),
                pl.BlockSpec((3, c2, 9 * c1), lambda b: (0, 0, 0)),
                pl.BlockSpec((c2, 1), lambda b: (0, 0)),
                pl.BlockSpec((3, c3, 9 * c2), lambda b: (0, 0, 0)),
                pl.BlockSpec((c3, 1), lambda b: (0, 0)),
                pl.BlockSpec((1, MP), lambda b: (0, 0)),
            ],
            out_specs=pl.BlockSpec((None, c3, MP), lambda b: (b, 0, 0)),
            scratch_shapes=[
                pltpu.VMEM((cmx, L), jnp.float32),        # flat activation frame
                pltpu.VMEM((9 * cmx, MP), jnp.float32),   # per-kd im2col (transposed)
            ],
        ),
        compiler_params=pltpu.CompilerParams(
            dimension_semantics=("parallel",),
            vmem_limit_bytes=16 * 1024 * 1024,
        ),
    )(x, w1f, b1f, w2f, b2f, w3f, b3f, mask)

    # Undo the lane-dense flat layout in the wrapper: free reshape + slice of
    # the valid corner box -> NCDHW, exactly the PyTorch output layout.
    return out_flat.reshape(B, c3, DP, HP, WP)[:, :, :D, :H, :W]


def init_transformer_params(key, in_channels, out_channels):
    """Deterministic PyTorch-like init: uniform(-1/sqrt(fan_in), 1/sqrt(fan_in))."""
    def conv_init(k, cin, cout):
        kw_, kb_ = jax.random.split(k)
        bound = 1.0 / np.sqrt(cin * 27)
        w = jax.random.uniform(kw_, (cout, cin, 3, 3, 3), jnp.float32,
                               -bound, bound)
        b = jax.random.uniform(kb_, (cout,), jnp.float32, -bound, bound)
        return w, b

    k1, k2, k3 = jax.random.split(key, 3)
    return {
        "conv3d_1a": conv_init(k1, in_channels, in_channels),
        "conv3d_1b": conv_init(k2, in_channels, out_channels),
        "conv3d_1c": conv_init(k3, out_channels, out_channels),
    }


def _ref_forward(params, x):
    """Pure-XLA reference (NCDHW conv3d + bias + ReLU, three times)."""
    def conv_relu(x, w, b):
        y = jax.lax.conv_general_dilated(
            x, w, window_strides=(1, 1, 1),
            padding=((1, 1), (1, 1), (1, 1)),
            dimension_numbers=("NCDHW", "OIDHW", "NCDHW"))
        return jnp.maximum(y + b[None, :, None, None, None], 0.0)

    for name in ("conv3d_1a", "conv3d_1b", "conv3d_1c"):
        w, b = params[name]
        x = conv_relu(x, w, b)
    return x


if __name__ == "__main__":
    B, Cin, Cout = 2, 4, 8
    D, H, W = 4, 8, 8

    key = jax.random.PRNGKey(0)
    k_params, k_x = jax.random.split(key)
    params = init_transformer_params(k_params, Cin, Cout)

    # NCDHW input, same convention as the PyTorch module.
    x = jax.random.normal(k_x, (B, Cin, D, H, W), jnp.float32)

    out = jax.block_until_ready(transformer_forward(params, x))
    ref = jax.block_until_ready(_ref_forward(params, x))

    assert out.shape == (B, Cout, D, H, W)
    assert jnp.allclose(out, ref, atol=1e-4, rtol=1e-4), "mismatch vs XLA reference"

    print("KERNEL_OK")
</pallas_src>

<mosaic_0001>
module attributes {stable_mosaic.version = 11 : i64} {
  func.func @_fused_transformer_kernel(%arg0: i32, %arg1: memref<1x4x4x8x8xf32, #tpu.memory_space<vmem>>, %arg2: memref<3x4x36xf32, #tpu.memory_space<vmem>>, %arg3: memref<4x1xf32, #tpu.memory_space<vmem>>, %arg4: memref<3x8x36xf32, #tpu.memory_space<vmem>>, %arg5: memref<8x1xf32, #tpu.memory_space<vmem>>, %arg6: memref<3x8x72xf32, #tpu.memory_space<vmem>>, %arg7: memref<8x1xf32, #tpu.memory_space<vmem>>, %arg8: memref<1x600xf32, #tpu.memory_space<vmem>>, %arg9: memref<1x8x600xf32, #tpu.memory_space<vmem>>, %arg10: memref<8x896xf32, #tpu.memory_space<vmem>>, %arg11: memref<72x600xf32, #tpu.memory_space<vmem>>) attributes {dimension_semantics = [#tpu.dimension_semantics<parallel>], iteration_bounds = array<i64: 2>, scalar_prefetch = 0 : i64, scratch_operands = 2 : i64, tpu.core_type = #tpu.core_type<tc>, window_params = [{transform_indices = @transform_0, window_bounds = array<i64: 1, 4, 4, 8, 8>}, {pipeline_mode = #tpu.pipeline_mode<synchronous>, transform_indices = @transform_1, window_bounds = array<i64: 3, 4, 36>}, {pipeline_mode = #tpu.pipeline_mode<synchronous>, transform_indices = @transform_2, window_bounds = array<i64: 4, 1>}, {pipeline_mode = #tpu.pipeline_mode<synchronous>, transform_indices = @transform_3, window_bounds = array<i64: 3, 8, 36>}, {pipeline_mode = #tpu.pipeline_mode<synchronous>, transform_indices = @transform_4, window_bounds = array<i64: 8, 1>}, {pipeline_mode = #tpu.pipeline_mode<synchronous>, transform_indices = @transform_5, window_bounds = array<i64: 3, 8, 72>}, {pipeline_mode = #tpu.pipeline_mode<synchronous>, transform_indices = @transform_6, window_bounds = array<i64: 8, 1>}, {pipeline_mode = #tpu.pipeline_mode<synchronous>, transform_indices = @transform_7, window_bounds = array<i64: 1, 600>}, {transform_indices = @transform_8, window_bounds = array<i64: 1, 8, 600>}]} {
    %cst = arith.constant 0.000000e+00 : f32
    %0 = vector.broadcast %cst : f32 to vector<8x896xf32>
    %c0 = arith.constant 0 : index
    %c0_0 = arith.constant 0 : index
    %1 = vector.load %arg10[%c0, %c0_0] : memref<8x896xf32, #tpu.memory_space<vmem>>, vector<8x896xf32>
    tpu.vector_store %arg10[%c0, %c0_0], %0 {strides = array<i32>} : memref<8x896xf32, #tpu.memory_space<vmem>>, vector<8x896xf32>,
    %c0_1 = arith.constant 0 : index
    %c0_2 = arith.constant 0 : index
    %c0_3 = arith.constant 0 : index
    %c0_4 = arith.constant 0 : index
    %c0_5 = arith.constant 0 : index
    %2 = vector.load %arg1[%c0_1, %c0_2, %c0_3, %c0_4, %c0_5] : memref<1x4x4x8x8xf32, #tpu.memory_space<vmem>>, vector<1x4x1x1x8xf32>
    %3 = vector.shape_cast %2 : vector<1x4x1x1x8xf32> to vector<4x8xf32>
    %c0_6 = arith.constant 0 : index
    %c111 = arith.constant 111 : index
    %4 = vector.load %arg10[%c0_6, %c111] : memref<8x896xf32, #tpu.memory_space<vmem>>, vector<4x8xf32>
    tpu.vector_store %arg10[%c0_6, %c111], %3 {strides = array<i32>} : memref<8x896xf32, #tpu.memory_space<vmem>>, vector<4x8xf32>,
    %c0_7 = arith.constant 0 : index
    %c0_8 = arith.constant 0 : index
    %c0_9 = arith.constant 0 : index
    %c1 = arith.constant 1 : index
    %c0_10 = arith.constant 0 : index
    %5 = vector.load %arg1[%c0_7, %c0_8, %c0_9, %c1, %c0_10] : memref<1x4x4x8x8xf32, #tpu.memory_space<vmem>>, vector<1x4x1x1x8xf32>
    %6 = vector.shape_cast %5 : vector<1x4x1x1x8xf32> to vector<4x8xf32>
    %c0_11 = arith.constant 0 : index
    %c121 = arith.constant 121 : index
    %7 = vector.load %arg10[%c0_11, %c121] : memref<8x896xf32, #tpu.memory_space<vmem>>, vector<4x8xf32>
    tpu.vector_store %arg10[%c0_11, %c121], %6 {strides = array<i32>} : memref<8x896xf32, #tpu.memory_space<vmem>>, vector<4x8xf32>,
    %c0_12 = arith.constant 0 : index
    %c0_13 = arith.constant 0 : index
    %c0_14 = arith.constant 0 : index
    %c2 = arith.constant 2 : index
    %c0_15 = arith.constant 0 : index
    %8 = vector.load %arg1[%c0_12, %c0_13, %c0_14, %c2, %c0_15] : memref<1x4x4x8x8xf32, #tpu.memory_space<vmem>>, vector<1x4x1x1x8xf32>
    %9 = vector.shape_cast %8 : vector<1x4x1x1x8xf32> to vector<4x8xf32>
    %c0_16 = arith.constant 0 : index
    %c131 = arith.constant 131 : index
    %10 = vector.load %arg10[%c0_16, %c131] : memref<8x896xf32, #tpu.memory_space<vmem>>, vector<4x8xf32>
    tpu.vector_store %arg10[%c0_16, %c131], %9 {strides = array<i32>} : memref<8x896xf32, #tpu.memory_space<vmem>>, vector<4x8xf32>,
    %c0_17 = arith.constant 0 : index
    %c0_18 = arith.constant 0 : index
    %c0_19 = arith.constant 0 : index
    %c3 = arith.constant 3 : index
    %c0_20 = arith.constant 0 : index
    %11 = vector.load %arg1[%c0_17, %c0_18, %c0_19, %c3, %c0_20] : memref<1x4x4x8x8xf32, #tpu.memory_space<vmem>>, vector<1x4x1x1x8xf32>
    %12 = vector.shape_cast %11 : vector<1x4x1x1x8xf32> to vector<4x8xf32>
    %c0_21 = arith.constant 0 : index
    %c141 = arith.constant 141 : index
    %13 = vector.load %arg10[%c0_21, %c141] : memref<8x896xf32, #tpu.memory_space<vmem>>, vector<4x8xf32>
    tpu.vector_store %arg10[%c0_21, %c141], %12 {strides = array<i32>} : memref<8x896xf32, #tpu.memory_space<vmem>>, vector<4x8xf32>,
    %c0_22 = arith.constant 0 : index
    %c0_23 = arith.constant 0 : index
    %c0_24 = arith.constant 0 : index
    %c4 = arith.constant 4 : index
    %c0_25 = arith.constant 0 : index
    %14 = vector.load %arg1[%c0_22, %c0_23, %c0_24, %c4, %c0_25] : memref<1x4x4x8x8xf32, #tpu.memory_space<vmem>>, vector<1x4x1x1x8xf32>
    %15 = vector.shape_cast %14 : vector<1x4x1x1x8xf32> to vector<4x8xf32>
    %c0_26 = arith.constant 0 : index
    %c151 = arith.constant 151 : index
    %16 = vector.load %arg10[%c0_26, %c151] : memref<8x896xf32, #tpu.memory_space<vmem>>, vector<4x8xf32>
    tpu.vector_store %arg10[%c0_26, %c151], %15 {strides = array<i32>} : memref<8x896xf32, #tpu.memory_space<vmem>>, vector<4x8xf32>,
    %c0_27 = arith.constant 0 : index
    %c0_28 = arith.constant 0 : index
    %c0_29 = arith.constant 0 : index
    %c5 = arith.constant 5 : index
    %c0_30 = arith.constant 0 : index
    %17 = vector.load %arg1[%c0_27, %c0_28, %c0_29, %c5, %c0_30] : memref<1x4x4x8x8xf32, #tpu.memory_space<vmem>>, vector<1x4x1x1x8xf32>
    %18 = vector.shape_cast %17 : vector<1x4x1x1x8xf32> to vector<4x8xf32>
    %c0_31 = arith.constant 0 : index
    %c161 = arith.constant 161 : index
    %19 = vector.load %arg10[%c0_31, %c161] : memref<8x896xf32, #tpu.memory_space<vmem>>, vector<4x8xf32>
    tpu.vector_store %arg10[%c0_31, %c161], %18 {strides = array<i32>} : memref<8x896xf32, #tpu.memory_space<vmem>>, vector<4x8xf32>,
    %c0_32 = arith.constant 0 : index
    %c0_33 = arith.constant 0 : index
    %c0_34 = arith.constant 0 : index
    %c6 = arith.constant 6 : index
    %c0_35 = arith.constant 0 : index
    %20 = vector.load %arg1[%c0_32, %c0_33, %c0_34, %c6, %c0_35] : memref<1x4x4x8x8xf32, #tpu.memory_space<vmem>>, vector<1x4x1x1x8xf32>
    %21 = vector.shape_cast %20 : vector<1x4x1x1x8xf32> to vector<4x8xf32>
    %c0_36 = arith.constant 0 : index
    %c171 = arith.constant 171 : index
    %22 = vector.load %arg10[%c0_36, %c171] : memref<8x896xf32, #tpu.memory_space<vmem>>, vector<4x8xf32>
    tpu.vector_store %arg10[%c0_36, %c171], %21 {strides = array<i32>} : memref<8x896xf32, #tpu.memory_space<vmem>>, vector<4x8xf32>,
    %c0_37 = arith.constant 0 : index
    %c0_38 = arith.constant 0 : index
    %c0_39 = arith.constant 0 : index
    %c7 = arith.constant 7 : index
    %c0_40 = arith.constant 0 : index
    %23 = vector.load %arg1[%c0_37, %c0_38, %c0_39, %c7, %c0_40] : memref<1x4x4x8x8xf32, #tpu.memory_space<vmem>>, vector<1x4x1x1x8xf32>
    %24 = vector.shape_cast %23 : vector<1x4x1x1x8xf32> to vector<4x8xf32>
    %c0_41 = arith.constant 0 : index
    %c181 = arith.constant 181 : index
    %25 = vector.load %arg10[%c0_41, %c181] : memref<8x896xf32, #tpu.memory_space<vmem>>, vector<4x8xf32>
    tpu.vector_store %arg10[%c0_41, %c181], %24 {strides = array<i32>} : memref<8x896xf32, #tpu.memory_space<vmem>>, vector<4x8xf32>,
    %c0_42 = arith.constant 0 : index
    %c0_43 = arith.constant 0 : index
    %c1_44 = arith.constant 1 : index
    %c0_45 = arith.constant 0 : index
    %c0_46 = arith.constant 0 : index
    %26 = vector.load %arg1[%c0_42, %c0_43, %c1_44, %c0_45, %c0_46] : memref<1x4x4x8x8xf32, #tpu.memory_space<vmem>>, vector<1x4x1x1x8xf32>
    %27 = vector.shape_cast %26 : vector<1x4x1x1x8xf32> to vector<4x8xf32>
    %c0_47 = arith.constant 0 : index
    %c211 = arith.constant 211 : index
    %28 = vector.load %arg10[%c0_47, %c211] : memref<8x896xf32, #tpu.memory_space<vmem>>, vector<4x8xf32>
    tpu.vector_store %arg10[%c0_47, %c211], %27 {strides = array<i32>} : memref<8x896xf32, #tpu.memory_space<vmem>>, vector<4x8xf32>,
    %c0_48 = arith.constant 0 : index
    %c0_49 = arith.constant 0 : index
    %c1_50 = arith.constant 1 : index
    %c1_51 = arith.constant 1 : index
    %c0_52 = arith.constant 0 : index
    %29 = vector.load %arg1[%c0_48, %c0_49, %c1_50, %c1_51, %c0_52] : memref<1x4x4x8x8xf32, #tpu.memory_space<vmem>>, vector<1x4x1x1x8xf32>
    %30 = vector.shape_cast %29 : vector<1x4x1x1x8xf32> to vector<4x8xf32>
    %c0_53 = arith.constant 0 : index
    %c221 = arith.constant 221 : index
    %31 = vector.load %arg10[%c0_53, %c221] : memref<8x896xf32, #tpu.memory_space<vmem>>, vector<4x8xf32>
    tpu.vector_store %arg10[%c0_53, %c221], %30 {strides = array<i32>} : memref<8x896xf32, #tpu.memory_space<vmem>>, vector<4x8xf32>,
    %c0_54 = arith.constant 0 : index
    %c0_55 = arith.constant 0 : index
    %c1_56 = arith.constant 1 : index
    %c2_57 = arith.constant 2 : index
    %c0_58 = arith.constant 0 : index
    %32 = vector.load %arg1[%c0_54, %c0_55, %c1_56, %c2_57, %c0_58] : memref<1x4x4x8x8xf32, #tpu.memory_space<vmem>>, vector<1x4x1x1x8xf32>
    %33 = vector.shape_cast %32 : vector<1x4x1x1x8xf32> to vector<4x8xf32>
    %c0_59 = arith.constant 0 : index
    %c231 = arith.constant 231 : index
    %34 = vector.load %arg10[%c0_59, %c231] : memref<8x896xf32, #tpu.memory_space<vmem>>, vector<4x8xf32>
    tpu.vector_store %arg10[%c0_59, %c231], %33 {strides = array<i32>} : memref<8x896xf32, #tpu.memory_space<vmem>>, vector<4x8xf32>,
    %c0_60 = arith.constant 0 : index
    %c0_61 = arith.constant 0 : index
    %c1_62 = arith.constant 1 : index
    %c3_63 = arith.constant 3 : index
    %c0_64 = arith.constant 0 : index
    %35 = vector.load %arg1[%c0_60, %c0_61, %c1_62, %c3_63, %c0_64] : memref<1x4x4x8x8xf32, #tpu.memory_space<vmem>>, vector<1x4x1x1x8xf32>
    %36 = vector.shape_cast %35 : vector<1x4x1x1x8xf32> to vector<4x8xf32>
    %c0_65 = arith.constant 0 : index
    %c241 = arith.constant 241 : index
    %37 = vector.load %arg10[%c0_65, %c241] : memref<8x896xf32, #tpu.memory_space<vmem>>, vector<4x8xf32>
    tpu.vector_store %arg10[%c0_65, %c241], %36 {strides = array<i32>} : memref<8x896xf32, #tpu.memory_space<vmem>>, vector<4x8xf32>,
    %c0_66 = arith.constant 0 : index
    %c0_67 = arith.constant 0 : index
    %c1_68 = arith.constant 1 : index
    %c4_69 = arith.constant 4 : index
    %c0_70 = arith.constant 0 : index
    %38 = vector.load %arg1[%c0_66, %c0_67, %c1_68, %c4_69, %c0_70] : memref<1x4x4x8x8xf32, #tpu.memory_space<vmem>>, vector<1x4x1x1x8xf32>
    %39 = vector.shape_cast %38 : vector<1x4x1x1x8xf32> to vector<4x8xf32>
    %c0_71 = arith.constant 0 : index
    %c251 = arith.constant 251 : index
    %40 = vector.load %arg10[%c0_71, %c251] : memref<8x896xf32, #tpu.memory_space<vmem>>, vector<4x8xf32>
    tpu.vector_store %arg10[%c0_71, %c251], %39 {strides = array<i32>} : memref<8x896xf32, #tpu.memory_space<vmem>>, vector<4x8xf32>,
    %c0_72 = arith.constant 0 : index
    %c0_73 = arith.constant 0 : index
    %c1_74 = arith.constant 1 : index
    %c5_75 = arith.constant 5 : index
    %c0_76 = arith.constant 0 : index
    %41 = vector.load %arg1[%c0_72, %c0_73, %c1_74, %c5_75, %c0_76] : memref<1x4x4x8x8xf32, #tpu.memory_space<vmem>>, vector<1x4x1x1x8xf32>
    %42 = vector.shape_cast %41 : vector<1x4x1x1x8xf32> to vector<4x8xf32>
    %c0_77 = arith.constant 0 : index
    %c261 = arith.constant 261 : index
    %43 = vector.load %arg10[%c0_77, %c261] : memref<8x896xf32, #tpu.memory_space<vmem>>, vector<4x8xf32>
    tpu.vector_store %arg10[%c0_77, %c261], %42 {strides = array<i32>} : memref<8x896xf32, #tpu.memory_space<vmem>>, vector<4x8xf32>,
    %c0_78 = arith.constant 0 : index
    %c0_79 = arith.constant 0 : index
    %c1_80 = arith.constant 1 : index
    %c6_81 = arith.constant 6 : index
    %c0_82 = arith.constant 0 : index
    %44 = vector.load %arg1[%c0_78, %c0_79, %c1_80, %c6_81, %c0_82] : memref<1x4x4x8x8xf32, #tpu.memory_space<vmem>>, vector<1x4x1x1x8xf32>
    %45 = vector.shape_cast %44 : vector<1x4x1x1x8xf32> to vector<4x8xf32>
    %c0_83 = arith.constant 0 : index
    %c271 = arith.constant 271 : index
    %46 = vector.load %arg10[%c0_83, %c271] : memref<8x896xf32, #tpu.memory_space<vmem>>, vector<4x8xf32>
    tpu.vector_store %arg10[%c0_83, %c271], %45 {strides = array<i32>} : memref<8x896xf32, #tpu.memory_space<vmem>>, vector<4x8xf32>,
    %c0_84 = arith.constant 0 : index
    %c0_85 = arith.constant 0 : index
    %c1_86 = arith.constant 1 : index
    %c7_87 = arith.constant 7 : index
    %c0_88 = arith.constant 0 : index
    %47 = vector.load %arg1[%c0_84, %c0_85, %c1_86, %c7_87, %c0_88] : memref<1x4x4x8x8xf32, #tpu.memory_space<vmem>>, vector<1x4x1x1x8xf32>
    %48 = vector.shape_cast %47 : vector<1x4x1x1x8xf32> to vector<4x8xf32>
    %c0_89 = arith.constant 0 : index
    %c281 = arith.constant 281 : index
    %49 = vector.load %arg10[%c0_89, %c281] : memref<8x896xf32, #tpu.memory_space<vmem>>, vector<4x8xf32>
    tpu.vector_store %arg10[%c0_89, %c281], %48 {strides = array<i32>} : memref<8x896xf32, #tpu.memory_space<vmem>>, vector<4x8xf32>,
    %c0_90 = arith.constant 0 : index
    %c0_91 = arith.constant 0 : index
    %c2_92 = arith.constant 2 : index
    %c0_93 = arith.constant 0 : index
    %c0_94 = arith.constant 0 : index
    %50 = vector.load %arg1[%c0_90, %c0_91, %c2_92, %c0_93, %c0_94] : memref<1x4x4x8x8xf32, #tpu.memory_space<vmem>>, vector<1x4x1x1x8xf32>
    %51 = vector.shape_cast %50 : vector<1x4x1x1x8xf32> to vector<4x8xf32>
    %c0_95 = arith.constant 0 : index
    %c311 = arith.constant 311 : index
    %52 = vector.load %arg10[%c0_95, %c311] : memref<8x896xf32, #tpu.memory_space<vmem>>, vector<4x8xf32>
    tpu.vector_store %arg10[%c0_95, %c311], %51 {strides = array<i32>} : memref<8x896xf32, #tpu.memory_space<vmem>>, vector<4x8xf32>,
    %c0_96 = arith.constant 0 : index
    %c0_97 = arith.constant 0 : index
    %c2_98 = arith.constant 2 : index
    %c1_99 = arith.constant 1 : index
    %c0_100 = arith.constant 0 : index
    %53 = vector.load %arg1[%c0_96, %c0_97, %c2_98, %c1_99, %c0_100] : memref<1x4x4x8x8xf32, #tpu.memory_space<vmem>>, vector<1x4x1x1x8xf32>
    %54 = vector.shape_cast %53 : vector<1x4x1x1x8xf32> to vector<4x8xf32>
    %c0_101 = arith.constant 0 : index
    %c321 = arith.constant 321 : index
    %55 = vector.load %arg10[%c0_101, %c321] : memref<8x896xf32, #tpu.memory_space<vmem>>, vector<4x8xf32>
    tpu.vector_store %arg10[%c0_101, %c321], %54 {strides = array<i32>} : memref<8x896xf32, #tpu.memory_space<vmem>>, vector<4x8xf32>,
    %c0_102 = arith.constant 0 : index
    %c0_103 = arith.constant 0 : index
    %c2_104 = arith.constant 2 : index
    %c2_105 = arith.constant 2 : index
    %c0_106 = arith.constant 0 : index
    %56 = vector.load %arg1[%c0_102, %c0_103, %c2_104, %c2_105, %c0_106] : memref<1x4x4x8x8xf32, #tpu.memory_space<vmem>>, vector<1x4x1x1x8xf32>
    %57 = vector.shape_cast %56 : vector<1x4x1x1x8xf32> to vector<4x8xf32>
    %c0_107 = arith.constant 0 : index
    %c331 = arith.constant 331 : index
    %58 = vector.load %arg10[%c0_107, %c331] : memref<8x896xf32, #tpu.memory_space<vmem>>, vector<4x8xf32>
    tpu.vector_store %arg10[%c0_107, %c331], %57 {strides = array<i32>} : memref<8x896xf32, #tpu.memory_space<vmem>>, vector<4x8xf32>,
    %c0_108 = arith.constant 0 : index
    %c0_109 = arith.constant 0 : index
    %c2_110 = arith.constant 2 : index
    %c3_111 = arith.constant 3 : index
    %c0_112 = arith.constant 0 : index
    %59 = vector.load %arg1[%c0_108, %c0_109, %c2_110, %c3_111, %c0_112] : memref<1x4x4x8x8xf32, #tpu.memory_space<vmem>>, vector<1x4x1x1x8xf32>
    %60 = vector.shape_cast %59 : vector<1x4x1x1x8xf32> to vector<4x8xf32>
    %c0_113 = arith.constant 0 : index
    %c341 = arith.constant 341 : index
    %61 = vector.load %arg10[%c0_113, %c341] : memref<8x896xf32, #tpu.memory_space<vmem>>, vector<4x8xf32>
    tpu.vector_store %arg10[%c0_113, %c341], %60 {strides = array<i32>} : memref<8x896xf32, #tpu.memory_space<vmem>>, vector<4x8xf32>,
    %c0_114 = arith.constant 0 : index
    %c0_115 = arith.constant 0 : index
    %c2_116 = arith.constant 2 : index
    %c4_117 = arith.constant 4 : index
    %c0_118 = arith.constant 0 : index
    %62 = vector.load %arg1[%c0_114, %c0_115, %c2_116, %c4_117, %c0_118] : memref<1x4x4x8x8xf32, #tpu.memory_space<vmem>>, vector<1x4x1x1x8xf32>
    %63 = vector.shape_cast %62 : vector<1x4x1x1x8xf32> to vector<4x8xf32>
    %c0_119 = arith.constant 0 : index
    %c351 = arith.constant 351 : index
    %64 = vector.load %arg10[%c0_119, %c351] : memref<8x896xf32, #tpu.memory_space<vmem>>, vector<4x8xf32>
    tpu.vector_store %arg10[%c0_119, %c351], %63 {strides = array<i32>} : memref<8x896xf32, #tpu.memory_space<vmem>>, vector<4x8xf32>,
    %c0_120 = arith.constant 0 : index
    %c0_121 = arith.constant 0 : index
    %c2_122 = arith.constant 2 : index
    %c5_123 = arith.constant 5 : index
    %c0_124 = arith.constant 0 : index
    %65 = vector.load %arg1[%c0_120, %c0_121, %c2_122, %c5_123, %c0_124] : memref<1x4x4x8x8xf32, #tpu.memory_space<vmem>>, vector<1x4x1x1x8xf32>
    %66 = vector.shape_cast %65 : vector<1x4x1x1x8xf32> to vector<4x8xf32>
    %c0_125 = arith.constant 0 : index
    %c361 = arith.constant 361 : index
    %67 = vector.load %arg10[%c0_125, %c361] : memref<8x896xf32, #tpu.memory_space<vmem>>, vector<4x8xf32>
    tpu.vector_store %arg10[%c0_125, %c361], %66 {strides = array<i32>} : memref<8x896xf32, #tpu.memory_space<vmem>>, vector<4x8xf32>,
    %c0_126 = arith.constant 0 : index
    %c0_127 = arith.constant 0 : index
    %c2_128 = arith.constant 2 : index
    %c6_129 = arith.constant 6 : index
    %c0_130 = arith.constant 0 : index
    %68 = vector.load %arg1[%c0_126, %c0_127, %c2_128, %c6_129, %c0_130] : memref<1x4x4x8x8xf32, #tpu.memory_space<vmem>>, vector<1x4x1x1x8xf32>
    %69 = vector.shape_cast %68 : vector<1x4x1x1x8xf32> to vector<4x8xf32>
    %c0_131 = arith.constant 0 : index
    %c371 = arith.constant 371 : index
    %70 = vector.load %arg10[%c0_131, %c371] : memref<8x896xf32, #tpu.memory_space<vmem>>, vector<4x8xf32>
    tpu.vector_store %arg10[%c0_131, %c371], %69 {strides = array<i32>} : memref<8x896xf32, #tpu.memory_space<vmem>>, vector<4x8xf32>,
    %c0_132 = arith.constant 0 : index
    %c0_133 = arith.constant 0 : index
    %c2_134 = arith.constant 2 : index
    %c7_135 = arith.constant 7 : index
    %c0_136 = arith.constant 0 : index
    %71 = vector.load %arg1[%c0_132, %c0_133, %c2_134, %c7_135, %c0_136] : memref<1x4x4x8x8xf32, #tpu.memory_space<vmem>>, vector<1x4x1x1x8xf32>
    %72 = vector.shape_cast %71 : vector<1x4x1x1x8xf32> to vector<4x8xf32>
    %c0_137 = arith.constant 0 : index
    %c381 = arith.constant 381 : index
    %73 = vector.load %arg10[%c0_137, %c381] : memref<8x896xf32, #tpu.memory_space<vmem>>, vector<4x8xf32>
    tpu.vector_store %arg10[%c0_137, %c381], %72 {strides = array<i32>} : memref<8x896xf32, #tpu.memory_space<vmem>>, vector<4x8xf32>,
    %c0_138 = arith.constant 0 : index
    %c0_139 = arith.constant 0 : index
    %c3_140 = arith.constant 3 : index
    %c0_141 = arith.constant 0 : index
    %c0_142 = arith.constant 0 : index
    %74 = vector.load %arg1[%c0_138, %c0_139, %c3_140, %c0_141, %c0_142] : memref<1x4x4x8x8xf32, #tpu.memory_space<vmem>>, vector<1x4x1x1x8xf32>
    %75 = vector.shape_cast %74 : vector<1x4x1x1x8xf32> to vector<4x8xf32>
    %c0_143 = arith.constant 0 : index
    %c411 = arith.constant 411 : index
    %76 = vector.load %arg10[%c0_143, %c411] : memref<8x896xf32, #tpu.memory_space<vmem>>, vector<4x8xf32>
    tpu.vector_store %arg10[%c0_143, %c411], %75 {strides = array<i32>} : memref<8x896xf32, #tpu.memory_space<vmem>>, vector<4x8xf32>,
    %c0_144 = arith.constant 0 : index
    %c0_145 = arith.constant 0 : index
    %c3_146 = arith.constant 3 : index
    %c1_147 = arith.constant 1 : index
    %c0_148 = arith.constant 0 : index
    %77 = vector.load %arg1[%c0_144, %c0_145, %c3_146, %c1_147, %c0_148] : memref<1x4x4x8x8xf32, #tpu.memory_space<vmem>>, vector<1x4x1x1x8xf32>
    %78 = vector.shape_cast %77 : vector<1x4x1x1x8xf32> to vector<4x8xf32>
    %c0_149 = arith.constant 0 : index
    %c421 = arith.constant 421 : index
    %79 = vector.load %arg10[%c0_149, %c421] : memref<8x896xf32, #tpu.memory_space<vmem>>, vector<4x8xf32>
    tpu.vector_store %arg10[%c0_149, %c421], %78 {strides = array<i32>} : memref<8x896xf32, #tpu.memory_space<vmem>>, vector<4x8xf32>,
    %c0_150 = arith.constant 0 : index
    %c0_151 = arith.constant 0 : index
    %c3_152 = arith.constant 3 : index
    %c2_153 = arith.constant 2 : index
    %c0_154 = arith.constant 0 : index
    %80 = vector.load %arg1[%c0_150, %c0_151, %c3_152, %c2_153, %c0_154] : memref<1x4x4x8x8xf32, #tpu.memory_space<vmem>>, vector<1x4x1x1x8xf32>
    %81 = vector.shape_cast %80 : vector<1x4x1x1x8xf32> to vector<4x8xf32>
    %c0_155 = arith.constant 0 : index
    %c431 = arith.constant 431 : index
    %82 = vector.load %arg10[%c0_155, %c431] : memref<8x896xf32, #tpu.memory_space<vmem>>, vector<4x8xf32>
    tpu.vector_store %arg10[%c0_155, %c431], %81 {strides = array<i32>} : memref<8x896xf32, #tpu.memory_space<vmem>>, vector<4x8xf32>,
    %c0_156 = arith.constant 0 : index
    %c0_157 = arith.constant 0 : index
    %c3_158 = arith.constant 3 : index
    %c3_159 = arith.constant 3 : index
    %c0_160 = arith.constant 0 : index
    %83 = vector.load %arg1[%c0_156, %c0_157, %c3_158, %c3_159, %c0_160] : memref<1x4x4x8x8xf32, #tpu.memory_space<vmem>>, vector<1x4x1x1x8xf32>
    %84 = vector.shape_cast %83 : vector<1x4x1x1x8xf32> to vector<4x8xf32>
    %c0_161 = arith.constant 0 : index
    %c441 = arith.constant 441 : index
    %85 = vector.load %arg10[%c0_161, %c441] : memref<8x896xf32, #tpu.memory_space<vmem>>, vector<4x8xf32>
    tpu.vector_store %arg10[%c0_161, %c441], %84 {strides = array<i32>} : memref<8x896xf32, #tpu.memory_space<vmem>>, vector<4x8xf32>,
    %c0_162 = arith.constant 0 : index
    %c0_163 = arith.constant 0 : index
    %c3_164 = arith.constant 3 : index
    %c4_165 = arith.constant 4 : index
    %c0_166 = arith.constant 0 : index
    %86 = vector.load %arg1[%c0_162, %c0_163, %c3_164, %c4_165, %c0_166] : memref<1x4x4x8x8xf32, #tpu.memory_space<vmem>>, vector<1x4x1x1x8xf32>
    %87 = vector.shape_cast %86 : vector<1x4x1x1x8xf32> to vector<4x8xf32>
    %c0_167 = arith.constant 0 : index
    %c451 = arith.constant 451 : index
    %88 = vector.load %arg10[%c0_167, %c451] : memref<8x896xf32, #tpu.memory_space<vmem>>, vector<4x8xf32>
    tpu.vector_store %arg10[%c0_167, %c451], %87 {strides = array<i32>} : memref<8x896xf32, #tpu.memory_space<vmem>>, vector<4x8xf32>,
    %c0_168 = arith.constant 0 : index
    %c0_169 = arith.constant 0 : index
    %c3_170 = arith.constant 3 : index
    %c5_171 = arith.constant 5 : index
    %c0_172 = arith.constant 0 : index
    %89 = vector.load %arg1[%c0_168, %c0_169, %c3_170, %c5_171, %c0_172] : memref<1x4x4x8x8xf32, #tpu.memory_space<vmem>>, vector<1x4x1x1x8xf32>
    %90 = vector.shape_cast %89 : vector<1x4x1x1x8xf32> to vector<4x8xf32>
    %c0_173 = arith.constant 0 : index
    %c461 = arith.constant 461 : index
    %91 = vector.load %arg10[%c0_173, %c461] : memref<8x896xf32, #tpu.memory_space<vmem>>, vector<4x8xf32>
    tpu.vector_store %arg10[%c0_173, %c461], %90 {strides = array<i32>} : memref<8x896xf32, #tpu.memory_space<vmem>>, vector<4x8xf32>,
    %c0_174 = arith.constant 0 : index
    %c0_175 = arith.constant 0 : index
    %c3_176 = arith.constant 3 : index
    %c6_177 = arith.constant 6 : index
    %c0_178 = arith.constant 0 : index
    %92 = vector.load %arg1[%c0_174, %c0_175, %c3_176, %c6_177, %c0_178] : memref<1x4x4x8x8xf32, #tpu.memory_space<vmem>>, vector<1x4x1x1x8xf32>
    %93 = vector.shape_cast %92 : vector<1x4x1x1x8xf32> to vector<4x8xf32>
    %c0_179 = arith.constant 0 : index
    %c471 = arith.constant 471 : index
    %94 = vector.load %arg10[%c0_179, %c471] : memref<8x896xf32, #tpu.memory_space<vmem>>, vector<4x8xf32>
    tpu.vector_store %arg10[%c0_179, %c471], %93 {strides = array<i32>} : memref<8x896xf32, #tpu.memory_space<vmem>>, vector<4x8xf32>,
    %c0_180 = arith.constant 0 : index
    %c0_181 = arith.constant 0 : index
    %c3_182 = arith.constant 3 : index
    %c7_183 = arith.constant 7 : index
    %c0_184 = arith.constant 0 : index
    %95 = vector.load %arg1[%c0_180, %c0_181, %c3_182, %c7_183, %c0_184] : memref<1x4x4x8x8xf32, #tpu.memory_space<vmem>>, vector<1x4x1x1x8xf32>
    %96 = vector.shape_cast %95 : vector<1x4x1x1x8xf32> to vector<4x8xf32>
    %c0_185 = arith.constant 0 : index
    %c481 = arith.constant 481 : index
    %97 = vector.load %arg10[%c0_185, %c481] : memref<8x896xf32, #tpu.memory_space<vmem>>, vector<4x8xf32>
    tpu.vector_store %arg10[%c0_185, %c481], %96 {strides = array<i32>} : memref<8x896xf32, #tpu.memory_space<vmem>>, vector<4x8xf32>,
    %c0_186 = arith.constant 0 : index
    %c0_187 = arith.constant 0 : index
    %98 = vector.load %arg8[%c0_186, %c0_187] : memref<1x600xf32, #tpu.memory_space<vmem>>, vector<1x600xf32>
    %c0_188 = arith.constant 0 : index
    %c0_189 = arith.constant 0 : index
    %99 = vector.load %arg10[%c0_188, %c0_189] : memref<8x896xf32, #tpu.memory_space<vmem>>, vector<4x600xf32>
    %c0_190 = arith.constant 0 : index
    %c0_191 = arith.constant 0 : index
    %100 = vector.load %arg11[%c0_190, %c0_191] : memref<72x600xf32, #tpu.memory_space<vmem>>, vector<4x600xf32>
    tpu.vector_store %arg11[%c0_190, %c0_191], %99 {strides = array<i32>} : memref<72x600xf32, #tpu.memory_space<vmem>>, vector<4x600xf32>,
    %c0_192 = arith.constant 0 : index
    %c1_193 = arith.constant 1 : index
    %101 = vector.load %arg10[%c0_192, %c1_193] : memref<8x896xf32, #tpu.memory_space<vmem>>, vector<4x600xf32>
    %c4_194 = arith.constant 4 : index
    %c0_195 = arith.constant 0 : index
    %102 = vector.load %arg11[%c4_194, %c0_195] : memref<72x600xf32, #tpu.memory_space<vmem>>, vector<4x600xf32>
    tpu.vector_store %arg11[%c4_194, %c0_195], %101 {strides = array<i32>} : memref<72x600xf32, #tpu.memory_space<vmem>>, vector<4x600xf32>,
    %c0_196 = arith.constant 0 : index
    %c2_197 = arith.constant 2 : index
    %103 = vector.load %arg10[%c0_196, %c2_197] : memref<8x896xf32, #tpu.memory_space<vmem>>, vector<4x600xf32>
    %c8 = arith.constant 8 : index
    %c0_198 = arith.constant 0 : index
    %104 = vector.load %arg11[%c8, %c0_198] : memref<72x600xf32, #tpu.memory_space<vmem>>, vector<4x600xf32>
    tpu.vector_store %arg11[%c8, %c0_198], %103 {strides = array<i32>} : memref<72x600xf32, #tpu.memory_space<vmem>>, vector<4x600xf32>,
    %c0_199 = arith.constant 0 : index
    %c10 = arith.constant 10 : index
    %105 = vector.load %arg10[%c0_199, %c10] : memref<8x896xf32, #tpu.memory_space<vmem>>, vector<4x600xf32>
    %c12 = arith.constant 12 : index
    %c0_200 = arith.constant 0 : index
    %106 = vector.load %arg11[%c12, %c0_200] : memref<72x600xf32, #tpu.memory_space<vmem>>, vector<4x600xf32>
    tpu.vector_store %arg11[%c12, %c0_200], %105 {strides = array<i32>} : memref<72x600xf32, #tpu.memory_space<vmem>>, vector<4x600xf32>,
    %c0_201 = arith.constant 0 : index
    %c11 = arith.constant 11 : index
    %107 = vector.load %arg10[%c0_201, %c11] : memref<8x896xf32, #tpu.memory_space<vmem>>, vector<4x600xf32>
    %c16 = arith.constant 16 : index
    %c0_202 = arith.constant 0 : index
    %108 = vector.load %arg11[%c16, %c0_202] : memref<72x600xf32, #tpu.memory_space<vmem>>, vector<4x600xf32>
    tpu.vector_store %arg11[%c16, %c0_202], %107 {strides = array<i32>} : memref<72x600xf32, #tpu.memory_space<vmem>>, vector<4x600xf32>,
    %c0_203 = arith.constant 0 : index
    %c12_204 = arith.constant 12 : index
    %109 = vector.load %arg10[%c0_203, %c12_204] : memref<8x896xf32, #tpu.memory_space<vmem>>, vector<4x600xf32>
    %c20 = arith.constant 20 : index
    %c0_205 = arith.constant 0 : index
    %110 = vector.load %arg11[%c20, %c0_205] : memref<72x600xf32, #tpu.memory_space<vmem>>, vector<4x600xf32>
    tpu.vector_store %arg11[%c20, %c0_205], %109 {strides = array<i32>} : memref<72x600xf32, #tpu.memory_space<vmem>>, vector<4x600xf32>,
    %c0_206 = arith.constant 0 : index
    %c20_207 = arith.constant 20 : index
    %111 = vector.load %arg10[%c0_206, %c20_207] : memref<8x896xf32, #tpu.memory_space<vmem>>, vector<4x600xf32>
    %c24 = arith.constant 24 : index
    %c0_208 = arith.constant 0 : index
    %112 = vector.load %arg11[%c24, %c0_208] : memref<72x600xf32, #tpu.memory_space<vmem>>, vector<4x600xf32>
    tpu.vector_store %arg11[%c24, %c0_208], %111 {strides = array<i32>} : memref<72x600xf32, #tpu.memory_space<vmem>>, vector<4x600xf32>,
    %c0_209 = arith.constant 0 : index
    %c21 = arith.constant 21 : index
    %113 = vector.load %arg10[%c0_209, %c21] : memref<8x896xf32, #tpu.memory_space<vmem>>, vector<4x600xf32>
    %c28 = arith.constant 28 : index
    %c0_210 = arith.constant 0 : index
    %114 = vector.load %arg11[%c28, %c0_210] : memref<72x600xf32, #tpu.memory_space<vmem>>, vector<4x600xf32>
    tpu.vector_store %arg11[%c28, %c0_210], %113 {strides = array<i32>} : memref<72x600xf32, #tpu.memory_space<vmem>>, vector<4x600xf32>,
    %c0_211 = arith.constant 0 : index
    %c22 = arith.constant 22 : index
    %115 = vector.load %arg10[%c0_211, %c22] : memref<8x896xf32, #tpu.memory_space<vmem>>, vector<4x600xf32>
    %c32 = arith.constant 32 : index
    %c0_212 = arith.constant 0 : index
    %116 = vector.load %arg11[%c32, %c0_212] : memref<72x600xf32, #tpu.memory_space<vmem>>, vector<4x600xf32>
    tpu.vector_store %arg11[%c32, %c0_212], %115 {strides = array<i32>} : memref<72x600xf32, #tpu.memory_space<vmem>>, vector<4x600xf32>,
    %c0_213 = arith.constant 0 : index
    %c0_214 = arith.constant 0 : index
    %c0_215 = arith.constant 0 : index
    %117 = vector.load %arg2[%c0_213, %c0_214, %c0_215] : memref<3x4x36xf32, #tpu.memory_space<vmem>>, vector<1x4x36xf32>
    %118 = vector.shape_cast %117 : vector<1x4x36xf32> to vector<4x36xf32>
    %c0_216 = arith.constant 0 : index
    %c0_217 = arith.constant 0 : index
    %119 = vector.load %arg11[%c0_216, %c0_217] : memref<72x600xf32, #tpu.memory_space<vmem>>, vector<36x600xf32>
    %cst_218 = arith.constant dense<0.000000e+00> : vector<4x600xf32>
    %120 = tpu.matmul %118, %119, %cst_218 {dimension_numbers = #tpu.dot_dimension_numbers<[1], [0], [0], [1], [0, 0, 1, 1], [], []>} : vector<4x36xf32>, vector<36x600xf32>, vector<4x600xf32> -> vector<4x600xf32>
    %c0_219 = arith.constant 0 : index
    %c100 = arith.constant 100 : index
    %121 = vector.load %arg10[%c0_219, %c100] : memref<8x896xf32, #tpu.memory_space<vmem>>, vector<4x600xf32>
    %c0_220 = arith.constant 0 : index
    %c0_221 = arith.constant 0 : index
    %122 = vector.load %arg11[%c0_220, %c0_221] : memref<72x600xf32, #tpu.memory_space<vmem>>, vector<4x600xf32>
    tpu.vector_store %arg11[%c0_220, %c0_221], %121 {strides = array<i32>} : memref<72x600xf32, #tpu.memory_space<vmem>>, vector<4x600xf32>,
    %c0_222 = arith.constant 0 : index
    %c101 = arith.constant 101 : index
    %123 = vector.load %arg10[%c0_222, %c101] : memref<8x896xf32, #tpu.memory_space<vmem>>, vector<4x600xf32>
    %c4_223 = arith.constant 4 : index
    %c0_224 = arith.constant 0 : index
    %124 = vector.load %arg11[%c4_223, %c0_224] : memref<72x600xf32, #tpu.memory_space<vmem>>, vector<4x600xf32>
    tpu.vector_store %arg11[%c4_223, %c0_224], %123 {strides = array<i32>} : memref<72x600xf32, #tpu.memory_space<vmem>>, vector<4x600xf32>,
    %c0_225 = arith.constant 0 : index
    %c102 = arith.constant 102 : index
    %125 = vector.load %arg10[%c0_225, %c102] : memref<8x896xf32, #tpu.memory_space<vmem>>, vector<4x600xf32>
    %c8_226 = arith.constant 8 : index
    %c0_227 = arith.constant 0 : index
    %126 = vector.load %arg11[%c8_226, %c0_227] : memref<72x600xf32, #tpu.memory_space<vmem>>, vector<4x600xf32>
    tpu.vector_store %arg11[%c8_226, %c0_227], %125 {strides = array<i32>} : memref<72x600xf32, #tpu.memory_space<vmem>>, vector<4x600xf32>,
    %c0_228 = arith.constant 0 : index
    %c110 = arith.constant 110 : index
    %127 = vector.load %arg10[%c0_228, %c110] : memref<8x896xf32, #tpu.memory_space<vmem>>, vector<4x600xf32>
    %c12_229 = arith.constant 12 : index
    %c0_230 = arith.constant 0 : index
    %128 = vector.load %arg11[%c12_229, %c0_230] : memref<72x600xf32, #tpu.memory_space<vmem>>, vector<4x600xf32>
    tpu.vector_store %arg11[%c12_229, %c0_230], %127 {strides = array<i32>} : memref<72x600xf32, #tpu.memory_space<vmem>>, vector<4x600xf32>,
    %c0_231 = arith.constant 0 : index
    %c111_232 = arith.constant 111 : index
    %129 = vector.load %arg10[%c0_231, %c111_232] : memref<8x896xf32, #tpu.memory_space<vmem>>, vector<4x600xf32>
    %c16_233 = arith.constant 16 : index
    %c0_234 = arith.constant 0 : index
    %130 = vector.load %arg11[%c16_233, %c0_234] : memref<72x600xf32, #tpu.memory_space<vmem>>, vector<4x600xf32>
    tpu.vector_store %arg11[%c16_233, %c0_234], %129 {strides = array<i32>} : memref<72x600xf32, #tpu.memory_space<vmem>>, vector<4x600xf32>,
    %c0_235 = arith.constant 0 : index
    %c112 = arith.constant 112 : index
    %131 = vector.load %arg10[%c0_235, %c112] : memref<8x896xf32, #tpu.memory_space<vmem>>, vector<4x600xf32>
    %c20_236 = arith.constant 20 : index
    %c0_237 = arith.constant 0 : index
    %132 = vector.load %arg11[%c20_236, %c0_237] : memref<72x600xf32, #tpu.memory_space<vmem>>, vector<4x600xf32>
    tpu.vector_store %arg11[%c20_236, %c0_237], %131 {strides = array<i32>} : memref<72x600xf32, #tpu.memory_space<vmem>>, vector<4x600xf32>,
    %c0_238 = arith.constant 0 : index
    %c120 = arith.constant 120 : index
    %133 = vector.load %arg10[%c0_238, %c120] : memref<8x896xf32, #tpu.memory_space<vmem>>, vector<4x600xf32>
    %c24_239 = arith.constant 24 : index
    %c0_240 = arith.constant 0 : index
    %134 = vector.load %arg11[%c24_239, %c0_240] : memref<72x600xf32, #tpu.memory_space<vmem>>, vector<4x600xf32>
    tpu.vector_store %arg11[%c24_239, %c0_240], %133 {strides = array<i32>} : memref<72x600xf32, #tpu.memory_space<vmem>>, vector<4x600xf32>,
    %c0_241 = arith.constant 0 : index
    %c121_242 = arith.constant 121 : index
    %135 = vector.load %arg10[%c0_241, %c121_242] : memref<8x896xf32, #tpu.memory_space<vmem>>, vector<4x600xf32>
    %c28_243 = arith.constant 28 : index
    %c0_244 = arith.constant 0 : index
    %136 = vector.load %arg11[%c28_243, %c0_244] : memref<72x600xf32, #tpu.memory_space<vmem>>, vector<4x600xf32>
    tpu.vector_store %arg11[%c28_243, %c0_244], %135 {strides = array<i32>} : memref<72x600xf32, #tpu.memory_space<vmem>>, vector<4x600xf32>,
    %c0_245 = arith.constant 0 : index
    %c122 = arith.constant 122 : index
    %137 = vector.load %arg10[%c0_245, %c122] : memref<8x896xf32, #tpu.memory_space<vmem>>, vector<4x600xf32>
    %c32_246 = arith.constant 32 : index
    %c0_247 = arith.constant 0 : index
    %138 = vector.load %arg11[%c32_246, %c0_247] : memref<72x600xf32, #tpu.memory_space<vmem>>, vector<4x600xf32>
    tpu.vector_store %arg11[%c32_246, %c0_247], %137 {strides = array<i32>} : memref<72x600xf32, #tpu.memory_space<vmem>>, vector<4x600xf32>,
    %c1_248 = arith.constant 1 : index
    %c0_249 = arith.constant 0 : index
    %c0_250 = arith.constant 0 : index
    %139 = vector.load %arg2[%c1_248, %c0_249, %c0_250] : memref<3x4x36xf32, #tpu.memory_space<vmem>>, vector<1x4x36xf32>
    %140 = vector.shape_cast %139 : vector<1x4x36xf32> to vector<4x36xf32>
    %c0_251 = arith.constant 0 : index
    %c0_252 = arith.constant 0 : index
    %141 = vector.load %arg11[%c0_251, %c0_252] : memref<72x600xf32, #tpu.memory_space<vmem>>, vector<36x600xf32>
    %cst_253 = arith.constant dense<0.000000e+00> : vector<4x600xf32>
    %142 = tpu.matmul %140, %141, %cst_253 {dimension_numbers = #tpu.dot_dimension_numbers<[1], [0], [0], [1], [0, 0, 1, 1], [], []>} : vector<4x36xf32>, vector<36x600xf32>, vector<4x600xf32> -> vector<4x600xf32>
    %143 = arith.addf %120, %142 : vector<4x600xf32>
    %c0_254 = arith.constant 0 : index
    %c200 = arith.constant 200 : index
    %144 = vector.load %arg10[%c0_254, %c200] : memref<8x896xf32, #tpu.memory_space<vmem>>, vector<4x600xf32>
    %c0_255 = arith.constant 0 : index
    %c0_256 = arith.constant 0 : index
    %145 = vector.load %arg11[%c0_255, %c0_256] : memref<72x600xf32, #tpu.memory_space<vmem>>, vector<4x600xf32>
    tpu.vector_store %arg11[%c0_255, %c0_256], %144 {strides = array<i32>} : memref<72x600xf32, #tpu.memory_space<vmem>>, vector<4x600xf32>,
    %c0_257 = arith.constant 0 : index
    %c201 = arith.constant 201 : index
    %146 = vector.load %arg10[%c0_257, %c201] : memref<8x896xf32, #tpu.memory_space<vmem>>, vector<4x600xf32>
    %c4_258 = arith.constant 4 : index
    %c0_259 = arith.constant 0 : index
    %147 = vector.load %arg11[%c4_258, %c0_259] : memref<72x600xf32, #tpu.memory_space<vmem>>, vector<4x600xf32>
    tpu.vector_store %arg11[%c4_258, %c0_259], %146 {strides = array<i32>} : memref<72x600xf32, #tpu.memory_space<vmem>>, vector<4x600xf32>,
    %c0_260 = arith.constant 0 : index
    %c202 = arith.constant 202 : index
    %148 = vector.load %arg10[%c0_260, %c202] : memref<8x896xf32, #tpu.memory_space<vmem>>, vector<4x600xf32>
    %c8_261 = arith.constant 8 : index
    %c0_262 = arith.constant 0 : index
    %149 = vector.load %arg11[%c8_261, %c0_262] : memref<72x600xf32, #tpu.memory_space<vmem>>, vector<4x600xf32>
    tpu.vector_store %arg11[%c8_261, %c0_262], %148 {strides = array<i32>} : memref<72x600xf32, #tpu.memory_space<vmem>>, vector<4x600xf32>,
    %c0_263 = arith.constant 0 : index
    %c210 = arith.constant 210 : index
    %150 = vector.load %arg10[%c0_263, %c210] : memref<8x896xf32, #tpu.memory_space<vmem>>, vector<4x600xf32>
    %c12_264 = arith.constant 12 : index
    %c0_265 = arith.constant 0 : index
    %151 = vector.load %arg11[%c12_264, %c0_265] : memref<72x600xf32, #tpu.memory_space<vmem>>, vector<4x600xf32>
    tpu.vector_store %arg11[%c12_264, %c0_265], %150 {strides = array<i32>} : memref<72x600xf32, #tpu.memory_space<vmem>>, vector<4x600xf32>,
    %c0_266 = arith.constant 0 : index
    %c211_267 = arith.constant 211 : index
    %152 = vector.load %arg10[%c0_266, %c211_267] : memref<8x896xf32, #tpu.memory_space<vmem>>, vector<4x600xf32>
    %c16_268 = arith.constant 16 : index
    %c0_269 = arith.constant 0 : index
    %153 = vector.load %arg11[%c16_268, %c0_269] : memref<72x600xf32, #tpu.memory_space<vmem>>, vector<4x600xf32>
    tpu.vector_store %arg11[%c16_268, %c0_269], %152 {strides = array<i32>} : memref<72x600xf32, #tpu.memory_space<vmem>>, vector<4x600xf32>,
    %c0_270 = arith.constant 0 : index
    %c212 = arith.constant 212 : index
    %154 = vector.load %arg10[%c0_270, %c212] : memref<8x896xf32, #tpu.memory_space<vmem>>, vector<4x600xf32>
    %c20_271 = arith.constant 20 : index
    %c0_272 = arith.constant 0 : index
    %155 = vector.load %arg11[%c20_271, %c0_272] : memref<72x600xf32, #tpu.memory_space<vmem>>, vector<4x600xf32>
    tpu.vector_store %arg11[%c20_271, %c0_272], %154 {strides = array<i32>} : memref<72x600xf32, #tpu.memory_space<vmem>>, vector<4x600xf32>,
    %c0_273 = arith.constant 0 : index
    %c220 = arith.constant 220 : index
    %156 = vector.load %arg10[%c0_273, %c220] : memref<8x896xf32, #tpu.memory_space<vmem>>, vector<4x600xf32>
    %c24_274 = arith.constant 24 : index
    %c0_275 = arith.constant 0 : index
    %157 = vector.load %arg11[%c24_274, %c0_275] : memref<72x600xf32, #tpu.memory_space<vmem>>, vector<4x600xf32>
    tpu.vector_store %arg11[%c24_274, %c0_275], %156 {strides = array<i32>} : memref<72x600xf32, #tpu.memory_space<vmem>>, vector<4x600xf32>,
    %c0_276 = arith.constant 0 : index
    %c221_277 = arith.constant 221 : index
    %158 = vector.load %arg10[%c0_276, %c221_277] : memref<8x896xf32, #tpu.memory_space<vmem>>, vector<4x600xf32>
    %c28_278 = arith.constant 28 : index
    %c0_279 = arith.constant 0 : index
    %159 = vector.load %arg11[%c28_278, %c0_279] : memref<72x600xf32, #tpu.memory_space<vmem>>, vector<4x600xf32>
    tpu.vector_store %arg11[%c28_278, %c0_279], %158 {strides = array<i32>} : memref<72x600xf32, #tpu.memory_space<vmem>>, vector<4x600xf32>,
    %c0_280 = arith.constant 0 : index
    %c222 = arith.constant 222 : index
    %160 = vector.load %arg10[%c0_280, %c222] : memref<8x896xf32, #tpu.memory_space<vmem>>, vector<4x600xf32>
    %c32_281 = arith.constant 32 : index
    %c0_282 = arith.constant 0 : index
    %161 = vector.load %arg11[%c32_281, %c0_282] : memref<72x600xf32, #tpu.memory_space<vmem>>, vector<4x600xf32>
    tpu.vector_store %arg11[%c32_281, %c0_282], %160 {strides = array<i32>} : memref<72x600xf32, #tpu.memory_space<vmem>>, vector<4x600xf32>,
    %c2_283 = arith.constant 2 : index
    %c0_284 = arith.constant 0 : index
    %c0_285 = arith.constant 0 : index
    %162 = vector.load %arg2[%c2_283, %c0_284, %c0_285] : memref<3x4x36xf32, #tpu.memory_space<vmem>>, vector<1x4x36xf32>
    %163 = vector.shape_cast %162 : vector<1x4x36xf32> to vector<4x36xf32>
    %c0_286 = arith.constant 0 : index
    %c0_287 = arith.constant 0 : index
    %164 = vector.load %arg11[%c0_286, %c0_287] : memref<72x600xf32, #tpu.memory_space<vmem>>, vector<36x600xf32>
    %cst_288 = arith.constant dense<0.000000e+00> : vector<4x600xf32>
    %165 = tpu.matmul %163, %164, %cst_288 {dimension_numbers = #tpu.dot_dimension_numbers<[1], [0], [0], [1], [0, 0, 1, 1], [], []>} : vector<4x36xf32>, vector<36x600xf32>, vector<4x600xf32> -> vector<4x600xf32>
    %166 = arith.addf %143, %165 : vector<4x600xf32>
    %c0_289 = arith.constant 0 : index
    %c0_290 = arith.constant 0 : index
    %167 = vector.load %arg3[%c0_289, %c0_290] : memref<4x1xf32, #tpu.memory_space<vmem>>, vector<4x1xf32>
    %168 = vector.broadcast %167 : vector<4x1xf32> to vector<4x600xf32>
    %169 = arith.addf %166, %168 : vector<4x600xf32>
    %cst_291 = arith.constant 0.000000e+00 : f32
    %170 = vector.broadcast %cst_291 : f32 to vector<4x600xf32>
    %171 = arith.maximumf %169, %170 : vector<4x600xf32>
    %172 = vector.broadcast %98 : vector<1x600xf32> to vector<4x600xf32>
    %173 = arith.mulf %171, %172 : vector<4x600xf32>
    %c0_292 = arith.constant 0 : index
    %c111_293 = arith.constant 111 : index
    %174 = vector.load %arg10[%c0_292, %c111_293] : memref<8x896xf32, #tpu.memory_space<vmem>>, vector<4x600xf32>
    tpu.vector_store %arg10[%c0_292, %c111_293], %173 {strides = array<i32>} : memref<8x896xf32, #tpu.memory_space<vmem>>, vector<4x600xf32>,
    %c0_294 = arith.constant 0 : index
    %c0_295 = arith.constant 0 : index
    %175 = vector.load %arg10[%c0_294, %c0_295] : memref<8x896xf32, #tpu.memory_space<vmem>>, vector<4x600xf32>
    %c0_296 = arith.constant 0 : index
    %c0_297 = arith.constant 0 : index
    %176 = vector.load %arg11[%c0_296, %c0_297] : memref<72x600xf32, #tpu.memory_space<vmem>>, vector<4x600xf32>
    tpu.vector_store %arg11[%c0_296, %c0_297], %175 {strides = array<i32>} : memref<72x600xf32, #tpu.memory_space<vmem>>, vector<4x600xf32>,
    %c0_298 = arith.constant 0 : index
    %c1_299 = arith.constant 1 : index
    %177 = vector.load %arg10[%c0_298, %c1_299] : memref<8x896xf32, #tpu.memory_space<vmem>>, vector<4x600xf32>
    %c4_300 = arith.constant 4 : index
    %c0_301 = arith.constant 0 : index
    %178 = vector.load %arg11[%c4_300, %c0_301] : memref<72x600xf32, #tpu.memory_space<vmem>>, vector<4x600xf32>
    tpu.vector_store %arg11[%c4_300, %c0_301], %177 {strides = array<i32>} : memref<72x600xf32, #tpu.memory_space<vmem>>, vector<4x600xf32>,
    %c0_302 = arith.constant 0 : index
    %c2_303 = arith.constant 2 : index
    %179 = vector.load %arg10[%c0_302, %c2_303] : memref<8x896xf32, #tpu.memory_space<vmem>>, vector<4x600xf32>
    %c8_304 = arith.constant 8 : index
    %c0_305 = arith.constant 0 : index
    %180 = vector.load %arg11[%c8_304, %c0_305] : memref<72x600xf32, #tpu.memory_space<vmem>>, vector<4x600xf32>
    tpu.vector_store %arg11[%c8_304, %c0_305], %179 {strides = array<i32>} : memref<72x600xf32, #tpu.memory_space<vmem>>, vector<4x600xf32>,
    %c0_306 = arith.constant 0 : index
    %c10_307 = arith.constant 10 : index
    %181 = vector.load %arg10[%c0_306, %c10_307] : memref<8x896xf32, #tpu.memory_space<vmem>>, vector<4x600xf32>
    %c12_308 = arith.constant 12 : index
    %c0_309 = arith.constant 0 : index
    %182 = vector.load %arg11[%c12_308, %c0_309] : memref<72x600xf32, #tpu.memory_space<vmem>>, vector<4x600xf32>
    tpu.vector_store %arg11[%c12_308, %c0_309], %181 {strides = array<i32>} : memref<72x600xf32, #tpu.memory_space<vmem>>, vector<4x600xf32>,
    %c0_310 = arith.constant 0 : index
    %c11_311 = arith.constant 11 : index
    %183 = vector.load %arg10[%c0_310, %c11_311] : memref<8x896xf32, #tpu.memory_space<vmem>>, vector<4x600xf32>
    %c16_312 = arith.constant 16 : index
    %c0_313 = arith.constant 0 : index
    %184 = vector.load %arg11[%c16_312, %c0_313] : memref<72x600xf32, #tpu.memory_space<vmem>>, vector<4x600xf32>
    tpu.vector_store %arg11[%c16_312, %c0_313], %183 {strides = array<i32>} : memref<72x600xf32, #tpu.memory_space<vmem>>, vector<4x600xf32>,
    %c0_314 = arith.constant 0 : index
    %c12_315 = arith.constant 12 : index
    %185 = vector.load %arg10[%c0_314, %c12_315] : memref<8x896xf32, #tpu.memory_space<vmem>>, vector<4x600xf32>
    %c20_316 = arith.constant 20 : index
    %c0_317 = arith.constant 0 : index
    %186 = vector.load %arg11[%c20_316, %c0_317] : memref<72x600xf32, #tpu.memory_space<vmem>>, vector<4x600xf32>
    tpu.vector_store %arg11[%c20_316, %c0_317], %185 {strides = array<i32>} : memref<72x600xf32, #tpu.memory_space<vmem>>, vector<4x600xf32>,
    %c0_318 = arith.constant 0 : index
    %c20_319 = arith.constant 20 : index
    %187 = vector.load %arg10[%c0_318, %c20_319] : memref<8x896xf32, #tpu.memory_space<vmem>>, vector<4x600xf32>
    %c24_320 = arith.constant 24 : index
    %c0_321 = arith.constant 0 : index
    %188 = vector.load %arg11[%c24_320, %c0_321] : memref<72x600xf32, #tpu.memory_space<vmem>>, vector<4x600xf32>
    tpu.vector_store %arg11[%c24_320, %c0_321], %187 {strides = array<i32>} : memref<72x600xf32, #tpu.memory_space<vmem>>, vector<4x600xf32>,
    %c0_322 = arith.constant 0 : index
    %c21_323 = arith.constant 21 : index
    %189 = vector.load %arg10[%c0_322, %c21_323] : memref<8x896xf32, #tpu.memory_space<vmem>>, vector<4x600xf32>
    %c28_324 = arith.constant 28 : index
    %c0_325 = arith.constant 0 : index
    %190 = vector.load %arg11[%c28_324, %c0_325] : memref<72x600xf32, #tpu.memory_space<vmem>>, vector<4x600xf32>
    tpu.vector_store %arg11[%c28_324, %c0_325], %189 {strides = array<i32>} : memref<72x600xf32, #tpu.memory_space<vmem>>, vector<4x600xf32>,
    %c0_326 = arith.constant 0 : index
    %c22_327 = arith.constant 22 : index
    %191 = vector.load %arg10[%c0_326, %c22_327] : memref<8x896xf32, #tpu.memory_space<vmem>>, vector<4x600xf32>
    %c32_328 = arith.constant 32 : index
    %c0_329 = arith.constant 0 : index
    %192 = vector.load %arg11[%c32_328, %c0_329] : memref<72x600xf32, #tpu.memory_space<vmem>>, vector<4x600xf32>
    tpu.vector_store %arg11[%c32_328, %c0_329], %191 {strides = array<i32>} : memref<72x600xf32, #tpu.memory_space<vmem>>, vector<4x600xf32>,
    %c0_330 = arith.constant 0 : index
    %c0_331 = arith.constant 0 : index
    %c0_332 = arith.constant 0 : index
    %193 = vector.load %arg4[%c0_330, %c0_331, %c0_332] : memref<3x8x36xf32, #tpu.memory_space<vmem>>, vector<1x8x36xf32>
    %194 = vector.shape_cast %193 : vector<1x8x36xf32> to vector<8x36xf32>
    %c0_333 = arith.constant 0 : index
    %c0_334 = arith.constant 0 : index
    %195 = vector.load %arg11[%c0_333, %c0_334] : memref<72x600xf32, #tpu.memory_space<vmem>>, vector<36x600xf32>
    %cst_335 = arith.constant dense<0.000000e+00> : vector<8x600xf32>
    %196 = tpu.matmul %194, %195, %cst_335 {dimension_numbers = #tpu.dot_dimension_numbers<[1], [0], [0], [1], [0, 0, 1, 1], [], []>} : vector<8x36xf32>, vector<36x600xf32>, vector<8x600xf32> -> vector<8x600xf32>
    %c0_336 = arith.constant 0 : index
    %c100_337 = arith.constant 100 : index
    %197 = vector.load %arg10[%c0_336, %c100_337] : memref<8x896xf32, #tpu.memory_space<vmem>>, vector<4x600xf32>
    %c0_338 = arith.constant 0 : index
    %c0_339 = arith.constant 0 : index
    %198 = vector.load %arg11[%c0_338, %c0_339] : memref<72x600xf32, #tpu.memory_space<vmem>>, vector<4x600xf32>
    tpu.vector_store %arg11[%c0_338, %c0_339], %197 {strides = array<i32>} : memref<72x600xf32, #tpu.memory_space<vmem>>, vector<4x600xf32>,
    %c0_340 = arith.constant 0 : index
    %c101_341 = arith.constant 101 : index
    %199 = vector.load %arg10[%c0_340, %c101_341] : memref<8x896xf32, #tpu.memory_space<vmem>>, vector<4x600xf32>
    %c4_342 = arith.constant 4 : index
    %c0_343 = arith.constant 0 : index
    %200 = vector.load %arg11[%c4_342, %c0_343] : memref<72x600xf32, #tpu.memory_space<vmem>>, vector<4x600xf32>
    tpu.vector_store %arg11[%c4_342, %c0_343], %199 {strides = array<i32>} : memref<72x600xf32, #tpu.memory_space<vmem>>, vector<4x600xf32>,
    %c0_344 = arith.constant 0 : index
    %c102_345 = arith.constant 102 : index
    %201 = vector.load %arg10[%c0_344, %c102_345] : memref<8x896xf32, #tpu.memory_space<vmem>>, vector<4x600xf32>
    %c8_346 = arith.constant 8 : index
    %c0_347 = arith.constant 0 : index
    %202 = vector.load %arg11[%c8_346, %c0_347] : memref<72x600xf32, #tpu.memory_space<vmem>>, vector<4x600xf32>
    tpu.vector_store %arg11[%c8_346, %c0_347], %201 {strides = array<i32>} : memref<72x600xf32, #tpu.memory_space<vmem>>, vector<4x600xf32>,
    %c0_348 = arith.constant 0 : index
    %c110_349 = arith.constant 110 : index
    %203 = vector.load %arg10[%c0_348, %c110_349] : memref<8x896xf32, #tpu.memory_space<vmem>>, vector<4x600xf32>
    %c12_350 = arith.constant 12 : index
    %c0_351 = arith.constant 0 : index
    %204 = vector.load %arg11[%c12_350, %c0_351] : memref<72x600xf32, #tpu.memory_space<vmem>>, vector<4x600xf32>
    tpu.vector_store %arg11[%c12_350, %c0_351], %203 {strides = array<i32>} : memref<72x600xf32, #tpu.memory_space<vmem>>, vector<4x600xf32>,
    %c0_352 = arith.constant 0 : index
    %c111_353 = arith.constant 111 : index
    %205 = vector.load %arg10[%c0_352, %c111_353] : memref<8x896xf32, #tpu.memory_space<vmem>>, vector<4x600xf32>
    %c16_354 = arith.constant 16 : index
    %c0_355 = arith.constant 0 : index
    %206 = vector.load %arg11[%c16_354, %c0_355] : memref<72x600xf32, #tpu.memory_space<vmem>>, vector<4x600xf32>
    tpu.vector_store %arg11[%c16_354, %c0_355], %205 {strides = array<i32>} : memref<72x600xf32, #tpu.memory_space<vmem>>, vector<4x600xf32>,
    %c0_356 = arith.constant 0 : index
    %c112_357 = arith.constant 112 : index
    %207 = vector.load %arg10[%c0_356, %c112_357] : memref<8x896xf32, #tpu.memory_space<vmem>>, vector<4x600xf32>
    %c20_358 = arith.constant 20 : index
    %c0_359 = arith.constant 0 : index
    %208 = vector.load %arg11[%c20_358, %c0_359] : memref<72x600xf32, #tpu.memory_space<vmem>>, vector<4x600xf32>
    tpu.vector_store %arg11[%c20_358, %c0_359], %207 {strides = array<i32>} : memref<72x600xf32, #tpu.memory_space<vmem>>, vector<4x600xf32>,
    %c0_360 = arith.constant 0 : index
    %c120_361 = arith.constant 120 : index
    %209 = vector.load %arg10[%c0_360, %c120_361] : memref<8x896xf32, #tpu.memory_space<vmem>>, vector<4x600xf32>
    %c24_362 = arith.constant 24 : index
    %c0_363 = arith.constant 0 : index
    %210 = vector.load %arg11[%c24_362, %c0_363] : memref<72x600xf32, #tpu.memory_space<vmem>>, vector<4x600xf32>
    tpu.vector_store %arg11[%c24_362, %c0_363], %209 {strides = array<i32>} : memref<72x600xf32, #tpu.memory_space<vmem>>, vector<4x600xf32>,
    %c0_364 = arith.constant 0 : index
    %c121_365 = arith.constant 121 : index
    %211 = vector.load %arg10[%c0_364, %c121_365] : memref<8x896xf32, #tpu.memory_space<vmem>>, vector<4x600xf32>
    %c28_366 = arith.constant 28 : index
    %c0_367 = arith.constant 0 : index
    %212 = vector.load %arg11[%c28_366, %c0_367] : memref<72x600xf32, #tpu.memory_space<vmem>>, vector<4x600xf32>
    tpu.vector_store %arg11[%c28_366, %c0_367], %211 {strides = array<i32>} : memref<72x600xf32, #tpu.memory_space<vmem>>, vector<4x600xf32>,
    %c0_368 = arith.constant 0 : index
    %c122_369 = arith.constant 122 : index
    %213 = vector.load %arg10[%c0_368, %c122_369] : memref<8x896xf32, #tpu.memory_space<vmem>>, vector<4x600xf32>
    %c32_370 = arith.constant 32 : index
    %c0_371 = arith.constant 0 : index
    %214 = vector.load %arg11[%c32_370, %c0_371] : memref<72x600xf32, #tpu.memory_space<vmem>>, vector<4x600xf32>
    tpu.vector_store %arg11[%c32_370, %c0_371], %213 {strides = array<i32>} : memref<72x600xf32, #tpu.memory_space<vmem>>, vector<4x600xf32>,
    %c1_372 = arith.constant 1 : index
    %c0_373 = arith.constant 0 : index
    %c0_374 = arith.constant 0 : index
    %215 = vector.load %arg4[%c1_372, %c0_373, %c0_374] : memref<3x8x36xf32, #tpu.memory_space<vmem>>, vector<1x8x36xf32>
    %216 = vector.shape_cast %215 : vector<1x8x36xf32> to vector<8x36xf32>
    %c0_375 = arith.constant 0 : index
    %c0_376 = arith.constant 0 : index
    %217 = vector.load %arg11[%c0_375, %c0_376] : memref<72x600xf32, #tpu.memory_space<vmem>>, vector<36x600xf32>
    %cst_377 = arith.constant dense<0.000000e+00> : vector<8x600xf32>
    %218 = tpu.matmul %216, %217, %cst_377 {dimension_numbers = #tpu.dot_dimension_numbers<[1], [0], [0], [1], [0, 0, 1, 1], [], []>} : vector<8x36xf32>, vector<36x600xf32>, vector<8x600xf32> -> vector<8x600xf32>
    %219 = arith.addf %196, %218 : vector<8x600xf32>
    %c0_378 = arith.constant 0 : index
    %c200_379 = arith.constant 200 : index
    %220 = vector.load %arg10[%c0_378, %c200_379] : memref<8x896xf32, #tpu.memory_space<vmem>>, vector<4x600xf32>
    %c0_380 = arith.constant 0 : index
    %c0_381 = arith.constant 0 : index
    %221 = vector.load %arg11[%c0_380, %c0_381] : memref<72x600xf32, #tpu.memory_space<vmem>>, vector<4x600xf32>
    tpu.vector_store %arg11[%c0_380, %c0_381], %220 {strides = array<i32>} : memref<72x600xf32, #tpu.memory_space<vmem>>, vector<4x600xf32>,
    %c0_382 = arith.constant 0 : index
    %c201_383 = arith.constant 201 : index
    %222 = vector.load %arg10[%c0_382, %c201_383] : memref<8x896xf32, #tpu.memory_space<vmem>>, vector<4x600xf32>
    %c4_384 = arith.constant 4 : index
    %c0_385 = arith.constant 0 : index
    %223 = vector.load %arg11[%c4_384, %c0_385] : memref<72x600xf32, #tpu.memory_space<vmem>>, vector<4x600xf32>
    tpu.vector_store %arg11[%c4_384, %c0_385], %222 {strides = array<i32>} : memref<72x600xf32, #tpu.memory_space<vmem>>, vector<4x600xf32>,
    %c0_386 = arith.constant 0 : index
    %c202_387 = arith.constant 202 : index
    %224 = vector.load %arg10[%c0_386, %c202_387] : memref<8x896xf32, #tpu.memory_space<vmem>>, vector<4x600xf32>
    %c8_388 = arith.constant 8 : index
    %c0_389 = arith.constant 0 : index
    %225 = vector.load %arg11[%c8_388, %c0_389] : memref<72x600xf32, #tpu.memory_space<vmem>>, vector<4x600xf32>
    tpu.vector_store %arg11[%c8_388, %c0_389], %224 {strides = array<i32>} : memref<72x600xf32, #tpu.memory_space<vmem>>, vector<4x600xf32>,
    %c0_390 = arith.constant 0 : index
    %c210_391 = arith.constant 210 : index
    %226 = vector.load %arg10[%c0_390, %c210_391] : memref<8x896xf32, #tpu.memory_space<vmem>>, vector<4x600xf32>
    %c12_392 = arith.constant 12 : index
    %c0_393 = arith.constant 0 : index
    %227 = vector.load %arg11[%c12_392, %c0_393] : memref<72x600xf32, #tpu.memory_space<vmem>>, vector<4x600xf32>
    tpu.vector_store %arg11[%c12_392, %c0_393], %226 {strides = array<i32>} : memref<72x600xf32, #tpu.memory_space<vmem>>, vector<4x600xf32>,
    %c0_394 = arith.constant 0 : index
    %c211_395 = arith.constant 211 : index
    %228 = vector.load %arg10[%c0_394, %c211_395] : memref<8x896xf32, #tpu.memory_space<vmem>>, vector<4x600xf32>
    %c16_396 = arith.constant 16 : index
    %c0_397 = arith.constant 0 : index
    %229 = vector.load %arg11[%c16_396, %c0_397] : memref<72x600xf32, #tpu.memory_space<vmem>>, vector<4x600xf32>
    tpu.vector_store %arg11[%c16_396, %c0_397], %228 {strides = array<i32>} : memref<72x600xf32, #tpu.memory_space<vmem>>, vector<4x600xf32>,
    %c0_398 = arith.constant 0 : index
    %c212_399 = arith.constant 212 : index
    %230 = vector.load %arg10[%c0_398, %c212_399] : memref<8x896xf32, #tpu.memory_space<vmem>>, vector<4x600xf32>
    %c20_400 = arith.constant 20 : index
    %c0_401 = arith.constant 0 : index
    %231 = vector.load %arg11[%c20_400, %c0_401] : memref<72x600xf32, #tpu.memory_space<vmem>>, vector<4x600xf32>
    tpu.vector_store %arg11[%c20_400, %c0_401], %230 {strides = array<i32>} : memref<72x600xf32, #tpu.memory_space<vmem>>, vector<4x600xf32>,
    %c0_402 = arith.constant 0 : index
    %c220_403 = arith.constant 220 : index
    %232 = vector.load %arg10[%c0_402, %c220_403] : memref<8x896xf32, #tpu.memory_space<vmem>>, vector<4x600xf32>
    %c24_404 = arith.constant 24 : index
    %c0_405 = arith.constant 0 : index
    %233 = vector.load %arg11[%c24_404, %c0_405] : memref<72x600xf32, #tpu.memory_space<vmem>>, vector<4x600xf32>
    tpu.vector_store %arg11[%c24_404, %c0_405], %232 {strides = array<i32>} : memref<72x600xf32, #tpu.memory_space<vmem>>, vector<4x600xf32>,
    %c0_406 = arith.constant 0 : index
    %c221_407 = arith.constant 221 : index
    %234 = vector.load %arg10[%c0_406, %c221_407] : memref<8x896xf32, #tpu.memory_space<vmem>>, vector<4x600xf32>
    %c28_408 = arith.constant 28 : index
    %c0_409 = arith.constant 0 : index
    %235 = vector.load %arg11[%c28_408, %c0_409] : memref<72x600xf32, #tpu.memory_space<vmem>>, vector<4x600xf32>
    tpu.vector_store %arg11[%c28_408, %c0_409], %234 {strides = array<i32>} : memref<72x600xf32, #tpu.memory_space<vmem>>, vector<4x600xf32>,
    %c0_410 = arith.constant 0 : index
    %c222_411 = arith.constant 222 : index
    %236 = vector.load %arg10[%c0_410, %c222_411] : memref<8x896xf32, #tpu.memory_space<vmem>>, vector<4x600xf32>
    %c32_412 = arith.constant 32 : index
    %c0_413 = arith.constant 0 : index
    %237 = vector.load %arg11[%c32_412, %c0_413] : memref<72x600xf32, #tpu.memory_space<vmem>>, vector<4x600xf32>
    tpu.vector_store %arg11[%c32_412, %c0_413], %236 {strides = array<i32>} : memref<72x600xf32, #tpu.memory_space<vmem>>, vector<4x600xf32>,
    %c2_414 = arith.constant 2 : index
    %c0_415 = arith.constant 0 : index
    %c0_416 = arith.constant 0 : index
    %238 = vector.load %arg4[%c2_414, %c0_415, %c0_416] : memref<3x8x36xf32, #tpu.memory_space<vmem>>, vector<1x8x36xf32>
    %239 = vector.shape_cast %238 : vector<1x8x36xf32> to vector<8x36xf32>
    %c0_417 = arith.constant 0 : index
    %c0_418 = arith.constant 0 : index
    %240 = vector.load %arg11[%c0_417, %c0_418] : memref<72x600xf32, #tpu.memory_space<vmem>>, vector<36x600xf32>
    %cst_419 = arith.constant dense<0.000000e+00> : vector<8x600xf32>
    %241 = tpu.matmul %239, %240, %cst_419 {dimension_numbers = #tpu.dot_dimension_numbers<[1], [0], [0], [1], [0, 0, 1, 1], [], []>} : vector<8x36xf32>, vector<36x600xf32>, vector<8x600xf32> -> vector<8x600xf32>
    %242 = arith.addf %219, %241 : vector<8x600xf32>
    %c0_420 = arith.constant 0 : index
    %c0_421 = arith.constant 0 : index
    %243 = vector.load %arg5[%c0_420, %c0_421] : memref<8x1xf32, #tpu.memory_space<vmem>>, vector<8x1xf32>
    %244 = vector.broadcast %243 : vector<8x1xf32> to vector<8x600xf32>
    %245 = arith.addf %242, %244 : vector<8x600xf32>
    %cst_422 = arith.constant 0.000000e+00 : f32
    %246 = vector.broadcast %cst_422 : f32 to vector<8x600xf32>
    %247 = arith.maximumf %245, %246 : vector<8x600xf32>
    %248 = vector.broadcast %98 : vector<1x600xf32> to vector<8x600xf32>
    %249 = arith.mulf %247, %248 : vector<8x600xf32>
    %c0_423 = arith.constant 0 : index
    %c111_424 = arith.constant 111 : index
    %250 = vector.load %arg10[%c0_423, %c111_424] : memref<8x896xf32, #tpu.memory_space<vmem>>, vector<8x600xf32>
    tpu.vector_store %arg10[%c0_423, %c111_424], %249 {strides = array<i32>} : memref<8x896xf32, #tpu.memory_space<vmem>>, vector<8x600xf32>,
    %c0_425 = arith.constant 0 : index
    %c0_426 = arith.constant 0 : index
    %251 = vector.load %arg10[%c0_425, %c0_426] : memref<8x896xf32, #tpu.memory_space<vmem>>, vector<8x600xf32>
    %c0_427 = arith.constant 0 : index
    %c0_428 = arith.constant 0 : index
    %252 = vector.load %arg11[%c0_427, %c0_428] : memref<72x600xf32, #tpu.memory_space<vmem>>, vector<8x600xf32>
    tpu.vector_store %arg11[%c0_427, %c0_428], %251 {strides = array<i32>} : memref<72x600xf32, #tpu.memory_space<vmem>>, vector<8x600xf32>,
    %c0_429 = arith.constant 0 : index
    %c1_430 = arith.constant 1 : index
    %253 = vector.load %arg10[%c0_429, %c1_430] : memref<8x896xf32, #tpu.memory_space<vmem>>, vector<8x600xf32>
    %c8_431 = arith.constant 8 : index
    %c0_432 = arith.constant 0 : index
    %254 = vector.load %arg11[%c8_431, %c0_432] : memref<72x600xf32, #tpu.memory_space<vmem>>, vector<8x600xf32>
    tpu.vector_store %arg11[%c8_431, %c0_432], %253 {strides = array<i32>} : memref<72x600xf32, #tpu.memory_space<vmem>>, vector<8x600xf32>,
    %c0_433 = arith.constant 0 : index
    %c2_434 = arith.constant 2 : index
    %255 = vector.load %arg10[%c0_433, %c2_434] : memref<8x896xf32, #tpu.memory_space<vmem>>, vector<8x600xf32>
    %c16_435 = arith.constant 16 : index
    %c0_436 = arith.constant 0 : index
    %256 = vector.load %arg11[%c16_435, %c0_436] : memref<72x600xf32, #tpu.memory_space<vmem>>, vector<8x600xf32>
    tpu.vector_store %arg11[%c16_435, %c0_436], %255 {strides = array<i32>} : memref<72x600xf32, #tpu.memory_space<vmem>>, vector<8x600xf32>,
    %c0_437 = arith.constant 0 : index
    %c10_438 = arith.constant 10 : index
    %257 = vector.load %arg10[%c0_437, %c10_438] : memref<8x896xf32, #tpu.memory_space<vmem>>, vector<8x600xf32>
    %c24_439 = arith.constant 24 : index
    %c0_440 = arith.constant 0 : index
    %258 = vector.load %arg11[%c24_439, %c0_440] : memref<72x600xf32, #tpu.memory_space<vmem>>, vector<8x600xf32>
    tpu.vector_store %arg11[%c24_439, %c0_440], %257 {strides = array<i32>} : memref<72x600xf32, #tpu.memory_space<vmem>>, vector<8x600xf32>,
    %c0_441 = arith.constant 0 : index
    %c11_442 = arith.constant 11 : index
    %259 = vector.load %arg10[%c0_441, %c11_442] : memref<8x896xf32, #tpu.memory_space<vmem>>, vector<8x600xf32>
    %c32_443 = arith.constant 32 : index
    %c0_444 = arith.constant 0 : index
    %260 = vector.load %arg11[%c32_443, %c0_444] : memref<72x600xf32, #tpu.memory_space<vmem>>, vector<8x600xf32>
    tpu.vector_store %arg11[%c32_443, %c0_444], %259 {strides = array<i32>} : memref<72x600xf32, #tpu.memory_space<vmem>>, vector<8x600xf32>,
    %c0_445 = arith.constant 0 : index
    %c12_446 = arith.constant 12 : index
    %261 = vector.load %arg10[%c0_445, %c12_446] : memref<8x896xf32, #tpu.memory_space<vmem>>, vector<8x600xf32>
    %c40 = arith.constant 40 : index
    %c0_447 = arith.constant 0 : index
    %262 = vector.load %arg11[%c40, %c0_447] : memref<72x600xf32, #tpu.memory_space<vmem>>, vector<8x600xf32>
    tpu.vector_store %arg11[%c40, %c0_447], %261 {strides = array<i32>} : memref<72x600xf32, #tpu.memory_space<vmem>>, vector<8x600xf32>,
    %c0_448 = arith.constant 0 : index
    %c20_449 = arith.constant 20 : index
    %263 = vector.load %arg10[%c0_448, %c20_449] : memref<8x896xf32, #tpu.memory_space<vmem>>, vector<8x600xf32>
    %c48 = arith.constant 48 : index
    %c0_450 = arith.constant 0 : index
    %264 = vector.load %arg11[%c48, %c0_450] : memref<72x600xf32, #tpu.memory_space<vmem>>, vector<8x600xf32>
    tpu.vector_store %arg11[%c48, %c0_450], %263 {strides = array<i32>} : memref<72x600xf32, #tpu.memory_space<vmem>>, vector<8x600xf32>,
    %c0_451 = arith.constant 0 : index
    %c21_452 = arith.constant 21 : index
    %265 = vector.load %arg10[%c0_451, %c21_452] : memref<8x896xf32, #tpu.memory_space<vmem>>, vector<8x600xf32>
    %c56 = arith.constant 56 : index
    %c0_453 = arith.constant 0 : index
    %266 = vector.load %arg11[%c56, %c0_453] : memref<72x600xf32, #tpu.memory_space<vmem>>, vector<8x600xf32>
    tpu.vector_store %arg11[%c56, %c0_453], %265 {strides = array<i32>} : memref<72x600xf32, #tpu.memory_space<vmem>>, vector<8x600xf32>,
    %c0_454 = arith.constant 0 : index
    %c22_455 = arith.constant 22 : index
    %267 = vector.load %arg10[%c0_454, %c22_455] : memref<8x896xf32, #tpu.memory_space<vmem>>, vector<8x600xf32>
    %c64 = arith.constant 64 : index
    %c0_456 = arith.constant 0 : index
    %268 = vector.load %arg11[%c64, %c0_456] : memref<72x600xf32, #tpu.memory_space<vmem>>, vector<8x600xf32>
    tpu.vector_store %arg11[%c64, %c0_456], %267 {strides = array<i32>} : memref<72x600xf32, #tpu.memory_space<vmem>>, vector<8x600xf32>,
    %c0_457 = arith.constant 0 : index
    %c0_458 = arith.constant 0 : index
    %c0_459 = arith.constant 0 : index
    %269 = vector.load %arg6[%c0_457, %c0_458, %c0_459] : memref<3x8x72xf32, #tpu.memory_space<vmem>>, vector<1x8x72xf32>
    %270 = vector.shape_cast %269 : vector<1x8x72xf32> to vector<8x72xf32>
    %c0_460 = arith.constant 0 : index
    %c0_461 = arith.constant 0 : index
    %271 = vector.load %arg11[%c0_460, %c0_461] : memref<72x600xf32, #tpu.memory_space<vmem>>, vector<72x600xf32>
    %cst_462 = arith.constant dense<0.000000e+00> : vector<8x600xf32>
    %272 = tpu.matmul %270, %271, %cst_462 {dimension_numbers = #tpu.dot_dimension_numbers<[1], [0], [0], [1], [0, 0, 1, 1], [], []>} : vector<8x72xf32>, vector<72x600xf32>, vector<8x600xf32> -> vector<8x600xf32>
    %c0_463 = arith.constant 0 : index
    %c100_464 = arith.constant 100 : index
    %273 = vector.load %arg10[%c0_463, %c100_464] : memref<8x896xf32, #tpu.memory_space<vmem>>, vector<8x600xf32>
    %c0_465 = arith.constant 0 : index
    %c0_466 = arith.constant 0 : index
    %274 = vector.load %arg11[%c0_465, %c0_466] : memref<72x600xf32, #tpu.memory_space<vmem>>, vector<8x600xf32>
    tpu.vector_store %arg11[%c0_465, %c0_466], %273 {strides = array<i32>} : memref<72x600xf32, #tpu.memory_space<vmem>>, vector<8x600xf32>,
    %c0_467 = arith.constant 0 : index
    %c101_468 = arith.constant 101 : index
    %275 = vector.load %arg10[%c0_467, %c101_468] : memref<8x896xf32, #tpu.memory_space<vmem>>, vector<8x600xf32>
    %c8_469 = arith.constant 8 : index
    %c0_470 = arith.constant 0 : index
    %276 = vector.load %arg11[%c8_469, %c0_470] : memref<72x600xf32, #tpu.memory_space<vmem>>, vector<8x600xf32>
    tpu.vector_store %arg11[%c8_469, %c0_470], %275 {strides = array<i32>} : memref<72x600xf32, #tpu.memory_space<vmem>>, vector<8x600xf32>,
    %c0_471 = arith.constant 0 : index
    %c102_472 = arith.constant 102 : index
    %277 = vector.load %arg10[%c0_471, %c102_472] : memref<8x896xf32, #tpu.memory_space<vmem>>, vector<8x600xf32>
    %c16_473 = arith.constant 16 : index
    %c0_474 = arith.constant 0 : index
    %278 = vector.load %arg11[%c16_473, %c0_474] : memref<72x600xf32, #tpu.memory_space<vmem>>, vector<8x600xf32>
    tpu.vector_store %arg11[%c16_473, %c0_474], %277 {strides = array<i32>} : memref<72x600xf32, #tpu.memory_space<vmem>>, vector<8x600xf32>,
    %c0_475 = arith.constant 0 : index
    %c110_476 = arith.constant 110 : index
    %279 = vector.load %arg10[%c0_475, %c110_476] : memref<8x896xf32, #tpu.memory_space<vmem>>, vector<8x600xf32>
    %c24_477 = arith.constant 24 : index
    %c0_478 = arith.constant 0 : index
    %280 = vector.load %arg11[%c24_477, %c0_478] : memref<72x600xf32, #tpu.memory_space<vmem>>, vector<8x600xf32>
    tpu.vector_store %arg11[%c24_477, %c0_478], %279 {strides = array<i32>} : memref<72x600xf32, #tpu.memory_space<vmem>>, vector<8x600xf32>,
    %c0_479 = arith.constant 0 : index
    %c111_480 = arith.constant 111 : index
    %281 = vector.load %arg10[%c0_479, %c111_480] : memref<8x896xf32, #tpu.memory_space<vmem>>, vector<8x600xf32>
    %c32_481 = arith.constant 32 : index
    %c0_482 = arith.constant 0 : index
    %282 = vector.load %arg11[%c32_481, %c0_482] : memref<72x600xf32, #tpu.memory_space<vmem>>, vector<8x600xf32>
    tpu.vector_store %arg11[%c32_481, %c0_482], %281 {strides = array<i32>} : memref<72x600xf32, #tpu.memory_space<vmem>>, vector<8x600xf32>,
    %c0_483 = arith.constant 0 : index
    %c112_484 = arith.constant 112 : index
    %283 = vector.load %arg10[%c0_483, %c112_484] : memref<8x896xf32, #tpu.memory_space<vmem>>, vector<8x600xf32>
    %c40_485 = arith.constant 40 : index
    %c0_486 = arith.constant 0 : index
    %284 = vector.load %arg11[%c40_485, %c0_486] : memref<72x600xf32, #tpu.memory_space<vmem>>, vector<8x600xf32>
    tpu.vector_store %arg11[%c40_485, %c0_486], %283 {strides = array<i32>} : memref<72x600xf32, #tpu.memory_space<vmem>>, vector<8x600xf32>,
    %c0_487 = arith.constant 0 : index
    %c120_488 = arith.constant 120 : index
    %285 = vector.load %arg10[%c0_487, %c120_488] : memref<8x896xf32, #tpu.memory_space<vmem>>, vector<8x600xf32>
    %c48_489 = arith.constant 48 : index
    %c0_490 = arith.constant 0 : index
    %286 = vector.load %arg11[%c48_489, %c0_490] : memref<72x600xf32, #tpu.memory_space<vmem>>, vector<8x600xf32>
    tpu.vector_store %arg11[%c48_489, %c0_490], %285 {strides = array<i32>} : memref<72x600xf32, #tpu.memory_space<vmem>>, vector<8x600xf32>,
    %c0_491 = arith.constant 0 : index
    %c121_492 = arith.constant 121 : index
    %287 = vector.load %arg10[%c0_491, %c121_492] : memref<8x896xf32, #tpu.memory_space<vmem>>, vector<8x600xf32>
    %c56_493 = arith.constant 56 : index
    %c0_494 = arith.constant 0 : index
    %288 = vector.load %arg11[%c56_493, %c0_494] : memref<72x600xf32, #tpu.memory_space<vmem>>, vector<8x600xf32>
    tpu.vector_store %arg11[%c56_493, %c0_494], %287 {strides = array<i32>} : memref<72x600xf32, #tpu.memory_space<vmem>>, vector<8x600xf32>,
    %c0_495 = arith.constant 0 : index
    %c122_496 = arith.constant 122 : index
    %289 = vector.load %arg10[%c0_495, %c122_496] : memref<8x896xf32, #tpu.memory_space<vmem>>, vector<8x600xf32>
    %c64_497 = arith.constant 64 : index
    %c0_498 = arith.constant 0 : index
    %290 = vector.load %arg11[%c64_497, %c0_498] : memref<72x600xf32, #tpu.memory_space<vmem>>, vector<8x600xf32>
    tpu.vector_store %arg11[%c64_497, %c0_498], %289 {strides = array<i32>} : memref<72x600xf32, #tpu.memory_space<vmem>>, vector<8x600xf32>,
    %c1_499 = arith.constant 1 : index
    %c0_500 = arith.constant 0 : index
    %c0_501 = arith.constant 0 : index
    %291 = vector.load %arg6[%c1_499, %c0_500, %c0_501] : memref<3x8x72xf32, #tpu.memory_space<vmem>>, vector<1x8x72xf32>
    %292 = vector.shape_cast %291 : vector<1x8x72xf32> to vector<8x72xf32>
    %c0_502 = arith.constant 0 : index
    %c0_503 = arith.constant 0 : index
    %293 = vector.load %arg11[%c0_502, %c0_503] : memref<72x600xf32, #tpu.memory_space<vmem>>, vector<72x600xf32>
    %cst_504 = arith.constant dense<0.000000e+00> : vector<8x600xf32>
    %294 = tpu.matmul %292, %293, %cst_504 {dimension_numbers = #tpu.dot_dimension_numbers<[1], [0], [0], [1], [0, 0, 1, 1], [], []>} : vector<8x72xf32>, vector<72x600xf32>, vector<8x600xf32> -> vector<8x600xf32>
    %295 = arith.addf %272, %294 : vector<8x600xf32>
    %c0_505 = arith.constant 0 : index
    %c200_506 = arith.constant 200 : index
    %296 = vector.load %arg10[%c0_505, %c200_506] : memref<8x896xf32, #tpu.memory_space<vmem>>, vector<8x600xf32>
    %c0_507 = arith.constant 0 : index
    %c0_508 = arith.constant 0 : index
    %297 = vector.load %arg11[%c0_507, %c0_508] : memref<72x600xf32, #tpu.memory_space<vmem>>, vector<8x600xf32>
    tpu.vector_store %arg11[%c0_507, %c0_508], %296 {strides = array<i32>} : memref<72x600xf32, #tpu.memory_space<vmem>>, vector<8x600xf32>,
    %c0_509 = arith.constant 0 : index
    %c201_510 = arith.constant 201 : index
    %298 = vector.load %arg10[%c0_509, %c201_510] : memref<8x896xf32, #tpu.memory_space<vmem>>, vector<8x600xf32>
    %c8_511 = arith.constant 8 : index
    %c0_512 = arith.constant 0 : index
    %299 = vector.load %arg11[%c8_511, %c0_512] : memref<72x600xf32, #tpu.memory_space<vmem>>, vector<8x600xf32>
    tpu.vector_store %arg11[%c8_511, %c0_512], %298 {strides = array<i32>} : memref<72x600xf32, #tpu.memory_space<vmem>>, vector<8x600xf32>,
    %c0_513 = arith.constant 0 : index
    %c202_514 = arith.constant 202 : index
    %300 = vector.load %arg10[%c0_513, %c202_514] : memref<8x896xf32, #tpu.memory_space<vmem>>, vector<8x600xf32>
    %c16_515 = arith.constant 16 : index
    %c0_516 = arith.constant 0 : index
    %301 = vector.load %arg11[%c16_515, %c0_516] : memref<72x600xf32, #tpu.memory_space<vmem>>, vector<8x600xf32>
    tpu.vector_store %arg11[%c16_515, %c0_516], %300 {strides = array<i32>} : memref<72x600xf32, #tpu.memory_space<vmem>>, vector<8x600xf32>,
    %c0_517 = arith.constant 0 : index
    %c210_518 = arith.constant 210 : index
    %302 = vector.load %arg10[%c0_517, %c210_518] : memref<8x896xf32, #tpu.memory_space<vmem>>, vector<8x600xf32>
    %c24_519 = arith.constant 24 : index
    %c0_520 = arith.constant 0 : index
    %303 = vector.load %arg11[%c24_519, %c0_520] : memref<72x600xf32, #tpu.memory_space<vmem>>, vector<8x600xf32>
    tpu.vector_store %arg11[%c24_519, %c0_520], %302 {strides = array<i32>} : memref<72x600xf32, #tpu.memory_space<vmem>>, vector<8x600xf32>,
    %c0_521 = arith.constant 0 : index
    %c211_522 = arith.constant 211 : index
    %304 = vector.load %arg10[%c0_521, %c211_522] : memref<8x896xf32, #tpu.memory_space<vmem>>, vector<8x600xf32>
    %c32_523 = arith.constant 32 : index
    %c0_524 = arith.constant 0 : index
    %305 = vector.load %arg11[%c32_523, %c0_524] : memref<72x600xf32, #tpu.memory_space<vmem>>, vector<8x600xf32>
    tpu.vector_store %arg11[%c32_523, %c0_524], %304 {strides = array<i32>} : memref<72x600xf32, #tpu.memory_space<vmem>>, vector<8x600xf32>,
    %c0_525 = arith.constant 0 : index
    %c212_526 = arith.constant 212 : index
    %306 = vector.load %arg10[%c0_525, %c212_526] : memref<8x896xf32, #tpu.memory_space<vmem>>, vector<8x600xf32>
    %c40_527 = arith.constant 40 : index
    %c0_528 = arith.constant 0 : index
    %307 = vector.load %arg11[%c40_527, %c0_528] : memref<72x600xf32, #tpu.memory_space<vmem>>, vector<8x600xf32>
    tpu.vector_store %arg11[%c40_527, %c0_528], %306 {strides = array<i32>} : memref<72x600xf32, #tpu.memory_space<vmem>>, vector<8x600xf32>,
    %c0_529 = arith.constant 0 : index
    %c220_530 = arith.constant 220 : index
    %308 = vector.load %arg10[%c0_529, %c220_530] : memref<8x896xf32, #tpu.memory_space<vmem>>, vector<8x600xf32>
    %c48_531 = arith.constant 48 : index
    %c0_532 = arith.constant 0 : index
    %309 = vector.load %arg11[%c48_531, %c0_532] : memref<72x600xf32, #tpu.memory_space<vmem>>, vector<8x600xf32>
    tpu.vector_store %arg11[%c48_531, %c0_532], %308 {strides = array<i32>} : memref<72x600xf32, #tpu.memory_space<vmem>>, vector<8x600xf32>,
    %c0_533 = arith.constant 0 : index
    %c221_534 = arith.constant 221 : index
    %310 = vector.load %arg10[%c0_533, %c221_534] : memref<8x896xf32, #tpu.memory_space<vmem>>, vector<8x600xf32>
    %c56_535 = arith.constant 56 : index
    %c0_536 = arith.constant 0 : index
    %311 = vector.load %arg11[%c56_535, %c0_536] : memref<72x600xf32, #tpu.memory_space<vmem>>, vector<8x600xf32>
    tpu.vector_store %arg11[%c56_535, %c0_536], %310 {strides = array<i32>} : memref<72x600xf32, #tpu.memory_space<vmem>>, vector<8x600xf32>,
    %c0_537 = arith.constant 0 : index
    %c222_538 = arith.constant 222 : index
    %312 = vector.load %arg10[%c0_537, %c222_538] : memref<8x896xf32, #tpu.memory_space<vmem>>, vector<8x600xf32>
    %c64_539 = arith.constant 64 : index
    %c0_540 = arith.constant 0 : index
    %313 = vector.load %arg11[%c64_539, %c0_540] : memref<72x600xf32, #tpu.memory_space<vmem>>, vector<8x600xf32>
    tpu.vector_store %arg11[%c64_539, %c0_540], %312 {strides = array<i32>} : memref<72x600xf32, #tpu.memory_space<vmem>>, vector<8x600xf32>,
    %c2_541 = arith.constant 2 : index
    %c0_542 = arith.constant 0 : index
    %c0_543 = arith.constant 0 : index
    %314 = vector.load %arg6[%c2_541, %c0_542, %c0_543] : memref<3x8x72xf32, #tpu.memory_space<vmem>>, vector<1x8x72xf32>
    %315 = vector.shape_cast %314 : vector<1x8x72xf32> to vector<8x72xf32>
    %c0_544 = arith.constant 0 : index
    %c0_545 = arith.constant 0 : index
    %316 = vector.load %arg11[%c0_544, %c0_545] : memref<72x600xf32, #tpu.memory_space<vmem>>, vector<72x600xf32>
    %cst_546 = arith.constant dense<0.000000e+00> : vector<8x600xf32>
    %317 = tpu.matmul %315, %316, %cst_546 {dimension_numbers = #tpu.dot_dimension_numbers<[1], [0], [0], [1], [0, 0, 1, 1], [], []>} : vector<8x72xf32>, vector<72x600xf32>, vector<8x600xf32> -> vector<8x600xf32>
    %318 = arith.addf %295, %317 : vector<8x600xf32>
    %c0_547 = arith.constant 0 : index
    %c0_548 = arith.constant 0 : index
    %319 = vector.load %arg7[%c0_547, %c0_548] : memref<8x1xf32, #tpu.memory_space<vmem>>, vector<8x1xf32>
    %320 = vector.broadcast %319 : vector<8x1xf32> to vector<8x600xf32>
    %321 = arith.addf %318, %320 : vector<8x600xf32>
    %cst_549 = arith.constant 0.000000e+00 : f32
    %322 = vector.broadcast %cst_549 : f32 to vector<8x600xf32>
    %323 = arith.maximumf %321, %322 : vector<8x600xf32>
    %c0_550 = arith.constant 0 : index
    %c0_551 = arith.constant 0 : index
    %c0_552 = arith.constant 0 : index
    %324 = vector.load %arg9[%c0_550, %c0_551, %c0_552] : memref<1x8x600xf32, #tpu.memory_space<vmem>>, vector<1x8x600xf32>
    %325 = vector.shape_cast %324 : vector<1x8x600xf32> to vector<8x600xf32>
    %326 = vector.shape_cast %323 : vector<8x600xf32> to vector<1x8x600xf32>
    tpu.vector_store %arg9[%c0_550, %c0_551, %c0_552], %326 {strides = array<i32>} : memref<1x8x600xf32, #tpu.memory_space<vmem>>, vector<1x8x600xf32>,
    return
  }
  func.func @transform_0(%arg0: i32) -> (i32, i32, i32, i32, i32) {
    %c0_i32 = arith.constant 0 : i32
    %c0_i32_0 = arith.constant 0 : i32
    %c0_i32_1 = arith.constant 0 : i32
    %c0_i32_2 = arith.constant 0 : i32
    %c0_i32_3 = arith.constant 0 : i32
    return %arg0, %c0_i32, %c0_i32_0, %c0_i32_1, %c0_i32_2 : i32, i32, i32, i32, i32
  }
  func.func @transform_1(%arg0: i32) -> (i32, i32, i32) {
    %c0_i32 = arith.constant 0 : i32
    %c0_i32_0 = arith.constant 0 : i32
    %c0_i32_1 = arith.constant 0 : i32
    %c0_i32_2 = arith.constant 0 : i32
    return %c0_i32, %c0_i32_0, %c0_i32_1 : i32, i32, i32
  }
  func.func @transform_2(%arg0: i32) -> (i32, i32) {
    %c0_i32 = arith.constant 0 : i32
    %c0_i32_0 = arith.constant 0 : i32
    %c0_i32_1 = arith.constant 0 : i32
    return %c0_i32, %c0_i32_0 : i32, i32
  }
  func.func @transform_3(%arg0: i32) -> (i32, i32, i32) {
    %c0_i32 = arith.constant 0 : i32
    %c0_i32_0 = arith.constant 0 : i32
    %c0_i32_1 = arith.constant 0 : i32
    %c0_i32_2 = arith.constant 0 : i32
    return %c0_i32, %c0_i32_0, %c0_i32_1 : i32, i32, i32
  }
  func.func @transform_4(%arg0: i32) -> (i32, i32) {
    %c0_i32 = arith.constant 0 : i32
    %c0_i32_0 = arith.constant 0 : i32
    %c0_i32_1 = arith.constant 0 : i32
    return %c0_i32, %c0_i32_0 : i32, i32
  }
  func.func @transform_5(%arg0: i32) -> (i32, i32, i32) {
    %c0_i32 = arith.constant 0 : i32
    %c0_i32_0 = arith.constant 0 : i32
    %c0_i32_1 = arith.constant 0 : i32
    %c0_i32_2 = arith.constant 0 : i32
    return %c0_i32, %c0_i32_0, %c0_i32_1 : i32, i32, i32
  }
  func.func @transform_6(%arg0: i32) -> (i32, i32) {
    %c0_i32 = arith.constant 0 : i32
    %c0_i32_0 = arith.constant 0 : i32
    %c0_i32_1 = arith.constant 0 : i32
    return %c0_i32, %c0_i32_0 : i32, i32
  }
  func.func @transform_7(%arg0: i32) -> (i32, i32) {
    %c0_i32 = arith.constant 0 : i32
    %c0_i32_0 = arith.constant 0 : i32
    %c0_i32_1 = arith.constant 0 : i32
    return %c0_i32, %c0_i32_0 : i32, i32
  }
  func.func @transform_8(%arg0: i32) -> (i32, i32, i32) {
    %c0_i32 = arith.constant 0 : i32
    %c0_i32_0 = arith.constant 0 : i32
    %c0_i32_1 = arith.constant 0 : i32
    return %arg0, %c0_i32, %c0_i32_0 : i32, i32, i32
  }
}

</mosaic_0001>

<llo_original>
// kernel: tpu_custom_call.1
$region0: #{tpu_custom_call.1}
  #allocation0 [shape = 'u32[]', space=smem, size = 0x4, offset = 0x4, fixed_abs, tag = 'smem constant byte address 0x4 - core index']
  #allocation1 [shape = 'u32[144,128]{1,0:T(1,128)}', space=vmem, size = 0x12000, scoped, tag = 'internal scratch']
  #allocation2 [shape = 'f32[8,896]{1,0:T(8,128)}', space=vmem, size = 0x7000, scoped, tag = 'scratch operand']
  #allocation3 [shape = 'f32[72,600]{1,0:T(8,128)}', space=vmem, size = 0x2d000, scoped, tag = 'scratch operand']
  %s0 = inlined_call_operand.hbm [shape: f32[2,4,4,8,8], index: 0, kind: input, shape index: {}]
  %s1 = inlined_call_operand.hbm [shape: f32[3,4,36], index: 1, kind: input, shape index: {}]
  %s2 = inlined_call_operand.vmem [shape: f32[4,1], index: 2, kind: input, shape index: {}]
  %s3 = inlined_call_operand.vmem [shape: f32[3,8,36], index: 3, kind: input, shape index: {}]
  %s4 = inlined_call_operand.vmem [shape: f32[8,1], index: 4, kind: input, shape index: {}]
  %s5 = inlined_call_operand.hbm [shape: f32[3,8,72], index: 5, kind: input, shape index: {}]
  %s6 = inlined_call_operand.vmem [shape: f32[8,1], index: 6, kind: input, shape index: {}]
  %s7 = inlined_call_operand.vmem [shape: f32[1,600], index: 7, kind: input, shape index: {}]
  %s8 = inlined_call_operand.hbm [shape: f32[2,8,600], index: 8, kind: output, shape index: {}]
  %s9 = sld [smem:[#allocation0]]
  $region77: #{tpu_custom_call.1} parent=0
    _
  %s11 = ssub.s32 1, %s9
  %s12 = scalar_select 0, %s11, %s9
  $region1: #{tpu_custom_call.1} parent=0
    #allocation4 [shape = 'u8[131072]{0}', space=vmem, size = 0x20000, scoped, tag = 'input window, operand 0']
    #allocation5 [shape = 's32[2]{0}', space=sflag, size = 0x8, scoped, tag = 'scoped memory for tpu_custom_call.1']
    #allocation6 [shape = 's32[2]{0}', space=sflag, size = 0x8, scoped, tag = 'scoped memory for tpu_custom_call.1']
    #allocation7 [shape = 'u8[6144]{0}', space=vmem, size = 0x1800, scoped, tag = 'input window, operand 1, single buffered']
    #allocation8 [shape = 's32[1]{0}', space=sflag, size = 0x4, scoped, tag = 'scoped memory for tpu_custom_call.1']
    #allocation9 [shape = 'u8[12288]{0}', space=vmem, size = 0x3000, scoped, tag = 'input window, operand 5, single buffered']
    #allocation10 [shape = 'u8[40960]{0}', space=vmem, size = 0xa000, scoped, tag = 'output window, operand 0']
    %13 = vsyncpa [#allocation5], 0
    %s14 = scalar_lea.sflag [#allocation5], 1
    %15 = vsyncpa %s14, 0
    %16 = vsyncpa [#allocation8], 0
    %17 = vsyncpa [#allocation6], 0
    %s18 = scalar_lea.sflag [#allocation6], 1
    %19 = vsyncpa %s18, 0
    loop: start=0, step=1, limit=4
    $region2: #{tpu_custom_call.1} parent=1 // loop_pre_header
      _
    $region3: #{tpu_custom_call.1} parent=1 // loop_header
      %s21 = sphi 0, %s25
      %p22 = scmp.ge.s32.totalorder %s21, 4
      %s31 = sphi 0, %s33
      %s34 = sphi 0, %s31
      %s35 = sphi 0, %s34
      %s51 = sphi 0, %s35
      %s55 = sphi 0, %s55
      %s57 = sphi 0, %s55
      %s58 = sphi 0, %s57
      %s72 = sphi 0, %s58
      %s76 = sphi 0, %s76
      %s78 = sphi 0, %s76
      %s79 = sphi 0, %s78
      %s93 = sphi 0, %s79
      %s97 = sphi 0, %s97
      %s99 = sphi 0, %s97
      %s100 = sphi 0, %s99
      %s114 = sphi 0, %s100
      %s118 = sphi 0, %s118
      %s120 = sphi 0, %s118
      %s121 = sphi 0, %s120
      %s135 = sphi 0, %s121
      %s139 = sphi 0, %s139
      %s141 = sphi 0, %s139
      %s142 = sphi 0, %s141
      %s156 = sphi 0, %s142
      %s160 = sphi 0, %s160
      %s162 = sphi 0, %s160
      %s163 = sphi 0, %s162
      %s177 = sphi 0, %s163
      %s181 = sphi 0, %s181
      %s183 = sphi 0, %s181
      %s184 = sphi 0, %s183
      %s198 = sphi 0, %s184
      %s204 = sphi 0, %s206
      %s207 = sphi 0, %s204
      %s208 = sphi 0, %s207
      %s224 = sphi 0, %s208
    $region4: #{tpu_custom_call.1} parent=1 // loop_header_branch
      %24 = sbr.rel (%p22) target = $region8
    $region5: #{tpu_custom_call.1} parent=1 // loop_body
      %s26 = ssub.s32 %s21, 1
      %s27 = ssub.s32 %s21, 2
      %s28 = sadd.s32 %s21, 1
      %s29 = ssub.s32 %s21, %s28
      %p30 = scmp.eq.s32.totalorder %s29, 0
      %s32 = sadd.s32 %s31, 1
      %s33 = scalar_select %p30, %s31, %s32
      %p36 = pneg %p30
      %p37 = scmp.eq.s32.totalorder %s21, 1
      %p38 = por %p36, %p37
      %p39 = scmp.ne.s32.totalorder %s31, %s34
      %p40 = scmp.eq.s32.totalorder %s21, 0
      %p41 = por %p39, %p40
      %p42 = scmp.ne.s32.totalorder %s31, %s34
      %p43 = scmp.eq.s32.totalorder %s26, 1
      %p44 = por %p42, %p43
      %p45 = scmp.ne.s32.totalorder %s34, %s35
      %p46 = scmp.eq.s32.totalorder %s26, 0
      %p47 = por %p45, %p46
      %p48 = scmp.ne.s32.totalorder %s34, %s35
      %p49 = scmp.eq.s32.totalorder %s27, 1
      %p50 = por %p48, %p49
      %p52 = scmp.ne.s32.totalorder %s35, %s51
      %p53 = scmp.eq.s32.totalorder %s27, 0
      %p54 = por %p52, %p53
      %s56 = sadd.s32 %s55, 1
      %p59 = scmp.eq.s32.totalorder %s21, 1
      %p60 = scmp.ne.s32.totalorder %s55, %s57
      %p61 = scmp.eq.s32.totalorder %s21, 0
      %p62 = por %p60, %p61
      %p63 = scmp.ne.s32.totalorder %s55, %s57
      %p64 = scmp.eq.s32.totalorder %s26, 1
      %p65 = por %p63, %p64
      %p66 = scmp.ne.s32.totalorder %s57, %s58
      %p67 = scmp.eq.s32.totalorder %s26, 0
      %p68 = por %p66, %p67
      %p69 = scmp.ne.s32.totalorder %s57, %s58
      %p70 = scmp.eq.s32.totalorder %s27, 1
      %p71 = por %p69, %p70
      %p73 = scmp.ne.s32.totalorder %s58, %s72
      %p74 = scmp.eq.s32.totalorder %s27, 0
      %p75 = por %p73, %p74
      %s77 = sadd.s32 %s76, 1
      %p80 = scmp.eq.s32.totalorder %s21, 1
      %p81 = scmp.ne.s32.totalorder %s76, %s78
      %p82 = scmp.eq.s32.totalorder %s21, 0
      %p83 = por %p81, %p82
      %p84 = scmp.ne.s32.totalorder %s76, %s78
      %p85 = scmp.eq.s32.totalorder %s26, 1
      %p86 = por %p84, %p85
      %p87 = scmp.ne.s32.totalorder %s78, %s79
      %p88 = scmp.eq.s32.totalorder %s26, 0
      %p89 = por %p87, %p88
      %p90 = scmp.ne.s32.totalorder %s78, %s79
      %p91 = scmp.eq.s32.totalorder %s27, 1
      %p92 = por %p90, %p91
      %p94 = scmp.ne.s32.totalorder %s79, %s93
      %p95 = scmp.eq.s32.totalorder %s27, 0
      %p96 = por %p94, %p95
      %s98 = sadd.s32 %s97, 1
      %p101 = scmp.eq.s32.totalorder %s21, 1
      %p102 = scmp.ne.s32.totalorder %s97, %s99
      %p103 = scmp.eq.s32.totalorder %s21, 0
      %p104 = por %p102, %p103
      %p105 = scmp.ne.s32.totalorder %s97, %s99
      %p106 = scmp.eq.s32.totalorder %s26, 1
      %p107 = por %p105, %p106
      %p108 = scmp.ne.s32.totalorder %s99, %s100
      %p109 = scmp.eq.s32.totalorder %s26, 0
      %p110 = por %p108, %p109
      %p111 = scmp.ne.s32.totalorder %s99, %s100
      %p112 = scmp.eq.s32.totalorder %s27, 1
      %p113 = por %p111, %p112
      %p115 = scmp.ne.s32.totalorder %s100, %s114
      %p116 = scmp.eq.s32.totalorder %s27, 0
      %p117 = por %p115, %p116
      %s119 = sadd.s32 %s118, 1
      %p122 = scmp.eq.s32.totalorder %s21, 1
      %p123 = scmp.ne.s32.totalorder %s118, %s120
      %p124 = scmp.eq.s32.totalorder %s21, 0
      %p125 = por %p123, %p124
      %p126 = scmp.ne.s32.totalorder %s118, %s120
      %p127 = scmp.eq.s32.totalorder %s26, 1
      %p128 = por %p126, %p127
      %p129 = scmp.ne.s32.totalorder %s120, %s121
      %p130 = scmp.eq.s32.totalorder %s26, 0
      %p131 = por %p129, %p130
      %p132 = scmp.ne.s32.totalorder %s120, %s121
      %p133 = scmp.eq.s32.totalorder %s27, 1
      %p134 = por %p132, %p133
      %p136 = scmp.ne.s32.totalorder %s121, %s135
      %p137 = scmp.eq.s32.totalorder %s27, 0
      %p138 = por %p136, %p137
      %s140 = sadd.s32 %s139, 1
      %p143 = scmp.eq.s32.totalorder %s21, 1
      %p144 = scmp.ne.s32.totalorder %s139, %s141
      %p145 = scmp.eq.s32.totalorder %s21, 0
      %p146 = por %p144, %p145
      %p147 = scmp.ne.s32.totalorder %s139, %s141
      %p148 = scmp.eq.s32.totalorder %s26, 1
      %p149 = por %p147, %p148
      %p150 = scmp.ne.s32.totalorder %s141, %s142
      %p151 = scmp.eq.s32.totalorder %s26, 0
      %p152 = por %p150, %p151
      %p153 = scmp.ne.s32.totalorder %s141, %s142
      %p154 = scmp.eq.s32.totalorder %s27, 1
      %p155 = por %p153, %p154
      %p157 = scmp.ne.s32.totalorder %s142, %s156
      %p158 = scmp.eq.s32.totalorder %s27, 0
      %p159 = por %p157, %p158
      %s161 = sadd.s32 %s160, 1
      %p164 = scmp.eq.s32.totalorder %s21, 1
      %p165 = scmp.ne.s32.totalorder %s160, %s162
      %p166 = scmp.eq.s32.totalorder %s21, 0
      %p167 = por %p165, %p166
      %p168 = scmp.ne.s32.totalorder %s160, %s162
      %p169 = scmp.eq.s32.totalorder %s26, 1
      %p170 = por %p168, %p169
      %p171 = scmp.ne.s32.totalorder %s162, %s163
      %p172 = scmp.eq.s32.totalorder %s26, 0
      %p173 = por %p171, %p172
      %p174 = scmp.ne.s32.totalorder %s162, %s163
      %p175 = scmp.eq.s32.totalorder %s27, 1
      %p176 = por %p174, %p175
      %p178 = scmp.ne.s32.totalorder %s163, %s177
      %p179 = scmp.eq.s32.totalorder %s27, 0
      %p180 = por %p178, %p179
      %s182 = sadd.s32 %s181, 1
      %p185 = scmp.eq.s32.totalorder %s21, 1
      %p186 = scmp.ne.s32.totalorder %s181, %s183
      %p187 = scmp.eq.s32.totalorder %s21, 0
      %p188 = por %p186, %p187
      %p189 = scmp.ne.s32.totalorder %s181, %s183
      %p190 = scmp.eq.s32.totalorder %s26, 1
      %p191 = por %p189, %p190
      %p192 = scmp.ne.s32.totalorder %s183, %s184
      %p193 = scmp.eq.s32.totalorder %s26, 0
      %p194 = por %p192, %p193
      %p195 = scmp.ne.s32.totalorder %s183, %s184
      %p196 = scmp.eq.s32.totalorder %s27, 1
      %p197 = por %p195, %p196
      %p199 = scmp.ne.s32.totalorder %s184, %s198
      %p200 = scmp.eq.s32.totalorder %s27, 0
      %p201 = por %p199, %p200
      %s202 = ssub.s32 %s21, %s28
      %p203 = scmp.eq.s32.totalorder %s202, 0
      %s205 = sadd.s32 %s204, 1
      %s206 = scalar_select %p203, %s204, %s205
      %p209 = pneg %p203
      %p210 = scmp.eq.s32.totalorder %s21, 1
      %p211 = por %p209, %p210
      %p212 = scmp.ne.s32.totalorder %s204, %s207
      %p213 = scmp.eq.s32.totalorder %s21, 0
      %p214 = por %p212, %p213
      %p215 = scmp.ne.s32.totalorder %s204, %s207
      %p216 = scmp.eq.s32.totalorder %s26, 1
      %p217 = por %p215, %p216
      %p218 = scmp.ne.s32.totalorder %s207, %s208
      %p219 = scmp.eq.s32.totalorder %s26, 0
      %p220 = por %p218, %p219
      %p221 = scmp.ne.s32.totalorder %s207, %s208
      %p222 = scmp.eq.s32.totalorder %s27, 1
      %p223 = por %p221, %p222
      %p225 = scmp.ne.s32.totalorder %s208, %s224
      %p226 = scmp.eq.s32.totalorder %s27, 0
      %p227 = por %p225, %p226
      %p228 = scmp.le.s32.totalorder 1, %s21
      %p229 = scmp.lt.s32.totalorder %s21, 3
      %p230 = pnand %p228, %p229
      %p231 = pneg %p230
      // Predicated region
      $region9: #{tpu_custom_call.1} parent=5 // pred_check
        _
      $region10: #{tpu_custom_call.1} parent=5 // pred_check_branch
        %233 = sbr.rel (%p230) target = $region12
      $region11: #{tpu_custom_call.1} parent=5 // pred_region
        %s234 = ssub.s32 %s21, 1
        // Predicated region
        $region13: #{tpu_custom_call.1} parent=11 // pred_check
          %p235 = pneg %p68
        $region14: #{tpu_custom_call.1} parent=11 // pred_check_branch
          %237 = sbr.rel (%p235) target = $region16
        $region15: #{tpu_custom_call.1} parent=11 // pred_region
          %s239 = ssub.s32 192, 192
          %240 = vsyncadd [#allocation8], %s239
          %s241 = sshll.u32 [#allocation7], 4
          %s242 = int_to_ptr.vmem [resolvable:$true] %s241
          %247 = dma.hbm_to_vmem [thread:$0]  %s1, 192, %s242, [#allocation8], 64, 64, 4
        $region16: #{tpu_custom_call.1} parent=11 // pred_fallthru
          _
        // Predicated region
        $region17: #{tpu_custom_call.1} parent=11 // pred_check
          %p248 = pneg %p89
        $region18: #{tpu_custom_call.1} parent=11 // pred_check_branch
          %250 = sbr.rel (%p248) target = $region20
        $region19: #{tpu_custom_call.1} parent=11 // pred_region
          _
        $region20: #{tpu_custom_call.1} parent=11 // pred_fallthru
          _
        // Predicated region
        $region21: #{tpu_custom_call.1} parent=11 // pred_check
          %p251 = pneg %p110
        $region22: #{tpu_custom_call.1} parent=11 // pred_check_branch
          %253 = sbr.rel (%p251) target = $region24
        $region23: #{tpu_custom_call.1} parent=11 // pred_region
          _
        $region24: #{tpu_custom_call.1} parent=11 // pred_fallthru
          _
        // Predicated region
        $region25: #{tpu_custom_call.1} parent=11 // pred_check
          %p254 = pneg %p131
        $region26: #{tpu_custom_call.1} parent=11 // pred_check_branch
          %256 = sbr.rel (%p254) target = $region28
        $region27: #{tpu_custom_call.1} parent=11 // pred_region
          _
        $region28: #{tpu_custom_call.1} parent=11 // pred_fallthru
          _
        // Predicated region
        $region29: #{tpu_custom_call.1} parent=11 // pred_check
          %p257 = pneg %p152
        $region30: #{tpu_custom_call.1} parent=11 // pred_check_branch
          %259 = sbr.rel (%p257) target = $region32
        $region31: #{tpu_custom_call.1} parent=11 // pred_region
          %s261 = ssub.s32 384, 384
          %262 = vsyncadd [#allocation8], %s261
          %s263 = sshll.u32 [#allocation9], 4
          %s264 = int_to_ptr.vmem [resolvable:$true] %s263
          %269 = dma.hbm_to_vmem [thread:$0]  %s5, 384, %s264, [#allocation8], 128, 128, 8
        $region32: #{tpu_custom_call.1} parent=11 // pred_fallthru
          _
        // Predicated region
        $region33: #{tpu_custom_call.1} parent=11 // pred_check
          %p270 = pneg %p173
        $region34: #{tpu_custom_call.1} parent=11 // pred_check_branch
          %272 = sbr.rel (%p270) target = $region36
        $region35: #{tpu_custom_call.1} parent=11 // pred_region
          _
        $region36: #{tpu_custom_call.1} parent=11 // pred_fallthru
          _
        // Predicated region
        $region37: #{tpu_custom_call.1} parent=11 // pred_check
          %p273 = pneg %p194
        $region38: #{tpu_custom_call.1} parent=11 // pred_check_branch
          %275 = sbr.rel (%p273) target = $region40
        $region39: #{tpu_custom_call.1} parent=11 // pred_region
          _
        $region40: #{tpu_custom_call.1} parent=11 // pred_fallthru
          _
      $region12: #{tpu_custom_call.1} parent=5 // pred_fallthru
        _
      %p276 = scmp.lt.s32.totalorder %s21, 2
      // Predicated region
      $region41: #{tpu_custom_call.1} parent=5 // pred_check
        %p277 = pneg %p276
      $region42: #{tpu_custom_call.1} parent=5 // pred_check_branch
        %279 = sbr.rel (%p277) target = $region44
      $region43: #{tpu_custom_call.1} parent=5 // pred_region
        // Predicated region
        $region45: #{tpu_custom_call.1} parent=43 // pred_check
          %p280 = pneg %p41
        $region46: #{tpu_custom_call.1} parent=43 // pred_check_branch
          %282 = sbr.rel (%p280) target = $region48
        $region47: #{tpu_custom_call.1} parent=43 // pred_region
          %s283 = sand.u32 %s31, 1
          %s284 = scalar_lea.sflag [#allocation5], %s283
          %s285 = sand.u32 %s31, 1
          %s286 = smul.addr %s285, 128
          %s287 = scalar_lea.vmem [#allocation4], %s286
          %s289 = ssub.s32 2048, 2048
          %290 = vsyncadd %s284, %s289
          %s291 = smul.addr %s21, 16
          %s292 = smul.addr %s291, 128
          %s293 = scalar_lea.hbm %s0, %s292
          %s294 = sshll.u32 %s287, 4
          %s295 = int_to_ptr.vmem [resolvable:$true] %s294
          %300 = dma.hbm_to_vmem [thread:$0]  %s293, 2048, %s295, %s284, 128, 128, 8
        $region48: #{tpu_custom_call.1} parent=43 // pred_fallthru
          _
      $region44: #{tpu_custom_call.1} parent=5 // pred_fallthru
        _
      %p301 = scmp.le.s32.totalorder 1, %s21
      %p302 = scmp.lt.s32.totalorder %s21, 3
      %p303 = pnand %p301, %p302
      %p304 = pneg %p303
      // Predicated region
      $region49: #{tpu_custom_call.1} parent=5 // pred_check
        _
      $region50: #{tpu_custom_call.1} parent=5 // pred_check_branch
        %306 = sbr.rel (%p303) target = $region52
      $region51: #{tpu_custom_call.1} parent=5 // pred_region
        %s307 = ssub.s32 %s21, 1
        %s308 = sand.u32 %s34, 1
        %s309 = scalar_lea.sflag [#allocation5], %s308
        %s310 = sand.u32 %s34, 1
        %s311 = smul.addr %s310, 128
        %s312 = scalar_lea.vmem [#allocation4], %s311
        // Predicated region
        $region53: #{tpu_custom_call.1} parent=51 // pred_check
          %p313 = pneg %p47
        $region54: #{tpu_custom_call.1} parent=51 // pred_check_branch
          %315 = sbr.rel (%p313) target = $region56
        $region55: #{tpu_custom_call.1} parent=51 // pred_region
          %316 = dma.done %s309, 2048
        $region56: #{tpu_custom_call.1} parent=51 // pred_fallthru
          _
        // Predicated region
        $region57: #{tpu_custom_call.1} parent=51 // pred_check
          %p317 = pneg %p68
        $region58: #{tpu_custom_call.1} parent=51 // pred_check_branch
          %319 = sbr.rel (%p317) target = $region60
        $region59: #{tpu_custom_call.1} parent=51 // pred_region
          %320 = dma.done [#allocation8], 192
        $region60: #{tpu_custom_call.1} parent=51 // pred_fallthru
          _
        // Predicated region
        $region61: #{tpu_custom_call.1} parent=51 // pred_check
          %p321 = pneg %p152
        $region62: #{tpu_custom_call.1} parent=51 // pred_check_branch
          %323 = sbr.rel (%p321) target = $region64
        $region63: #{tpu_custom_call.1} parent=51 // pred_region
          %324 = dma.done [#allocation8], 384
        $region64: #{tpu_custom_call.1} parent=51 // pred_fallthru
          _
        %s325 = sand.u32 %s34, 1
        %s326 = scalar_lea.sflag [#allocation5], %s325
        %s327 = sand.u32 %s34, 1
        %s328 = smul.addr %s327, 128
        %s329 = scalar_lea.vmem [#allocation4], %s328
        %p330 = pneg %p47
        %p331 = pneg %p44
        %p332 = pneg %p68
        %p333 = pneg %p65
        %p334 = pneg %p89
        %p335 = pneg %p86
        %p336 = pneg %p110
        %p337 = pneg %p107
        %p338 = pneg %p131
        %p339 = pneg %p128
        %p340 = pneg %p152
        %p341 = pneg %p149
        %p342 = pneg %p173
        %p343 = pneg %p170
        %p344 = pneg %p194
        %p345 = pneg %p191
        %p346 = pneg %p220
        %p347 = pneg %p217
        %s348 = sand.u32 %s207, 1
        %s349 = scalar_lea.sflag [#allocation6], %s348
        %s350 = sand.u32 %s207, 1
        %s351 = smul.addr %s350, 40
        %s352 = scalar_lea.vmem [#allocation10], %s351
        %353 = vst [vmem:[#allocation2] sm:$0xff] 0.0
        %354 = vst [vmem:[#allocation2 + $0x8] sm:$0xff] 0.0
        %355 = vst [vmem:[#allocation2 + $0x10] sm:$0xff] 0.0
        %356 = vst [vmem:[#allocation2 + $0x18] sm:$0xff] 0.0
        %357 = vst [vmem:[#allocation2 + $0x20] sm:$0xff] 0.0
        %358 = vst [vmem:[#allocation2 + $0x28] sm:$0xff] 0.0
        %359 = vst [vmem:[#allocation2 + $0x30] sm:$0xff] 0.0
        %v360 = vld [vmem:[%s312] sm:$0x1]
        %v361 = vld [vmem:[%s312 + $0x20] sm:$0x1]
        %v362 = vld [vmem:[%s312 + $0x40] sm:$0x1]
        %v363 = vld [vmem:[%s312 + $0x60] sm:$0x1]
        %v368 = vrot.slane %v361, 7
        %vm369 = vcmask 1041409
        %v370 = vsel %vm369, %v368, %v360
        %v371 = vrot.slane %v362, 6
        %vm372 = vcmask 1042434
        %v373 = vsel %vm372, %v371, %v370
        %v374 = vrot.slane %v363, 5
        %vm375 = vcmask 1043459
        %v376 = vsel %vm375, %v374, %v373
        %377 = vrot.lane.b32.xlu0 %v376, 111
        %v378 = vpop.permute.xlu0 %377
        %vm380 = vcmask 970616
        %381 = vst.msk [vmem:[#allocation2] sm:$0xf] %vm380, %v378
        %v382 = vld [vmem:[%s312 + $0x1] sm:$0x1]
        %v383 = vld [vmem:[%s312 + $0x21] sm:$0x1]
        %v384 = vld [vmem:[%s312 + $0x41] sm:$0x1]
        %v385 = vld [vmem:[%s312 + $0x61] sm:$0x1]
        %v390 = vrot.slane %v383, 7
        %v391 = vsel %vm369, %v390, %v382
        %v392 = vrot.slane %v384, 6
        %v393 = vsel %vm372, %v392, %v391
        %v394 = vrot.slane %v385, 5
        %v395 = vsel %vm375, %v394, %v393
        %396 = vrot.lane.b32.xlu0 %v395, 121
        %v397 = vpop.permute.xlu0 %396
        %vm399 = vcmask 1044424
        %400 = vst.msk [vmem:[#allocation2] sm:$0xf] %vm399, %v397
        %vm401 = vcmask 3072
        %402 = vst.msk [vmem:[#allocation2 + $0x8] sm:$0xf] %vm401, %v397
        %v403 = vld [vmem:[%s312 + $0x2] sm:$0x1]
        %v404 = vld [vmem:[%s312 + $0x22] sm:$0x1]
        %v405 = vld [vmem:[%s312 + $0x42] sm:$0x1]
        %v406 = vld [vmem:[%s312 + $0x62] sm:$0x1]
        %v411 = vrot.slane %v404, 7
        %v412 = vsel %vm369, %v411, %v403
        %v413 = vrot.slane %v405, 6
        %v414 = vsel %vm372, %v413, %v412
        %v415 = vrot.slane %v406, 5
        %v416 = vsel %vm375, %v415, %v414
        %417 = vrot.lane.b32.xlu0 %v416, 3
        %v418 = vpop.permute.xlu0 %417
        %vm420 = vcmask 85016
        %421 = vst.msk [vmem:[#allocation2 + $0x8] sm:$0xf] %vm420, %v418
        %v422 = vld [vmem:[%s312 + $0x3] sm:$0x1]
        %v423 = vld [vmem:[%s312 + $0x23] sm:$0x1]
        %v424 = vld [vmem:[%s312 + $0x43] sm:$0x1]
        %v425 = vld [vmem:[%s312 + $0x63] sm:$0x1]
        %v430 = vrot.slane %v423, 7
        %v431 = vsel %vm369, %v430, %v422
        %v432 = vrot.slane %v424, 6
        %v433 = vsel %vm372, %v432, %v431
        %v434 = vrot.slane %v425, 5
        %v435 = vsel %vm375, %v434, %v433
        %436 = vrot.lane.b32.xlu0 %v435, 13
        %v437 = vpop.permute.xlu0 %436
        %vm439 = vcmask 167016
        %440 = vst.msk [vmem:[#allocation2 + $0x8] sm:$0xf] %vm439, %v437
        %v441 = vld [vmem:[%s312 + $0x4] sm:$0x1]
        %v442 = vld [vmem:[%s312 + $0x24] sm:$0x1]
        %v443 = vld [vmem:[%s312 + $0x44] sm:$0x1]
        %v444 = vld [vmem:[%s312 + $0x64] sm:$0x1]
        %v449 = vrot.slane %v442, 7
        %v450 = vsel %vm369, %v449, %v441
        %v451 = vrot.slane %v443, 6
        %v452 = vsel %vm372, %v451, %v450
        %v453 = vrot.slane %v444, 5
        %v454 = vsel %vm375, %v453, %v452
        %455 = vrot.lane.b32.xlu0 %v454, 23
        %v456 = vpop.permute.xlu0 %455
        %vm458 = vcmask 249016
        %459 = vst.msk [vmem:[#allocation2 + $0x8] sm:$0xf] %vm458, %v456
        %v460 = vld [vmem:[%s312 + $0x5] sm:$0x1]
        %v461 = vld [vmem:[%s312 + $0x25] sm:$0x1]
        %v462 = vld [vmem:[%s312 + $0x45] sm:$0x1]
        %v463 = vld [vmem:[%s312 + $0x65] sm:$0x1]
        %v468 = vrot.slane %v461, 7
        %v469 = vsel %vm369, %v468, %v460
        %v470 = vrot.slane %v462, 6
        %v471 = vsel %vm372, %v470, %v469
        %v472 = vrot.slane %v463, 5
        %v473 = vsel %vm375, %v472, %v471
        %474 = vrot.lane.b32.xlu0 %v473, 33
        %v475 = vpop.permute.xlu0 %474
        %vm477 = vcmask 331016
        %478 = vst.msk [vmem:[#allocation2 + $0x8] sm:$0xf] %vm477, %v475
        %v479 = vld [vmem:[%s312 + $0x6] sm:$0x1]
        %v480 = vld [vmem:[%s312 + $0x26] sm:$0x1]
        %v481 = vld [vmem:[%s312 + $0x46] sm:$0x1]
        %v482 = vld [vmem:[%s312 + $0x66] sm:$0x1]
        %v487 = vrot.slane %v480, 7
        %v488 = vsel %vm369, %v487, %v479
        %v489 = vrot.slane %v481, 6
        %v490 = vsel %vm372, %v489, %v488
        %v491 = vrot.slane %v482, 5
        %v492 = vsel %vm375, %v491, %v490
        %493 = vrot.lane.b32.xlu0 %v492, 43
        %v494 = vpop.permute.xlu0 %493
        %vm496 = vcmask 413016
        %497 = vst.msk [vmem:[#allocation2 + $0x8] sm:$0xf] %vm496, %v494
        %v498 = vld [vmem:[%s312 + $0x7] sm:$0x1]
        %v499 = vld [vmem:[%s312 + $0x27] sm:$0x1]
        %v500 = vld [vmem:[%s312 + $0x47] sm:$0x1]
        %v501 = vld [vmem:[%s312 + $0x67] sm:$0x1]
        %v506 = vrot.slane %v499, 7
        %v507 = vsel %vm369, %v506, %v498
        %v508 = vrot.slane %v500, 6
        %v509 = vsel %vm372, %v508, %v507
        %v510 = vrot.slane %v501, 5
        %v511 = vsel %vm375, %v510, %v509
        %512 = vrot.lane.b32.xlu0 %v511, 53
        %v513 = vpop.permute.xlu0 %512
        %vm515 = vcmask 495016
        %516 = vst.msk [vmem:[#allocation2 + $0x8] sm:$0xf] %vm515, %v513
        %s517 = scalar_lea.vmem %s312, 8 [#allocation4]
        %v518 = vld [vmem:[%s517] sm:$0x1]
        %v519 = vld [vmem:[%s517 + $0x20] sm:$0x1]
        %v520 = vld [vmem:[%s517 + $0x40] sm:$0x1]
        %v521 = vld [vmem:[%s517 + $0x60] sm:$0x1]
        %v526 = vrot.slane %v519, 7
        %v527 = vsel %vm369, %v526, %v518
        %v528 = vrot.slane %v520, 6
        %v529 = vsel %vm372, %v528, %v527
        %v530 = vrot.slane %v521, 5
        %v531 = vsel %vm375, %v530, %v529
        %532 = vrot.lane.b32.xlu0 %v531, 83
        %v533 = vpop.permute.xlu0 %532
        %vm535 = vcmask 741016
        %536 = vst.msk [vmem:[#allocation2 + $0x8] sm:$0xf] %vm535, %v533
        %v537 = vld [vmem:[%s517 + $0x1] sm:$0x1]
        %v538 = vld [vmem:[%s517 + $0x21] sm:$0x1]
        %v539 = vld [vmem:[%s517 + $0x41] sm:$0x1]
        %v540 = vld [vmem:[%s517 + $0x61] sm:$0x1]
        %v545 = vrot.slane %v538, 7
        %v546 = vsel %vm369, %v545, %v537
        %v547 = vrot.slane %v539, 6
        %v548 = vsel %vm372, %v547, %v546
        %v549 = vrot.slane %v540, 5
        %v550 = vsel %vm375, %v549, %v548
        %551 = vrot.lane.b32.xlu0 %v550, 93
        %v552 = vpop.permute.xlu0 %551
        %vm554 = vcmask 823016
        %555 = vst.msk [vmem:[#allocation2 + $0x8] sm:$0xf] %vm554, %v552
        %v556 = vld [vmem:[%s517 + $0x2] sm:$0x1]
        %v557 = vld [vmem:[%s517 + $0x22] sm:$0x1]
        %v558 = vld [vmem:[%s517 + $0x42] sm:$0x1]
        %v559 = vld [vmem:[%s517 + $0x62] sm:$0x1]
        %v564 = vrot.slane %v557, 7
        %v565 = vsel %vm369, %v564, %v556
        %v566 = vrot.slane %v558, 6
        %v567 = vsel %vm372, %v566, %v565
        %v568 = vrot.slane %v559, 5
        %v569 = vsel %vm375, %v568, %v567
        %570 = vrot.lane.b32.xlu0 %v569, 103
        %v571 = vpop.permute.xlu0 %570
        %vm573 = vcmask 905016
        %574 = vst.msk [vmem:[#allocation2 + $0x8] sm:$0xf] %vm573, %v571
        %v575 = vld [vmem:[%s517 + $0x3] sm:$0x1]
        %v576 = vld [vmem:[%s517 + $0x23] sm:$0x1]
        %v577 = vld [vmem:[%s517 + $0x43] sm:$0x1]
        %v578 = vld [vmem:[%s517 + $0x63] sm:$0x1]
        %v583 = vrot.slane %v576, 7
        %v584 = vsel %vm369, %v583, %v575
        %v585 = vrot.slane %v577, 6
        %v586 = vsel %vm372, %v585, %v584
        %v587 = vrot.slane %v578, 5
        %v588 = vsel %vm375, %v587, %v586
        %589 = vrot.lane.b32.xlu0 %v588, 113
        %v590 = vpop.permute.xlu0 %589
        %vm592 = vcmask 987016
        %593 = vst.msk [vmem:[#allocation2 + $0x8] sm:$0xf] %vm592, %v590
        %v594 = vld [vmem:[%s517 + $0x4] sm:$0x1]
        %v595 = vld [vmem:[%s517 + $0x24] sm:$0x1]
        %v596 = vld [vmem:[%s517 + $0x44] sm:$0x1]
        %v597 = vld [vmem:[%s517 + $0x64] sm:$0x1]
        %v602 = vrot.slane %v595, 7
        %v603 = vsel %vm369, %v602, %v594
        %v604 = vrot.slane %v596, 6
        %v605 = vsel %vm372, %v604, %v603
        %v606 = vrot.slane %v597, 5
        %v607 = vsel %vm375, %v606, %v605
        %608 = vrot.lane.b32.xlu0 %v607, 123
        %v609 = vpop.permute.xlu0 %608
        %vm611 = vcmask 1044440
        %612 = vst.msk [vmem:[#allocation2 + $0x8] sm:$0xf] %vm611, %v609
        %vm613 = vcmask 19456
        %614 = vst.msk [vmem:[#allocation2 + $0x10] sm:$0xf] %vm613, %v609
        %v615 = vld [vmem:[%s517 + $0x5] sm:$0x1]
        %v616 = vld [vmem:[%s517 + $0x25] sm:$0x1]
        %v617 = vld [vmem:[%s517 + $0x45] sm:$0x1]
        %v618 = vld [vmem:[%s517 + $0x65] sm:$0x1]
        %v623 = vrot.slane %v616, 7
        %v624 = vsel %vm369, %v623, %v615
        %v625 = vrot.slane %v617, 6
        %v626 = vsel %vm372, %v625, %v624
        %v627 = vrot.slane %v618, 5
        %v628 = vsel %vm375, %v627, %v626
        %629 = vrot.lane.b32.xlu0 %v628, 5
        %v630 = vpop.permute.xlu0 %629
        %vm632 = vcmask 101416
        %633 = vst.msk [vmem:[#allocation2 + $0x10] sm:$0xf] %vm632, %v630
        %v634 = vld [vmem:[%s517 + $0x6] sm:$0x1]
        %v635 = vld [vmem:[%s517 + $0x26] sm:$0x1]
        %v636 = vld [vmem:[%s517 + $0x46] sm:$0x1]
        %v637 = vld [vmem:[%s517 + $0x66] sm:$0x1]
        %v642 = vrot.slane %v635, 7
        %v643 = vsel %vm369, %v642, %v634
        %v644 = vrot.slane %v636, 6
        %v645 = vsel %vm372, %v644, %v643
        %v646 = vrot.slane %v637, 5
        %v647 = vsel %vm375, %v646, %v645
        %648 = vrot.lane.b32.xlu0 %v647, 15
        %v649 = vpop.permute.xlu0 %648
        %vm651 = vcmask 183416
        %652 = vst.msk [vmem:[#allocation2 + $0x10] sm:$0xf] %vm651, %v649
        %v653 = vld [vmem:[%s517 + $0x7] sm:$0x1]
        %v654 = vld [vmem:[%s517 + $0x27] sm:$0x1]
        %v655 = vld [vmem:[%s517 + $0x47] sm:$0x1]
        %v656 = vld [vmem:[%s517 + $0x67] sm:$0x1]
        %v661 = vrot.slane %v654, 7
        %v662 = vsel %vm369, %v661, %v653
        %v663 = vrot.slane %v655, 6
        %v664 = vsel %vm372, %v663, %v662
        %v665 = vrot.slane %v656, 5
        %v666 = vsel %vm375, %v665, %v664
        %667 = vrot.lane.b32.xlu0 %v666, 25
        %v668 = vpop.permute.xlu0 %667
        %vm670 = vcmask 265416
        %671 = vst.msk [vmem:[#allocation2 + $0x10] sm:$0xf] %vm670, %v668
        %s672 = scalar_lea.vmem %s312, 16 [#allocation4]
        %v673 = vld [vmem:[%s672] sm:$0x1]
        %v674 = vld [vmem:[%s672 + $0x20] sm:$0x1]
        %v675 = vld [vmem:[%s672 + $0x40] sm:$0x1]
        %v676 = vld [vmem:[%s672 + $0x60] sm:$0x1]
        %v681 = vrot.slane %v674, 7
        %v682 = vsel %vm369, %v681, %v673
        %v683 = vrot.slane %v675, 6
        %v684 = vsel %vm372, %v683, %v682
        %v685 = vrot.slane %v676, 5
        %v686 = vsel %vm375, %v685, %v684
        %687 = vrot.lane.b32.xlu0 %v686, 55
        %v688 = vpop.permute.xlu0 %687
        %vm690 = vcmask 511416
        %691 = vst.msk [vmem:[#allocation2 + $0x10] sm:$0xf] %vm690, %v688
        %v692 = vld [vmem:[%s672 + $0x1] sm:$0x1]
        %v693 = vld [vmem:[%s672 + $0x21] sm:$0x1]
        %v694 = vld [vmem:[%s672 + $0x41] sm:$0x1]
        %v695 = vld [vmem:[%s672 + $0x61] sm:$0x1]
        %v700 = vrot.slane %v693, 7
        %v701 = vsel %vm369, %v700, %v692
        %v702 = vrot.slane %v694, 6
        %v703 = vsel %vm372, %v702, %v701
        %v704 = vrot.slane %v695, 5
        %v705 = vsel %vm375, %v704, %v703
        %706 = vrot.lane.b32.xlu0 %v705, 65
        %v707 = vpop.permute.xlu0 %706
        %vm709 = vcmask 593416
        %710 = vst.msk [vmem:[#allocation2 + $0x10] sm:$0xf] %vm709, %v707
        %v711 = vld [vmem:[%s672 + $0x2] sm:$0x1]
        %v712 = vld [vmem:[%s672 + $0x22] sm:$0x1]
        %v713 = vld [vmem:[%s672 + $0x42] sm:$0x1]
        %v714 = vld [vmem:[%s672 + $0x62] sm:$0x1]
        %v719 = vrot.slane %v712, 7
        %v720 = vsel %vm369, %v719, %v711
        %v721 = vrot.slane %v713, 6
        %v722 = vsel %vm372, %v721, %v720
        %v723 = vrot.slane %v714, 5
        %v724 = vsel %vm375, %v723, %v722
        %725 = vrot.lane.b32.xlu0 %v724, 75
        %v726 = vpop.permute.xlu0 %725
        %vm728 = vcmask 675416
        %729 = vst.msk [vmem:[#allocation2 + $0x10] sm:$0xf] %vm728, %v726
        %v730 = vld [vmem:[%s672 + $0x3] sm:$0x1]
        %v731 = vld [vmem:[%s672 + $0x23] sm:$0x1]
        %v732 = vld [vmem:[%s672 + $0x43] sm:$0x1]
        %v733 = vld [vmem:[%s672 + $0x63] sm:$0x1]
        %v738 = vrot.slane %v731, 7
        %v739 = vsel %vm369, %v738, %v730
        %v740 = vrot.slane %v732, 6
        %v741 = vsel %vm372, %v740, %v739
        %v742 = vrot.slane %v733, 5
        %v743 = vsel %vm375, %v742, %v741
        %744 = vrot.lane.b32.xlu0 %v743, 85
        %v745 = vpop.permute.xlu0 %744
        %vm747 = vcmask 757416
        %748 = vst.msk [vmem:[#allocation2 + $0x10] sm:$0xf] %vm747, %v745
        %v749 = vld [vmem:[%s672 + $0x4] sm:$0x1]
        %v750 = vld [vmem:[%s672 + $0x24] sm:$0x1]
        %v751 = vld [vmem:[%s672 + $0x44] sm:$0x1]
        %v752 = vld [vmem:[%s672 + $0x64] sm:$0x1]
        %v757 = vrot.slane %v750, 7
        %v758 = vsel %vm369, %v757, %v749
        %v759 = vrot.slane %v751, 6
        %v760 = vsel %vm372, %v759, %v758
        %v761 = vrot.slane %v752, 5
        %v762 = vsel %vm375, %v761, %v760
        %763 = vrot.lane.b32.xlu0 %v762, 95
        %v764 = vpop.permute.xlu0 %763
        %vm766 = vcmask 839416
        %767 = vst.msk [vmem:[#allocation2 + $0x10] sm:$0xf] %vm766, %v764
        %v768 = vld [vmem:[%s672 + $0x5] sm:$0x1]
        %v769 = vld [vmem:[%s672 + $0x25] sm:$0x1]
        %v770 = vld [vmem:[%s672 + $0x45] sm:$0x1]
        %v771 = vld [vmem:[%s672 + $0x65] sm:$0x1]
        %v776 = vrot.slane %v769, 7
        %v777 = vsel %vm369, %v776, %v768
        %v778 = vrot.slane %v770, 6
        %v779 = vsel %vm372, %v778, %v777
        %v780 = vrot.slane %v771, 5
        %v781 = vsel %vm375, %v780, %v779
        %782 = vrot.lane.b32.xlu0 %v781, 105
        %v783 = vpop.permute.xlu0 %782
        %vm785 = vcmask 921416
        %786 = vst.msk [vmem:[#allocation2 + $0x10] sm:$0xf] %vm785, %v783
        %v787 = vld [vmem:[%s672 + $0x6] sm:$0x1]
        %v788 = vld [vmem:[%s672 + $0x26] sm:$0x1]
        %v789 = vld [vmem:[%s672 + $0x46] sm:$0x1]
        %v790 = vld [vmem:[%s672 + $0x66] sm:$0x1]
        %v795 = vrot.slane %v788, 7
        %v796 = vsel %vm369, %v795, %v787
        %v797 = vrot.slane %v789, 6
        %v798 = vsel %vm372, %v797, %v796
        %v799 = vrot.slane %v790, 5
        %v800 = vsel %vm375, %v799, %v798
        %801 = vrot.lane.b32.xlu0 %v800, 115
        %v802 = vpop.permute.xlu0 %801
        %vm804 = vcmask 1003416
        %805 = vst.msk [vmem:[#allocation2 + $0x10] sm:$0xf] %vm804, %v802
        %v806 = vld [vmem:[%s672 + $0x7] sm:$0x1]
        %v807 = vld [vmem:[%s672 + $0x27] sm:$0x1]
        %v808 = vld [vmem:[%s672 + $0x47] sm:$0x1]
        %v809 = vld [vmem:[%s672 + $0x67] sm:$0x1]
        %v814 = vrot.slane %v807, 7
        %v815 = vsel %vm369, %v814, %v806
        %v816 = vrot.slane %v808, 6
        %v817 = vsel %vm372, %v816, %v815
        %v818 = vrot.slane %v809, 5
        %v819 = vsel %vm375, %v818, %v817
        %820 = vrot.lane.b32.xlu0 %v819, 125
        %v821 = vpop.permute.xlu0 %820
        %vm823 = vcmask 1044456
        %824 = vst.msk [vmem:[#allocation2 + $0x10] sm:$0xf] %vm823, %v821
        %vm825 = vcmask 35840
        %826 = vst.msk [vmem:[#allocation2 + $0x18] sm:$0xf] %vm825, %v821
        %s827 = scalar_lea.vmem %s312, 24 [#allocation4]
        %v828 = vld [vmem:[%s827] sm:$0x1]
        %v829 = vld [vmem:[%s827 + $0x20] sm:$0x1]
        %v830 = vld [vmem:[%s827 + $0x40] sm:$0x1]
        %v831 = vld [vmem:[%s827 + $0x60] sm:$0x1]
        %v836 = vrot.slane %v829, 7
        %v837 = vsel %vm369, %v836, %v828
        %v838 = vrot.slane %v830, 6
        %v839 = vsel %vm372, %v838, %v837
        %v840 = vrot.slane %v831, 5
        %v841 = vsel %vm375, %v840, %v839
        %842 = vrot.lane.b32.xlu0 %v841, 27
        %v843 = vpop.permute.xlu0 %842
        %vm845 = vcmask 281816
        %846 = vst.msk [vmem:[#allocation2 + $0x18] sm:$0xf] %vm845, %v843
        %v847 = vld [vmem:[%s827 + $0x1] sm:$0x1]
        %v848 = vld [vmem:[%s827 + $0x21] sm:$0x1]
        %v849 = vld [vmem:[%s827 + $0x41] sm:$0x1]
        %v850 = vld [vmem:[%s827 + $0x61] sm:$0x1]
        %v855 = vrot.slane %v848, 7
        %v856 = vsel %vm369, %v855, %v847
        %v857 = vrot.slane %v849, 6
        %v858 = vsel %vm372, %v857, %v856
        %v859 = vrot.slane %v850, 5
        %v860 = vsel %vm375, %v859, %v858
        %861 = vrot.lane.b32.xlu0 %v860, 37
        %v862 = vpop.permute.xlu0 %861
        %vm864 = vcmask 363816
        %865 = vst.msk [vmem:[#allocation2 + $0x18] sm:$0xf] %vm864, %v862
        %v866 = vld [vmem:[%s827 + $0x2] sm:$0x1]
        %v867 = vld [vmem:[%s827 + $0x22] sm:$0x1]
        %v868 = vld [vmem:[%s827 + $0x42] sm:$0x1]
        %v869 = vld [vmem:[%s827 + $0x62] sm:$0x1]
        %v874 = vrot.slane %v867, 7
        %v875 = vsel %vm369, %v874, %v866
        %v876 = vrot.slane %v868, 6
        %v877 = vsel %vm372, %v876, %v875
        %v878 = vrot.slane %v869, 5
        %v879 = vsel %vm375, %v878, %v877
        %880 = vrot.lane.b32.xlu0 %v879, 47
        %v881 = vpop.permute.xlu0 %880
        %vm883 = vcmask 445816
        %884 = vst.msk [vmem:[#allocation2 + $0x18] sm:$0xf] %vm883, %v881
        %v885 = vld [vmem:[%s827 + $0x3] sm:$0x1]
        %v886 = vld [vmem:[%s827 + $0x23] sm:$0x1]
        %v887 = vld [vmem:[%s827 + $0x43] sm:$0x1]
        %v888 = vld [vmem:[%s827 + $0x63] sm:$0x1]
        %v893 = vrot.slane %v886, 7
        %v894 = vsel %vm369, %v893, %v885
        %v895 = vrot.slane %v887, 6
        %v896 = vsel %vm372, %v895, %v894
        %v897 = vrot.slane %v888, 5
        %v898 = vsel %vm375, %v897, %v896
        %899 = vrot.lane.b32.xlu0 %v898, 57
        %v900 = vpop.permute.xlu0 %899
        %vm902 = vcmask 527816
        %903 = vst.msk [vmem:[#allocation2 + $0x18] sm:$0xf] %vm902, %v900
        %v904 = vld [vmem:[%s827 + $0x4] sm:$0x1]
        %v905 = vld [vmem:[%s827 + $0x24] sm:$0x1]
        %v906 = vld [vmem:[%s827 + $0x44] sm:$0x1]
        %v907 = vld [vmem:[%s827 + $0x64] sm:$0x1]
        %v912 = vrot.slane %v905, 7
        %v913 = vsel %vm369, %v912, %v904
        %v914 = vrot.slane %v906, 6
        %v915 = vsel %vm372, %v914, %v913
        %v916 = vrot.slane %v907, 5
        %v917 = vsel %vm375, %v916, %v915
        %918 = vrot.lane.b32.xlu0 %v917, 67
        %v919 = vpop.permute.xlu0 %918
        %vm921 = vcmask 609816
        %922 = vst.msk [vmem:[#allocation2 + $0x18] sm:$0xf] %vm921, %v919
        %v923 = vld [vmem:[%s827 + $0x5] sm:$0x1]
        %v924 = vld [vmem:[%s827 + $0x25] sm:$0x1]
        %v925 = vld [vmem:[%s827 + $0x45] sm:$0x1]
        %v926 = vld [vmem:[%s827 + $0x65] sm:$0x1]
        %v931 = vrot.slane %v924, 7
        %v932 = vsel %vm369, %v931, %v923
        %v933 = vrot.slane %v925, 6
        %v934 = vsel %vm372, %v933, %v932
        %v935 = vrot.slane %v926, 5
        %v936 = vsel %vm375, %v935, %v934
        %937 = vrot.lane.b32.xlu0 %v936, 77
        %v938 = vpop.permute.xlu0 %937
        %vm940 = vcmask 691816
        %941 = vst.msk [vmem:[#allocation2 + $0x18] sm:$0xf] %vm940, %v938
        %v942 = vld [vmem:[%s827 + $0x6] sm:$0x1]
        %v943 = vld [vmem:[%s827 + $0x26] sm:$0x1]
        %v944 = vld [vmem:[%s827 + $0x46] sm:$0x1]
        %v945 = vld [vmem:[%s827 + $0x66] sm:$0x1]
        %v950 = vrot.slane %v943, 7
        %v951 = vsel %vm369, %v950, %v942
        %v952 = vrot.slane %v944, 6
        %v953 = vsel %vm372, %v952, %v951
        %v954 = vrot.slane %v945, 5
        %v955 = vsel %vm375, %v954, %v953
        %956 = vrot.lane.b32.xlu0 %v955, 87
        %v957 = vpop.permute.xlu0 %956
        %vm959 = vcmask 773816
        %960 = vst.msk [vmem:[#allocation2 + $0x18] sm:$0xf] %vm959, %v957
        %v961 = vld [vmem:[%s827 + $0x7] sm:$0x1]
        %v962 = vld [vmem:[%s827 + $0x27] sm:$0x1]
        %v963 = vld [vmem:[%s827 + $0x47] sm:$0x1]
        %v964 = vld [vmem:[%s827 + $0x67] sm:$0x1]
        %v969 = vrot.slane %v962, 7
        %v970 = vsel %vm369, %v969, %v961
        %v971 = vrot.slane %v963, 6
        %v972 = vsel %vm372, %v971, %v970
        %v973 = vrot.slane %v964, 5
        %v974 = vsel %vm375, %v973, %v972
        %975 = vrot.lane.b32.xlu0 %v974, 97
        %v976 = vpop.permute.xlu0 %975
        %vm978 = vcmask 855816
        %979 = vst.msk [vmem:[#allocation2 + $0x18] sm:$0xf] %vm978, %v976
        %v980 = vld [vmem:[%s7] sm:$0x1f]
        %v981 = vld [vmem:[#allocation2] sm:$0xf]
        %v982 = vld [vmem:[#allocation2 + $0x8] sm:$0xf]
        %v983 = vld [vmem:[#allocation2 + $0x10] sm:$0xf]
        %v984 = vld [vmem:[#allocation2 + $0x18] sm:$0xf]
        %v985 = vld [vmem:[#allocation2 + $0x20] sm:$0xf]
        %986 = vst [vmem:[#allocation3] sm:$0xf] %v981
        %987 = vst [vmem:[#allocation3 + $0x8] sm:$0xf] %v982
        %988 = vst [vmem:[#allocation3 + $0x10] sm:$0xf] %v983
        %989 = vst [vmem:[#allocation3 + $0x18] sm:$0xf] %v984
        %vm990 = vcmask 715776
        %991 = vst.msk [vmem:[#allocation3 + $0x20] sm:$0xf] %vm990, %v985
        %v992 = vld [vmem:[#allocation2] sm:$0xf]
        %v993 = vld [vmem:[#allocation2 + $0x8] sm:$0xf]
        %v994 = vld [vmem:[#allocation2 + $0x10] sm:$0xf]
        %v995 = vld [vmem:[#allocation2 + $0x18] sm:$0xf]
        %v996 = vld [vmem:[#allocation2 + $0x20] sm:$0xf]
        %v1002 = vrot.slane %v992, 4
        %v1003 = vrot.slane %v993, 4
        %v1004 = vrot.slane %v994, 4
        %v1005 = vrot.slane %v995, 4
        %v1006 = vrot.slane %v996, 4
        %1007 = vrot.lane.b32.xlu0 %v1002, 127
        %v1008 = vpop.permute.xlu0 %1007
        %1009 = vrot.lane.b32.xlu0 %v1003, 127
        %v1010 = vpop.permute.xlu0 %1009
        %1011 = vrot.lane.b32.xlu0 %v1004, 127
        %v1012 = vpop.permute.xlu0 %1011
        %1013 = vrot.lane.b32.xlu0 %v1005, 127
        %v1014 = vpop.permute.xlu0 %1013
        %1015 = vrot.lane.b32.xlu0 %v1006, 127
        %v1016 = vpop.permute.xlu0 %1015
        %vm1017 = vcmask 1039360
        %v1018 = vsel %vm1017, %v1008, %v1010
        %v1019 = vsel %vm1017, %v1010, %v1012
        %v1020 = vsel %vm1017, %v1012, %v1014
        %v1021 = vsel %vm1017, %v1014, %v1016
        %1027 = vst [vmem:[#allocation3] sm:$0xf0] %v1018
        %1028 = vst [vmem:[#allocation3 + $0x8] sm:$0xf0] %v1019
        %1029 = vst [vmem:[#allocation3 + $0x10] sm:$0xf0] %v1020
        %1030 = vst [vmem:[#allocation3 + $0x18] sm:$0xf0] %v1021
        %vm1031 = vcmask 719876
        %1032 = vst.msk [vmem:[#allocation3 + $0x20] sm:$0xf0] %vm1031, %v1016
        %v1033 = vld [vmem:[#allocation2] sm:$0xf]
        %v1034 = vld [vmem:[#allocation2 + $0x8] sm:$0xf]
        %v1035 = vld [vmem:[#allocation2 + $0x10] sm:$0xf]
        %v1036 = vld [vmem:[#allocation2 + $0x18] sm:$0xf]
        %v1037 = vld [vmem:[#allocation2 + $0x20] sm:$0xf]
        %1043 = vrot.lane.b32.xlu0 %v1033, 126
        %v1044 = vpop.permute.xlu0 %1043
        %1045 = vrot.lane.b32.xlu0 %v1034, 126
        %v1046 = vpop.permute.xlu0 %1045
        %1047 = vrot.lane.b32.xlu0 %v1035, 126
        %v1048 = vpop.permute.xlu0 %1047
        %1049 = vrot.lane.b32.xlu0 %v1036, 126
        %v1050 = vpop.permute.xlu0 %1049
        %1051 = vrot.lane.b32.xlu0 %v1037, 126
        %v1052 = vpop.permute.xlu0 %1051
        %vm1053 = vcmask 1031168
        %v1054 = vsel %vm1053, %v1044, %v1046
        %v1055 = vsel %vm1053, %v1046, %v1048
        %v1056 = vsel %vm1053, %v1048, %v1050
        %v1057 = vsel %vm1053, %v1050, %v1052
        %1063 = vst [vmem:[#allocation3 + $0x28] sm:$0xf] %v1054
        %1064 = vst [vmem:[#allocation3 + $0x30] sm:$0xf] %v1055
        %1065 = vst [vmem:[#allocation3 + $0x38] sm:$0xf] %v1056
        %1066 = vst [vmem:[#allocation3 + $0x40] sm:$0xf] %v1057
        %1067 = vst.msk [vmem:[#allocation3 + $0x48] sm:$0xf] %vm990, %v1052
        %v1068 = vld [vmem:[#allocation2] sm:$0xf]
        %v1069 = vld [vmem:[#allocation2 + $0x8] sm:$0xf]
        %v1070 = vld [vmem:[#allocation2 + $0x10] sm:$0xf]
        %v1071 = vld [vmem:[#allocation2 + $0x18] sm:$0xf]
        %v1072 = vld [vmem:[#allocation2 + $0x20] sm:$0xf]
        %v1078 = vrot.slane %v1068, 4
        %v1079 = vrot.slane %v1069, 4
        %v1080 = vrot.slane %v1070, 4
        %v1081 = vrot.slane %v1071, 4
        %v1082 = vrot.slane %v1072, 4
        %1083 = vrot.lane.b32.xlu0 %v1078, 118
        %v1084 = vpop.permute.xlu0 %1083
        %1085 = vrot.lane.b32.xlu0 %v1079, 118
        %v1086 = vpop.permute.xlu0 %1085
        %1087 = vrot.lane.b32.xlu0 %v1080, 118
        %v1088 = vpop.permute.xlu0 %1087
        %1089 = vrot.lane.b32.xlu0 %v1081, 118
        %v1090 = vpop.permute.xlu0 %1089
        %1091 = vrot.lane.b32.xlu0 %v1082, 118
        %v1092 = vpop.permute.xlu0 %1091
        %vm1093 = vcmask 965632
        %v1094 = vsel %vm1093, %v1084, %v1086
        %v1095 = vsel %vm1093, %v1086, %v1088
        %v1096 = vsel %vm1093, %v1088, %v1090
        %v1097 = vsel %vm1093, %v1090, %v1092
        %1103 = vst [vmem:[#allocation3 + $0x28] sm:$0xf0] %v1094
        %1104 = vst [vmem:[#allocation3 + $0x30] sm:$0xf0] %v1095
        %1105 = vst [vmem:[#allocation3 + $0x38] sm:$0xf0] %v1096
        %1106 = vst [vmem:[#allocation3 + $0x40] sm:$0xf0] %v1097
        %1107 = vst.msk [vmem:[#allocation3 + $0x48] sm:$0xf0] %vm1031, %v1092
        %v1108 = vld [vmem:[#allocation2] sm:$0xf]
        %v1109 = vld [vmem:[#allocation2 + $0x8] sm:$0xf]
        %v1110 = vld [vmem:[#allocation2 + $0x10] sm:$0xf]
        %v1111 = vld [vmem:[#allocation2 + $0x18] sm:$0xf]
        %v1112 = vld [vmem:[#allocation2 + $0x20] sm:$0xf]
        %1118 = vrot.lane.b32.xlu0 %v1108, 117
        %v1119 = vpop.permute.xlu0 %1118
        %1120 = vrot.lane.b32.xlu0 %v1109, 117
        %v1121 = vpop.permute.xlu0 %1120
        %1122 = vrot.lane.b32.xlu0 %v1110, 117
        %v1123 = vpop.permute.xlu0 %1122
        %1124 = vrot.lane.b32.xlu0 %v1111, 117
        %v1125 = vpop.permute.xlu0 %1124
        %1126 = vrot.lane.b32.xlu0 %v1112, 117
        %v1127 = vpop.permute.xlu0 %1126
        %vm1128 = vcmask 957440
        %v1129 = vsel %vm1128, %v1119, %v1121
        %v1130 = vsel %vm1128, %v1121, %v1123
        %v1131 = vsel %vm1128, %v1123, %v1125
        %v1132 = vsel %vm1128, %v1125, %v1127
        %1138 = vst [vmem:[#allocation3 + $0x50] sm:$0xf] %v1129
        %1139 = vst [vmem:[#allocation3 + $0x58] sm:$0xf] %v1130
        %1140 = vst [vmem:[#allocation3 + $0x60] sm:$0xf] %v1131
        %1141 = vst [vmem:[#allocation3 + $0x68] sm:$0xf] %v1132
        %1142 = vst.msk [vmem:[#allocation3 + $0x70] sm:$0xf] %vm990, %v1127
        %v1143 = vld [vmem:[#allocation2] sm:$0xf]
        %v1144 = vld [vmem:[#allocation2 + $0x8] sm:$0xf]
        %v1145 = vld [vmem:[#allocation2 + $0x10] sm:$0xf]
        %v1146 = vld [vmem:[#allocation2 + $0x18] sm:$0xf]
        %v1147 = vld [vmem:[#allocation2 + $0x20] sm:$0xf]
        %v1153 = vrot.slane %v1143, 4
        %v1154 = vrot.slane %v1144, 4
        %v1155 = vrot.slane %v1145, 4
        %v1156 = vrot.slane %v1146, 4
        %v1157 = vrot.slane %v1147, 4
        %1158 = vrot.lane.b32.xlu0 %v1153, 116
        %v1159 = vpop.permute.xlu0 %1158
        %1160 = vrot.lane.b32.xlu0 %v1154, 116
        %v1161 = vpop.permute.xlu0 %1160
        %1162 = vrot.lane.b32.xlu0 %v1155, 116
        %v1163 = vpop.permute.xlu0 %1162
        %1164 = vrot.lane.b32.xlu0 %v1156, 116
        %v1165 = vpop.permute.xlu0 %1164
        %1166 = vrot.lane.b32.xlu0 %v1157, 116
        %v1167 = vpop.permute.xlu0 %1166
        %vm1168 = vcmask 949248
        %v1169 = vsel %vm1168, %v1159, %v1161
        %v1170 = vsel %vm1168, %v1161, %v1163
        %v1171 = vsel %vm1168, %v1163, %v1165
        %v1172 = vsel %vm1168, %v1165, %v1167
        %1178 = vst [vmem:[#allocation3 + $0x50] sm:$0xf0] %v1169
        %1179 = vst [vmem:[#allocation3 + $0x58] sm:$0xf0] %v1170
        %1180 = vst [vmem:[#allocation3 + $0x60] sm:$0xf0] %v1171
        %1181 = vst [vmem:[#allocation3 + $0x68] sm:$0xf0] %v1172
        %1182 = vst.msk [vmem:[#allocation3 + $0x70] sm:$0xf0] %vm1031, %v1167
        %v1183 = vld [vmem:[#allocation2] sm:$0xf]
        %v1184 = vld [vmem:[#allocation2 + $0x8] sm:$0xf]
        %v1185 = vld [vmem:[#allocation2 + $0x10] sm:$0xf]
        %v1186 = vld [vmem:[#allocation2 + $0x18] sm:$0xf]
        %v1187 = vld [vmem:[#allocation2 + $0x20] sm:$0xf]
        %1193 = vrot.lane.b32.xlu0 %v1183, 108
        %v1194 = vpop.permute.xlu0 %1193
        %1195 = vrot.lane.b32.xlu0 %v1184, 108
        %v1196 = vpop.permute.xlu0 %1195
        %1197 = vrot.lane.b32.xlu0 %v1185, 108
        %v1198 = vpop.permute.xlu0 %1197
        %1199 = vrot.lane.b32.xlu0 %v1186, 108
        %v1200 = vpop.permute.xlu0 %1199
        %1201 = vrot.lane.b32.xlu0 %v1187, 108
        %v1202 = vpop.permute.xlu0 %1201
        %vm1203 = vcmask 883712
        %v1204 = vsel %vm1203, %v1194, %v1196
        %v1205 = vsel %vm1203, %v1196, %v1198
        %v1206 = vsel %vm1203, %v1198, %v1200
        %v1207 = vsel %vm1203, %v1200, %v1202
        %1213 = vst [vmem:[#allocation3 + $0x78] sm:$0xf] %v1204
        %1214 = vst [vmem:[#allocation3 + $0x80] sm:$0xf] %v1205
        %1215 = vst [vmem:[#allocation3 + $0x88] sm:$0xf] %v1206
        %1216 = vst [vmem:[#allocation3 + $0x90] sm:$0xf] %v1207
        %1217 = vst.msk [vmem:[#allocation3 + $0x98] sm:$0xf] %vm990, %v1202
        %v1218 = vld [vmem:[#allocation2] sm:$0xf]
        %v1219 = vld [vmem:[#allocation2 + $0x8] sm:$0xf]
        %v1220 = vld [vmem:[#allocation2 + $0x10] sm:$0xf]
        %v1221 = vld [vmem:[#allocation2 + $0x18] sm:$0xf]
        %v1222 = vld [vmem:[#allocation2 + $0x20] sm:$0xf]
        %v1228 = vrot.slane %v1218, 4
        %v1229 = vrot.slane %v1219, 4
        %v1230 = vrot.slane %v1220, 4
        %v1231 = vrot.slane %v1221, 4
        %v1232 = vrot.slane %v1222, 4
        %1233 = vrot.lane.b32.xlu0 %v1228, 107
        %v1234 = vpop.permute.xlu0 %1233
        %1235 = vrot.lane.b32.xlu0 %v1229, 107
        %v1236 = vpop.permute.xlu0 %1235
        %1237 = vrot.lane.b32.xlu0 %v1230, 107
        %v1238 = vpop.permute.xlu0 %1237
        %1239 = vrot.lane.b32.xlu0 %v1231, 107
        %v1240 = vpop.permute.xlu0 %1239
        %1241 = vrot.lane.b32.xlu0 %v1232, 107
        %v1242 = vpop.permute.xlu0 %1241
        %vm1243 = vcmask 875520
        %v1244 = vsel %vm1243, %v1234, %v1236
        %v1245 = vsel %vm1243, %v1236, %v1238
        %v1246 = vsel %vm1243, %v1238, %v1240
        %v1247 = vsel %vm1243, %v1240, %v1242
        %1253 = vst [vmem:[#allocation3 + $0x78] sm:$0xf0] %v1244
        %1254 = vst [vmem:[#allocation3 + $0x80] sm:$0xf0] %v1245
        %1255 = vst [vmem:[#allocation3 + $0x88] sm:$0xf0] %v1246
        %1256 = vst [vmem:[#allocation3 + $0x90] sm:$0xf0] %v1247
        %1257 = vst.msk [vmem:[#allocation3 + $0x98] sm:$0xf0] %vm1031, %v1242
        %v1258 = vld [vmem:[#allocation2] sm:$0xf]
        %v1259 = vld [vmem:[#allocation2 + $0x8] sm:$0xf]
        %v1260 = vld [vmem:[#allocation2 + $0x10] sm:$0xf]
        %v1261 = vld [vmem:[#allocation2 + $0x18] sm:$0xf]
        %v1262 = vld [vmem:[#allocation2 + $0x20] sm:$0xf]
        %1268 = vrot.lane.b32.xlu0 %v1258, 106
        %v1269 = vpop.permute.xlu0 %1268
        %1270 = vrot.lane.b32.xlu0 %v1259, 106
        %v1271 = vpop.permute.xlu0 %1270
        %1272 = vrot.lane.b32.xlu0 %v1260, 106
        %v1273 = vpop.permute.xlu0 %1272
        %1274 = vrot.lane.b32.xlu0 %v1261, 106
        %v1275 = vpop.permute.xlu0 %1274
        %1276 = vrot.lane.b32.xlu0 %v1262, 106
        %v1277 = vpop.permute.xlu0 %1276
        %vm1278 = vcmask 867328
        %v1279 = vsel %vm1278, %v1269, %v1271
        %v1280 = vsel %vm1278, %v1271, %v1273
        %v1281 = vsel %vm1278, %v1273, %v1275
        %v1282 = vsel %vm1278, %v1275, %v1277
        %1288 = vst [vmem:[#allocation3 + $0xa0] sm:$0xf] %v1279
        %1289 = vst [vmem:[#allocation3 + $0xa8] sm:$0xf] %v1280
        %1290 = vst [vmem:[#allocation3 + $0xb0] sm:$0xf] %v1281
        %1291 = vst [vmem:[#allocation3 + $0xb8] sm:$0xf] %v1282
        %1292 = vst.msk [vmem:[#allocation3 + $0xc0] sm:$0xf] %vm990, %v1277
        %v1293 = vld [vmem:[#allocation7] sm:$0xf]
        %v1294 = vld [vmem:[#allocation3] sm:$0xff]
        %v1295 = vld [vmem:[#allocation3 + $0x8] sm:$0xff]
        %v1296 = vld [vmem:[#allocation3 + $0x10] sm:$0xff]
        %v1297 = vld [vmem:[#allocation3 + $0x18] sm:$0xff]
        %v1298 = vld [vmem:[#allocation3 + $0x20] sm:$0xff]
        %v1299 = vld [vmem:[#allocation3 + $0x28] sm:$0xff]
        %v1300 = vld [vmem:[#allocation3 + $0x30] sm:$0xff]
        %v1301 = vld [vmem:[#allocation3 + $0x38] sm:$0xff]
        %v1302 = vld [vmem:[#allocation3 + $0x40] sm:$0xff]
        %v1303 = vld [vmem:[#allocation3 + $0x48] sm:$0xff]
        %v1304 = vld [vmem:[#allocation3 + $0x50] sm:$0xff]
        %v1305 = vld [vmem:[#allocation3 + $0x58] sm:$0xff]
        %v1306 = vld [vmem:[#allocation3 + $0x60] sm:$0xff]
        %v1307 = vld [vmem:[#allocation3 + $0x68] sm:$0xff]
        %v1308 = vld [vmem:[#allocation3 + $0x70] sm:$0xff]
        %v1309 = vld [vmem:[#allocation3 + $0x78] sm:$0xff]
        %v1310 = vld [vmem:[#allocation3 + $0x80] sm:$0xff]
        %v1311 = vld [vmem:[#allocation3 + $0x88] sm:$0xff]
        %v1312 = vld [vmem:[#allocation3 + $0x90] sm:$0xff]
        %v1313 = vld [vmem:[#allocation3 + $0x98] sm:$0xff]
        %v1314 = vld [vmem:[#allocation3 + $0xa0] sm:$0xf]
        %v1315 = vld [vmem:[#allocation3 + $0xa8] sm:$0xf]
        %v1316 = vld [vmem:[#allocation3 + $0xb0] sm:$0xf]
        %v1317 = vld [vmem:[#allocation3 + $0xb8] sm:$0xf]
        %v1318 = vld [vmem:[#allocation3 + $0xc0] sm:$0xf]
        %v1319 = vld [vmem:[#allocation2] sm:$0xf]
        %v1320 = vld [vmem:[#allocation2 + $0x8] sm:$0xf]
        %v1321 = vld [vmem:[#allocation2 + $0x10] sm:$0xf]
        %v1322 = vld [vmem:[#allocation2 + $0x18] sm:$0xf]
        %v1323 = vld [vmem:[#allocation2 + $0x20] sm:$0xf]
        %v1324 = vld [vmem:[#allocation2 + $0x28] sm:$0xf]
        %1331 = vrot.lane.b32.xlu0 %v1319, 28
        %v1332 = vpop.permute.xlu0 %1331
        %1333 = vrot.lane.b32.xlu0 %v1320, 28
        %v1334 = vpop.permute.xlu0 %1333
        %1335 = vrot.lane.b32.xlu0 %v1321, 28
        %v1336 = vpop.permute.xlu0 %1335
        %1337 = vrot.lane.b32.xlu0 %v1322, 28
        %v1338 = vpop.permute.xlu0 %1337
        %1339 = vrot.lane.b32.xlu0 %v1323, 28
        %v1340 = vpop.permute.xlu0 %1339
        %1341 = vrot.lane.b32.xlu0 %v1324, 28
        %v1342 = vpop.permute.xlu0 %1341
        %vm1343 = vcmask 228352
        %v1344 = vsel %vm1343, %v1332, %v1334
        %v1345 = vsel %vm1343, %v1334, %v1336
        %v1346 = vsel %vm1343, %v1336, %v1338
        %v1347 = vsel %vm1343, %v1338, %v1340
        %v1348 = vsel %vm1343, %v1340, %v1342
        %1354 = vst [vmem:[#allocation3] sm:$0xf] %v1344
        %1355 = vst [vmem:[#allocation3 + $0x8] sm:$0xf] %v1345
        %1356 = vst [vmem:[#allocation3 + $0x10] sm:$0xf] %v1346
        %1357 = vst [vmem:[#allocation3 + $0x18] sm:$0xf] %v1347
        %1358 = vst.msk [vmem:[#allocation3 + $0x20] sm:$0xf] %vm990, %v1348
        %v1359 = vld [vmem:[#allocation2] sm:$0xf]
        %v1360 = vld [vmem:[#allocation2 + $0x8] sm:$0xf]
        %v1361 = vld [vmem:[#allocation2 + $0x10] sm:$0xf]
        %v1362 = vld [vmem:[#allocation2 + $0x18] sm:$0xf]
        %v1363 = vld [vmem:[#allocation2 + $0x20] sm:$0xf]
        %v1364 = vld [vmem:[#allocation2 + $0x28] sm:$0xf]
        %v1371 = vrot.slane %v1359, 4
        %v1372 = vrot.slane %v1360, 4
        %v1373 = vrot.slane %v1361, 4
        %v1374 = vrot.slane %v1362, 4
        %v1375 = vrot.slane %v1363, 4
        %v1376 = vrot.slane %v1364, 4
        %1377 = vrot.lane.b32.xlu0 %v1371, 27
        %v1378 = vpop.permute.xlu0 %1377
        %1379 = vrot.lane.b32.xlu0 %v1372, 27
        %v1380 = vpop.permute.xlu0 %1379
        %1381 = vrot.lane.b32.xlu0 %v1373, 27
        %v1382 = vpop.permute.xlu0 %1381
        %1383 = vrot.lane.b32.xlu0 %v1374, 27
        %v1384 = vpop.permute.xlu0 %1383
        %1385 = vrot.lane.b32.xlu0 %v1375, 27
        %v1386 = vpop.permute.xlu0 %1385
        %1387 = vrot.lane.b32.xlu0 %v1376, 27
        %v1388 = vpop.permute.xlu0 %1387
        %vm1389 = vcmask 220160
        %v1390 = vsel %vm1389, %v1378, %v1380
        %v1391 = vsel %vm1389, %v1380, %v1382
        %v1392 = vsel %vm1389, %v1382, %v1384
        %v1393 = vsel %vm1389, %v1384, %v1386
        %v1394 = vsel %vm1389, %v1386, %v1388
        %1400 = vst [vmem:[#allocation3] sm:$0xf0] %v1390
        %1401 = vst [vmem:[#allocation3 + $0x8] sm:$0xf0] %v1391
        %1402 = vst [vmem:[#allocation3 + $0x10] sm:$0xf0] %v1392
        %1403 = vst [vmem:[#allocation3 + $0x18] sm:$0xf0] %v1393
        %1404 = vst.msk [vmem:[#allocation3 + $0x20] sm:$0xf0] %vm1031, %v1394
        %v1405 = vld [vmem:[#allocation2] sm:$0xf]
        %v1406 = vld [vmem:[#allocation2 + $0x8] sm:$0xf]
        %v1407 = vld [vmem:[#allocation2 + $0x10] sm:$0xf]
        %v1408 = vld [vmem:[#allocation2 + $0x18] sm:$0xf]
        %v1409 = vld [vmem:[#allocation2 + $0x20] sm:$0xf]
        %v1410 = vld [vmem:[#allocation2 + $0x28] sm:$0xf]
        %1417 = vrot.lane.b32.xlu0 %v1405, 26
        %v1418 = vpop.permute.xlu0 %1417
        %1419 = vrot.lane.b32.xlu0 %v1406, 26
        %v1420 = vpop.permute.xlu0 %1419
        %1421 = vrot.lane.b32.xlu0 %v1407, 26
        %v1422 = vpop.permute.xlu0 %1421
        %1423 = vrot.lane.b32.xlu0 %v1408, 26
        %v1424 = vpop.permute.xlu0 %1423
        %1425 = vrot.lane.b32.xlu0 %v1409, 26
        %v1426 = vpop.permute.xlu0 %1425
        %1427 = vrot.lane.b32.xlu0 %v1410, 26
        %v1428 = vpop.permute.xlu0 %1427
        %vm1429 = vcmask 211968
        %v1430 = vsel %vm1429, %v1418, %v1420
        %v1431 = vsel %vm1429, %v1420, %v1422
        %v1432 = vsel %vm1429, %v1422, %v1424
        %v1433 = vsel %vm1429, %v1424, %v1426
        %v1434 = vsel %vm1429, %v1426, %v1428
        %1440 = vst [vmem:[#allocation3 + $0x28] sm:$0xf] %v1430
        %1441 = vst [vmem:[#allocation3 + $0x30] sm:$0xf] %v1431
        %1442 = vst [vmem:[#allocation3 + $0x38] sm:$0xf] %v1432
        %1443 = vst [vmem:[#allocation3 + $0x40] sm:$0xf] %v1433
        %1444 = vst.msk [vmem:[#allocation3 + $0x48] sm:$0xf] %vm990, %v1434
        %v1445 = vld [vmem:[#allocation2] sm:$0xf]
        %v1446 = vld [vmem:[#allocation2 + $0x8] sm:$0xf]
        %v1447 = vld [vmem:[#allocation2 + $0x10] sm:$0xf]
        %v1448 = vld [vmem:[#allocation2 + $0x18] sm:$0xf]
        %v1449 = vld [vmem:[#allocation2 + $0x20] sm:$0xf]
        %v1450 = vld [vmem:[#allocation2 + $0x28] sm:$0xf]
        %v1457 = vrot.slane %v1445, 4
        %v1458 = vrot.slane %v1446, 4
        %v1459 = vrot.slane %v1447, 4
        %v1460 = vrot.slane %v1448, 4
        %v1461 = vrot.slane %v1449, 4
        %v1462 = vrot.slane %v1450, 4
        %1463 = vrot.lane.b32.xlu0 %v1457, 18
        %v1464 = vpop.permute.xlu0 %1463
        %1465 = vrot.lane.b32.xlu0 %v1458, 18
        %v1466 = vpop.permute.xlu0 %1465
        %1467 = vrot.lane.b32.xlu0 %v1459, 18
        %v1468 = vpop.permute.xlu0 %1467
        %1469 = vrot.lane.b32.xlu0 %v1460, 18
        %v1470 = vpop.permute.xlu0 %1469
        %1471 = vrot.lane.b32.xlu0 %v1461, 18
        %v1472 = vpop.permute.xlu0 %1471
        %1473 = vrot.lane.b32.xlu0 %v1462, 18
        %v1474 = vpop.permute.xlu0 %1473
        %vm1475 = vcmask 146432
        %v1476 = vsel %vm1475, %v1464, %v1466
        %v1477 = vsel %vm1475, %v1466, %v1468
        %v1478 = vsel %vm1475, %v1468, %v1470
        %v1479 = vsel %vm1475, %v1470, %v1472
        %v1480 = vsel %vm1475, %v1472, %v1474
        %1486 = vst [vmem:[#allocation3 + $0x28] sm:$0xf0] %v1476
        %1487 = vst [vmem:[#allocation3 + $0x30] sm:$0xf0] %v1477
        %1488 = vst [vmem:[#allocation3 + $0x38] sm:$0xf0] %v1478
        %1489 = vst [vmem:[#allocation3 + $0x40] sm:$0xf0] %v1479
        %1490 = vst.msk [vmem:[#allocation3 + $0x48] sm:$0xf0] %vm1031, %v1480
        %v1491 = vld [vmem:[#allocation2] sm:$0xf]
        %v1492 = vld [vmem:[#allocation2 + $0x8] sm:$0xf]
        %v1493 = vld [vmem:[#allocation2 + $0x10] sm:$0xf]
        %v1494 = vld [vmem:[#allocation2 + $0x18] sm:$0xf]
        %v1495 = vld [vmem:[#allocation2 + $0x20] sm:$0xf]
        %v1496 = vld [vmem:[#allocation2 + $0x28] sm:$0xf]
        %1503 = vrot.lane.b32.xlu0 %v1491, 17
        %v1504 = vpop.permute.xlu0 %1503
        %1505 = vrot.lane.b32.xlu0 %v1492, 17
        %v1506 = vpop.permute.xlu0 %1505
        %1507 = vrot.lane.b32.xlu0 %v1493, 17
        %v1508 = vpop.permute.xlu0 %1507
        %1509 = vrot.lane.b32.xlu0 %v1494, 17
        %v1510 = vpop.permute.xlu0 %1509
        %1511 = vrot.lane.b32.xlu0 %v1495, 17
        %v1512 = vpop.permute.xlu0 %1511
        %1513 = vrot.lane.b32.xlu0 %v1496, 17
        %v1514 = vpop.permute.xlu0 %1513
        %vm1515 = vcmask 138240
        %v1516 = vsel %vm1515, %v1504, %v1506
        %v1517 = vsel %vm1515, %v1506, %v1508
        %v1518 = vsel %vm1515, %v1508, %v1510
        %v1519 = vsel %vm1515, %v1510, %v1512
        %v1520 = vsel %vm1515, %v1512, %v1514
        %1526 = vst [vmem:[#allocation3 + $0x50] sm:$0xf] %v1516
        %1527 = vst [vmem:[#allocation3 + $0x58] sm:$0xf] %v1517
        %1528 = vst [vmem:[#allocation3 + $0x60] sm:$0xf] %v1518
        %1529 = vst [vmem:[#allocation3 + $0x68] sm:$0xf] %v1519
        %1530 = vst.msk [vmem:[#allocation3 + $0x70] sm:$0xf] %vm990, %v1520
        %v1531 = vld [vmem:[#allocation2] sm:$0xf]
        %v1532 = vld [vmem:[#allocation2 + $0x8] sm:$0xf]
        %v1533 = vld [vmem:[#allocation2 + $0x10] sm:$0xf]
        %v1534 = vld [vmem:[#allocation2 + $0x18] sm:$0xf]
        %v1535 = vld [vmem:[#allocation2 + $0x20] sm:$0xf]
        %v1536 = vld [vmem:[#allocation2 + $0x28] sm:$0xf]
        %v1543 = vrot.slane %v1531, 4
        %v1544 = vrot.slane %v1532, 4
        %v1545 = vrot.slane %v1533, 4
        %v1546 = vrot.slane %v1534, 4
        %v1547 = vrot.slane %v1535, 4
        %v1548 = vrot.slane %v1536, 4
        %1549 = vrot.lane.b32.xlu0 %v1543, 16
        %v1550 = vpop.permute.xlu0 %1549
        %1551 = vrot.lane.b32.xlu0 %v1544, 16
        %v1552 = vpop.permute.xlu0 %1551
        %1553 = vrot.lane.b32.xlu0 %v1545, 16
        %v1554 = vpop.permute.xlu0 %1553
        %1555 = vrot.lane.b32.xlu0 %v1546, 16
        %v1556 = vpop.permute.xlu0 %1555
        %1557 = vrot.lane.b32.xlu0 %v1547, 16
        %v1558 = vpop.permute.xlu0 %1557
        %1559 = vrot.lane.b32.xlu0 %v1548, 16
        %v1560 = vpop.permute.xlu0 %1559
        %vm1561 = vcmask 130048
        %v1562 = vsel %vm1561, %v1550, %v1552
        %v1563 = vsel %vm1561, %v1552, %v1554
        %v1564 = vsel %vm1561, %v1554, %v1556
        %v1565 = vsel %vm1561, %v1556, %v1558
        %v1566 = vsel %vm1561, %v1558, %v1560
        %1572 = vst [vmem:[#allocation3 + $0x50] sm:$0xf0] %v1562
        %1573 = vst [vmem:[#allocation3 + $0x58] sm:$0xf0] %v1563
        %1574 = vst [vmem:[#allocation3 + $0x60] sm:$0xf0] %v1564
        %1575 = vst [vmem:[#allocation3 + $0x68] sm:$0xf0] %v1565
        %1576 = vst.msk [vmem:[#allocation3 + $0x70] sm:$0xf0] %vm1031, %v1566
        %v1577 = vld [vmem:[#allocation2] sm:$0xf]
        %v1578 = vld [vmem:[#allocation2 + $0x8] sm:$0xf]
        %v1579 = vld [vmem:[#allocation2 + $0x10] sm:$0xf]
        %v1580 = vld [vmem:[#allocation2 + $0x18] sm:$0xf]
        %v1581 = vld [vmem:[#allocation2 + $0x20] sm:$0xf]
        %v1582 = vld [vmem:[#allocation2 + $0x28] sm:$0xf]
        %1589 = vrot.lane.b32.xlu0 %v1577, 8
        %v1590 = vpop.permute.xlu0 %1589
        %1591 = vrot.lane.b32.xlu0 %v1578, 8
        %v1592 = vpop.permute.xlu0 %1591
        %1593 = vrot.lane.b32.xlu0 %v1579, 8
        %v1594 = vpop.permute.xlu0 %1593
        %1595 = vrot.lane.b32.xlu0 %v1580, 8
        %v1596 = vpop.permute.xlu0 %1595
        %1597 = vrot.lane.b32.xlu0 %v1581, 8
        %v1598 = vpop.permute.xlu0 %1597
        %1599 = vrot.lane.b32.xlu0 %v1582, 8
        %v1600 = vpop.permute.xlu0 %1599
        %vm1601 = vcmask 64512
        %v1602 = vsel %vm1601, %v1590, %v1592
        %v1603 = vsel %vm1601, %v1592, %v1594
        %v1604 = vsel %vm1601, %v1594, %v1596
        %v1605 = vsel %vm1601, %v1596, %v1598
        %v1606 = vsel %vm1601, %v1598, %v1600
        %1612 = vst [vmem:[#allocation3 + $0x78] sm:$0xf] %v1602
        %1613 = vst [vmem:[#allocation3 + $0x80] sm:$0xf] %v1603
        %1614 = vst [vmem:[#allocation3 + $0x88] sm:$0xf] %v1604
        %1615 = vst [vmem:[#allocation3 + $0x90] sm:$0xf] %v1605
        %1616 = vst.msk [vmem:[#allocation3 + $0x98] sm:$0xf] %vm990, %v1606
        %v1617 = vld [vmem:[#allocation2] sm:$0xf]
        %v1618 = vld [vmem:[#allocation2 + $0x8] sm:$0xf]
        %v1619 = vld [vmem:[#allocation2 + $0x10] sm:$0xf]
        %v1620 = vld [vmem:[#allocation2 + $0x18] sm:$0xf]
        %v1621 = vld [vmem:[#allocation2 + $0x20] sm:$0xf]
        %v1622 = vld [vmem:[#allocation2 + $0x28] sm:$0xf]
        %v1629 = vrot.slane %v1617, 4
        %v1630 = vrot.slane %v1618, 4
        %v1631 = vrot.slane %v1619, 4
        %v1632 = vrot.slane %v1620, 4
        %v1633 = vrot.slane %v1621, 4
        %v1634 = vrot.slane %v1622, 4
        %1635 = vrot.lane.b32.xlu0 %v1629, 7
        %v1636 = vpop.permute.xlu0 %1635
        %1637 = vrot.lane.b32.xlu0 %v1630, 7
        %v1638 = vpop.permute.xlu0 %1637
        %1639 = vrot.lane.b32.xlu0 %v1631, 7
        %v1640 = vpop.permute.xlu0 %1639
        %1641 = vrot.lane.b32.xlu0 %v1632, 7
        %v1642 = vpop.permute.xlu0 %1641
        %1643 = vrot.lane.b32.xlu0 %v1633, 7
        %v1644 = vpop.permute.xlu0 %1643
        %1645 = vrot.lane.b32.xlu0 %v1634, 7
        %v1646 = vpop.permute.xlu0 %1645
        %vm1647 = vcmask 56320
        %v1648 = vsel %vm1647, %v1636, %v1638
        %v1649 = vsel %vm1647, %v1638, %v1640
        %v1650 = vsel %vm1647, %v1640, %v1642
        %v1651 = vsel %vm1647, %v1642, %v1644
        %v1652 = vsel %vm1647, %v1644, %v1646
        %1658 = vst [vmem:[#allocation3 + $0x78] sm:$0xf0] %v1648
        %1659 = vst [vmem:[#allocation3 + $0x80] sm:$0xf0] %v1649
        %1660 = vst [vmem:[#allocation3 + $0x88] sm:$0xf0] %v1650
        %1661 = vst [vmem:[#allocation3 + $0x90] sm:$0xf0] %v1651
        %1662 = vst.msk [vmem:[#allocation3 + $0x98] sm:$0xf0] %vm1031, %v1652
        %v1663 = vld [vmem:[#allocation2] sm:$0xf]
        %v1664 = vld [vmem:[#allocation2 + $0x8] sm:$0xf]
        %v1665 = vld [vmem:[#allocation2 + $0x10] sm:$0xf]
        %v1666 = vld [vmem:[#allocation2 + $0x18] sm:$0xf]
        %v1667 = vld [vmem:[#allocation2 + $0x20] sm:$0xf]
        %v1668 = vld [vmem:[#allocation2 + $0x28] sm:$0xf]
        %1675 = vrot.lane.b32.xlu0 %v1663, 6
        %v1676 = vpop.permute.xlu0 %1675
        %1677 = vrot.lane.b32.xlu0 %v1664, 6
        %v1678 = vpop.permute.xlu0 %1677
        %1679 = vrot.lane.b32.xlu0 %v1665, 6
        %v1680 = vpop.permute.xlu0 %1679
        %1681 = vrot.lane.b32.xlu0 %v1666, 6
        %v1682 = vpop.permute.xlu0 %1681
        %1683 = vrot.lane.b32.xlu0 %v1667, 6
        %v1684 = vpop.permute.xlu0 %1683
        %1685 = vrot.lane.b32.xlu0 %v1668, 6
        %v1686 = vpop.permute.xlu0 %1685
        %vm1687 = vcmask 48128
        %v1688 = vsel %vm1687, %v1676, %v1678
        %v1689 = vsel %vm1687, %v1678, %v1680
        %v1690 = vsel %vm1687, %v1680, %v1682
        %v1691 = vsel %vm1687, %v1682, %v1684
        %v1692 = vsel %vm1687, %v1684, %v1686
        %1698 = vst [vmem:[#allocation3 + $0xa0] sm:$0xf] %v1688
        %1699 = vst [vmem:[#allocation3 + $0xa8] sm:$0xf] %v1689
        %1700 = vst [vmem:[#allocation3 + $0xb0] sm:$0xf] %v1690
        %1701 = vst [vmem:[#allocation3 + $0xb8] sm:$0xf] %v1691
        %1702 = vst.msk [vmem:[#allocation3 + $0xc0] sm:$0xf] %vm990, %v1692
        %s1703 = scalar_lea.vmem [#allocation7], 4
        %v1704 = vld [vmem:[%s1703] sm:$0xf]
        %v1705 = vld [vmem:[#allocation3] sm:$0xff]
        %v1706 = vld [vmem:[#allocation3 + $0x8] sm:$0xff]
        %v1707 = vld [vmem:[#allocation3 + $0x10] sm:$0xff]
        %v1708 = vld [vmem:[#allocation3 + $0x18] sm:$0xff]
        %v1709 = vld [vmem:[#allocation3 + $0x20] sm:$0xff]
        %v1710 = vld [vmem:[#allocation3 + $0x28] sm:$0xff]
        %v1711 = vld [vmem:[#allocation3 + $0x30] sm:$0xff]
        %v1712 = vld [vmem:[#allocation3 + $0x38] sm:$0xff]
        %v1713 = vld [vmem:[#allocation3 + $0x40] sm:$0xff]
        %v1714 = vld [vmem:[#allocation3 + $0x48] sm:$0xff]
        %v1715 = vld [vmem:[#allocation3 + $0x50] sm:$0xff]
        %v1716 = vld [vmem:[#allocation3 + $0x58] sm:$0xff]
        %v1717 = vld [vmem:[#allocation3 + $0x60] sm:$0xff]
        %v1718 = vld [vmem:[#allocation3 + $0x68] sm:$0xff]
        %v1719 = vld [vmem:[#allocation3 + $0x70] sm:$0xff]
        %v1720 = vld [vmem:[#allocation3 + $0x78] sm:$0xff]
        %v1721 = vld [vmem:[#allocation3 + $0x80] sm:$0xff]
        %v1722 = vld [vmem:[#allocation3 + $0x88] sm:$0xff]
        %v1723 = vld [vmem:[#allocation3 + $0x90] sm:$0xff]
        %v1724 = vld [vmem:[#allocation3 + $0x98] sm:$0xff]
        %v1725 = vld [vmem:[#allocation3 + $0xa0] sm:$0xf]
        %v1726 = vld [vmem:[#allocation3 + $0xa8] sm:$0xf]
        %v1727 = vld [vmem:[#allocation3 + $0xb0] sm:$0xf]
        %v1728 = vld [vmem:[#allocation3 + $0xb8] sm:$0xf]
        %v1729 = vld [vmem:[#allocation3 + $0xc0] sm:$0xf]
        %vm1730 = vcmask 293888
        %v1732 = vsel %vm1730, %v1704, 0
        %vm1734 = vcmask 1043456
        %v1736 = vsel %vm1734, %v1725, 0
        %v1739 = vsel %vm1734, %v1726, 0
        %v1742 = vsel %vm1734, %v1727, 0
        %v1745 = vsel %vm1734, %v1728, 0
        %v1748 = vsel %vm1734, %v1729, 0
        %1750 = vmatprep.subr.mxu0 0.0
        %1751 = vmatpush1.msra.mxu0 0.0
        %1752 = vmatprep.subr.mxu0 0.0
        %1753 = vmatpush1.msra.mxu0 0.0
        %1754 = vmatprep.subr.mxu0 0.0
        %1755 = vmatpush1.msra.mxu0 0.0
        %1756 = vmatprep.subr.mxu0 0.0
        %1757 = vmatpush1.msra.mxu0 0.0
        %1758 = vmatprep.subr.mxu0 0.0
        %1759 = vmatpush1.msra.mxu0 0.0
        %1760 = vmatprep.subr.mxu0 0.0
        %1761 = vmatpush1.msra.mxu0 0.0
        %1762 = vmatprep.subr.mxu0 0.0
        %1763 = vmatpush1.msra.mxu0 0.0
        %1764 = vmatprep.subr.mxu0 0.0
        %1765 = vmatpush1.msra.mxu0 0.0
        %1766 = vmatprep.subr.mxu0 0.0
        %1767 = vmatpush1.msra.mxu0 0.0
        %1768 = vmatprep.subr.mxu0 0.0
        %1769 = vmatpush1.msra.mxu0 0.0
        %1770 = vmatprep.subr.mxu0 0.0
        %1771 = vmatpush1.msra.mxu0 0.0
        %1772 = vmatprep.subr.mxu0 %v1739
        %1773 = vmatpush1.msra.mxu0 %v1736
        %1774 = vmatprep.subr.mxu0 %v1721
        %1775 = vmatpush1.msra.mxu0 %v1720
        %1776 = vmatprep.subr.mxu0 %v1716
        %1777 = vmatpush1.msra.mxu0 %v1715
        %1778 = vmatprep.subr.mxu0 %v1711
        %1779 = vmatpush1.msra.mxu0 %v1710
        %1780 = vmatprep.subr.mxu0 %v1706
        %1781 = vmatpush1.msra.mxu0 %v1705
        %1782 = vmatprep.subr.mxu0 0.0
        %1783 = vmatpush2.msra.mxu0 0.0
        %1784 = vmatprep.subr.mxu0 0.0
        %1785 = vmatpush2.msra.mxu0 0.0
        %1786 = vmatprep.subr.mxu0 0.0
        %1787 = vmatpush2.msra.mxu0 0.0
        %1788 = vmatprep.subr.mxu0 0.0
        %1789 = vmatpush2.msra.mxu0 0.0
        %1790 = vmatprep.subr.mxu0 0.0
        %1791 = vmatpush2.msra.mxu0 0.0
        %1792 = vmatprep.subr.mxu0 0.0
        %1793 = vmatpush2.msra.mxu0 0.0
        %1794 = vmatprep.subr.mxu0 0.0
        %1795 = vmatpush2.msra.mxu0 0.0
        %1796 = vmatprep.subr.mxu0 0.0
        %1797 = vmatpush2.msra.mxu0 0.0
        %1798 = vmatprep.subr.mxu0 0.0
        %1799 = vmatpush2.msra.mxu0 0.0
        %1800 = vmatprep.subr.mxu0 0.0
        %1801 = vmatpush2.msra.mxu0 0.0
        %1802 = vmatprep.subr.mxu0 0.0
        %1803 = vmatpush2.msra.mxu0 0.0
        %1804 = vmatprep.subr.mxu0 0.0
        %1805 = vmatpush2.msra.mxu0 0.0
        %1806 = vmatprep.subr.mxu0 0.0
        %1807 = vmatpush2.msra.mxu0 0.0
        %1808 = vmatprep.subr.mxu0 0.0
        %1809 = vmatpush2.msra.mxu0 0.0
        %1810 = vmatprep.subr.mxu0 0.0
        %1811 = vmatpush2.msra.mxu0 0.0
        %1812 = vmatprep.subr.mxu0 0.0
        %1813 = vmatpush2.msra.mxu0 0.0
        %1814 = vmatprep.mubr.f32.mxu0 0.0
        %1815 = vmatmul.mubr.f32.gmra.mxu0 %v1732
        %v1816 = vpop.f32.mrf.mxu0
        %v1817 = vadd.f32 0.0, %v1816
        %v1818 = vpop.f32.mrf.mxu0
        %v1819 = vadd.f32 0.0, %v1818
        %1820 = vdwg.mxu0
        %1821 = vmatprep.subr.mxu0 0.0
        %1822 = vmatpush1.msra.mxu0 0.0
        %1823 = vmatprep.subr.mxu0 0.0
        %1824 = vmatpush1.msra.mxu0 0.0
        %1825 = vmatprep.subr.mxu0 0.0
        %1826 = vmatpush1.msra.mxu0 0.0
        %1827 = vmatprep.subr.mxu0 0.0
        %1828 = vmatpush1.msra.mxu0 0.0
        %1829 = vmatprep.subr.mxu0 0.0
        %1830 = vmatpush1.msra.mxu0 0.0
        %1831 = vmatprep.subr.mxu0 0.0
        %1832 = vmatpush1.msra.mxu0 0.0
        %1833 = vmatprep.subr.mxu0 0.0
        %1834 = vmatpush1.msra.mxu0 0.0
        %1835 = vmatprep.subr.mxu0 0.0
        %1836 = vmatpush1.msra.mxu0 0.0
        %1837 = vmatprep.subr.mxu0 0.0
        %1838 = vmatpush1.msra.mxu0 0.0
        %1839 = vmatprep.subr.mxu0 0.0
        %1840 = vmatpush1.msra.mxu0 0.0
        %1841 = vmatprep.subr.mxu0 0.0
        %1842 = vmatpush1.msra.mxu0 0.0
        %1843 = vmatprep.subr.mxu0 %v1745
        %1844 = vmatpush1.msra.mxu0 %v1742
        %1845 = vmatprep.subr.mxu0 %v1723
        %1846 = vmatpush1.msra.mxu0 %v1722
        %1847 = vmatprep.subr.mxu0 %v1718
        %1848 = vmatpush1.msra.mxu0 %v1717
        %1849 = vmatprep.subr.mxu0 %v1713
        %1850 = vmatpush1.msra.mxu0 %v1712
        %1851 = vmatprep.subr.mxu0 %v1708
        %1852 = vmatpush1.msra.mxu0 %v1707
        %1853 = vmatprep.subr.mxu0 0.0
        %1854 = vmatpush2.msra.mxu0 0.0
        %1855 = vmatprep.subr.mxu0 0.0
        %1856 = vmatpush2.msra.mxu0 0.0
        %1857 = vmatprep.subr.mxu0 0.0
        %1858 = vmatpush2.msra.mxu0 0.0
        %1859 = vmatprep.subr.mxu0 0.0
        %1860 = vmatpush2.msra.mxu0 0.0
        %1861 = vmatprep.subr.mxu0 0.0
        %1862 = vmatpush2.msra.mxu0 0.0
        %1863 = vmatprep.subr.mxu0 0.0
        %1864 = vmatpush2.msra.mxu0 0.0
        %1865 = vmatprep.subr.mxu0 0.0
        %1866 = vmatpush2.msra.mxu0 0.0
        %1867 = vmatprep.subr.mxu0 0.0
        %1868 = vmatpush2.msra.mxu0 0.0
        %1869 = vmatprep.subr.mxu0 0.0
        %1870 = vmatpush2.msra.mxu0 0.0
        %1871 = vmatprep.subr.mxu0 0.0
        %1872 = vmatpush2.msra.mxu0 0.0
        %1873 = vmatprep.subr.mxu0 0.0
        %1874 = vmatpush2.msra.mxu0 0.0
        %1875 = vmatprep.subr.mxu0 0.0
        %1876 = vmatpush2.msra.mxu0 0.0
        %1877 = vmatprep.subr.mxu0 0.0
        %1878 = vmatpush2.msra.mxu0 0.0
        %1879 = vmatprep.subr.mxu0 0.0
        %1880 = vmatpush2.msra.mxu0 0.0
        %1881 = vmatprep.subr.mxu0 0.0
        %1882 = vmatpush2.msra.mxu0 0.0
        %1883 = vmatprep.subr.mxu0 0.0
        %1884 = vmatpush2.msra.mxu0 0.0
        %1885 = vmatprep.mubr.f32.mxu0 0.0
        %1886 = vmatmul.mubr.f32.gmra.mxu0 %v1732
        %v1887 = vpop.f32.mrf.mxu0
        %v1888 = vadd.f32 0.0, %v1887
        %v1889 = vpop.f32.mrf.mxu0
        %v1890 = vadd.f32 0.0, %v1889
        %1891 = vdwg.mxu0
        %1892 = vmatprep.subr.mxu0 0.0
        %1893 = vmatpush1.msra.mxu0 0.0
        %1894 = vmatprep.subr.mxu0 0.0
        %1895 = vmatpush1.msra.mxu0 0.0
        %1896 = vmatprep.subr.mxu0 0.0
        %1897 = vmatpush1.msra.mxu0 0.0
        %1898 = vmatprep.subr.mxu0 0.0
        %1899 = vmatpush1.msra.mxu0 0.0
        %1900 = vmatprep.subr.mxu0 0.0
        %1901 = vmatpush1.msra.mxu0 0.0
        %1902 = vmatprep.subr.mxu0 0.0
        %1903 = vmatpush1.msra.mxu0 0.0
        %1904 = vmatprep.subr.mxu0 0.0
        %1905 = vmatpush1.msra.mxu0 0.0
        %1906 = vmatprep.subr.mxu0 0.0
        %1907 = vmatpush1.msra.mxu0 0.0
        %1908 = vmatprep.subr.mxu0 0.0
        %1909 = vmatpush1.msra.mxu0 0.0
        %1910 = vmatprep.subr.mxu0 0.0
        %1911 = vmatpush1.msra.mxu0 0.0
        %1912 = vmatprep.subr.mxu0 0.0
        %1913 = vmatpush1.msra.mxu0 0.0
        %1914 = vmatprep.subr.mxu0 0.0
        %1915 = vmatpush1.msra.mxu0 %v1748
        %1916 = vmatprep.subr.mxu0 0.0
        %1917 = vmatpush1.msra.mxu0 %v1724
        %1918 = vmatprep.subr.mxu0 0.0
        %1919 = vmatpush1.msra.mxu0 %v1719
        %1920 = vmatprep.subr.mxu0 0.0
        %1921 = vmatpush1.msra.mxu0 %v1714
        %1922 = vmatprep.subr.mxu0 0.0
        %1923 = vmatpush1.msra.mxu0 %v1709
        %1924 = vmatprep.subr.mxu0 0.0
        %1925 = vmatpush2.msra.mxu0 0.0
        %1926 = vmatprep.subr.mxu0 0.0
        %1927 = vmatpush2.msra.mxu0 0.0
        %1928 = vmatprep.subr.mxu0 0.0
        %1929 = vmatpush2.msra.mxu0 0.0
        %1930 = vmatprep.subr.mxu0 0.0
        %1931 = vmatpush2.msra.mxu0 0.0
        %1932 = vmatprep.subr.mxu0 0.0
        %1933 = vmatpush2.msra.mxu0 0.0
        %1934 = vmatprep.subr.mxu0 0.0
        %1935 = vmatpush2.msra.mxu0 0.0
        %1936 = vmatprep.subr.mxu0 0.0
        %1937 = vmatpush2.msra.mxu0 0.0
        %1938 = vmatprep.subr.mxu0 0.0
        %1939 = vmatpush2.msra.mxu0 0.0
        %1940 = vmatprep.subr.mxu0 0.0
        %1941 = vmatpush2.msra.mxu0 0.0
        %1942 = vmatprep.subr.mxu0 0.0
        %1943 = vmatpush2.msra.mxu0 0.0
        %1944 = vmatprep.subr.mxu0 0.0
        %1945 = vmatpush2.msra.mxu0 0.0
        %1946 = vmatprep.subr.mxu0 0.0
        %1947 = vmatpush2.msra.mxu0 0.0
        %1948 = vmatprep.subr.mxu0 0.0
        %1949 = vmatpush2.msra.mxu0 0.0
        %1950 = vmatprep.subr.mxu0 0.0
        %1951 = vmatpush2.msra.mxu0 0.0
        %1952 = vmatprep.subr.mxu0 0.0
        %1953 = vmatpush2.msra.mxu0 0.0
        %1954 = vmatprep.subr.mxu0 0.0
        %1955 = vmatpush2.msra.mxu0 0.0
        %1956 = vmatprep.mubr.f32.mxu0 0.0
        %1957 = vmatmul.mubr.f32.gmra.mxu0 %v1732
        %v1958 = vpop.f32.mrf.mxu0
        %v1959 = vadd.f32 0.0, %v1958
        %v1960 = vpop.f32.mrf.mxu0
        %1961 = vdwg.mxu0
        %v1963 = vsel %vm1730, %v1293, 0
        %v1966 = vsel %vm1734, %v1314, 0
        %v1969 = vsel %vm1734, %v1315, 0
        %v1972 = vsel %vm1734, %v1316, 0
        %v1975 = vsel %vm1734, %v1317, 0
        %v1978 = vsel %vm1734, %v1318, 0
        %1980 = vmatprep.subr.mxu0 0.0
        %1981 = vmatpush1.msra.mxu0 0.0
        %1982 = vmatprep.subr.mxu0 0.0
        %1983 = vmatpush1.msra.mxu0 0.0
        %1984 = vmatprep.subr.mxu0 0.0
        %1985 = vmatpush1.msra.mxu0 0.0
        %1986 = vmatprep.subr.mxu0 0.0
        %1987 = vmatpush1.msra.mxu0 0.0
        %1988 = vmatprep.subr.mxu0 0.0
        %1989 = vmatpush1.msra.mxu0 0.0
        %1990 = vmatprep.subr.mxu0 0.0
        %1991 = vmatpush1.msra.mxu0 0.0
        %1992 = vmatprep.subr.mxu0 0.0
        %1993 = vmatpush1.msra.mxu0 0.0
        %1994 = vmatprep.subr.mxu0 0.0
        %1995 = vmatpush1.msra.mxu0 0.0
        %1996 = vmatprep.subr.mxu0 0.0
        %1997 = vmatpush1.msra.mxu0 0.0
        %1998 = vmatprep.subr.mxu0 0.0
        %1999 = vmatpush1.msra.mxu0 0.0
        %2000 = vmatprep.subr.mxu0 0.0
        %2001 = vmatpush1.msra.mxu0 0.0
        %2002 = vmatprep.subr.mxu0 %v1969
        %2003 = vmatpush1.msra.mxu0 %v1966
        %2004 = vmatprep.subr.mxu0 %v1310
        %2005 = vmatpush1.msra.mxu0 %v1309
        %2006 = vmatprep.subr.mxu0 %v1305
        %2007 = vmatpush1.msra.mxu0 %v1304
        %2008 = vmatprep.subr.mxu0 %v1300
        %2009 = vmatpush1.msra.mxu0 %v1299
        %2010 = vmatprep.subr.mxu0 %v1295
        %2011 = vmatpush1.msra.mxu0 %v1294
        %2012 = vmatprep.subr.mxu0 0.0
        %2013 = vmatpush2.msra.mxu0 0.0
        %2014 = vmatprep.subr.mxu0 0.0
        %2015 = vmatpush2.msra.mxu0 0.0
        %2016 = vmatprep.subr.mxu0 0.0
        %2017 = vmatpush2.msra.mxu0 0.0
        %2018 = vmatprep.subr.mxu0 0.0
        %2019 = vmatpush2.msra.mxu0 0.0
        %2020 = vmatprep.subr.mxu0 0.0
        %2021 = vmatpush2.msra.mxu0 0.0
        %2022 = vmatprep.subr.mxu0 0.0
        %2023 = vmatpush2.msra.mxu0 0.0
        %2024 = vmatprep.subr.mxu0 0.0
        %2025 = vmatpush2.msra.mxu0 0.0
        %2026 = vmatprep.subr.mxu0 0.0
        %2027 = vmatpush2.msra.mxu0 0.0
        %2028 = vmatprep.subr.mxu0 0.0
        %2029 = vmatpush2.msra.mxu0 0.0
        %2030 = vmatprep.subr.mxu0 0.0
        %2031 = vmatpush2.msra.mxu0 0.0
        %2032 = vmatprep.subr.mxu0 0.0
        %2033 = vmatpush2.msra.mxu0 0.0
        %2034 = vmatprep.subr.mxu0 0.0
        %2035 = vmatpush2.msra.mxu0 0.0
        %2036 = vmatprep.subr.mxu0 0.0
        %2037 = vmatpush2.msra.mxu0 0.0
        %2038 = vmatprep.subr.mxu0 0.0
        %2039 = vmatpush2.msra.mxu0 0.0
        %2040 = vmatprep.subr.mxu0 0.0
        %2041 = vmatpush2.msra.mxu0 0.0
        %2042 = vmatprep.subr.mxu0 0.0
        %2043 = vmatpush2.msra.mxu0 0.0
        %2044 = vmatprep.mubr.f32.mxu0 0.0
        %2045 = vmatmul.mubr.f32.gmra.mxu0 %v1963
        %v2046 = vpop.f32.mrf.mxu0
        %v2047 = vadd.f32 %v1817, %v2046
        %v2048 = vpop.f32.mrf.mxu0
        %v2049 = vadd.f32 %v1819, %v2048
        %2050 = vdwg.mxu0
        %2051 = vmatprep.subr.mxu0 0.0
        %2052 = vmatpush1.msra.mxu0 0.0
        %2053 = vmatprep.subr.mxu0 0.0
        %2054 = vmatpush1.msra.mxu0 0.0
        %2055 = vmatprep.subr.mxu0 0.0
        %2056 = vmatpush1.msra.mxu0 0.0
        %2057 = vmatprep.subr.mxu0 0.0
        %2058 = vmatpush1.msra.mxu0 0.0
        %2059 = vmatprep.subr.mxu0 0.0
        %2060 = vmatpush1.msra.mxu0 0.0
        %2061 = vmatprep.subr.mxu0 0.0
        %2062 = vmatpush1.msra.mxu0 0.0
        %2063 = vmatprep.subr.mxu0 0.0
        %2064 = vmatpush1.msra.mxu0 0.0
        %2065 = vmatprep.subr.mxu0 0.0
        %2066 = vmatpush1.msra.mxu0 0.0
        %2067 = vmatprep.subr.mxu0 0.0
        %2068 = vmatpush1.msra.mxu0 0.0
        %2069 = vmatprep.subr.mxu0 0.0
        %2070 = vmatpush1.msra.mxu0 0.0
        %2071 = vmatprep.subr.mxu0 0.0
        %2072 = vmatpush1.msra.mxu0 0.0
        %2073 = vmatprep.subr.mxu0 %v1975
        %2074 = vmatpush1.msra.mxu0 %v1972
        %2075 = vmatprep.subr.mxu0 %v1312
        %2076 = vmatpush1.msra.mxu0 %v1311
        %2077 = vmatprep.subr.mxu0 %v1307
        %2078 = vmatpush1.msra.mxu0 %v1306
        %2079 = vmatprep.subr.mxu0 %v1302
        %2080 = vmatpush1.msra.mxu0 %v1301
        %2081 = vmatprep.subr.mxu0 %v1297
        %2082 = vmatpush1.msra.mxu0 %v1296
        %2083 = vmatprep.subr.mxu0 0.0
        %2084 = vmatpush2.msra.mxu0 0.0
        %2085 = vmatprep.subr.mxu0 0.0
        %2086 = vmatpush2.msra.mxu0 0.0
        %2087 = vmatprep.subr.mxu0 0.0
        %2088 = vmatpush2.msra.mxu0 0.0
        %2089 = vmatprep.subr.mxu0 0.0
        %2090 = vmatpush2.msra.mxu0 0.0
        %2091 = vmatprep.subr.mxu0 0.0
        %2092 = vmatpush2.msra.mxu0 0.0
        %2093 = vmatprep.subr.mxu0 0.0
        %2094 = vmatpush2.msra.mxu0 0.0
        %2095 = vmatprep.subr.mxu0 0.0
        %2096 = vmatpush2.msra.mxu0 0.0
        %2097 = vmatprep.subr.mxu0 0.0
        %2098 = vmatpush2.msra.mxu0 0.0
        %2099 = vmatprep.subr.mxu0 0.0
        %2100 = vmatpush2.msra.mxu0 0.0
        %2101 = vmatprep.subr.mxu0 0.0
        %2102 = vmatpush2.msra.mxu0 0.0
        %2103 = vmatprep.subr.mxu0 0.0
        %2104 = vmatpush2.msra.mxu0 0.0
        %2105 = vmatprep.subr.mxu0 0.0
        %2106 = vmatpush2.msra.mxu0 0.0
        %2107 = vmatprep.subr.mxu0 0.0
        %2108 = vmatpush2.msra.mxu0 0.0
        %2109 = vmatprep.subr.mxu0 0.0
        %2110 = vmatpush2.msra.mxu0 0.0
        %2111 = vmatprep.subr.mxu0 0.0
        %2112 = vmatpush2.msra.mxu0 0.0
        %2113 = vmatprep.subr.mxu0 0.0
        %2114 = vmatpush2.msra.mxu0 0.0
        %2115 = vmatprep.mubr.f32.mxu0 0.0
        %2116 = vmatmul.mubr.f32.gmra.mxu0 %v1963
        %v2117 = vpop.f32.mrf.mxu0
        %v2118 = vadd.f32 %v1888, %v2117
        %v2119 = vpop.f32.mrf.mxu0
        %v2120 = vadd.f32 %v1890, %v2119
        %2121 = vdwg.mxu0
        %2122 = vmatprep.subr.mxu0 0.0
        %2123 = vmatpush1.msra.mxu0 0.0
        %2124 = vmatprep.subr.mxu0 0.0
        %2125 = vmatpush1.msra.mxu0 0.0
        %2126 = vmatprep.subr.mxu0 0.0
        %2127 = vmatpush1.msra.mxu0 0.0
        %2128 = vmatprep.subr.mxu0 0.0
        %2129 = vmatpush1.msra.mxu0 0.0
        %2130 = vmatprep.subr.mxu0 0.0
        %2131 = vmatpush1.msra.mxu0 0.0
        %2132 = vmatprep.subr.mxu0 0.0
        %2133 = vmatpush1.msra.mxu0 0.0
        %2134 = vmatprep.subr.mxu0 0.0
        %2135 = vmatpush1.msra.mxu0 0.0
        %2136 = vmatprep.subr.mxu0 0.0
        %2137 = vmatpush1.msra.mxu0 0.0
        %2138 = vmatprep.subr.mxu0 0.0
        %2139 = vmatpush1.msra.mxu0 0.0
        %2140 = vmatprep.subr.mxu0 0.0
        %2141 = vmatpush1.msra.mxu0 0.0
        %2142 = vmatprep.subr.mxu0 0.0
        %2143 = vmatpush1.msra.mxu0 0.0
        %2144 = vmatprep.subr.mxu0 0.0
        %2145 = vmatpush1.msra.mxu0 %v1978
        %2146 = vmatprep.subr.mxu0 0.0
        %2147 = vmatpush1.msra.mxu0 %v1313
        %2148 = vmatprep.subr.mxu0 0.0
        %2149 = vmatpush1.msra.mxu0 %v1308
        %2150 = vmatprep.subr.mxu0 0.0
        %2151 = vmatpush1.msra.mxu0 %v1303
        %2152 = vmatprep.subr.mxu0 0.0
        %2153 = vmatpush1.msra.mxu0 %v1298
        %2154 = vmatprep.subr.mxu0 0.0
        %2155 = vmatpush2.msra.mxu0 0.0
        %2156 = vmatprep.subr.mxu0 0.0
        %2157 = vmatpush2.msra.mxu0 0.0
        %2158 = vmatprep.subr.mxu0 0.0
        %2159 = vmatpush2.msra.mxu0 0.0
        %2160 = vmatprep.subr.mxu0 0.0
        %2161 = vmatpush2.msra.mxu0 0.0
        %2162 = vmatprep.subr.mxu0 0.0
        %2163 = vmatpush2.msra.mxu0 0.0
        %2164 = vmatprep.subr.mxu0 0.0
        %2165 = vmatpush2.msra.mxu0 0.0
        %2166 = vmatprep.subr.mxu0 0.0
        %2167 = vmatpush2.msra.mxu0 0.0
        %2168 = vmatprep.subr.mxu0 0.0
        %2169 = vmatpush2.msra.mxu0 0.0
        %2170 = vmatprep.subr.mxu0 0.0
        %2171 = vmatpush2.msra.mxu0 0.0
        %2172 = vmatprep.subr.mxu0 0.0
        %2173 = vmatpush2.msra.mxu0 0.0
        %2174 = vmatprep.subr.mxu0 0.0
        %2175 = vmatpush2.msra.mxu0 0.0
        %2176 = vmatprep.subr.mxu0 0.0
        %2177 = vmatpush2.msra.mxu0 0.0
        %2178 = vmatprep.subr.mxu0 0.0
        %2179 = vmatpush2.msra.mxu0 0.0
        %2180 = vmatprep.subr.mxu0 0.0
        %2181 = vmatpush2.msra.mxu0 0.0
        %2182 = vmatprep.subr.mxu0 0.0
        %2183 = vmatpush2.msra.mxu0 0.0
        %2184 = vmatprep.subr.mxu0 0.0
        %2185 = vmatpush2.msra.mxu0 0.0
        %2186 = vmatprep.mubr.f32.mxu0 0.0
        %2187 = vmatmul.mubr.f32.gmra.mxu0 %v1963
        %v2188 = vpop.f32.mrf.mxu0
        %v2189 = vadd.f32 %v1959, %v2188
        %v2190 = vpop.f32.mrf.mxu0
        %2191 = vdwg.mxu0
        %v2192 = vld [vmem:[#allocation2 + $0x8] sm:$0xf]
        %v2193 = vld [vmem:[#allocation2 + $0x10] sm:$0xf]
        %v2194 = vld [vmem:[#allocation2 + $0x18] sm:$0xf]
        %v2195 = vld [vmem:[#allocation2 + $0x20] sm:$0xf]
        %v2196 = vld [vmem:[#allocation2 + $0x28] sm:$0xf]
        %v2197 = vld [vmem:[#allocation2 + $0x30] sm:$0xf]
        %2204 = vrot.lane.b32.xlu0 %v2192, 56
        %v2205 = vpop.permute.xlu0 %2204
        %2206 = vrot.lane.b32.xlu0 %v2193, 56
        %v2207 = vpop.permute.xlu0 %2206
        %2208 = vrot.lane.b32.xlu0 %v2194, 56
        %v2209 = vpop.permute.xlu0 %2208
        %2210 = vrot.lane.b32.xlu0 %v2195, 56
        %v2211 = vpop.permute.xlu0 %2210
        %2212 = vrot.lane.b32.xlu0 %v2196, 56
        %v2213 = vpop.permute.xlu0 %2212
        %2214 = vrot.lane.b32.xlu0 %v2197, 56
        %v2215 = vpop.permute.xlu0 %2214
        %vm2216 = vcmask 457728
        %v2217 = vsel %vm2216, %v2205, %v2207
        %v2218 = vsel %vm2216, %v2207, %v2209
        %v2219 = vsel %vm2216, %v2209, %v2211
        %v2220 = vsel %vm2216, %v2211, %v2213
        %v2221 = vsel %vm2216, %v2213, %v2215
        %2227 = vst [vmem:[#allocation3] sm:$0xf] %v2217
        %2228 = vst [vmem:[#allocation3 + $0x8] sm:$0xf] %v2218
        %2229 = vst [vmem:[#allocation3 + $0x10] sm:$0xf] %v2219
        %2230 = vst [vmem:[#allocation3 + $0x18] sm:$0xf] %v2220
        %2231 = vst.msk [vmem:[#allocation3 + $0x20] sm:$0xf] %vm990, %v2221
        %v2232 = vld [vmem:[#allocation2 + $0x8] sm:$0xf]
        %v2233 = vld [vmem:[#allocation2 + $0x10] sm:$0xf]
        %v2234 = vld [vmem:[#allocation2 + $0x18] sm:$0xf]
        %v2235 = vld [vmem:[#allocation2 + $0x20] sm:$0xf]
        %v2236 = vld [vmem:[#allocation2 + $0x28] sm:$0xf]
        %v2237 = vld [vmem:[#allocation2 + $0x30] sm:$0xf]
        %v2244 = vrot.slane %v2232, 4
        %v2245 = vrot.slane %v2233, 4
        %v2246 = vrot.slane %v2234, 4
        %v2247 = vrot.slane %v2235, 4
        %v2248 = vrot.slane %v2236, 4
        %v2249 = vrot.slane %v2237, 4
        %2250 = vrot.lane.b32.xlu0 %v2244, 55
        %v2251 = vpop.permute.xlu0 %2250
        %2252 = vrot.lane.b32.xlu0 %v2245, 55
        %v2253 = vpop.permute.xlu0 %2252
        %2254 = vrot.lane.b32.xlu0 %v2246, 55
        %v2255 = vpop.permute.xlu0 %2254
        %2256 = vrot.lane.b32.xlu0 %v2247, 55
        %v2257 = vpop.permute.xlu0 %2256
        %2258 = vrot.lane.b32.xlu0 %v2248, 55
        %v2259 = vpop.permute.xlu0 %2258
        %2260 = vrot.lane.b32.xlu0 %v2249, 55
        %v2261 = vpop.permute.xlu0 %2260
        %vm2262 = vcmask 449536
        %v2263 = vsel %vm2262, %v2251, %v2253
        %v2264 = vsel %vm2262, %v2253, %v2255
        %v2265 = vsel %vm2262, %v2255, %v2257
        %v2266 = vsel %vm2262, %v2257, %v2259
        %v2267 = vsel %vm2262, %v2259, %v2261
        %2273 = vst [vmem:[#allocation3] sm:$0xf0] %v2263
        %2274 = vst [vmem:[#allocation3 + $0x8] sm:$0xf0] %v2264
        %2275 = vst [vmem:[#allocation3 + $0x10] sm:$0xf0] %v2265
        %2276 = vst [vmem:[#allocation3 + $0x18] sm:$0xf0] %v2266
        %2277 = vst.msk [vmem:[#allocation3 + $0x20] sm:$0xf0] %vm1031, %v2267
        %v2278 = vld [vmem:[#allocation2 + $0x8] sm:$0xf]
        %v2279 = vld [vmem:[#allocation2 + $0x10] sm:$0xf]
        %v2280 = vld [vmem:[#allocation2 + $0x18] sm:$0xf]
        %v2281 = vld [vmem:[#allocation2 + $0x20] sm:$0xf]
        %v2282 = vld [vmem:[#allocation2 + $0x28] sm:$0xf]
        %v2283 = vld [vmem:[#allocation2 + $0x30] sm:$0xf]
        %2290 = vrot.lane.b32.xlu0 %v2278, 54
        %v2291 = vpop.permute.xlu0 %2290
        %2292 = vrot.lane.b32.xlu0 %v2279, 54
        %v2293 = vpop.permute.xlu0 %2292
        %2294 = vrot.lane.b32.xlu0 %v2280, 54
        %v2295 = vpop.permute.xlu0 %2294
        %2296 = vrot.lane.b32.xlu0 %v2281, 54
        %v2297 = vpop.permute.xlu0 %2296
        %2298 = vrot.lane.b32.xlu0 %v2282, 54
        %v2299 = vpop.permute.xlu0 %2298
        %2300 = vrot.lane.b32.xlu0 %v2283, 54
        %v2301 = vpop.permute.xlu0 %2300
        %vm2302 = vcmask 441344
        %v2303 = vsel %vm2302, %v2291, %v2293
        %v2304 = vsel %vm2302, %v2293, %v2295
        %v2305 = vsel %vm2302, %v2295, %v2297
        %v2306 = vsel %vm2302, %v2297, %v2299
        %v2307 = vsel %vm2302, %v2299, %v2301
        %2313 = vst [vmem:[#allocation3 + $0x28] sm:$0xf] %v2303
        %2314 = vst [vmem:[#allocation3 + $0x30] sm:$0xf] %v2304
        %2315 = vst [vmem:[#allocation3 + $0x38] sm:$0xf] %v2305
        %2316 = vst [vmem:[#allocation3 + $0x40] sm:$0xf] %v2306
        %2317 = vst.msk [vmem:[#allocation3 + $0x48] sm:$0xf] %vm990, %v2307
        %v2318 = vld [vmem:[#allocation2 + $0x8] sm:$0xf]
        %v2319 = vld [vmem:[#allocation2 + $0x10] sm:$0xf]
        %v2320 = vld [vmem:[#allocation2 + $0x18] sm:$0xf]
        %v2321 = vld [vmem:[#allocation2 + $0x20] sm:$0xf]
        %v2322 = vld [vmem:[#allocation2 + $0x28] sm:$0xf]
        %v2323 = vld [vmem:[#allocation2 + $0x30] sm:$0xf]
        %v2330 = vrot.slane %v2318, 4
        %v2331 = vrot.slane %v2319, 4
        %v2332 = vrot.slane %v2320, 4
        %v2333 = vrot.slane %v2321, 4
        %v2334 = vrot.slane %v2322, 4
        %v2335 = vrot.slane %v2323, 4
        %2336 = vrot.lane.b32.xlu0 %v2330, 46
        %v2337 = vpop.permute.xlu0 %2336
        %2338 = vrot.lane.b32.xlu0 %v2331, 46
        %v2339 = vpop.permute.xlu0 %2338
        %2340 = vrot.lane.b32.xlu0 %v2332, 46
        %v2341 = vpop.permute.xlu0 %2340
        %2342 = vrot.lane.b32.xlu0 %v2333, 46
        %v2343 = vpop.permute.xlu0 %2342
        %2344 = vrot.lane.b32.xlu0 %v2334, 46
        %v2345 = vpop.permute.xlu0 %2344
        %2346 = vrot.lane.b32.xlu0 %v2335, 46
        %v2347 = vpop.permute.xlu0 %2346
        %vm2348 = vcmask 375808
        %v2349 = vsel %vm2348, %v2337, %v2339
        %v2350 = vsel %vm2348, %v2339, %v2341
        %v2351 = vsel %vm2348, %v2341, %v2343
        %v2352 = vsel %vm2348, %v2343, %v2345
        %v2353 = vsel %vm2348, %v2345, %v2347
        %2359 = vst [vmem:[#allocation3 + $0x28] sm:$0xf0] %v2349
        %2360 = vst [vmem:[#allocation3 + $0x30] sm:$0xf0] %v2350
        %2361 = vst [vmem:[#allocation3 + $0x38] sm:$0xf0] %v2351
        %2362 = vst [vmem:[#allocation3 + $0x40] sm:$0xf0] %v2352
        %2363 = vst.msk [vmem:[#allocation3 + $0x48] sm:$0xf0] %vm1031, %v2353
        %v2364 = vld [vmem:[#allocation2 + $0x8] sm:$0xf]
        %v2365 = vld [vmem:[#allocation2 + $0x10] sm:$0xf]
        %v2366 = vld [vmem:[#allocation2 + $0x18] sm:$0xf]
        %v2367 = vld [vmem:[#allocation2 + $0x20] sm:$0xf]
        %v2368 = vld [vmem:[#allocation2 + $0x28] sm:$0xf]
        %v2369 = vld [vmem:[#allocation2 + $0x30] sm:$0xf]
        %2376 = vrot.lane.b32.xlu0 %v2364, 45
        %v2377 = vpop.permute.xlu0 %2376
        %2378 = vrot.lane.b32.xlu0 %v2365, 45
        %v2379 = vpop.permute.xlu0 %2378
        %2380 = vrot.lane.b32.xlu0 %v2366, 45
        %v2381 = vpop.permute.xlu0 %2380
        %2382 = vrot.lane.b32.xlu0 %v2367, 45
        %v2383 = vpop.permute.xlu0 %2382
        %2384 = vrot.lane.b32.xlu0 %v2368, 45
        %v2385 = vpop.permute.xlu0 %2384
        %2386 = vrot.lane.b32.xlu0 %v2369, 45
        %v2387 = vpop.permute.xlu0 %2386
        %vm2388 = vcmask 367616
        %v2389 = vsel %vm2388, %v2377, %v2379
        %v2390 = vsel %vm2388, %v2379, %v2381
        %v2391 = vsel %vm2388, %v2381, %v2383
        %v2392 = vsel %vm2388, %v2383, %v2385
        %v2393 = vsel %vm2388, %v2385, %v2387
        %2399 = vst [vmem:[#allocation3 + $0x50] sm:$0xf] %v2389
        %2400 = vst [vmem:[#allocation3 + $0x58] sm:$0xf] %v2390
        %2401 = vst [vmem:[#allocation3 + $0x60] sm:$0xf] %v2391
        %2402 = vst [vmem:[#allocation3 + $0x68] sm:$0xf] %v2392
        %2403 = vst.msk [vmem:[#allocation3 + $0x70] sm:$0xf] %vm990, %v2393
        %v2404 = vld [vmem:[#allocation2 + $0x8] sm:$0xf]
        %v2405 = vld [vmem:[#allocation2 + $0x10] sm:$0xf]
        %v2406 = vld [vmem:[#allocation2 + $0x18] sm:$0xf]
        %v2407 = vld [vmem:[#allocation2 + $0x20] sm:$0xf]
        %v2408 = vld [vmem:[#allocation2 + $0x28] sm:$0xf]
        %v2409 = vld [vmem:[#allocation2 + $0x30] sm:$0xf]
        %v2416 = vrot.slane %v2404, 4
        %v2417 = vrot.slane %v2405, 4
        %v2418 = vrot.slane %v2406, 4
        %v2419 = vrot.slane %v2407, 4
        %v2420 = vrot.slane %v2408, 4
        %v2421 = vrot.slane %v2409, 4
        %2422 = vrot.lane.b32.xlu0 %v2416, 44
        %v2423 = vpop.permute.xlu0 %2422
        %2424 = vrot.lane.b32.xlu0 %v2417, 44
        %v2425 = vpop.permute.xlu0 %2424
        %2426 = vrot.lane.b32.xlu0 %v2418, 44
        %v2427 = vpop.permute.xlu0 %2426
        %2428 = vrot.lane.b32.xlu0 %v2419, 44
        %v2429 = vpop.permute.xlu0 %2428
        %2430 = vrot.lane.b32.xlu0 %v2420, 44
        %v2431 = vpop.permute.xlu0 %2430
        %2432 = vrot.lane.b32.xlu0 %v2421, 44
        %v2433 = vpop.permute.xlu0 %2432
        %vm2434 = vcmask 359424
        %v2435 = vsel %vm2434, %v2423, %v2425
        %v2436 = vsel %vm2434, %v2425, %v2427
        %v2437 = vsel %vm2434, %v2427, %v2429
        %v2438 = vsel %vm2434, %v2429, %v2431
        %v2439 = vsel %vm2434, %v2431, %v2433
        %2445 = vst [vmem:[#allocation3 + $0x50] sm:$0xf0] %v2435
        %2446 = vst [vmem:[#allocation3 + $0x58] sm:$0xf0] %v2436
        %2447 = vst [vmem:[#allocation3 + $0x60] sm:$0xf0] %v2437
        %2448 = vst [vmem:[#allocation3 + $0x68] sm:$0xf0] %v2438
        %2449 = vst.msk [vmem:[#allocation3 + $0x70] sm:$0xf0] %vm1031, %v2439
        %v2450 = vld [vmem:[#allocation2 + $0x8] sm:$0xf]
        %v2451 = vld [vmem:[#allocation2 + $0x10] sm:$0xf]
        %v2452 = vld [vmem:[#allocation2 + $0x18] sm:$0xf]
        %v2453 = vld [vmem:[#allocation2 + $0x20] sm:$0xf]
        %v2454 = vld [vmem:[#allocation2 + $0x28] sm:$0xf]
        %v2455 = vld [vmem:[#allocation2 + $0x30] sm:$0xf]
        %2462 = vrot.lane.b32.xlu0 %v2450, 36
        %v2463 = vpop.permute.xlu0 %2462
        %2464 = vrot.lane.b32.xlu0 %v2451, 36
        %v2465 = vpop.permute.xlu0 %2464
        %2466 = vrot.lane.b32.xlu0 %v2452, 36
        %v2467 = vpop.permute.xlu0 %2466
        %2468 = vrot.lane.b32.xlu0 %v2453, 36
        %v2469 = vpop.permute.xlu0 %2468
        %2470 = vrot.lane.b32.xlu0 %v2454, 36
        %v2471 = vpop.permute.xlu0 %2470
        %2472 = vrot.lane.b32.xlu0 %v2455, 36
        %v2473 = vpop.permute.xlu0 %2472
        %v2474 = vsel %vm1730, %v2463, %v2465
        %v2475 = vsel %vm1730, %v2465, %v2467
        %v2476 = vsel %vm1730, %v2467, %v2469
        %v2477 = vsel %vm1730, %v2469, %v2471
        %v2478 = vsel %vm1730, %v2471, %v2473
        %2484 = vst [vmem:[#allocation3 + $0x78] sm:$0xf] %v2474
        %2485 = vst [vmem:[#allocation3 + $0x80] sm:$0xf] %v2475
        %2486 = vst [vmem:[#allocation3 + $0x88] sm:$0xf] %v2476
        %2487 = vst [vmem:[#allocation3 + $0x90] sm:$0xf] %v2477
        %2488 = vst.msk [vmem:[#allocation3 + $0x98] sm:$0xf] %vm990, %v2478
        %v2489 = vld [vmem:[#allocation2 + $0x8] sm:$0xf]
        %v2490 = vld [vmem:[#allocation2 + $0x10] sm:$0xf]
        %v2491 = vld [vmem:[#allocation2 + $0x18] sm:$0xf]
        %v2492 = vld [vmem:[#allocation2 + $0x20] sm:$0xf]
        %v2493 = vld [vmem:[#allocation2 + $0x28] sm:$0xf]
        %v2494 = vld [vmem:[#allocation2 + $0x30] sm:$0xf]
        %v2501 = vrot.slane %v2489, 4
        %v2502 = vrot.slane %v2490, 4
        %v2503 = vrot.slane %v2491, 4
        %v2504 = vrot.slane %v2492, 4
        %v2505 = vrot.slane %v2493, 4
        %v2506 = vrot.slane %v2494, 4
        %2507 = vrot.lane.b32.xlu0 %v2501, 35
        %v2508 = vpop.permute.xlu0 %2507
        %2509 = vrot.lane.b32.xlu0 %v2502, 35
        %v2510 = vpop.permute.xlu0 %2509
        %2511 = vrot.lane.b32.xlu0 %v2503, 35
        %v2512 = vpop.permute.xlu0 %2511
        %2513 = vrot.lane.b32.xlu0 %v2504, 35
        %v2514 = vpop.permute.xlu0 %2513
        %2515 = vrot.lane.b32.xlu0 %v2505, 35
        %v2516 = vpop.permute.xlu0 %2515
        %2517 = vrot.lane.b32.xlu0 %v2506, 35
        %v2518 = vpop.permute.xlu0 %2517
        %vm2519 = vcmask 285696
        %v2520 = vsel %vm2519, %v2508, %v2510
        %v2521 = vsel %vm2519, %v2510, %v2512
        %v2522 = vsel %vm2519, %v2512, %v2514
        %v2523 = vsel %vm2519, %v2514, %v2516
        %v2524 = vsel %vm2519, %v2516, %v2518
        %2530 = vst [vmem:[#allocation3 + $0x78] sm:$0xf0] %v2520
        %2531 = vst [vmem:[#allocation3 + $0x80] sm:$0xf0] %v2521
        %2532 = vst [vmem:[#allocation3 + $0x88] sm:$0xf0] %v2522
        %2533 = vst [vmem:[#allocation3 + $0x90] sm:$0xf0] %v2523
        %2534 = vst.msk [vmem:[#allocation3 + $0x98] sm:$0xf0] %vm1031, %v2524
        %v2535 = vld [vmem:[#allocation2 + $0x8] sm:$0xf]
        %v2536 = vld [vmem:[#allocation2 + $0x10] sm:$0xf]
        %v2537 = vld [vmem:[#allocation2 + $0x18] sm:$0xf]
        %v2538 = vld [vmem:[#allocation2 + $0x20] sm:$0xf]
        %v2539 = vld [vmem:[#allocation2 + $0x28] sm:$0xf]
        %v2540 = vld [vmem:[#allocation2 + $0x30] sm:$0xf]
        %2547 = vrot.lane.b32.xlu0 %v2535, 34
        %v2548 = vpop.permute.xlu0 %2547
        %2549 = vrot.lane.b32.xlu0 %v2536, 34
        %v2550 = vpop.permute.xlu0 %2549
        %2551 = vrot.lane.b32.xlu0 %v2537, 34
        %v2552 = vpop.permute.xlu0 %2551
        %2553 = vrot.lane.b32.xlu0 %v2538, 34
        %v2554 = vpop.permute.xlu0 %2553
        %2555 = vrot.lane.b32.xlu0 %v2539, 34
        %v2556 = vpop.permute.xlu0 %2555
        %2557 = vrot.lane.b32.xlu0 %v2540, 34
        %v2558 = vpop.permute.xlu0 %2557
        %vm2559 = vcmask 277504
        %v2560 = vsel %vm2559, %v2548, %v2550
        %v2561 = vsel %vm2559, %v2550, %v2552
        %v2562 = vsel %vm2559, %v2552, %v2554
        %v2563 = vsel %vm2559, %v2554, %v2556
        %v2564 = vsel %vm2559, %v2556, %v2558
        %2570 = vst [vmem:[#allocation3 + $0xa0] sm:$0xf] %v2560
        %2571 = vst [vmem:[#allocation3 + $0xa8] sm:$0xf] %v2561
        %2572 = vst [vmem:[#allocation3 + $0xb0] sm:$0xf] %v2562
        %2573 = vst [vmem:[#allocation3 + $0xb8] sm:$0xf] %v2563
        %2574 = vst.msk [vmem:[#allocation3 + $0xc0] sm:$0xf] %vm990, %v2564
        %s2575 = scalar_lea.vmem [#allocation7], 8
        %v2576 = vld [vmem:[%s2575] sm:$0xf]
        %v2577 = vld [vmem:[#allocation3] sm:$0xff]
        %v2578 = vld [vmem:[#allocation3 + $0x8] sm:$0xff]
        %v2579 = vld [vmem:[#allocation3 + $0x10] sm:$0xff]
        %v2580 = vld [vmem:[#allocation3 + $0x18] sm:$0xff]
        %v2581 = vld [vmem:[#allocation3 + $0x20] sm:$0xff]
        %v2582 = vld [vmem:[#allocation3 + $0x28] sm:$0xff]
        %v2583 = vld [vmem:[#allocation3 + $0x30] sm:$0xff]
        %v2584 = vld [vmem:[#allocation3 + $0x38] sm:$0xff]
        %v2585 = vld [vmem:[#allocation3 + $0x40] sm:$0xff]
        %v2586 = vld [vmem:[#allocation3 + $0x48] sm:$0xff]
        %v2587 = vld [vmem:[#allocation3 + $0x50] sm:$0xff]
        %v2588 = vld [vmem:[#allocation3 + $0x58] sm:$0xff]
        %v2589 = vld [vmem:[#allocation3 + $0x60] sm:$0xff]
        %v2590 = vld [vmem:[#allocation3 + $0x68] sm:$0xff]
        %v2591 = vld [vmem:[#allocation3 + $0x70] sm:$0xff]
        %v2592 = vld [vmem:[#allocation3 + $0x78] sm:$0xff]
        %v2593 = vld [vmem:[#allocation3 + $0x80] sm:$0xff]
        %v2594 = vld [vmem:[#allocation3 + $0x88] sm:$0xff]
        %v2595 = vld [vmem:[#allocation3 + $0x90] sm:$0xff]
        %v2596 = vld [vmem:[#allocation3 + $0x98] sm:$0xff]
        %v2597 = vld [vmem:[#allocation3 + $0xa0] sm:$0xf]
        %v2598 = vld [vmem:[#allocation3 + $0xa8] sm:$0xf]
        %v2599 = vld [vmem:[#allocation3 + $0xb0] sm:$0xf]
        %v2600 = vld [vmem:[#allocation3 + $0xb8] sm:$0xf]
        %v2601 = vld [vmem:[#allocation3 + $0xc0] sm:$0xf]
        %v2603 = vsel %vm1730, %v2576, 0
        %v2606 = vsel %vm1734, %v2597, 0
        %v2609 = vsel %vm1734, %v2598, 0
        %v2612 = vsel %vm1734, %v2599, 0
        %v2615 = vsel %vm1734, %v2600, 0
        %v2618 = vsel %vm1734, %v2601, 0
        %2620 = vmatprep.subr.mxu0 0.0
        %2621 = vmatpush1.msra.mxu0 0.0
        %2622 = vmatprep.subr.mxu0 0.0
        %2623 = vmatpush1.msra.mxu0 0.0
        %2624 = vmatprep.subr.mxu0 0.0
        %2625 = vmatpush1.msra.mxu0 0.0
        %2626 = vmatprep.subr.mxu0 0.0
        %2627 = vmatpush1.msra.mxu0 0.0
        %2628 = vmatprep.subr.mxu0 0.0
        %2629 = vmatpush1.msra.mxu0 0.0
        %2630 = vmatprep.subr.mxu0 0.0
        %2631 = vmatpush1.msra.mxu0 0.0
        %2632 = vmatprep.subr.mxu0 0.0
        %2633 = vmatpush1.msra.mxu0 0.0
        %2634 = vmatprep.subr.mxu0 0.0
        %2635 = vmatpush1.msra.mxu0 0.0
        %2636 = vmatprep.subr.mxu0 0.0
        %2637 = vmatpush1.msra.mxu0 0.0
        %2638 = vmatprep.subr.mxu0 0.0
        %2639 = vmatpush1.msra.mxu0 0.0
        %2640 = vmatprep.subr.mxu0 0.0
        %2641 = vmatpush1.msra.mxu0 0.0
        %2642 = vmatprep.subr.mxu0 %v2609
        %2643 = vmatpush1.msra.mxu0 %v2606
        %2644 = vmatprep.subr.mxu0 %v2593
        %2645 = vmatpush1.msra.mxu0 %v2592
        %2646 = vmatprep.subr.mxu0 %v2588
        %2647 = vmatpush1.msra.mxu0 %v2587
        %2648 = vmatprep.subr.mxu0 %v2583
        %2649 = vmatpush1.msra.mxu0 %v2582
        %2650 = vmatprep.subr.mxu0 %v2578
        %2651 = vmatpush1.msra.mxu0 %v2577
        %2652 = vmatprep.subr.mxu0 0.0
        %2653 = vmatpush2.msra.mxu0 0.0
        %2654 = vmatprep.subr.mxu0 0.0
        %2655 = vmatpush2.msra.mxu0 0.0
        %2656 = vmatprep.subr.mxu0 0.0
        %2657 = vmatpush2.msra.mxu0 0.0
        %2658 = vmatprep.subr.mxu0 0.0
        %2659 = vmatpush2.msra.mxu0 0.0
        %2660 = vmatprep.subr.mxu0 0.0
        %2661 = vmatpush2.msra.mxu0 0.0
        %2662 = vmatprep.subr.mxu0 0.0
        %2663 = vmatpush2.msra.mxu0 0.0
        %2664 = vmatprep.subr.mxu0 0.0
        %2665 = vmatpush2.msra.mxu0 0.0
        %2666 = vmatprep.subr.mxu0 0.0
        %2667 = vmatpush2.msra.mxu0 0.0
        %2668 = vmatprep.subr.mxu0 0.0
        %2669 = vmatpush2.msra.mxu0 0.0
        %2670 = vmatprep.subr.mxu0 0.0
        %2671 = vmatpush2.msra.mxu0 0.0
        %2672 = vmatprep.subr.mxu0 0.0
        %2673 = vmatpush2.msra.mxu0 0.0
        %2674 = vmatprep.subr.mxu0 0.0
        %2675 = vmatpush2.msra.mxu0 0.0
        %2676 = vmatprep.subr.mxu0 0.0
        %2677 = vmatpush2.msra.mxu0 0.0
        %2678 = vmatprep.subr.mxu0 0.0
        %2679 = vmatpush2.msra.mxu0 0.0
        %2680 = vmatprep.subr.mxu0 0.0
        %2681 = vmatpush2.msra.mxu0 0.0
        %2682 = vmatprep.subr.mxu0 0.0
        %2683 = vmatpush2.msra.mxu0 0.0
        %2684 = vmatprep.mubr.f32.mxu0 0.0
        %2685 = vmatmul.mubr.f32.gmra.mxu0 %v2603
        %v2686 = vpop.f32.mrf.mxu0
        %v2687 = vadd.f32 0.0, %v2686
        %v2688 = vpop.f32.mrf.mxu0
        %v2689 = vadd.f32 0.0, %v2688
        %2690 = vdwg.mxu0
        %2691 = vmatprep.subr.mxu0 0.0
        %2692 = vmatpush1.msra.mxu0 0.0
        %2693 = vmatprep.subr.mxu0 0.0
        %2694 = vmatpush1.msra.mxu0 0.0
        %2695 = vmatprep.subr.mxu0 0.0
        %2696 = vmatpush1.msra.mxu0 0.0
        %2697 = vmatprep.subr.mxu0 0.0
        %2698 = vmatpush1.msra.mxu0 0.0
        %2699 = vmatprep.subr.mxu0 0.0
        %2700 = vmatpush1.msra.mxu0 0.0
        %2701 = vmatprep.subr.mxu0 0.0
        %2702 = vmatpush1.msra.mxu0 0.0
        %2703 = vmatprep.subr.mxu0 0.0
        %2704 = vmatpush1.msra.mxu0 0.0
        %2705 = vmatprep.subr.mxu0 0.0
        %2706 = vmatpush1.msra.mxu0 0.0
        %2707 = vmatprep.subr.mxu0 0.0
        %2708 = vmatpush1.msra.mxu0 0.0
        %2709 = vmatprep.subr.mxu0 0.0
        %2710 = vmatpush1.msra.mxu0 0.0
        %2711 = vmatprep.subr.mxu0 0.0
        %2712 = vmatpush1.msra.mxu0 0.0
        %2713 = vmatprep.subr.mxu0 %v2615
        %2714 = vmatpush1.msra.mxu0 %v2612
        %2715 = vmatprep.subr.mxu0 %v2595
        %2716 = vmatpush1.msra.mxu0 %v2594
        %2717 = vmatprep.subr.mxu0 %v2590
        %2718 = vmatpush1.msra.mxu0 %v2589
        %2719 = vmatprep.subr.mxu0 %v2585
        %2720 = vmatpush1.msra.mxu0 %v2584
        %2721 = vmatprep.subr.mxu0 %v2580
        %2722 = vmatpush1.msra.mxu0 %v2579
        %2723 = vmatprep.subr.mxu0 0.0
        %2724 = vmatpush2.msra.mxu0 0.0
        %2725 = vmatprep.subr.mxu0 0.0
        %2726 = vmatpush2.msra.mxu0 0.0
        %2727 = vmatprep.subr.mxu0 0.0
        %2728 = vmatpush2.msra.mxu0 0.0
        %2729 = vmatprep.subr.mxu0 0.0
        %2730 = vmatpush2.msra.mxu0 0.0
        %2731 = vmatprep.subr.mxu0 0.0
        %2732 = vmatpush2.msra.mxu0 0.0
        %2733 = vmatprep.subr.mxu0 0.0
        %2734 = vmatpush2.msra.mxu0 0.0
        %2735 = vmatprep.subr.mxu0 0.0
        %2736 = vmatpush2.msra.mxu0 0.0
        %2737 = vmatprep.subr.mxu0 0.0
        %2738 = vmatpush2.msra.mxu0 0.0
        %2739 = vmatprep.subr.mxu0 0.0
        %2740 = vmatpush2.msra.mxu0 0.0
        %2741 = vmatprep.subr.mxu0 0.0
        %2742 = vmatpush2.msra.mxu0 0.0
        %2743 = vmatprep.subr.mxu0 0.0
        %2744 = vmatpush2.msra.mxu0 0.0
        %2745 = vmatprep.subr.mxu0 0.0
        %2746 = vmatpush2.msra.mxu0 0.0
        %2747 = vmatprep.subr.mxu0 0.0
        %2748 = vmatpush2.msra.mxu0 0.0
        %2749 = vmatprep.subr.mxu0 0.0
        %2750 = vmatpush2.msra.mxu0 0.0
        %2751 = vmatprep.subr.mxu0 0.0
        %2752 = vmatpush2.msra.mxu0 0.0
        %2753 = vmatprep.subr.mxu0 0.0
        %2754 = vmatpush2.msra.mxu0 0.0
        %2755 = vmatprep.mubr.f32.mxu0 0.0
        %2756 = vmatmul.mubr.f32.gmra.mxu0 %v2603
        %v2757 = vpop.f32.mrf.mxu0
        %v2758 = vadd.f32 0.0, %v2757
        %v2759 = vpop.f32.mrf.mxu0
        %v2760 = vadd.f32 0.0, %v2759
        %2761 = vdwg.mxu0
        %2762 = vmatprep.subr.mxu0 0.0
        %2763 = vmatpush1.msra.mxu0 0.0
        %2764 = vmatprep.subr.mxu0 0.0
        %2765 = vmatpush1.msra.mxu0 0.0
        %2766 = vmatprep.subr.mxu0 0.0
        %2767 = vmatpush1.msra.mxu0 0.0
        %2768 = vmatprep.subr.mxu0 0.0
        %2769 = vmatpush1.msra.mxu0 0.0
        %2770 = vmatprep.subr.mxu0 0.0
        %2771 = vmatpush1.msra.mxu0 0.0
        %2772 = vmatprep.subr.mxu0 0.0
        %2773 = vmatpush1.msra.mxu0 0.0
        %2774 = vmatprep.subr.mxu0 0.0
        %2775 = vmatpush1.msra.mxu0 0.0
        %2776 = vmatprep.subr.mxu0 0.0
        %2777 = vmatpush1.msra.mxu0 0.0
        %2778 = vmatprep.subr.mxu0 0.0
        %2779 = vmatpush1.msra.mxu0 0.0
        %2780 = vmatprep.subr.mxu0 0.0
        %2781 = vmatpush1.msra.mxu0 0.0
        %2782 = vmatprep.subr.mxu0 0.0
        %2783 = vmatpush1.msra.mxu0 0.0
        %2784 = vmatprep.subr.mxu0 0.0
        %2785 = vmatpush1.msra.mxu0 %v2618
        %2786 = vmatprep.subr.mxu0 0.0
        %2787 = vmatpush1.msra.mxu0 %v2596
        %2788 = vmatprep.subr.mxu0 0.0
        %2789 = vmatpush1.msra.mxu0 %v2591
        %2790 = vmatprep.subr.mxu0 0.0
        %2791 = vmatpush1.msra.mxu0 %v2586
        %2792 = vmatprep.subr.mxu0 0.0
        %2793 = vmatpush1.msra.mxu0 %v2581
        %2794 = vmatprep.subr.mxu0 0.0
        %2795 = vmatpush2.msra.mxu0 0.0
        %2796 = vmatprep.subr.mxu0 0.0
        %2797 = vmatpush2.msra.mxu0 0.0
        %2798 = vmatprep.subr.mxu0 0.0
        %2799 = vmatpush2.msra.mxu0 0.0
        %2800 = vmatprep.subr.mxu0 0.0
        %2801 = vmatpush2.msra.mxu0 0.0
        %2802 = vmatprep.subr.mxu0 0.0
        %2803 = vmatpush2.msra.mxu0 0.0
        %2804 = vmatprep.subr.mxu0 0.0
        %2805 = vmatpush2.msra.mxu0 0.0
        %2806 = vmatprep.subr.mxu0 0.0
        %2807 = vmatpush2.msra.mxu0 0.0
        %2808 = vmatprep.subr.mxu0 0.0
        %2809 = vmatpush2.msra.mxu0 0.0
        %2810 = vmatprep.subr.mxu0 0.0
        %2811 = vmatpush2.msra.mxu0 0.0
        %2812 = vmatprep.subr.mxu0 0.0
        %2813 = vmatpush2.msra.mxu0 0.0
        %2814 = vmatprep.subr.mxu0 0.0
        %2815 = vmatpush2.msra.mxu0 0.0
        %2816 = vmatprep.subr.mxu0 0.0
        %2817 = vmatpush2.msra.mxu0 0.0
        %2818 = vmatprep.subr.mxu0 0.0
        %2819 = vmatpush2.msra.mxu0 0.0
        %2820 = vmatprep.subr.mxu0 0.0
        %2821 = vmatpush2.msra.mxu0 0.0
        %2822 = vmatprep.subr.mxu0 0.0
        %2823 = vmatpush2.msra.mxu0 0.0
        %2824 = vmatprep.subr.mxu0 0.0
        %2825 = vmatpush2.msra.mxu0 0.0
        %2826 = vmatprep.mubr.f32.mxu0 0.0
        %2827 = vmatmul.mubr.f32.gmra.mxu0 %v2603
        %v2828 = vpop.f32.mrf.mxu0
        %v2829 = vadd.f32 0.0, %v2828
        %v2830 = vpop.f32.mrf.mxu0
        %2831 = vdwg.mxu0
        %v2832 = vadd.f32 %v2047, %v2687
        %v2833 = vadd.f32 %v2049, %v2689
        %v2834 = vadd.f32 %v2118, %v2758
        %v2835 = vadd.f32 %v2120, %v2760
        %v2836 = vadd.f32 %v2189, %v2829
        %v2837 = vld [vmem:[%s2] sm:$0xf]
        %2839 = vset.pattern.permute.xlu0 0
        %2840 = vperm.xlu0 %2839, %v2837
        %v2841 = vpop.permute.xlu0 %2840
        %v2843 = vadd.f32 %v2832, %v2841
        %v2844 = vadd.f32 %v2833, %v2841
        %v2845 = vadd.f32 %v2834, %v2841
        %v2846 = vadd.f32 %v2835, %v2841
        %v2847 = vadd.f32 %v2836, %v2841
        %v2848 = vmax.f32 %v2843, 0.0
        %v2849 = vmax.f32 %v2844, 0.0
        %v2850 = vmax.f32 %v2845, 0.0
        %v2851 = vmax.f32 %v2846, 0.0
        %v2852 = vmax.f32 %v2847, 0.0
        %v2854 = vlaneseq
        %v2855 = vshrl.u32 %v2854, 7
        %v2856 = vsub.s32 0, %v2855
        %v2857 = vrot.slane %v980, %v2856
        %v2858 = vlaneseq
        %v2859 = vshrl.u32 %v2858, 7
        %v2860 = vsub.s32 1, %v2859
        %v2861 = vrot.slane %v980, %v2860
        %v2862 = vlaneseq
        %v2863 = vshrl.u32 %v2862, 7
        %v2864 = vsub.s32 2, %v2863
        %v2865 = vrot.slane %v980, %v2864
        %v2866 = vlaneseq
        %v2867 = vshrl.u32 %v2866, 7
        %v2868 = vsub.s32 3, %v2867
        %v2869 = vrot.slane %v980, %v2868
        %v2870 = vlaneseq
        %v2871 = vshrl.u32 %v2870, 7
        %v2872 = vsub.s32 4, %v2871
        %v2873 = vrot.slane %v980, %v2872
        %v2879 = vmul.f32 %v2848, %v2857
        %v2880 = vmul.f32 %v2849, %v2861
        %v2881 = vmul.f32 %v2850, %v2865
        %v2882 = vmul.f32 %v2851, %v2869
        %v2883 = vmul.f32 %v2852, %v2873
        %2889 = vrot.lane.b32.xlu0 %v2879, 111
        %v2890 = vpop.permute.xlu0 %2889
        %2891 = vrot.lane.b32.xlu0 %v2880, 111
        %v2892 = vpop.permute.xlu0 %2891
        %2893 = vrot.lane.b32.xlu0 %v2881, 111
        %v2894 = vpop.permute.xlu0 %2893
        %2895 = vrot.lane.b32.xlu0 %v2882, 111
        %v2896 = vpop.permute.xlu0 %2895
        %2897 = vrot.lane.b32.xlu0 %v2883, 111
        %v2898 = vpop.permute.xlu0 %2897
        %vm2899 = vcmask 908288
        %v2900 = vsel %vm2899, %v2890, %v2892
        %v2901 = vsel %vm2899, %v2892, %v2894
        %v2902 = vsel %vm2899, %v2894, %v2896
        %v2903 = vsel %vm2899, %v2896, %v2898
        %vm2910 = vcmask 1044344
        %2911 = vst.msk [vmem:[#allocation2] sm:$0xf] %vm2910, %v2890
        %2912 = vst [vmem:[#allocation2 + $0x8] sm:$0xf] %v2900
        %2913 = vst [vmem:[#allocation2 + $0x10] sm:$0xf] %v2901
        %2914 = vst [vmem:[#allocation2 + $0x18] sm:$0xf] %v2902
        %2915 = vst [vmem:[#allocation2 + $0x20] sm:$0xf] %v2903
        %vm2916 = vcmask 576512
        %2917 = vst.msk [vmem:[#allocation2 + $0x28] sm:$0xf] %vm2916, %v2898
        %v2918 = vld [vmem:[#allocation2] sm:$0xf]
        %v2919 = vld [vmem:[#allocation2 + $0x8] sm:$0xf]
        %v2920 = vld [vmem:[#allocation2 + $0x10] sm:$0xf]
        %v2921 = vld [vmem:[#allocation2 + $0x18] sm:$0xf]
        %v2922 = vld [vmem:[#allocation2 + $0x20] sm:$0xf]
        %2923 = vst [vmem:[#allocation3] sm:$0xf] %v2918
        %2924 = vst [vmem:[#allocation3 + $0x8] sm:$0xf] %v2919
        %2925 = vst [vmem:[#allocation3 + $0x10] sm:$0xf] %v2920
        %2926 = vst [vmem:[#allocation3 + $0x18] sm:$0xf] %v2921
        %2927 = vst.msk [vmem:[#allocation3 + $0x20] sm:$0xf] %vm990, %v2922
        %v2928 = vld [vmem:[#allocation2] sm:$0xf]
        %v2929 = vld [vmem:[#allocation2 + $0x8] sm:$0xf]
        %v2930 = vld [vmem:[#allocation2 + $0x10] sm:$0xf]
        %v2931 = vld [vmem:[#allocation2 + $0x18] sm:$0xf]
        %v2932 = vld [vmem:[#allocation2 + $0x20] sm:$0xf]
        %v2938 = vrot.slane %v2928, 4
        %v2939 = vrot.slane %v2929, 4
        %v2940 = vrot.slane %v2930, 4
        %v2941 = vrot.slane %v2931, 4
        %v2942 = vrot.slane %v2932, 4
        %2943 = vrot.lane.b32.xlu0 %v2938, 127
        %v2944 = vpop.permute.xlu0 %2943
        %2945 = vrot.lane.b32.xlu0 %v2939, 127
        %v2946 = vpop.permute.xlu0 %2945
        %2947 = vrot.lane.b32.xlu0 %v2940, 127
        %v2948 = vpop.permute.xlu0 %2947
        %2949 = vrot.lane.b32.xlu0 %v2941, 127
        %v2950 = vpop.permute.xlu0 %2949
        %2951 = vrot.lane.b32.xlu0 %v2942, 127
        %v2952 = vpop.permute.xlu0 %2951
        %v2953 = vsel %vm1017, %v2944, %v2946
        %v2954 = vsel %vm1017, %v2946, %v2948
        %v2955 = vsel %vm1017, %v2948, %v2950
        %v2956 = vsel %vm1017, %v2950, %v2952
        %2962 = vst [vmem:[#allocation3] sm:$0xf0] %v2953
        %2963 = vst [vmem:[#allocation3 + $0x8] sm:$0xf0] %v2954
        %2964 = vst [vmem:[#allocation3 + $0x10] sm:$0xf0] %v2955
        %2965 = vst [vmem:[#allocation3 + $0x18] sm:$0xf0] %v2956
        %2966 = vst.msk [vmem:[#allocation3 + $0x20] sm:$0xf0] %vm1031, %v2952
        %v2967 = vld [vmem:[#allocation2] sm:$0xf]
        %v2968 = vld [vmem:[#allocation2 + $0x8] sm:$0xf]
        %v2969 = vld [vmem:[#allocation2 + $0x10] sm:$0xf]
        %v2970 = vld [vmem:[#allocation2 + $0x18] sm:$0xf]
        %v2971 = vld [vmem:[#allocation2 + $0x20] sm:$0xf]
        %2977 = vrot.lane.b32.xlu0 %v2967, 126
        %v2978 = vpop.permute.xlu0 %2977
        %2979 = vrot.lane.b32.xlu0 %v2968, 126
        %v2980 = vpop.permute.xlu0 %2979
        %2981 = vrot.lane.b32.xlu0 %v2969, 126
        %v2982 = vpop.permute.xlu0 %2981
        %2983 = vrot.lane.b32.xlu0 %v2970, 126
        %v2984 = vpop.permute.xlu0 %2983
        %2985 = vrot.lane.b32.xlu0 %v2971, 126
        %v2986 = vpop.permute.xlu0 %2985
        %v2987 = vsel %vm1053, %v2978, %v2980
        %v2988 = vsel %vm1053, %v2980, %v2982
        %v2989 = vsel %vm1053, %v2982, %v2984
        %v2990 = vsel %vm1053, %v2984, %v2986
        %2996 = vst [vmem:[#allocation3 + $0x28] sm:$0xf] %v2987
        %2997 = vst [vmem:[#allocation3 + $0x30] sm:$0xf] %v2988
        %2998 = vst [vmem:[#allocation3 + $0x38] sm:$0xf] %v2989
        %2999 = vst [vmem:[#allocation3 + $0x40] sm:$0xf] %v2990
        %3000 = vst.msk [vmem:[#allocation3 + $0x48] sm:$0xf] %vm990, %v2986
        %v3001 = vld [vmem:[#allocation2] sm:$0xf]
        %v3002 = vld [vmem:[#allocation2 + $0x8] sm:$0xf]
        %v3003 = vld [vmem:[#allocation2 + $0x10] sm:$0xf]
        %v3004 = vld [vmem:[#allocation2 + $0x18] sm:$0xf]
        %v3005 = vld [vmem:[#allocation2 + $0x20] sm:$0xf]
        %v3011 = vrot.slane %v3001, 4
        %v3012 = vrot.slane %v3002, 4
        %v3013 = vrot.slane %v3003, 4
        %v3014 = vrot.slane %v3004, 4
        %v3015 = vrot.slane %v3005, 4
        %3016 = vrot.lane.b32.xlu0 %v3011, 118
        %v3017 = vpop.permute.xlu0 %3016
        %3018 = vrot.lane.b32.xlu0 %v3012, 118
        %v3019 = vpop.permute.xlu0 %3018
        %3020 = vrot.lane.b32.xlu0 %v3013, 118
        %v3021 = vpop.permute.xlu0 %3020
        %3022 = vrot.lane.b32.xlu0 %v3014, 118
        %v3023 = vpop.permute.xlu0 %3022
        %3024 = vrot.lane.b32.xlu0 %v3015, 118
        %v3025 = vpop.permute.xlu0 %3024
        %v3026 = vsel %vm1093, %v3017, %v3019
        %v3027 = vsel %vm1093, %v3019, %v3021
        %v3028 = vsel %vm1093, %v3021, %v3023
        %v3029 = vsel %vm1093, %v3023, %v3025
        %3035 = vst [vmem:[#allocation3 + $0x28] sm:$0xf0] %v3026
        %3036 = vst [vmem:[#allocation3 + $0x30] sm:$0xf0] %v3027
        %3037 = vst [vmem:[#allocation3 + $0x38] sm:$0xf0] %v3028
        %3038 = vst [vmem:[#allocation3 + $0x40] sm:$0xf0] %v3029
        %3039 = vst.msk [vmem:[#allocation3 + $0x48] sm:$0xf0] %vm1031, %v3025
        %v3040 = vld [vmem:[#allocation2] sm:$0xf]
        %v3041 = vld [vmem:[#allocation2 + $0x8] sm:$0xf]
        %v3042 = vld [vmem:[#allocation2 + $0x10] sm:$0xf]
        %v3043 = vld [vmem:[#allocation2 + $0x18] sm:$0xf]
        %v3044 = vld [vmem:[#allocation2 + $0x20] sm:$0xf]
        %3050 = vrot.lane.b32.xlu0 %v3040, 117
        %v3051 = vpop.permute.xlu0 %3050
        %3052 = vrot.lane.b32.xlu0 %v3041, 117
        %v3053 = vpop.permute.xlu0 %3052
        %3054 = vrot.lane.b32.xlu0 %v3042, 117
        %v3055 = vpop.permute.xlu0 %3054
        %3056 = vrot.lane.b32.xlu0 %v3043, 117
        %v3057 = vpop.permute.xlu0 %3056
        %3058 = vrot.lane.b32.xlu0 %v3044, 117
        %v3059 = vpop.permute.xlu0 %3058
        %v3060 = vsel %vm1128, %v3051, %v3053
        %v3061 = vsel %vm1128, %v3053, %v3055
        %v3062 = vsel %vm1128, %v3055, %v3057
        %v3063 = vsel %vm1128, %v3057, %v3059
        %3069 = vst [vmem:[#allocation3 + $0x50] sm:$0xf] %v3060
        %3070 = vst [vmem:[#allocation3 + $0x58] sm:$0xf] %v3061
        %3071 = vst [vmem:[#allocation3 + $0x60] sm:$0xf] %v3062
        %3072 = vst [vmem:[#allocation3 + $0x68] sm:$0xf] %v3063
        %3073 = vst.msk [vmem:[#allocation3 + $0x70] sm:$0xf] %vm990, %v3059
        %v3074 = vld [vmem:[#allocation2] sm:$0xf]
        %v3075 = vld [vmem:[#allocation2 + $0x8] sm:$0xf]
        %v3076 = vld [vmem:[#allocation2 + $0x10] sm:$0xf]
        %v3077 = vld [vmem:[#allocation2 + $0x18] sm:$0xf]
        %v3078 = vld [vmem:[#allocation2 + $0x20] sm:$0xf]
        %v3084 = vrot.slane %v3074, 4
        %v3085 = vrot.slane %v3075, 4
        %v3086 = vrot.slane %v3076, 4
        %v3087 = vrot.slane %v3077, 4
        %v3088 = vrot.slane %v3078, 4
        %3089 = vrot.lane.b32.xlu0 %v3084, 116
        %v3090 = vpop.permute.xlu0 %3089
        %3091 = vrot.lane.b32.xlu0 %v3085, 116
        %v3092 = vpop.permute.xlu0 %3091
        %3093 = vrot.lane.b32.xlu0 %v3086, 116
        %v3094 = vpop.permute.xlu0 %3093
        %3095 = vrot.lane.b32.xlu0 %v3087, 116
        %v3096 = vpop.permute.xlu0 %3095
        %3097 = vrot.lane.b32.xlu0 %v3088, 116
        %v3098 = vpop.permute.xlu0 %3097
        %v3099 = vsel %vm1168, %v3090, %v3092
        %v3100 = vsel %vm1168, %v3092, %v3094
        %v3101 = vsel %vm1168, %v3094, %v3096
        %v3102 = vsel %vm1168, %v3096, %v3098
        %3108 = vst [vmem:[#allocation3 + $0x50] sm:$0xf0] %v3099
        %3109 = vst [vmem:[#allocation3 + $0x58] sm:$0xf0] %v3100
        %3110 = vst [vmem:[#allocation3 + $0x60] sm:$0xf0] %v3101
        %3111 = vst [vmem:[#allocation3 + $0x68] sm:$0xf0] %v3102
        %3112 = vst.msk [vmem:[#allocation3 + $0x70] sm:$0xf0] %vm1031, %v3098
        %v3113 = vld [vmem:[#allocation2] sm:$0xf]
        %v3114 = vld [vmem:[#allocation2 + $0x8] sm:$0xf]
        %v3115 = vld [vmem:[#allocation2 + $0x10] sm:$0xf]
        %v3116 = vld [vmem:[#allocation2 + $0x18] sm:$0xf]
        %v3117 = vld [vmem:[#allocation2 + $0x20] sm:$0xf]
        %3123 = vrot.lane.b32.xlu0 %v3113, 108
        %v3124 = vpop.permute.xlu0 %3123
        %3125 = vrot.lane.b32.xlu0 %v3114, 108
        %v3126 = vpop.permute.xlu0 %3125
        %3127 = vrot.lane.b32.xlu0 %v3115, 108
        %v3128 = vpop.permute.xlu0 %3127
        %3129 = vrot.lane.b32.xlu0 %v3116, 108
        %v3130 = vpop.permute.xlu0 %3129
        %3131 = vrot.lane.b32.xlu0 %v3117, 108
        %v3132 = vpop.permute.xlu0 %3131
        %v3133 = vsel %vm1203, %v3124, %v3126
        %v3134 = vsel %vm1203, %v3126, %v3128
        %v3135 = vsel %vm1203, %v3128, %v3130
        %v3136 = vsel %vm1203, %v3130, %v3132
        %3142 = vst [vmem:[#allocation3 + $0x78] sm:$0xf] %v3133
        %3143 = vst [vmem:[#allocation3 + $0x80] sm:$0xf] %v3134
        %3144 = vst [vmem:[#allocation3 + $0x88] sm:$0xf] %v3135
        %3145 = vst [vmem:[#allocation3 + $0x90] sm:$0xf] %v3136
        %3146 = vst.msk [vmem:[#allocation3 + $0x98] sm:$0xf] %vm990, %v3132
        %v3147 = vld [vmem:[#allocation2] sm:$0xf]
        %v3148 = vld [vmem:[#allocation2 + $0x8] sm:$0xf]
        %v3149 = vld [vmem:[#allocation2 + $0x10] sm:$0xf]
        %v3150 = vld [vmem:[#allocation2 + $0x18] sm:$0xf]
        %v3151 = vld [vmem:[#allocation2 + $0x20] sm:$0xf]
        %v3157 = vrot.slane %v3147, 4
        %v3158 = vrot.slane %v3148, 4
        %v3159 = vrot.slane %v3149, 4
        %v3160 = vrot.slane %v3150, 4
        %v3161 = vrot.slane %v3151, 4
        %3162 = vrot.lane.b32.xlu0 %v3157, 107
        %v3163 = vpop.permute.xlu0 %3162
        %3164 = vrot.lane.b32.xlu0 %v3158, 107
        %v3165 = vpop.permute.xlu0 %3164
        %3166 = vrot.lane.b32.xlu0 %v3159, 107
        %v3167 = vpop.permute.xlu0 %3166
        %3168 = vrot.lane.b32.xlu0 %v3160, 107
        %v3169 = vpop.permute.xlu0 %3168
        %3170 = vrot.lane.b32.xlu0 %v3161, 107
        %v3171 = vpop.permute.xlu0 %3170
        %v3172 = vsel %vm1243, %v3163, %v3165
        %v3173 = vsel %vm1243, %v3165, %v3167
        %v3174 = vsel %vm1243, %v3167, %v3169
        %v3175 = vsel %vm1243, %v3169, %v3171
        %3181 = vst [vmem:[#allocation3 + $0x78] sm:$0xf0] %v3172
        %3182 = vst [vmem:[#allocation3 + $0x80] sm:$0xf0] %v3173
        %3183 = vst [vmem:[#allocation3 + $0x88] sm:$0xf0] %v3174
        %3184 = vst [vmem:[#allocation3 + $0x90] sm:$0xf0] %v3175
        %3185 = vst.msk [vmem:[#allocation3 + $0x98] sm:$0xf0] %vm1031, %v3171
        %v3186 = vld [vmem:[#allocation2] sm:$0xf]
        %v3187 = vld [vmem:[#allocation2 + $0x8] sm:$0xf]
        %v3188 = vld [vmem:[#allocation2 + $0x10] sm:$0xf]
        %v3189 = vld [vmem:[#allocation2 + $0x18] sm:$0xf]
        %v3190 = vld [vmem:[#allocation2 + $0x20] sm:$0xf]
        %3196 = vrot.lane.b32.xlu0 %v3186, 106
        %v3197 = vpop.permute.xlu0 %3196
        %3198 = vrot.lane.b32.xlu0 %v3187, 106
        %v3199 = vpop.permute.xlu0 %3198
        %3200 = vrot.lane.b32.xlu0 %v3188, 106
        %v3201 = vpop.permute.xlu0 %3200
        %3202 = vrot.lane.b32.xlu0 %v3189, 106
        %v3203 = vpop.permute.xlu0 %3202
        %3204 = vrot.lane.b32.xlu0 %v3190, 106
        %v3205 = vpop.permute.xlu0 %3204
        %v3206 = vsel %vm1278, %v3197, %v3199
        %v3207 = vsel %vm1278, %v3199, %v3201
        %v3208 = vsel %vm1278, %v3201, %v3203
        %v3209 = vsel %vm1278, %v3203, %v3205
        %3215 = vst [vmem:[#allocation3 + $0xa0] sm:$0xf] %v3206
        %3216 = vst [vmem:[#allocation3 + $0xa8] sm:$0xf] %v3207
        %3217 = vst [vmem:[#allocation3 + $0xb0] sm:$0xf] %v3208
        %3218 = vst [vmem:[#allocation3 + $0xb8] sm:$0xf] %v3209
        %3219 = vst.msk [vmem:[#allocation3 + $0xc0] sm:$0xf] %vm990, %v3205
        %v3220 = vld [vmem:[%s3] sm:$0xff]
        %v3221 = vld [vmem:[#allocation3] sm:$0xff]
        %v3222 = vld [vmem:[#allocation3 + $0x8] sm:$0xff]
        %v3223 = vld [vmem:[#allocation3 + $0x10] sm:$0xff]
        %v3224 = vld [vmem:[#allocation3 + $0x18] sm:$0xff]
        %v3225 = vld [vmem:[#allocation3 + $0x20] sm:$0xff]
        %v3226 = vld [vmem:[#allocation3 + $0x28] sm:$0xff]
        %v3227 = vld [vmem:[#allocation3 + $0x30] sm:$0xff]
        %v3228 = vld [vmem:[#allocation3 + $0x38] sm:$0xff]
        %v3229 = vld [vmem:[#allocation3 + $0x40] sm:$0xff]
        %v3230 = vld [vmem:[#allocation3 + $0x48] sm:$0xff]
        %v3231 = vld [vmem:[#allocation3 + $0x50] sm:$0xff]
        %v3232 = vld [vmem:[#allocation3 + $0x58] sm:$0xff]
        %v3233 = vld [vmem:[#allocation3 + $0x60] sm:$0xff]
        %v3234 = vld [vmem:[#allocation3 + $0x68] sm:$0xff]
        %v3235 = vld [vmem:[#allocation3 + $0x70] sm:$0xff]
        %v3236 = vld [vmem:[#allocation3 + $0x78] sm:$0xff]
        %v3237 = vld [vmem:[#allocation3 + $0x80] sm:$0xff]
        %v3238 = vld [vmem:[#allocation3 + $0x88] sm:$0xff]
        %v3239 = vld [vmem:[#allocation3 + $0x90] sm:$0xff]
        %v3240 = vld [vmem:[#allocation3 + $0x98] sm:$0xff]
        %v3241 = vld [vmem:[#allocation3 + $0xa0] sm:$0xf]
        %v3242 = vld [vmem:[#allocation3 + $0xa8] sm:$0xf]
        %v3243 = vld [vmem:[#allocation3 + $0xb0] sm:$0xf]
        %v3244 = vld [vmem:[#allocation3 + $0xb8] sm:$0xf]
        %v3245 = vld [vmem:[#allocation3 + $0xc0] sm:$0xf]
        %v3246 = vld [vmem:[#allocation2] sm:$0xf]
        %v3247 = vld [vmem:[#allocation2 + $0x8] sm:$0xf]
        %v3248 = vld [vmem:[#allocation2 + $0x10] sm:$0xf]
        %v3249 = vld [vmem:[#allocation2 + $0x18] sm:$0xf]
        %v3250 = vld [vmem:[#allocation2 + $0x20] sm:$0xf]
        %v3251 = vld [vmem:[#allocation2 + $0x28] sm:$0xf]
        %3258 = vrot.lane.b32.xlu0 %v3246, 28
        %v3259 = vpop.permute.xlu0 %3258
        %3260 = vrot.lane.b32.xlu0 %v3247, 28
        %v3261 = vpop.permute.xlu0 %3260
        %3262 = vrot.lane.b32.xlu0 %v3248, 28
        %v3263 = vpop.permute.xlu0 %3262
        %3264 = vrot.lane.b32.xlu0 %v3249, 28
        %v3265 = vpop.permute.xlu0 %3264
        %3266 = vrot.lane.b32.xlu0 %v3250, 28
        %v3267 = vpop.permute.xlu0 %3266
        %3268 = vrot.lane.b32.xlu0 %v3251, 28
        %v3269 = vpop.permute.xlu0 %3268
        %v3270 = vsel %vm1343, %v3259, %v3261
        %v3271 = vsel %vm1343, %v3261, %v3263
        %v3272 = vsel %vm1343, %v3263, %v3265
        %v3273 = vsel %vm1343, %v3265, %v3267
        %v3274 = vsel %vm1343, %v3267, %v3269
        %3280 = vst [vmem:[#allocation3] sm:$0xf] %v3270
        %3281 = vst [vmem:[#allocation3 + $0x8] sm:$0xf] %v3271
        %3282 = vst [vmem:[#allocation3 + $0x10] sm:$0xf] %v3272
        %3283 = vst [vmem:[#allocation3 + $0x18] sm:$0xf] %v3273
        %3284 = vst.msk [vmem:[#allocation3 + $0x20] sm:$0xf] %vm990, %v3274
        %v3285 = vld [vmem:[#allocation2] sm:$0xf]
        %v3286 = vld [vmem:[#allocation2 + $0x8] sm:$0xf]
        %v3287 = vld [vmem:[#allocation2 + $0x10] sm:$0xf]
        %v3288 = vld [vmem:[#allocation2 + $0x18] sm:$0xf]
        %v3289 = vld [vmem:[#allocation2 + $0x20] sm:$0xf]
        %v3290 = vld [vmem:[#allocation2 + $0x28] sm:$0xf]
        %v3297 = vrot.slane %v3285, 4
        %v3298 = vrot.slane %v3286, 4
        %v3299 = vrot.slane %v3287, 4
        %v3300 = vrot.slane %v3288, 4
        %v3301 = vrot.slane %v3289, 4
        %v3302 = vrot.slane %v3290, 4
        %3303 = vrot.lane.b32.xlu0 %v3297, 27
        %v3304 = vpop.permute.xlu0 %3303
        %3305 = vrot.lane.b32.xlu0 %v3298, 27
        %v3306 = vpop.permute.xlu0 %3305
        %3307 = vrot.lane.b32.xlu0 %v3299, 27
        %v3308 = vpop.permute.xlu0 %3307
        %3309 = vrot.lane.b32.xlu0 %v3300, 27
        %v3310 = vpop.permute.xlu0 %3309
        %3311 = vrot.lane.b32.xlu0 %v3301, 27
        %v3312 = vpop.permute.xlu0 %3311
        %3313 = vrot.lane.b32.xlu0 %v3302, 27
        %v3314 = vpop.permute.xlu0 %3313
        %v3315 = vsel %vm1389, %v3304, %v3306
        %v3316 = vsel %vm1389, %v3306, %v3308
        %v3317 = vsel %vm1389, %v3308, %v3310
        %v3318 = vsel %vm1389, %v3310, %v3312
        %v3319 = vsel %vm1389, %v3312, %v3314
        %3325 = vst [vmem:[#allocation3] sm:$0xf0] %v3315
        %3326 = vst [vmem:[#allocation3 + $0x8] sm:$0xf0] %v3316
        %3327 = vst [vmem:[#allocation3 + $0x10] sm:$0xf0] %v3317
        %3328 = vst [vmem:[#allocation3 + $0x18] sm:$0xf0] %v3318
        %3329 = vst.msk [vmem:[#allocation3 + $0x20] sm:$0xf0] %vm1031, %v3319
        %v3330 = vld [vmem:[#allocation2] sm:$0xf]
        %v3331 = vld [vmem:[#allocation2 + $0x8] sm:$0xf]
        %v3332 = vld [vmem:[#allocation2 + $0x10] sm:$0xf]
        %v3333 = vld [vmem:[#allocation2 + $0x18] sm:$0xf]
        %v3334 = vld [vmem:[#allocation2 + $0x20] sm:$0xf]
        %v3335 = vld [vmem:[#allocation2 + $0x28] sm:$0xf]
        %3342 = vrot.lane.b32.xlu0 %v3330, 26
        %v3343 = vpop.permute.xlu0 %3342
        %3344 = vrot.lane.b32.xlu0 %v3331, 26
        %v3345 = vpop.permute.xlu0 %3344
        %3346 = vrot.lane.b32.xlu0 %v3332, 26
        %v3347 = vpop.permute.xlu0 %3346
        %3348 = vrot.lane.b32.xlu0 %v3333, 26
        %v3349 = vpop.permute.xlu0 %3348
        %3350 = vrot.lane.b32.xlu0 %v3334, 26
        %v3351 = vpop.permute.xlu0 %3350
        %3352 = vrot.lane.b32.xlu0 %v3335, 26
        %v3353 = vpop.permute.xlu0 %3352
        %v3354 = vsel %vm1429, %v3343, %v3345
        %v3355 = vsel %vm1429, %v3345, %v3347
        %v3356 = vsel %vm1429, %v3347, %v3349
        %v3357 = vsel %vm1429, %v3349, %v3351
        %v3358 = vsel %vm1429, %v3351, %v3353
        %3364 = vst [vmem:[#allocation3 + $0x28] sm:$0xf] %v3354
        %3365 = vst [vmem:[#allocation3 + $0x30] sm:$0xf] %v3355
        %3366 = vst [vmem:[#allocation3 + $0x38] sm:$0xf] %v3356
        %3367 = vst [vmem:[#allocation3 + $0x40] sm:$0xf] %v3357
        %3368 = vst.msk [vmem:[#allocation3 + $0x48] sm:$0xf] %vm990, %v3358
        %v3369 = vld [vmem:[#allocation2] sm:$0xf]
        %v3370 = vld [vmem:[#allocation2 + $0x8] sm:$0xf]
        %v3371 = vld [vmem:[#allocation2 + $0x10] sm:$0xf]
        %v3372 = vld [vmem:[#allocation2 + $0x18] sm:$0xf]
        %v3373 = vld [vmem:[#allocation2 + $0x20] sm:$0xf]
        %v3374 = vld [vmem:[#allocation2 + $0x28] sm:$0xf]
        %v3381 = vrot.slane %v3369, 4
        %v3382 = vrot.slane %v3370, 4
        %v3383 = vrot.slane %v3371, 4
        %v3384 = vrot.slane %v3372, 4
        %v3385 = vrot.slane %v3373, 4
        %v3386 = vrot.slane %v3374, 4
        %3387 = vrot.lane.b32.xlu0 %v3381, 18
        %v3388 = vpop.permute.xlu0 %3387
        %3389 = vrot.lane.b32.xlu0 %v3382, 18
        %v3390 = vpop.permute.xlu0 %3389
        %3391 = vrot.lane.b32.xlu0 %v3383, 18
        %v3392 = vpop.permute.xlu0 %3391
        %3393 = vrot.lane.b32.xlu0 %v3384, 18
        %v3394 = vpop.permute.xlu0 %3393
        %3395 = vrot.lane.b32.xlu0 %v3385, 18
        %v3396 = vpop.permute.xlu0 %3395
        %3397 = vrot.lane.b32.xlu0 %v3386, 18
        %v3398 = vpop.permute.xlu0 %3397
        %v3399 = vsel %vm1475, %v3388, %v3390
        %v3400 = vsel %vm1475, %v3390, %v3392
        %v3401 = vsel %vm1475, %v3392, %v3394
        %v3402 = vsel %vm1475, %v3394, %v3396
        %v3403 = vsel %vm1475, %v3396, %v3398
        %3409 = vst [vmem:[#allocation3 + $0x28] sm:$0xf0] %v3399
        %3410 = vst [vmem:[#allocation3 + $0x30] sm:$0xf0] %v3400
        %3411 = vst [vmem:[#allocation3 + $0x38] sm:$0xf0] %v3401
        %3412 = vst [vmem:[#allocation3 + $0x40] sm:$0xf0] %v3402
        %3413 = vst.msk [vmem:[#allocation3 + $0x48] sm:$0xf0] %vm1031, %v3403
        %v3414 = vld [vmem:[#allocation2] sm:$0xf]
        %v3415 = vld [vmem:[#allocation2 + $0x8] sm:$0xf]
        %v3416 = vld [vmem:[#allocation2 + $0x10] sm:$0xf]
        %v3417 = vld [vmem:[#allocation2 + $0x18] sm:$0xf]
        %v3418 = vld [vmem:[#allocation2 + $0x20] sm:$0xf]
        %v3419 = vld [vmem:[#allocation2 + $0x28] sm:$0xf]
        %3426 = vrot.lane.b32.xlu0 %v3414, 17
        %v3427 = vpop.permute.xlu0 %3426
        %3428 = vrot.lane.b32.xlu0 %v3415, 17
        %v3429 = vpop.permute.xlu0 %3428
        %3430 = vrot.lane.b32.xlu0 %v3416, 17
        %v3431 = vpop.permute.xlu0 %3430
        %3432 = vrot.lane.b32.xlu0 %v3417, 17
        %v3433 = vpop.permute.xlu0 %3432
        %3434 = vrot.lane.b32.xlu0 %v3418, 17
        %v3435 = vpop.permute.xlu0 %3434
        %3436 = vrot.lane.b32.xlu0 %v3419, 17
        %v3437 = vpop.permute.xlu0 %3436
        %v3438 = vsel %vm1515, %v3427, %v3429
        %v3439 = vsel %vm1515, %v3429, %v3431
        %v3440 = vsel %vm1515, %v3431, %v3433
        %v3441 = vsel %vm1515, %v3433, %v3435
        %v3442 = vsel %vm1515, %v3435, %v3437
        %3448 = vst [vmem:[#allocation3 + $0x50] sm:$0xf] %v3438
        %3449 = vst [vmem:[#allocation3 + $0x58] sm:$0xf] %v3439
        %3450 = vst [vmem:[#allocation3 + $0x60] sm:$0xf] %v3440
        %3451 = vst [vmem:[#allocation3 + $0x68] sm:$0xf] %v3441
        %3452 = vst.msk [vmem:[#allocation3 + $0x70] sm:$0xf] %vm990, %v3442
        %v3453 = vld [vmem:[#allocation2] sm:$0xf]
        %v3454 = vld [vmem:[#allocation2 + $0x8] sm:$0xf]
        %v3455 = vld [vmem:[#allocation2 + $0x10] sm:$0xf]
        %v3456 = vld [vmem:[#allocation2 + $0x18] sm:$0xf]
        %v3457 = vld [vmem:[#allocation2 + $0x20] sm:$0xf]
        %v3458 = vld [vmem:[#allocation2 + $0x28] sm:$0xf]
        %v3465 = vrot.slane %v3453, 4
        %v3466 = vrot.slane %v3454, 4
        %v3467 = vrot.slane %v3455, 4
        %v3468 = vrot.slane %v3456, 4
        %v3469 = vrot.slane %v3457, 4
        %v3470 = vrot.slane %v3458, 4
        %3471 = vrot.lane.b32.xlu0 %v3465, 16
        %v3472 = vpop.permute.xlu0 %3471
        %3473 = vrot.lane.b32.xlu0 %v3466, 16
        %v3474 = vpop.permute.xlu0 %3473
        %3475 = vrot.lane.b32.xlu0 %v3467, 16
        %v3476 = vpop.permute.xlu0 %3475
        %3477 = vrot.lane.b32.xlu0 %v3468, 16
        %v3478 = vpop.permute.xlu0 %3477
        %3479 = vrot.lane.b32.xlu0 %v3469, 16
        %v3480 = vpop.permute.xlu0 %3479
        %3481 = vrot.lane.b32.xlu0 %v3470, 16
        %v3482 = vpop.permute.xlu0 %3481
        %v3483 = vsel %vm1561, %v3472, %v3474
        %v3484 = vsel %vm1561, %v3474, %v3476
        %v3485 = vsel %vm1561, %v3476, %v3478
        %v3486 = vsel %vm1561, %v3478, %v3480
        %v3487 = vsel %vm1561, %v3480, %v3482
        %3493 = vst [vmem:[#allocation3 + $0x50] sm:$0xf0] %v3483
        %3494 = vst [vmem:[#allocation3 + $0x58] sm:$0xf0] %v3484
        %3495 = vst [vmem:[#allocation3 + $0x60] sm:$0xf0] %v3485
        %3496 = vst [vmem:[#allocation3 + $0x68] sm:$0xf0] %v3486
        %3497 = vst.msk [vmem:[#allocation3 + $0x70] sm:$0xf0] %vm1031, %v3487
        %v3498 = vld [vmem:[#allocation2] sm:$0xf]
        %v3499 = vld [vmem:[#allocation2 + $0x8] sm:$0xf]
        %v3500 = vld [vmem:[#allocation2 + $0x10] sm:$0xf]
        %v3501 = vld [vmem:[#allocation2 + $0x18] sm:$0xf]
        %v3502 = vld [vmem:[#allocation2 + $0x20] sm:$0xf]
        %v3503 = vld [vmem:[#allocation2 + $0x28] sm:$0xf]
        %3510 = vrot.lane.b32.xlu0 %v3498, 8
        %v3511 = vpop.permute.xlu0 %3510
        %3512 = vrot.lane.b32.xlu0 %v3499, 8
        %v3513 = vpop.permute.xlu0 %3512
        %3514 = vrot.lane.b32.xlu0 %v3500, 8
        %v3515 = vpop.permute.xlu0 %3514
        %3516 = vrot.lane.b32.xlu0 %v3501, 8
        %v3517 = vpop.permute.xlu0 %3516
        %3518 = vrot.lane.b32.xlu0 %v3502, 8
        %v3519 = vpop.permute.xlu0 %3518
        %3520 = vrot.lane.b32.xlu0 %v3503, 8
        %v3521 = vpop.permute.xlu0 %3520
        %v3522 = vsel %vm1601, %v3511, %v3513
        %v3523 = vsel %vm1601, %v3513, %v3515
        %v3524 = vsel %vm1601, %v3515, %v3517
        %v3525 = vsel %vm1601, %v3517, %v3519
        %v3526 = vsel %vm1601, %v3519, %v3521
        %3532 = vst [vmem:[#allocation3 + $0x78] sm:$0xf] %v3522
        %3533 = vst [vmem:[#allocation3 + $0x80] sm:$0xf] %v3523
        %3534 = vst [vmem:[#allocation3 + $0x88] sm:$0xf] %v3524
        %3535 = vst [vmem:[#allocation3 + $0x90] sm:$0xf] %v3525
        %3536 = vst.msk [vmem:[#allocation3 + $0x98] sm:$0xf] %vm990, %v3526
        %v3537 = vld [vmem:[#allocation2] sm:$0xf]
        %v3538 = vld [vmem:[#allocation2 + $0x8] sm:$0xf]
        %v3539 = vld [vmem:[#allocation2 + $0x10] sm:$0xf]
        %v3540 = vld [vmem:[#allocation2 + $0x18] sm:$0xf]
        %v3541 = vld [vmem:[#allocation2 + $0x20] sm:$0xf]
        %v3542 = vld [vmem:[#allocation2 + $0x28] sm:$0xf]
        %v3549 = vrot.slane %v3537, 4
        %v3550 = vrot.slane %v3538, 4
        %v3551 = vrot.slane %v3539, 4
        %v3552 = vrot.slane %v3540, 4
        %v3553 = vrot.slane %v3541, 4
        %v3554 = vrot.slane %v3542, 4
        %3555 = vrot.lane.b32.xlu0 %v3549, 7
        %v3556 = vpop.permute.xlu0 %3555
        %3557 = vrot.lane.b32.xlu0 %v3550, 7
        %v3558 = vpop.permute.xlu0 %3557
        %3559 = vrot.lane.b32.xlu0 %v3551, 7
        %v3560 = vpop.permute.xlu0 %3559
        %3561 = vrot.lane.b32.xlu0 %v3552, 7
        %v3562 = vpop.permute.xlu0 %3561
        %3563 = vrot.lane.b32.xlu0 %v3553, 7
        %v3564 = vpop.permute.xlu0 %3563
        %3565 = vrot.lane.b32.xlu0 %v3554, 7
        %v3566 = vpop.permute.xlu0 %3565
        %v3567 = vsel %vm1647, %v3556, %v3558
        %v3568 = vsel %vm1647, %v3558, %v3560
        %v3569 = vsel %vm1647, %v3560, %v3562
        %v3570 = vsel %vm1647, %v3562, %v3564
        %v3571 = vsel %vm1647, %v3564, %v3566
        %3577 = vst [vmem:[#allocation3 + $0x78] sm:$0xf0] %v3567
        %3578 = vst [vmem:[#allocation3 + $0x80] sm:$0xf0] %v3568
        %3579 = vst [vmem:[#allocation3 + $0x88] sm:$0xf0] %v3569
        %3580 = vst [vmem:[#allocation3 + $0x90] sm:$0xf0] %v3570
        %3581 = vst.msk [vmem:[#allocation3 + $0x98] sm:$0xf0] %vm1031, %v3571
        %v3582 = vld [vmem:[#allocation2] sm:$0xf]
        %v3583 = vld [vmem:[#allocation2 + $0x8] sm:$0xf]
        %v3584 = vld [vmem:[#allocation2 + $0x10] sm:$0xf]
        %v3585 = vld [vmem:[#allocation2 + $0x18] sm:$0xf]
        %v3586 = vld [vmem:[#allocation2 + $0x20] sm:$0xf]
        %v3587 = vld [vmem:[#allocation2 + $0x28] sm:$0xf]
        %3594 = vrot.lane.b32.xlu0 %v3582, 6
        %v3595 = vpop.permute.xlu0 %3594
        %3596 = vrot.lane.b32.xlu0 %v3583, 6
        %v3597 = vpop.permute.xlu0 %3596
        %3598 = vrot.lane.b32.xlu0 %v3584, 6
        %v3599 = vpop.permute.xlu0 %3598
        %3600 = vrot.lane.b32.xlu0 %v3585, 6
        %v3601 = vpop.permute.xlu0 %3600
        %3602 = vrot.lane.b32.xlu0 %v3586, 6
        %v3603 = vpop.permute.xlu0 %3602
        %3604 = vrot.lane.b32.xlu0 %v3587, 6
        %v3605 = vpop.permute.xlu0 %3604
        %v3606 = vsel %vm1687, %v3595, %v3597
        %v3607 = vsel %vm1687, %v3597, %v3599
        %v3608 = vsel %vm1687, %v3599, %v3601
        %v3609 = vsel %vm1687, %v3601, %v3603
        %v3610 = vsel %vm1687, %v3603, %v3605
        %3616 = vst [vmem:[#allocation3 + $0xa0] sm:$0xf] %v3606
        %3617 = vst [vmem:[#allocation3 + $0xa8] sm:$0xf] %v3607
        %3618 = vst [vmem:[#allocation3 + $0xb0] sm:$0xf] %v3608
        %3619 = vst [vmem:[#allocation3 + $0xb8] sm:$0xf] %v3609
        %3620 = vst.msk [vmem:[#allocation3 + $0xc0] sm:$0xf] %vm990, %v3610
        %s3621 = scalar_lea.vmem %s3, 8
        %v3622 = vld [vmem:[%s3621] sm:$0xff]
        %v3623 = vld [vmem:[#allocation3] sm:$0xff]
        %v3624 = vld [vmem:[#allocation3 + $0x8] sm:$0xff]
        %v3625 = vld [vmem:[#allocation3 + $0x10] sm:$0xff]
        %v3626 = vld [vmem:[#allocation3 + $0x18] sm:$0xff]
        %v3627 = vld [vmem:[#allocation3 + $0x20] sm:$0xff]
        %v3628 = vld [vmem:[#allocation3 + $0x28] sm:$0xff]
        %v3629 = vld [vmem:[#allocation3 + $0x30] sm:$0xff]
        %v3630 = vld [vmem:[#allocation3 + $0x38] sm:$0xff]
        %v3631 = vld [vmem:[#allocation3 + $0x40] sm:$0xff]
        %v3632 = vld [vmem:[#allocation3 + $0x48] sm:$0xff]
        %v3633 = vld [vmem:[#allocation3 + $0x50] sm:$0xff]
        %v3634 = vld [vmem:[#allocation3 + $0x58] sm:$0xff]
        %v3635 = vld [vmem:[#allocation3 + $0x60] sm:$0xff]
        %v3636 = vld [vmem:[#allocation3 + $0x68] sm:$0xff]
        %v3637 = vld [vmem:[#allocation3 + $0x70] sm:$0xff]
        %v3638 = vld [vmem:[#allocation3 + $0x78] sm:$0xff]
        %v3639 = vld [vmem:[#allocation3 + $0x80] sm:$0xff]
        %v3640 = vld [vmem:[#allocation3 + $0x88] sm:$0xff]
        %v3641 = vld [vmem:[#allocation3 + $0x90] sm:$0xff]
        %v3642 = vld [vmem:[#allocation3 + $0x98] sm:$0xff]
        %v3643 = vld [vmem:[#allocation3 + $0xa0] sm:$0xf]
        %v3644 = vld [vmem:[#allocation3 + $0xa8] sm:$0xf]
        %v3645 = vld [vmem:[#allocation3 + $0xb0] sm:$0xf]
        %v3646 = vld [vmem:[#allocation3 + $0xb8] sm:$0xf]
        %v3647 = vld [vmem:[#allocation3 + $0xc0] sm:$0xf]
        %v3649 = vsel %vm1730, %v3622, 0
        %v3652 = vsel %vm1734, %v3643, 0
        %v3655 = vsel %vm1734, %v3644, 0
        %v3658 = vsel %vm1734, %v3645, 0
        %v3661 = vsel %vm1734, %v3646, 0
        %v3664 = vsel %vm1734, %v3647, 0
        %3666 = vmatprep.subr.mxu0 0.0
        %3667 = vmatpush1.msra.mxu0 0.0
        %3668 = vmatprep.subr.mxu0 0.0
        %3669 = vmatpush1.msra.mxu0 0.0
        %3670 = vmatprep.subr.mxu0 0.0
        %3671 = vmatpush1.msra.mxu0 0.0
        %3672 = vmatprep.subr.mxu0 0.0
        %3673 = vmatpush1.msra.mxu0 0.0
        %3674 = vmatprep.subr.mxu0 0.0
        %3675 = vmatpush1.msra.mxu0 0.0
        %3676 = vmatprep.subr.mxu0 0.0
        %3677 = vmatpush1.msra.mxu0 0.0
        %3678 = vmatprep.subr.mxu0 0.0
        %3679 = vmatpush1.msra.mxu0 0.0
        %3680 = vmatprep.subr.mxu0 0.0
        %3681 = vmatpush1.msra.mxu0 0.0
        %3682 = vmatprep.subr.mxu0 0.0
        %3683 = vmatpush1.msra.mxu0 0.0
        %3684 = vmatprep.subr.mxu0 0.0
        %3685 = vmatpush1.msra.mxu0 0.0
        %3686 = vmatprep.subr.mxu0 0.0
        %3687 = vmatpush1.msra.mxu0 0.0
        %3688 = vmatprep.subr.mxu0 %v3655
        %3689 = vmatpush1.msra.mxu0 %v3652
        %3690 = vmatprep.subr.mxu0 %v3639
        %3691 = vmatpush1.msra.mxu0 %v3638
        %3692 = vmatprep.subr.mxu0 %v3634
        %3693 = vmatpush1.msra.mxu0 %v3633
        %3694 = vmatprep.subr.mxu0 %v3629
        %3695 = vmatpush1.msra.mxu0 %v3628
        %3696 = vmatprep.subr.mxu0 %v3624
        %3697 = vmatpush1.msra.mxu0 %v3623
        %3698 = vmatprep.subr.mxu0 0.0
        %3699 = vmatpush2.msra.mxu0 0.0
        %3700 = vmatprep.subr.mxu0 0.0
        %3701 = vmatpush2.msra.mxu0 0.0
        %3702 = vmatprep.subr.mxu0 0.0
        %3703 = vmatpush2.msra.mxu0 0.0
        %3704 = vmatprep.subr.mxu0 0.0
        %3705 = vmatpush2.msra.mxu0 0.0
        %3706 = vmatprep.subr.mxu0 0.0
        %3707 = vmatpush2.msra.mxu0 0.0
        %3708 = vmatprep.subr.mxu0 0.0
        %3709 = vmatpush2.msra.mxu0 0.0
        %3710 = vmatprep.subr.mxu0 0.0
        %3711 = vmatpush2.msra.mxu0 0.0
        %3712 = vmatprep.subr.mxu0 0.0
        %3713 = vmatpush2.msra.mxu0 0.0
        %3714 = vmatprep.subr.mxu0 0.0
        %3715 = vmatpush2.msra.mxu0 0.0
        %3716 = vmatprep.subr.mxu0 0.0
        %3717 = vmatpush2.msra.mxu0 0.0
        %3718 = vmatprep.subr.mxu0 0.0
        %3719 = vmatpush2.msra.mxu0 0.0
        %3720 = vmatprep.subr.mxu0 0.0
        %3721 = vmatpush2.msra.mxu0 0.0
        %3722 = vmatprep.subr.mxu0 0.0
        %3723 = vmatpush2.msra.mxu0 0.0
        %3724 = vmatprep.subr.mxu0 0.0
        %3725 = vmatpush2.msra.mxu0 0.0
        %3726 = vmatprep.subr.mxu0 0.0
        %3727 = vmatpush2.msra.mxu0 0.0
        %3728 = vmatprep.subr.mxu0 0.0
        %3729 = vmatpush2.msra.mxu0 0.0
        %3730 = vmatprep.mubr.f32.mxu0 0.0
        %3731 = vmatmul.mubr.f32.gmra.mxu0 %v3649
        %v3732 = vpop.f32.mrf.mxu0
        %v3733 = vadd.f32 0.0, %v3732
        %v3734 = vpop.f32.mrf.mxu0
        %v3735 = vadd.f32 0.0, %v3734
        %3736 = vdwg.mxu0
        %3737 = vmatprep.subr.mxu0 0.0
        %3738 = vmatpush1.msra.mxu0 0.0
        %3739 = vmatprep.subr.mxu0 0.0
        %3740 = vmatpush1.msra.mxu0 0.0
        %3741 = vmatprep.subr.mxu0 0.0
        %3742 = vmatpush1.msra.mxu0 0.0
        %3743 = vmatprep.subr.mxu0 0.0
        %3744 = vmatpush1.msra.mxu0 0.0
        %3745 = vmatprep.subr.mxu0 0.0
        %3746 = vmatpush1.msra.mxu0 0.0
        %3747 = vmatprep.subr.mxu0 0.0
        %3748 = vmatpush1.msra.mxu0 0.0
        %3749 = vmatprep.subr.mxu0 0.0
        %3750 = vmatpush1.msra.mxu0 0.0
        %3751 = vmatprep.subr.mxu0 0.0
        %3752 = vmatpush1.msra.mxu0 0.0
        %3753 = vmatprep.subr.mxu0 0.0
        %3754 = vmatpush1.msra.mxu0 0.0
        %3755 = vmatprep.subr.mxu0 0.0
        %3756 = vmatpush1.msra.mxu0 0.0
        %3757 = vmatprep.subr.mxu0 0.0
        %3758 = vmatpush1.msra.mxu0 0.0
        %3759 = vmatprep.subr.mxu0 %v3661
        %3760 = vmatpush1.msra.mxu0 %v3658
        %3761 = vmatprep.subr.mxu0 %v3641
        %3762 = vmatpush1.msra.mxu0 %v3640
        %3763 = vmatprep.subr.mxu0 %v3636
        %3764 = vmatpush1.msra.mxu0 %v3635
        %3765 = vmatprep.subr.mxu0 %v3631
        %3766 = vmatpush1.msra.mxu0 %v3630
        %3767 = vmatprep.subr.mxu0 %v3626
        %3768 = vmatpush1.msra.mxu0 %v3625
        %3769 = vmatprep.subr.mxu0 0.0
        %3770 = vmatpush2.msra.mxu0 0.0
        %3771 = vmatprep.subr.mxu0 0.0
        %3772 = vmatpush2.msra.mxu0 0.0
        %3773 = vmatprep.subr.mxu0 0.0
        %3774 = vmatpush2.msra.mxu0 0.0
        %3775 = vmatprep.subr.mxu0 0.0
        %3776 = vmatpush2.msra.mxu0 0.0
        %3777 = vmatprep.subr.mxu0 0.0
        %3778 = vmatpush2.msra.mxu0 0.0
        %3779 = vmatprep.subr.mxu0 0.0
        %3780 = vmatpush2.msra.mxu0 0.0
        %3781 = vmatprep.subr.mxu0 0.0
        %3782 = vmatpush2.msra.mxu0 0.0
        %3783 = vmatprep.subr.mxu0 0.0
        %3784 = vmatpush2.msra.mxu0 0.0
        %3785 = vmatprep.subr.mxu0 0.0
        %3786 = vmatpush2.msra.mxu0 0.0
        %3787 = vmatprep.subr.mxu0 0.0
        %3788 = vmatpush2.msra.mxu0 0.0
        %3789 = vmatprep.subr.mxu0 0.0
        %3790 = vmatpush2.msra.mxu0 0.0
        %3791 = vmatprep.subr.mxu0 0.0
        %3792 = vmatpush2.msra.mxu0 0.0
        %3793 = vmatprep.subr.mxu0 0.0
        %3794 = vmatpush2.msra.mxu0 0.0
        %3795 = vmatprep.subr.mxu0 0.0
        %3796 = vmatpush2.msra.mxu0 0.0
        %3797 = vmatprep.subr.mxu0 0.0
        %3798 = vmatpush2.msra.mxu0 0.0
        %3799 = vmatprep.subr.mxu0 0.0
        %3800 = vmatpush2.msra.mxu0 0.0
        %3801 = vmatprep.mubr.f32.mxu0 0.0
        %3802 = vmatmul.mubr.f32.gmra.mxu0 %v3649
        %v3803 = vpop.f32.mrf.mxu0
        %v3804 = vadd.f32 0.0, %v3803
        %v3805 = vpop.f32.mrf.mxu0
        %v3806 = vadd.f32 0.0, %v3805
        %3807 = vdwg.mxu0
        %3808 = vmatprep.subr.mxu0 0.0
        %3809 = vmatpush1.msra.mxu0 0.0
        %3810 = vmatprep.subr.mxu0 0.0
        %3811 = vmatpush1.msra.mxu0 0.0
        %3812 = vmatprep.subr.mxu0 0.0
        %3813 = vmatpush1.msra.mxu0 0.0
        %3814 = vmatprep.subr.mxu0 0.0
        %3815 = vmatpush1.msra.mxu0 0.0
        %3816 = vmatprep.subr.mxu0 0.0
        %3817 = vmatpush1.msra.mxu0 0.0
        %3818 = vmatprep.subr.mxu0 0.0
        %3819 = vmatpush1.msra.mxu0 0.0
        %3820 = vmatprep.subr.mxu0 0.0
        %3821 = vmatpush1.msra.mxu0 0.0
        %3822 = vmatprep.subr.mxu0 0.0
        %3823 = vmatpush1.msra.mxu0 0.0
        %3824 = vmatprep.subr.mxu0 0.0
        %3825 = vmatpush1.msra.mxu0 0.0
        %3826 = vmatprep.subr.mxu0 0.0
        %3827 = vmatpush1.msra.mxu0 0.0
        %3828 = vmatprep.subr.mxu0 0.0
        %3829 = vmatpush1.msra.mxu0 0.0
        %3830 = vmatprep.subr.mxu0 0.0
        %3831 = vmatpush1.msra.mxu0 %v3664
        %3832 = vmatprep.subr.mxu0 0.0
        %3833 = vmatpush1.msra.mxu0 %v3642
        %3834 = vmatprep.subr.mxu0 0.0
        %3835 = vmatpush1.msra.mxu0 %v3637
        %3836 = vmatprep.subr.mxu0 0.0
        %3837 = vmatpush1.msra.mxu0 %v3632
        %3838 = vmatprep.subr.mxu0 0.0
        %3839 = vmatpush1.msra.mxu0 %v3627
        %3840 = vmatprep.subr.mxu0 0.0
        %3841 = vmatpush2.msra.mxu0 0.0
        %3842 = vmatprep.subr.mxu0 0.0
        %3843 = vmatpush2.msra.mxu0 0.0
        %3844 = vmatprep.subr.mxu0 0.0
        %3845 = vmatpush2.msra.mxu0 0.0
        %3846 = vmatprep.subr.mxu0 0.0
        %3847 = vmatpush2.msra.mxu0 0.0
        %3848 = vmatprep.subr.mxu0 0.0
        %3849 = vmatpush2.msra.mxu0 0.0
        %3850 = vmatprep.subr.mxu0 0.0
        %3851 = vmatpush2.msra.mxu0 0.0
        %3852 = vmatprep.subr.mxu0 0.0
        %3853 = vmatpush2.msra.mxu0 0.0
        %3854 = vmatprep.subr.mxu0 0.0
        %3855 = vmatpush2.msra.mxu0 0.0
        %3856 = vmatprep.subr.mxu0 0.0
        %3857 = vmatpush2.msra.mxu0 0.0
        %3858 = vmatprep.subr.mxu0 0.0
        %3859 = vmatpush2.msra.mxu0 0.0
        %3860 = vmatprep.subr.mxu0 0.0
        %3861 = vmatpush2.msra.mxu0 0.0
        %3862 = vmatprep.subr.mxu0 0.0
        %3863 = vmatpush2.msra.mxu0 0.0
        %3864 = vmatprep.subr.mxu0 0.0
        %3865 = vmatpush2.msra.mxu0 0.0
        %3866 = vmatprep.subr.mxu0 0.0
        %3867 = vmatpush2.msra.mxu0 0.0
        %3868 = vmatprep.subr.mxu0 0.0
        %3869 = vmatpush2.msra.mxu0 0.0
        %3870 = vmatprep.subr.mxu0 0.0
        %3871 = vmatpush2.msra.mxu0 0.0
        %3872 = vmatprep.mubr.f32.mxu0 0.0
        %3873 = vmatmul.mubr.f32.gmra.mxu0 %v3649
        %v3874 = vpop.f32.mrf.mxu0
        %v3875 = vadd.f32 0.0, %v3874
        %v3876 = vpop.f32.mrf.mxu0
        %3877 = vdwg.mxu0
        %v3879 = vsel %vm1730, %v3220, 0
        %v3882 = vsel %vm1734, %v3241, 0
        %v3885 = vsel %vm1734, %v3242, 0
        %v3888 = vsel %vm1734, %v3243, 0
        %v3891 = vsel %vm1734, %v3244, 0
        %v3894 = vsel %vm1734, %v3245, 0
        %3896 = vmatprep.subr.mxu0 0.0
        %3897 = vmatpush1.msra.mxu0 0.0
        %3898 = vmatprep.subr.mxu0 0.0
        %3899 = vmatpush1.msra.mxu0 0.0
        %3900 = vmatprep.subr.mxu0 0.0
        %3901 = vmatpush1.msra.mxu0 0.0
        %3902 = vmatprep.subr.mxu0 0.0
        %3903 = vmatpush1.msra.mxu0 0.0
        %3904 = vmatprep.subr.mxu0 0.0
        %3905 = vmatpush1.msra.mxu0 0.0
        %3906 = vmatprep.subr.mxu0 0.0
        %3907 = vmatpush1.msra.mxu0 0.0
        %3908 = vmatprep.subr.mxu0 0.0
        %3909 = vmatpush1.msra.mxu0 0.0
        %3910 = vmatprep.subr.mxu0 0.0
        %3911 = vmatpush1.msra.mxu0 0.0
        %3912 = vmatprep.subr.mxu0 0.0
        %3913 = vmatpush1.msra.mxu0 0.0
        %3914 = vmatprep.subr.mxu0 0.0
        %3915 = vmatpush1.msra.mxu0 0.0
        %3916 = vmatprep.subr.mxu0 0.0
        %3917 = vmatpush1.msra.mxu0 0.0
        %3918 = vmatprep.subr.mxu0 %v3885
        %3919 = vmatpush1.msra.mxu0 %v3882
        %3920 = vmatprep.subr.mxu0 %v3237
        %3921 = vmatpush1.msra.mxu0 %v3236
        %3922 = vmatprep.subr.mxu0 %v3232
        %3923 = vmatpush1.msra.mxu0 %v3231
        %3924 = vmatprep.subr.mxu0 %v3227
        %3925 = vmatpush1.msra.mxu0 %v3226
        %3926 = vmatprep.subr.mxu0 %v3222
        %3927 = vmatpush1.msra.mxu0 %v3221
        %3928 = vmatprep.subr.mxu0 0.0
        %3929 = vmatpush2.msra.mxu0 0.0
        %3930 = vmatprep.subr.mxu0 0.0
        %3931 = vmatpush2.msra.mxu0 0.0
        %3932 = vmatprep.subr.mxu0 0.0
        %3933 = vmatpush2.msra.mxu0 0.0
        %3934 = vmatprep.subr.mxu0 0.0
        %3935 = vmatpush2.msra.mxu0 0.0
        %3936 = vmatprep.subr.mxu0 0.0
        %3937 = vmatpush2.msra.mxu0 0.0
        %3938 = vmatprep.subr.mxu0 0.0
        %3939 = vmatpush2.msra.mxu0 0.0
        %3940 = vmatprep.subr.mxu0 0.0
        %3941 = vmatpush2.msra.mxu0 0.0
        %3942 = vmatprep.subr.mxu0 0.0
        %3943 = vmatpush2.msra.mxu0 0.0
        %3944 = vmatprep.subr.mxu0 0.0
        %3945 = vmatpush2.msra.mxu0 0.0
        %3946 = vmatprep.subr.mxu0 0.0
        %3947 = vmatpush2.msra.mxu0 0.0
        %3948 = vmatprep.subr.mxu0 0.0
        %3949 = vmatpush2.msra.mxu0 0.0
        %3950 = vmatprep.subr.mxu0 0.0
        %3951 = vmatpush2.msra.mxu0 0.0
        %3952 = vmatprep.subr.mxu0 0.0
        %3953 = vmatpush2.msra.mxu0 0.0
        %3954 = vmatprep.subr.mxu0 0.0
        %3955 = vmatpush2.msra.mxu0 0.0
        %3956 = vmatprep.subr.mxu0 0.0
        %3957 = vmatpush2.msra.mxu0 0.0
        %3958 = vmatprep.subr.mxu0 0.0
        %3959 = vmatpush2.msra.mxu0 0.0
        %3960 = vmatprep.mubr.f32.mxu0 0.0
        %3961 = vmatmul.mubr.f32.gmra.mxu0 %v3879
        %v3962 = vpop.f32.mrf.mxu0
        %v3963 = vadd.f32 %v3733, %v3962
        %v3964 = vpop.f32.mrf.mxu0
        %v3965 = vadd.f32 %v3735, %v3964
        %3966 = vdwg.mxu0
        %3967 = vmatprep.subr.mxu0 0.0
        %3968 = vmatpush1.msra.mxu0 0.0
        %3969 = vmatprep.subr.mxu0 0.0
        %3970 = vmatpush1.msra.mxu0 0.0
        %3971 = vmatprep.subr.mxu0 0.0
        %3972 = vmatpush1.msra.mxu0 0.0
        %3973 = vmatprep.subr.mxu0 0.0
        %3974 = vmatpush1.msra.mxu0 0.0
        %3975 = vmatprep.subr.mxu0 0.0
        %3976 = vmatpush1.msra.mxu0 0.0
        %3977 = vmatprep.subr.mxu0 0.0
        %3978 = vmatpush1.msra.mxu0 0.0
        %3979 = vmatprep.subr.mxu0 0.0
        %3980 = vmatpush1.msra.mxu0 0.0
        %3981 = vmatprep.subr.mxu0 0.0
        %3982 = vmatpush1.msra.mxu0 0.0
        %3983 = vmatprep.subr.mxu0 0.0
        %3984 = vmatpush1.msra.mxu0 0.0
        %3985 = vmatprep.subr.mxu0 0.0
        %3986 = vmatpush1.msra.mxu0 0.0
        %3987 = vmatprep.subr.mxu0 0.0
        %3988 = vmatpush1.msra.mxu0 0.0
        %3989 = vmatprep.subr.mxu0 %v3891
        %3990 = vmatpush1.msra.mxu0 %v3888
        %3991 = vmatprep.subr.mxu0 %v3239
        %3992 = vmatpush1.msra.mxu0 %v3238
        %3993 = vmatprep.subr.mxu0 %v3234
        %3994 = vmatpush1.msra.mxu0 %v3233
        %3995 = vmatprep.subr.mxu0 %v3229
        %3996 = vmatpush1.msra.mxu0 %v3228
        %3997 = vmatprep.subr.mxu0 %v3224
        %3998 = vmatpush1.msra.mxu0 %v3223
        %3999 = vmatprep.subr.mxu0 0.0
        %4000 = vmatpush2.msra.mxu0 0.0
        %4001 = vmatprep.subr.mxu0 0.0
        %4002 = vmatpush2.msra.mxu0 0.0
        %4003 = vmatprep.subr.mxu0 0.0
        %4004 = vmatpush2.msra.mxu0 0.0
        %4005 = vmatprep.subr.mxu0 0.0
        %4006 = vmatpush2.msra.mxu0 0.0
        %4007 = vmatprep.subr.mxu0 0.0
        %4008 = vmatpush2.msra.mxu0 0.0
        %4009 = vmatprep.subr.mxu0 0.0
        %4010 = vmatpush2.msra.mxu0 0.0
        %4011 = vmatprep.subr.mxu0 0.0
        %4012 = vmatpush2.msra.mxu0 0.0
        %4013 = vmatprep.subr.mxu0 0.0
        %4014 = vmatpush2.msra.mxu0 0.0
        %4015 = vmatprep.subr.mxu0 0.0
        %4016 = vmatpush2.msra.mxu0 0.0
        %4017 = vmatprep.subr.mxu0 0.0
        %4018 = vmatpush2.msra.mxu0 0.0
        %4019 = vmatprep.subr.mxu0 0.0
        %4020 = vmatpush2.msra.mxu0 0.0
        %4021 = vmatprep.subr.mxu0 0.0
        %4022 = vmatpush2.msra.mxu0 0.0
        %4023 = vmatprep.subr.mxu0 0.0
        %4024 = vmatpush2.msra.mxu0 0.0
        %4025 = vmatprep.subr.mxu0 0.0
        %4026 = vmatpush2.msra.mxu0 0.0
        %4027 = vmatprep.subr.mxu0 0.0
        %4028 = vmatpush2.msra.mxu0 0.0
        %4029 = vmatprep.subr.mxu0 0.0
        %4030 = vmatpush2.msra.mxu0 0.0
        %4031 = vmatprep.mubr.f32.mxu0 0.0
        %4032 = vmatmul.mubr.f32.gmra.mxu0 %v3879
        %v4033 = vpop.f32.mrf.mxu0
        %v4034 = vadd.f32 %v3804, %v4033
        %v4035 = vpop.f32.mrf.mxu0
        %v4036 = vadd.f32 %v3806, %v4035
        %4037 = vdwg.mxu0
        %4038 = vmatprep.subr.mxu0 0.0
        %4039 = vmatpush1.msra.mxu0 0.0
        %4040 = vmatprep.subr.mxu0 0.0
        %4041 = vmatpush1.msra.mxu0 0.0
        %4042 = vmatprep.subr.mxu0 0.0
        %4043 = vmatpush1.msra.mxu0 0.0
        %4044 = vmatprep.subr.mxu0 0.0
        %4045 = vmatpush1.msra.mxu0 0.0
        %4046 = vmatprep.subr.mxu0 0.0
        %4047 = vmatpush1.msra.mxu0 0.0
        %4048 = vmatprep.subr.mxu0 0.0
        %4049 = vmatpush1.msra.mxu0 0.0
        %4050 = vmatprep.subr.mxu0 0.0
        %4051 = vmatpush1.msra.mxu0 0.0
        %4052 = vmatprep.subr.mxu0 0.0
        %4053 = vmatpush1.msra.mxu0 0.0
        %4054 = vmatprep.subr.mxu0 0.0
        %4055 = vmatpush1.msra.mxu0 0.0
        %4056 = vmatprep.subr.mxu0 0.0
        %4057 = vmatpush1.msra.mxu0 0.0
        %4058 = vmatprep.subr.mxu0 0.0
        %4059 = vmatpush1.msra.mxu0 0.0
        %4060 = vmatprep.subr.mxu0 0.0
        %4061 = vmatpush1.msra.mxu0 %v3894
        %4062 = vmatprep.subr.mxu0 0.0
        %4063 = vmatpush1.msra.mxu0 %v3240
        %4064 = vmatprep.subr.mxu0 0.0
        %4065 = vmatpush1.msra.mxu0 %v3235
        %4066 = vmatprep.subr.mxu0 0.0
        %4067 = vmatpush1.msra.mxu0 %v3230
        %4068 = vmatprep.subr.mxu0 0.0
        %4069 = vmatpush1.msra.mxu0 %v3225
        %4070 = vmatprep.subr.mxu0 0.0
        %4071 = vmatpush2.msra.mxu0 0.0
        %4072 = vmatprep.subr.mxu0 0.0
        %4073 = vmatpush2.msra.mxu0 0.0
        %4074 = vmatprep.subr.mxu0 0.0
        %4075 = vmatpush2.msra.mxu0 0.0
        %4076 = vmatprep.subr.mxu0 0.0
        %4077 = vmatpush2.msra.mxu0 0.0
        %4078 = vmatprep.subr.mxu0 0.0
        %4079 = vmatpush2.msra.mxu0 0.0
        %4080 = vmatprep.subr.mxu0 0.0
        %4081 = vmatpush2.msra.mxu0 0.0
        %4082 = vmatprep.subr.mxu0 0.0
        %4083 = vmatpush2.msra.mxu0 0.0
        %4084 = vmatprep.subr.mxu0 0.0
        %4085 = vmatpush2.msra.mxu0 0.0
        %4086 = vmatprep.subr.mxu0 0.0
        %4087 = vmatpush2.msra.mxu0 0.0
        %4088 = vmatprep.subr.mxu0 0.0
        %4089 = vmatpush2.msra.mxu0 0.0
        %4090 = vmatprep.subr.mxu0 0.0
        %4091 = vmatpush2.msra.mxu0 0.0
        %4092 = vmatprep.subr.mxu0 0.0
        %4093 = vmatpush2.msra.mxu0 0.0
        %4094 = vmatprep.subr.mxu0 0.0
        %4095 = vmatpush2.msra.mxu0 0.0
        %4096 = vmatprep.subr.mxu0 0.0
        %4097 = vmatpush2.msra.mxu0 0.0
        %4098 = vmatprep.subr.mxu0 0.0
        %4099 = vmatpush2.msra.mxu0 0.0
        %4100 = vmatprep.subr.mxu0 0.0
        %4101 = vmatpush2.msra.mxu0 0.0
        %4102 = vmatprep.mubr.f32.mxu0 0.0
        %4103 = vmatmul.mubr.f32.gmra.mxu0 %v3879
        %v4104 = vpop.f32.mrf.mxu0
        %v4105 = vadd.f32 %v3875, %v4104
        %v4106 = vpop.f32.mrf.mxu0
        %4107 = vdwg.mxu0
        %v4108 = vld [vmem:[#allocation2 + $0x8] sm:$0xf]
        %v4109 = vld [vmem:[#allocation2 + $0x10] sm:$0xf]
        %v4110 = vld [vmem:[#allocation2 + $0x18] sm:$0xf]
        %v4111 = vld [vmem:[#allocation2 + $0x20] sm:$0xf]
        %v4112 = vld [vmem:[#allocation2 + $0x28] sm:$0xf]
        %v4113 = vld [vmem:[#allocation2 + $0x30] sm:$0xf]
        %4120 = vrot.lane.b32.xlu0 %v4108, 56
        %v4121 = vpop.permute.xlu0 %4120
        %4122 = vrot.lane.b32.xlu0 %v4109, 56
        %v4123 = vpop.permute.xlu0 %4122
        %4124 = vrot.lane.b32.xlu0 %v4110, 56
        %v4125 = vpop.permute.xlu0 %4124
        %4126 = vrot.lane.b32.xlu0 %v4111, 56
        %v4127 = vpop.permute.xlu0 %4126
        %4128 = vrot.lane.b32.xlu0 %v4112, 56
        %v4129 = vpop.permute.xlu0 %4128
        %4130 = vrot.lane.b32.xlu0 %v4113, 56
        %v4131 = vpop.permute.xlu0 %4130
        %v4132 = vsel %vm2216, %v4121, %v4123
        %v4133 = vsel %vm2216, %v4123, %v4125
        %v4134 = vsel %vm2216, %v4125, %v4127
        %v4135 = vsel %vm2216, %v4127, %v4129
        %v4136 = vsel %vm2216, %v4129, %v4131
        %4142 = vst [vmem:[#allocation3] sm:$0xf] %v4132
        %4143 = vst [vmem:[#allocation3 + $0x8] sm:$0xf] %v4133
        %4144 = vst [vmem:[#allocation3 + $0x10] sm:$0xf] %v4134
        %4145 = vst [vmem:[#allocation3 + $0x18] sm:$0xf] %v4135
        %4146 = vst.msk [vmem:[#allocation3 + $0x20] sm:$0xf] %vm990, %v4136
        %v4147 = vld [vmem:[#allocation2 + $0x8] sm:$0xf]
        %v4148 = vld [vmem:[#allocation2 + $0x10] sm:$0xf]
        %v4149 = vld [vmem:[#allocation2 + $0x18] sm:$0xf]
        %v4150 = vld [vmem:[#allocation2 + $0x20] sm:$0xf]
        %v4151 = vld [vmem:[#allocation2 + $0x28] sm:$0xf]
        %v4152 = vld [vmem:[#allocation2 + $0x30] sm:$0xf]
        %v4159 = vrot.slane %v4147, 4
        %v4160 = vrot.slane %v4148, 4
        %v4161 = vrot.slane %v4149, 4
        %v4162 = vrot.slane %v4150, 4
        %v4163 = vrot.slane %v4151, 4
        %v4164 = vrot.slane %v4152, 4
        %4165 = vrot.lane.b32.xlu0 %v4159, 55
        %v4166 = vpop.permute.xlu0 %4165
        %4167 = vrot.lane.b32.xlu0 %v4160, 55
        %v4168 = vpop.permute.xlu0 %4167
        %4169 = vrot.lane.b32.xlu0 %v4161, 55
        %v4170 = vpop.permute.xlu0 %4169
        %4171 = vrot.lane.b32.xlu0 %v4162, 55
        %v4172 = vpop.permute.xlu0 %4171
        %4173 = vrot.lane.b32.xlu0 %v4163, 55
        %v4174 = vpop.permute.xlu0 %4173
        %4175 = vrot.lane.b32.xlu0 %v4164, 55
        %v4176 = vpop.permute.xlu0 %4175
        %v4177 = vsel %vm2262, %v4166, %v4168
        %v4178 = vsel %vm2262, %v4168, %v4170
        %v4179 = vsel %vm2262, %v4170, %v4172
        %v4180 = vsel %vm2262, %v4172, %v4174
        %v4181 = vsel %vm2262, %v4174, %v4176
        %4187 = vst [vmem:[#allocation3] sm:$0xf0] %v4177
        %4188 = vst [vmem:[#allocation3 + $0x8] sm:$0xf0] %v4178
        %4189 = vst [vmem:[#allocation3 + $0x10] sm:$0xf0] %v4179
        %4190 = vst [vmem:[#allocation3 + $0x18] sm:$0xf0] %v4180
        %4191 = vst.msk [vmem:[#allocation3 + $0x20] sm:$0xf0] %vm1031, %v4181
        %v4192 = vld [vmem:[#allocation2 + $0x8] sm:$0xf]
        %v4193 = vld [vmem:[#allocation2 + $0x10] sm:$0xf]
        %v4194 = vld [vmem:[#allocation2 + $0x18] sm:$0xf]
        %v4195 = vld [vmem:[#allocation2 + $0x20] sm:$0xf]
        %v4196 = vld [vmem:[#allocation2 + $0x28] sm:$0xf]
        %v4197 = vld [vmem:[#allocation2 + $0x30] sm:$0xf]
        %4204 = vrot.lane.b32.xlu0 %v4192, 54
        %v4205 = vpop.permute.xlu0 %4204
        %4206 = vrot.lane.b32.xlu0 %v4193, 54
        %v4207 = vpop.permute.xlu0 %4206
        %4208 = vrot.lane.b32.xlu0 %v4194, 54
        %v4209 = vpop.permute.xlu0 %4208
        %4210 = vrot.lane.b32.xlu0 %v4195, 54
        %v4211 = vpop.permute.xlu0 %4210
        %4212 = vrot.lane.b32.xlu0 %v4196, 54
        %v4213 = vpop.permute.xlu0 %4212
        %4214 = vrot.lane.b32.xlu0 %v4197, 54
        %v4215 = vpop.permute.xlu0 %4214
        %v4216 = vsel %vm2302, %v4205, %v4207
        %v4217 = vsel %vm2302, %v4207, %v4209
        %v4218 = vsel %vm2302, %v4209, %v4211
        %v4219 = vsel %vm2302, %v4211, %v4213
        %v4220 = vsel %vm2302, %v4213, %v4215
        %4226 = vst [vmem:[#allocation3 + $0x28] sm:$0xf] %v4216
        %4227 = vst [vmem:[#allocation3 + $0x30] sm:$0xf] %v4217
        %4228 = vst [vmem:[#allocation3 + $0x38] sm:$0xf] %v4218
        %4229 = vst [vmem:[#allocation3 + $0x40] sm:$0xf] %v4219
        %4230 = vst.msk [vmem:[#allocation3 + $0x48] sm:$0xf] %vm990, %v4220
        %v4231 = vld [vmem:[#allocation2 + $0x8] sm:$0xf]
        %v4232 = vld [vmem:[#allocation2 + $0x10] sm:$0xf]
        %v4233 = vld [vmem:[#allocation2 + $0x18] sm:$0xf]
        %v4234 = vld [vmem:[#allocation2 + $0x20] sm:$0xf]
        %v4235 = vld [vmem:[#allocation2 + $0x28] sm:$0xf]
        %v4236 = vld [vmem:[#allocation2 + $0x30] sm:$0xf]
        %v4243 = vrot.slane %v4231, 4
        %v4244 = vrot.slane %v4232, 4
        %v4245 = vrot.slane %v4233, 4
        %v4246 = vrot.slane %v4234, 4
        %v4247 = vrot.slane %v4235, 4
        %v4248 = vrot.slane %v4236, 4
        %4249 = vrot.lane.b32.xlu0 %v4243, 46
        %v4250 = vpop.permute.xlu0 %4249
        %4251 = vrot.lane.b32.xlu0 %v4244, 46
        %v4252 = vpop.permute.xlu0 %4251
        %4253 = vrot.lane.b32.xlu0 %v4245, 46
        %v4254 = vpop.permute.xlu0 %4253
        %4255 = vrot.lane.b32.xlu0 %v4246, 46
        %v4256 = vpop.permute.xlu0 %4255
        %4257 = vrot.lane.b32.xlu0 %v4247, 46
        %v4258 = vpop.permute.xlu0 %4257
        %4259 = vrot.lane.b32.xlu0 %v4248, 46
        %v4260 = vpop.permute.xlu0 %4259
        %v4261 = vsel %vm2348, %v4250, %v4252
        %v4262 = vsel %vm2348, %v4252, %v4254
        %v4263 = vsel %vm2348, %v4254, %v4256
        %v4264 = vsel %vm2348, %v4256, %v4258
        %v4265 = vsel %vm2348, %v4258, %v4260
        %4271 = vst [vmem:[#allocation3 + $0x28] sm:$0xf0] %v4261
        %4272 = vst [vmem:[#allocation3 + $0x30] sm:$0xf0] %v4262
        %4273 = vst [vmem:[#allocation3 + $0x38] sm:$0xf0] %v4263
        %4274 = vst [vmem:[#allocation3 + $0x40] sm:$0xf0] %v4264
        %4275 = vst.msk [vmem:[#allocation3 + $0x48] sm:$0xf0] %vm1031, %v4265
        %v4276 = vld [vmem:[#allocation2 + $0x8] sm:$0xf]
        %v4277 = vld [vmem:[#allocation2 + $0x10] sm:$0xf]
        %v4278 = vld [vmem:[#allocation2 + $0x18] sm:$0xf]
        %v4279 = vld [vmem:[#allocation2 + $0x20] sm:$0xf]
        %v4280 = vld [vmem:[#allocation2 + $0x28] sm:$0xf]
        %v4281 = vld [vmem:[#allocation2 + $0x30] sm:$0xf]
        %4288 = vrot.lane.b32.xlu0 %v4276, 45
        %v4289 = vpop.permute.xlu0 %4288
        %4290 = vrot.lane.b32.xlu0 %v4277, 45
        %v4291 = vpop.permute.xlu0 %4290
        %4292 = vrot.lane.b32.xlu0 %v4278, 45
        %v4293 = vpop.permute.xlu0 %4292
        %4294 = vrot.lane.b32.xlu0 %v4279, 45
        %v4295 = vpop.permute.xlu0 %4294
        %4296 = vrot.lane.b32.xlu0 %v4280, 45
        %v4297 = vpop.permute.xlu0 %4296
        %4298 = vrot.lane.b32.xlu0 %v4281, 45
        %v4299 = vpop.permute.xlu0 %4298
        %v4300 = vsel %vm2388, %v4289, %v4291
        %v4301 = vsel %vm2388, %v4291, %v4293
        %v4302 = vsel %vm2388, %v4293, %v4295
        %v4303 = vsel %vm2388, %v4295, %v4297
        %v4304 = vsel %vm2388, %v4297, %v4299
        %4310 = vst [vmem:[#allocation3 + $0x50] sm:$0xf] %v4300
        %4311 = vst [vmem:[#allocation3 + $0x58] sm:$0xf] %v4301
        %4312 = vst [vmem:[#allocation3 + $0x60] sm:$0xf] %v4302
        %4313 = vst [vmem:[#allocation3 + $0x68] sm:$0xf] %v4303
        %4314 = vst.msk [vmem:[#allocation3 + $0x70] sm:$0xf] %vm990, %v4304
        %v4315 = vld [vmem:[#allocation2 + $0x8] sm:$0xf]
        %v4316 = vld [vmem:[#allocation2 + $0x10] sm:$0xf]
        %v4317 = vld [vmem:[#allocation2 + $0x18] sm:$0xf]
        %v4318 = vld [vmem:[#allocation2 + $0x20] sm:$0xf]
        %v4319 = vld [vmem:[#allocation2 + $0x28] sm:$0xf]
        %v4320 = vld [vmem:[#allocation2 + $0x30] sm:$0xf]
        %v4327 = vrot.slane %v4315, 4
        %v4328 = vrot.slane %v4316, 4
        %v4329 = vrot.slane %v4317, 4
        %v4330 = vrot.slane %v4318, 4
        %v4331 = vrot.slane %v4319, 4
        %v4332 = vrot.slane %v4320, 4
        %4333 = vrot.lane.b32.xlu0 %v4327, 44
        %v4334 = vpop.permute.xlu0 %4333
        %4335 = vrot.lane.b32.xlu0 %v4328, 44
        %v4336 = vpop.permute.xlu0 %4335
        %4337 = vrot.lane.b32.xlu0 %v4329, 44
        %v4338 = vpop.permute.xlu0 %4337
        %4339 = vrot.lane.b32.xlu0 %v4330, 44
        %v4340 = vpop.permute.xlu0 %4339
        %4341 = vrot.lane.b32.xlu0 %v4331, 44
        %v4342 = vpop.permute.xlu0 %4341
        %4343 = vrot.lane.b32.xlu0 %v4332, 44
        %v4344 = vpop.permute.xlu0 %4343
        %v4345 = vsel %vm2434, %v4334, %v4336
        %v4346 = vsel %vm2434, %v4336, %v4338
        %v4347 = vsel %vm2434, %v4338, %v4340
        %v4348 = vsel %vm2434, %v4340, %v4342
        %v4349 = vsel %vm2434, %v4342, %v4344
        %4355 = vst [vmem:[#allocation3 + $0x50] sm:$0xf0] %v4345
        %4356 = vst [vmem:[#allocation3 + $0x58] sm:$0xf0] %v4346
        %4357 = vst [vmem:[#allocation3 + $0x60] sm:$0xf0] %v4347
        %4358 = vst [vmem:[#allocation3 + $0x68] sm:$0xf0] %v4348
        %4359 = vst.msk [vmem:[#allocation3 + $0x70] sm:$0xf0] %vm1031, %v4349
        %v4360 = vld [vmem:[#allocation2 + $0x8] sm:$0xf]
        %v4361 = vld [vmem:[#allocation2 + $0x10] sm:$0xf]
        %v4362 = vld [vmem:[#allocation2 + $0x18] sm:$0xf]
        %v4363 = vld [vmem:[#allocation2 + $0x20] sm:$0xf]
        %v4364 = vld [vmem:[#allocation2 + $0x28] sm:$0xf]
        %v4365 = vld [vmem:[#allocation2 + $0x30] sm:$0xf]
        %4372 = vrot.lane.b32.xlu0 %v4360, 36
        %v4373 = vpop.permute.xlu0 %4372
        %4374 = vrot.lane.b32.xlu0 %v4361, 36
        %v4375 = vpop.permute.xlu0 %4374
        %4376 = vrot.lane.b32.xlu0 %v4362, 36
        %v4377 = vpop.permute.xlu0 %4376
        %4378 = vrot.lane.b32.xlu0 %v4363, 36
        %v4379 = vpop.permute.xlu0 %4378
        %4380 = vrot.lane.b32.xlu0 %v4364, 36
        %v4381 = vpop.permute.xlu0 %4380
        %4382 = vrot.lane.b32.xlu0 %v4365, 36
        %v4383 = vpop.permute.xlu0 %4382
        %v4384 = vsel %vm1730, %v4373, %v4375
        %v4385 = vsel %vm1730, %v4375, %v4377
        %v4386 = vsel %vm1730, %v4377, %v4379
        %v4387 = vsel %vm1730, %v4379, %v4381
        %v4388 = vsel %vm1730, %v4381, %v4383
        %4394 = vst [vmem:[#allocation3 + $0x78] sm:$0xf] %v4384
        %4395 = vst [vmem:[#allocation3 + $0x80] sm:$0xf] %v4385
        %4396 = vst [vmem:[#allocation3 + $0x88] sm:$0xf] %v4386
        %4397 = vst [vmem:[#allocation3 + $0x90] sm:$0xf] %v4387
        %4398 = vst.msk [vmem:[#allocation3 + $0x98] sm:$0xf] %vm990, %v4388
        %v4399 = vld [vmem:[#allocation2 + $0x8] sm:$0xf]
        %v4400 = vld [vmem:[#allocation2 + $0x10] sm:$0xf]
        %v4401 = vld [vmem:[#allocation2 + $0x18] sm:$0xf]
        %v4402 = vld [vmem:[#allocation2 + $0x20] sm:$0xf]
        %v4403 = vld [vmem:[#allocation2 + $0x28] sm:$0xf]
        %v4404 = vld [vmem:[#allocation2 + $0x30] sm:$0xf]
        %v4411 = vrot.slane %v4399, 4
        %v4412 = vrot.slane %v4400, 4
        %v4413 = vrot.slane %v4401, 4
        %v4414 = vrot.slane %v4402, 4
        %v4415 = vrot.slane %v4403, 4
        %v4416 = vrot.slane %v4404, 4
        %4417 = vrot.lane.b32.xlu0 %v4411, 35
        %v4418 = vpop.permute.xlu0 %4417
        %4419 = vrot.lane.b32.xlu0 %v4412, 35
        %v4420 = vpop.permute.xlu0 %4419
        %4421 = vrot.lane.b32.xlu0 %v4413, 35
        %v4422 = vpop.permute.xlu0 %4421
        %4423 = vrot.lane.b32.xlu0 %v4414, 35
        %v4424 = vpop.permute.xlu0 %4423
        %4425 = vrot.lane.b32.xlu0 %v4415, 35
        %v4426 = vpop.permute.xlu0 %4425
        %4427 = vrot.lane.b32.xlu0 %v4416, 35
        %v4428 = vpop.permute.xlu0 %4427
        %v4429 = vsel %vm2519, %v4418, %v4420
        %v4430 = vsel %vm2519, %v4420, %v4422
        %v4431 = vsel %vm2519, %v4422, %v4424
        %v4432 = vsel %vm2519, %v4424, %v4426
        %v4433 = vsel %vm2519, %v4426, %v4428
        %4439 = vst [vmem:[#allocation3 + $0x78] sm:$0xf0] %v4429
        %4440 = vst [vmem:[#allocation3 + $0x80] sm:$0xf0] %v4430
        %4441 = vst [vmem:[#allocation3 + $0x88] sm:$0xf0] %v4431
        %4442 = vst [vmem:[#allocation3 + $0x90] sm:$0xf0] %v4432
        %4443 = vst.msk [vmem:[#allocation3 + $0x98] sm:$0xf0] %vm1031, %v4433
        %v4444 = vld [vmem:[#allocation2 + $0x8] sm:$0xf]
        %v4445 = vld [vmem:[#allocation2 + $0x10] sm:$0xf]
        %v4446 = vld [vmem:[#allocation2 + $0x18] sm:$0xf]
        %v4447 = vld [vmem:[#allocation2 + $0x20] sm:$0xf]
        %v4448 = vld [vmem:[#allocation2 + $0x28] sm:$0xf]
        %v4449 = vld [vmem:[#allocation2 + $0x30] sm:$0xf]
        %4456 = vrot.lane.b32.xlu0 %v4444, 34
        %v4457 = vpop.permute.xlu0 %4456
        %4458 = vrot.lane.b32.xlu0 %v4445, 34
        %v4459 = vpop.permute.xlu0 %4458
        %4460 = vrot.lane.b32.xlu0 %v4446, 34
        %v4461 = vpop.permute.xlu0 %4460
        %4462 = vrot.lane.b32.xlu0 %v4447, 34
        %v4463 = vpop.permute.xlu0 %4462
        %4464 = vrot.lane.b32.xlu0 %v4448, 34
        %v4465 = vpop.permute.xlu0 %4464
        %4466 = vrot.lane.b32.xlu0 %v4449, 34
        %v4467 = vpop.permute.xlu0 %4466
        %v4468 = vsel %vm2559, %v4457, %v4459
        %v4469 = vsel %vm2559, %v4459, %v4461
        %v4470 = vsel %vm2559, %v4461, %v4463
        %v4471 = vsel %vm2559, %v4463, %v4465
        %v4472 = vsel %vm2559, %v4465, %v4467
        %4478 = vst [vmem:[#allocation3 + $0xa0] sm:$0xf] %v4468
        %4479 = vst [vmem:[#allocation3 + $0xa8] sm:$0xf] %v4469
        %4480 = vst [vmem:[#allocation3 + $0xb0] sm:$0xf] %v4470
        %4481 = vst [vmem:[#allocation3 + $0xb8] sm:$0xf] %v4471
        %4482 = vst.msk [vmem:[#allocation3 + $0xc0] sm:$0xf] %vm990, %v4472
        %s4483 = scalar_lea.vmem %s3, 16
        %v4484 = vld [vmem:[%s4483] sm:$0xff]
        %v4485 = vld [vmem:[#allocation3] sm:$0xff]
        %v4486 = vld [vmem:[#allocation3 + $0x8] sm:$0xff]
        %v4487 = vld [vmem:[#allocation3 + $0x10] sm:$0xff]
        %v4488 = vld [vmem:[#allocation3 + $0x18] sm:$0xff]
        %v4489 = vld [vmem:[#allocation3 + $0x20] sm:$0xff]
        %v4490 = vld [vmem:[#allocation3 + $0x28] sm:$0xff]
        %v4491 = vld [vmem:[#allocation3 + $0x30] sm:$0xff]
        %v4492 = vld [vmem:[#allocation3 + $0x38] sm:$0xff]
        %v4493 = vld [vmem:[#allocation3 + $0x40] sm:$0xff]
        %v4494 = vld [vmem:[#allocation3 + $0x48] sm:$0xff]
        %v4495 = vld [vmem:[#allocation3 + $0x50] sm:$0xff]
        %v4496 = vld [vmem:[#allocation3 + $0x58] sm:$0xff]
        %v4497 = vld [vmem:[#allocation3 + $0x60] sm:$0xff]
        %v4498 = vld [vmem:[#allocation3 + $0x68] sm:$0xff]
        %v4499 = vld [vmem:[#allocation3 + $0x70] sm:$0xff]
        %v4500 = vld [vmem:[#allocation3 + $0x78] sm:$0xff]
        %v4501 = vld [vmem:[#allocation3 + $0x80] sm:$0xff]
        %v4502 = vld [vmem:[#allocation3 + $0x88] sm:$0xff]
        %v4503 = vld [vmem:[#allocation3 + $0x90] sm:$0xff]
        %v4504 = vld [vmem:[#allocation3 + $0x98] sm:$0xff]
        %v4505 = vld [vmem:[#allocation3 + $0xa0] sm:$0xf]
        %v4506 = vld [vmem:[#allocation3 + $0xa8] sm:$0xf]
        %v4507 = vld [vmem:[#allocation3 + $0xb0] sm:$0xf]
        %v4508 = vld [vmem:[#allocation3 + $0xb8] sm:$0xf]
        %v4509 = vld [vmem:[#allocation3 + $0xc0] sm:$0xf]
        %v4511 = vsel %vm1730, %v4484, 0
        %v4514 = vsel %vm1734, %v4505, 0
        %v4517 = vsel %vm1734, %v4506, 0
        %v4520 = vsel %vm1734, %v4507, 0
        %v4523 = vsel %vm1734, %v4508, 0
        %v4526 = vsel %vm1734, %v4509, 0
        %4528 = vmatprep.subr.mxu0 0.0
        %4529 = vmatpush1.msra.mxu0 0.0
        %4530 = vmatprep.subr.mxu0 0.0
        %4531 = vmatpush1.msra.mxu0 0.0
        %4532 = vmatprep.subr.mxu0 0.0
        %4533 = vmatpush1.msra.mxu0 0.0
        %4534 = vmatprep.subr.mxu0 0.0
        %4535 = vmatpush1.msra.mxu0 0.0
        %4536 = vmatprep.subr.mxu0 0.0
        %4537 = vmatpush1.msra.mxu0 0.0
        %4538 = vmatprep.subr.mxu0 0.0
        %4539 = vmatpush1.msra.mxu0 0.0
        %4540 = vmatprep.subr.mxu0 0.0
        %4541 = vmatpush1.msra.mxu0 0.0
        %4542 = vmatprep.subr.mxu0 0.0
        %4543 = vmatpush1.msra.mxu0 0.0
        %4544 = vmatprep.subr.mxu0 0.0
        %4545 = vmatpush1.msra.mxu0 0.0
        %4546 = vmatprep.subr.mxu0 0.0
        %4547 = vmatpush1.msra.mxu0 0.0
        %4548 = vmatprep.subr.mxu0 0.0
        %4549 = vmatpush1.msra.mxu0 0.0
        %4550 = vmatprep.subr.mxu0 %v4517
        %4551 = vmatpush1.msra.mxu0 %v4514
        %4552 = vmatprep.subr.mxu0 %v4501
        %4553 = vmatpush1.msra.mxu0 %v4500
        %4554 = vmatprep.subr.mxu0 %v4496
        %4555 = vmatpush1.msra.mxu0 %v4495
        %4556 = vmatprep.subr.mxu0 %v4491
        %4557 = vmatpush1.msra.mxu0 %v4490
        %4558 = vmatprep.subr.mxu0 %v4486
        %4559 = vmatpush1.msra.mxu0 %v4485
        %4560 = vmatprep.subr.mxu0 0.0
        %4561 = vmatpush2.msra.mxu0 0.0
        %4562 = vmatprep.subr.mxu0 0.0
        %4563 = vmatpush2.msra.mxu0 0.0
        %4564 = vmatprep.subr.mxu0 0.0
        %4565 = vmatpush2.msra.mxu0 0.0
        %4566 = vmatprep.subr.mxu0 0.0
        %4567 = vmatpush2.msra.mxu0 0.0
        %4568 = vmatprep.subr.mxu0 0.0
        %4569 = vmatpush2.msra.mxu0 0.0
        %4570 = vmatprep.subr.mxu0 0.0
        %4571 = vmatpush2.msra.mxu0 0.0
        %4572 = vmatprep.subr.mxu0 0.0
        %4573 = vmatpush2.msra.mxu0 0.0
        %4574 = vmatprep.subr.mxu0 0.0
        %4575 = vmatpush2.msra.mxu0 0.0
        %4576 = vmatprep.subr.mxu0 0.0
        %4577 = vmatpush2.msra.mxu0 0.0
        %4578 = vmatprep.subr.mxu0 0.0
        %4579 = vmatpush2.msra.mxu0 0.0
        %4580 = vmatprep.subr.mxu0 0.0
        %4581 = vmatpush2.msra.mxu0 0.0
        %4582 = vmatprep.subr.mxu0 0.0
        %4583 = vmatpush2.msra.mxu0 0.0
        %4584 = vmatprep.subr.mxu0 0.0
        %4585 = vmatpush2.msra.mxu0 0.0
        %4586 = vmatprep.subr.mxu0 0.0
        %4587 = vmatpush2.msra.mxu0 0.0
        %4588 = vmatprep.subr.mxu0 0.0
        %4589 = vmatpush2.msra.mxu0 0.0
        %4590 = vmatprep.subr.mxu0 0.0
        %4591 = vmatpush2.msra.mxu0 0.0
        %4592 = vmatprep.mubr.f32.mxu0 0.0
        %4593 = vmatmul.mubr.f32.gmra.mxu0 %v4511
        %v4594 = vpop.f32.mrf.mxu0
        %v4595 = vadd.f32 0.0, %v4594
        %v4596 = vpop.f32.mrf.mxu0
        %v4597 = vadd.f32 0.0, %v4596
        %4598 = vdwg.mxu0
        %4599 = vmatprep.subr.mxu0 0.0
        %4600 = vmatpush1.msra.mxu0 0.0
        %4601 = vmatprep.subr.mxu0 0.0
        %4602 = vmatpush1.msra.mxu0 0.0
        %4603 = vmatprep.subr.mxu0 0.0
        %4604 = vmatpush1.msra.mxu0 0.0
        %4605 = vmatprep.subr.mxu0 0.0
        %4606 = vmatpush1.msra.mxu0 0.0
        %4607 = vmatprep.subr.mxu0 0.0
        %4608 = vmatpush1.msra.mxu0 0.0
        %4609 = vmatprep.subr.mxu0 0.0
        %4610 = vmatpush1.msra.mxu0 0.0
        %4611 = vmatprep.subr.mxu0 0.0
        %4612 = vmatpush1.msra.mxu0 0.0
        %4613 = vmatprep.subr.mxu0 0.0
        %4614 = vmatpush1.msra.mxu0 0.0
        %4615 = vmatprep.subr.mxu0 0.0
        %4616 = vmatpush1.msra.mxu0 0.0
        %4617 = vmatprep.subr.mxu0 0.0
        %4618 = vmatpush1.msra.mxu0 0.0
        %4619 = vmatprep.subr.mxu0 0.0
        %4620 = vmatpush1.msra.mxu0 0.0
        %4621 = vmatprep.subr.mxu0 %v4523
        %4622 = vmatpush1.msra.mxu0 %v4520
        %4623 = vmatprep.subr.mxu0 %v4503
        %4624 = vmatpush1.msra.mxu0 %v4502
        %4625 = vmatprep.subr.mxu0 %v4498
        %4626 = vmatpush1.msra.mxu0 %v4497
        %4627 = vmatprep.subr.mxu0 %v4493
        %4628 = vmatpush1.msra.mxu0 %v4492
        %4629 = vmatprep.subr.mxu0 %v4488
        %4630 = vmatpush1.msra.mxu0 %v4487
        %4631 = vmatprep.subr.mxu0 0.0
        %4632 = vmatpush2.msra.mxu0 0.0
        %4633 = vmatprep.subr.mxu0 0.0
        %4634 = vmatpush2.msra.mxu0 0.0
        %4635 = vmatprep.subr.mxu0 0.0
        %4636 = vmatpush2.msra.mxu0 0.0
        %4637 = vmatprep.subr.mxu0 0.0
        %4638 = vmatpush2.msra.mxu0 0.0
        %4639 = vmatprep.subr.mxu0 0.0
        %4640 = vmatpush2.msra.mxu0 0.0
        %4641 = vmatprep.subr.mxu0 0.0
        %4642 = vmatpush2.msra.mxu0 0.0
        %4643 = vmatprep.subr.mxu0 0.0
        %4644 = vmatpush2.msra.mxu0 0.0
        %4645 = vmatprep.subr.mxu0 0.0
        %4646 = vmatpush2.msra.mxu0 0.0
        %4647 = vmatprep.subr.mxu0 0.0
        %4648 = vmatpush2.msra.mxu0 0.0
        %4649 = vmatprep.subr.mxu0 0.0
        %4650 = vmatpush2.msra.mxu0 0.0
        %4651 = vmatprep.subr.mxu0 0.0
        %4652 = vmatpush2.msra.mxu0 0.0
        %4653 = vmatprep.subr.mxu0 0.0
        %4654 = vmatpush2.msra.mxu0 0.0
        %4655 = vmatprep.subr.mxu0 0.0
        %4656 = vmatpush2.msra.mxu0 0.0
        %4657 = vmatprep.subr.mxu0 0.0
        %4658 = vmatpush2.msra.mxu0 0.0
        %4659 = vmatprep.subr.mxu0 0.0
        %4660 = vmatpush2.msra.mxu0 0.0
        %4661 = vmatprep.subr.mxu0 0.0
        %4662 = vmatpush2.msra.mxu0 0.0
        %4663 = vmatprep.mubr.f32.mxu0 0.0
        %4664 = vmatmul.mubr.f32.gmra.mxu0 %v4511
        %v4665 = vpop.f32.mrf.mxu0
        %v4666 = vadd.f32 0.0, %v4665
        %v4667 = vpop.f32.mrf.mxu0
        %v4668 = vadd.f32 0.0, %v4667
        %4669 = vdwg.mxu0
        %4670 = vmatprep.subr.mxu0 0.0
        %4671 = vmatpush1.msra.mxu0 0.0
        %4672 = vmatprep.subr.mxu0 0.0
        %4673 = vmatpush1.msra.mxu0 0.0
        %4674 = vmatprep.subr.mxu0 0.0
        %4675 = vmatpush1.msra.mxu0 0.0
        %4676 = vmatprep.subr.mxu0 0.0
        %4677 = vmatpush1.msra.mxu0 0.0
        %4678 = vmatprep.subr.mxu0 0.0
        %4679 = vmatpush1.msra.mxu0 0.0
        %4680 = vmatprep.subr.mxu0 0.0
        %4681 = vmatpush1.msra.mxu0 0.0
        %4682 = vmatprep.subr.mxu0 0.0
        %4683 = vmatpush1.msra.mxu0 0.0
        %4684 = vmatprep.subr.mxu0 0.0
        %4685 = vmatpush1.msra.mxu0 0.0
        %4686 = vmatprep.subr.mxu0 0.0
        %4687 = vmatpush1.msra.mxu0 0.0
        %4688 = vmatprep.subr.mxu0 0.0
        %4689 = vmatpush1.msra.mxu0 0.0
        %4690 = vmatprep.subr.mxu0 0.0
        %4691 = vmatpush1.msra.mxu0 0.0
        %4692 = vmatprep.subr.mxu0 0.0
        %4693 = vmatpush1.msra.mxu0 %v4526
        %4694 = vmatprep.subr.mxu0 0.0
        %4695 = vmatpush1.msra.mxu0 %v4504
        %4696 = vmatprep.subr.mxu0 0.0
        %4697 = vmatpush1.msra.mxu0 %v4499
        %4698 = vmatprep.subr.mxu0 0.0
        %4699 = vmatpush1.msra.mxu0 %v4494
        %4700 = vmatprep.subr.mxu0 0.0
        %4701 = vmatpush1.msra.mxu0 %v4489
        %4702 = vmatprep.subr.mxu0 0.0
        %4703 = vmatpush2.msra.mxu0 0.0
        %4704 = vmatprep.subr.mxu0 0.0
        %4705 = vmatpush2.msra.mxu0 0.0
        %4706 = vmatprep.subr.mxu0 0.0
        %4707 = vmatpush2.msra.mxu0 0.0
        %4708 = vmatprep.subr.mxu0 0.0
        %4709 = vmatpush2.msra.mxu0 0.0
        %4710 = vmatprep.subr.mxu0 0.0
        %4711 = vmatpush2.msra.mxu0 0.0
        %4712 = vmatprep.subr.mxu0 0.0
        %4713 = vmatpush2.msra.mxu0 0.0
        %4714 = vmatprep.subr.mxu0 0.0
        %4715 = vmatpush2.msra.mxu0 0.0
        %4716 = vmatprep.subr.mxu0 0.0
        %4717 = vmatpush2.msra.mxu0 0.0
        %4718 = vmatprep.subr.mxu0 0.0
        %4719 = vmatpush2.msra.mxu0 0.0
        %4720 = vmatprep.subr.mxu0 0.0
        %4721 = vmatpush2.msra.mxu0 0.0
        %4722 = vmatprep.subr.mxu0 0.0
        %4723 = vmatpush2.msra.mxu0 0.0
        %4724 = vmatprep.subr.mxu0 0.0
        %4725 = vmatpush2.msra.mxu0 0.0
        %4726 = vmatprep.subr.mxu0 0.0
        %4727 = vmatpush2.msra.mxu0 0.0
        %4728 = vmatprep.subr.mxu0 0.0
        %4729 = vmatpush2.msra.mxu0 0.0
        %4730 = vmatprep.subr.mxu0 0.0
        %4731 = vmatpush2.msra.mxu0 0.0
        %4732 = vmatprep.subr.mxu0 0.0
        %4733 = vmatpush2.msra.mxu0 0.0
        %4734 = vmatprep.mubr.f32.mxu0 0.0
        %4735 = vmatmul.mubr.f32.gmra.mxu0 %v4511
        %v4736 = vpop.f32.mrf.mxu0
        %v4737 = vadd.f32 0.0, %v4736
        %v4738 = vpop.f32.mrf.mxu0
        %4739 = vdwg.mxu0
        %v4740 = vadd.f32 %v3963, %v4595
        %v4741 = vadd.f32 %v3965, %v4597
        %v4742 = vadd.f32 %v4034, %v4666
        %v4743 = vadd.f32 %v4036, %v4668
        %v4744 = vadd.f32 %v4105, %v4737
        %v4745 = vld [vmem:[%s4] sm:$0xff]
        %4747 = vset.pattern.permute.xlu0 0
        %4748 = vperm.xlu0 %4747, %v4745
        %v4749 = vpop.permute.xlu0 %4748
        %v4751 = vadd.f32 %v4740, %v4749
        %v4752 = vadd.f32 %v4741, %v4749
        %v4753 = vadd.f32 %v4742, %v4749
        %v4754 = vadd.f32 %v4743, %v4749
        %v4755 = vadd.f32 %v4744, %v4749
        %v4756 = vmax.f32 %v4751, 0.0
        %v4757 = vmax.f32 %v4752, 0.0
        %v4758 = vmax.f32 %v4753, 0.0
        %v4759 = vmax.f32 %v4754, 0.0
        %v4760 = vmax.f32 %v4755, 0.0
        %v4761 = vmul.f32 %v4756, %v2857
        %v4762 = vmul.f32 %v4757, %v2861
        %v4763 = vmul.f32 %v4758, %v2865
        %v4764 = vmul.f32 %v4759, %v2869
        %v4765 = vmul.f32 %v4760, %v2873
        %4771 = vrot.lane.b32.xlu0 %v4761, 111
        %v4772 = vpop.permute.xlu0 %4771
        %4773 = vrot.lane.b32.xlu0 %v4762, 111
        %v4774 = vpop.permute.xlu0 %4773
        %4775 = vrot.lane.b32.xlu0 %v4763, 111
        %v4776 = vpop.permute.xlu0 %4775
        %4777 = vrot.lane.b32.xlu0 %v4764, 111
        %v4778 = vpop.permute.xlu0 %4777
        %4779 = vrot.lane.b32.xlu0 %v4765, 111
        %v4780 = vpop.permute.xlu0 %4779
        %v4781 = vsel %vm2899, %v4772, %v4774
        %v4782 = vsel %vm2899, %v4774, %v4776
        %v4783 = vsel %vm2899, %v4776, %v4778
        %v4784 = vsel %vm2899, %v4778, %v4780
        %vm4791 = vcmask 1048440
        %4792 = vst.msk [vmem:[#allocation2] sm:$0xff] %vm4791, %v4772
        %4793 = vst [vmem:[#allocation2 + $0x8] sm:$0xff] %v4781
        %4794 = vst [vmem:[#allocation2 + $0x10] sm:$0xff] %v4782
        %4795 = vst [vmem:[#allocation2 + $0x18] sm:$0xff] %v4783
        %4796 = vst [vmem:[#allocation2 + $0x20] sm:$0xff] %v4784
        %vm4797 = vcmask 580608
        %4798 = vst.msk [vmem:[#allocation2 + $0x28] sm:$0xff] %vm4797, %v4780
        %v4799 = vld [vmem:[#allocation2] sm:$0xff]
        %v4800 = vld [vmem:[#allocation2 + $0x8] sm:$0xff]
        %v4801 = vld [vmem:[#allocation2 + $0x10] sm:$0xff]
        %v4802 = vld [vmem:[#allocation2 + $0x18] sm:$0xff]
        %v4803 = vld [vmem:[#allocation2 + $0x20] sm:$0xff]
        %4804 = vst [vmem:[#allocation3] sm:$0xff] %v4799
        %4805 = vst [vmem:[#allocation3 + $0x8] sm:$0xff] %v4800
        %4806 = vst [vmem:[#allocation3 + $0x10] sm:$0xff] %v4801
        %4807 = vst [vmem:[#allocation3 + $0x18] sm:$0xff] %v4802
        %vm4808 = vcmask 719872
        %4809 = vst.msk [vmem:[#allocation3 + $0x20] sm:$0xff] %vm4808, %v4803
        %v4810 = vld [vmem:[#allocation2] sm:$0xff]
        %v4811 = vld [vmem:[#allocation2 + $0x8] sm:$0xff]
        %v4812 = vld [vmem:[#allocation2 + $0x10] sm:$0xff]
        %v4813 = vld [vmem:[#allocation2 + $0x18] sm:$0xff]
        %v4814 = vld [vmem:[#allocation2 + $0x20] sm:$0xff]
        %4820 = vrot.lane.b32.xlu0 %v4810, 127
        %v4821 = vpop.permute.xlu0 %4820
        %4822 = vrot.lane.b32.xlu0 %v4811, 127
        %v4823 = vpop.permute.xlu0 %4822
        %4824 = vrot.lane.b32.xlu0 %v4812, 127
        %v4825 = vpop.permute.xlu0 %4824
        %4826 = vrot.lane.b32.xlu0 %v4813, 127
        %v4827 = vpop.permute.xlu0 %4826
        %4828 = vrot.lane.b32.xlu0 %v4814, 127
        %v4829 = vpop.permute.xlu0 %4828
        %v4830 = vsel %vm1017, %v4821, %v4823
        %v4831 = vsel %vm1017, %v4823, %v4825
        %v4832 = vsel %vm1017, %v4825, %v4827
        %v4833 = vsel %vm1017, %v4827, %v4829
        %4839 = vst [vmem:[#allocation3 + $0x28] sm:$0xff] %v4830
        %4840 = vst [vmem:[#allocation3 + $0x30] sm:$0xff] %v4831
        %4841 = vst [vmem:[#allocation3 + $0x38] sm:$0xff] %v4832
        %4842 = vst [vmem:[#allocation3 + $0x40] sm:$0xff] %v4833
        %4843 = vst.msk [vmem:[#allocation3 + $0x48] sm:$0xff] %vm4808, %v4829
        %v4844 = vld [vmem:[#allocation2] sm:$0xff]
        %v4845 = vld [vmem:[#allocation2 + $0x8] sm:$0xff]
        %v4846 = vld [vmem:[#allocation2 + $0x10] sm:$0xff]
        %v4847 = vld [vmem:[#allocation2 + $0x18] sm:$0xff]
        %v4848 = vld [vmem:[#allocation2 + $0x20] sm:$0xff]
        %4854 = vrot.lane.b32.xlu0 %v4844, 126
        %v4855 = vpop.permute.xlu0 %4854
        %4856 = vrot.lane.b32.xlu0 %v4845, 126
        %v4857 = vpop.permute.xlu0 %4856
        %4858 = vrot.lane.b32.xlu0 %v4846, 126
        %v4859 = vpop.permute.xlu0 %4858
        %4860 = vrot.lane.b32.xlu0 %v4847, 126
        %v4861 = vpop.permute.xlu0 %4860
        %4862 = vrot.lane.b32.xlu0 %v4848, 126
        %v4863 = vpop.permute.xlu0 %4862
        %v4864 = vsel %vm1053, %v4855, %v4857
        %v4865 = vsel %vm1053, %v4857, %v4859
        %v4866 = vsel %vm1053, %v4859, %v4861
        %v4867 = vsel %vm1053, %v4861, %v4863
        %4873 = vst [vmem:[#allocation3 + $0x50] sm:$0xff] %v4864
        %4874 = vst [vmem:[#allocation3 + $0x58] sm:$0xff] %v4865
        %4875 = vst [vmem:[#allocation3 + $0x60] sm:$0xff] %v4866
        %4876 = vst [vmem:[#allocation3 + $0x68] sm:$0xff] %v4867
        %4877 = vst.msk [vmem:[#allocation3 + $0x70] sm:$0xff] %vm4808, %v4863
        %v4878 = vld [vmem:[#allocation2] sm:$0xff]
        %v4879 = vld [vmem:[#allocation2 + $0x8] sm:$0xff]
        %v4880 = vld [vmem:[#allocation2 + $0x10] sm:$0xff]
        %v4881 = vld [vmem:[#allocation2 + $0x18] sm:$0xff]
        %v4882 = vld [vmem:[#allocation2 + $0x20] sm:$0xff]
        %4888 = vrot.lane.b32.xlu0 %v4878, 118
        %v4889 = vpop.permute.xlu0 %4888
        %4890 = vrot.lane.b32.xlu0 %v4879, 118
        %v4891 = vpop.permute.xlu0 %4890
        %4892 = vrot.lane.b32.xlu0 %v4880, 118
        %v4893 = vpop.permute.xlu0 %4892
        %4894 = vrot.lane.b32.xlu0 %v4881, 118
        %v4895 = vpop.permute.xlu0 %4894
        %4896 = vrot.lane.b32.xlu0 %v4882, 118
        %v4897 = vpop.permute.xlu0 %4896
        %v4898 = vsel %vm1093, %v4889, %v4891
        %v4899 = vsel %vm1093, %v4891, %v4893
        %v4900 = vsel %vm1093, %v4893, %v4895
        %v4901 = vsel %vm1093, %v4895, %v4897
        %4907 = vst [vmem:[#allocation3 + $0x78] sm:$0xff] %v4898
        %4908 = vst [vmem:[#allocation3 + $0x80] sm:$0xff] %v4899
        %4909 = vst [vmem:[#allocation3 + $0x88] sm:$0xff] %v4900
        %4910 = vst [vmem:[#allocation3 + $0x90] sm:$0xff] %v4901
        %4911 = vst.msk [vmem:[#allocation3 + $0x98] sm:$0xff] %vm4808, %v4897
        %v4912 = vld [vmem:[#allocation2] sm:$0xff]
        %v4913 = vld [vmem:[#allocation2 + $0x8] sm:$0xff]
        %v4914 = vld [vmem:[#allocation2 + $0x10] sm:$0xff]
        %v4915 = vld [vmem:[#allocation2 + $0x18] sm:$0xff]
        %v4916 = vld [vmem:[#allocation2 + $0x20] sm:$0xff]
        %4922 = vrot.lane.b32.xlu0 %v4912, 117
        %v4923 = vpop.permute.xlu0 %4922
        %4924 = vrot.lane.b32.xlu0 %v4913, 117
        %v4925 = vpop.permute.xlu0 %4924
        %4926 = vrot.lane.b32.xlu0 %v4914, 117
        %v4927 = vpop.permute.xlu0 %4926
        %4928 = vrot.lane.b32.xlu0 %v4915, 117
        %v4929 = vpop.permute.xlu0 %4928
        %4930 = vrot.lane.b32.xlu0 %v4916, 117
        %v4931 = vpop.permute.xlu0 %4930
        %v4932 = vsel %vm1128, %v4923, %v4925
        %v4933 = vsel %vm1128, %v4925, %v4927
        %v4934 = vsel %vm1128, %v4927, %v4929
        %v4935 = vsel %vm1128, %v4929, %v4931
        %4941 = vst [vmem:[#allocation3 + $0xa0] sm:$0xff] %v4932
        %4942 = vst [vmem:[#allocation3 + $0xa8] sm:$0xff] %v4933
        %4943 = vst [vmem:[#allocation3 + $0xb0] sm:$0xff] %v4934
        %4944 = vst [vmem:[#allocation3 + $0xb8] sm:$0xff] %v4935
        %4945 = vst.msk [vmem:[#allocation3 + $0xc0] sm:$0xff] %vm4808, %v4931
        %v4946 = vld [vmem:[#allocation2] sm:$0xff]
        %v4947 = vld [vmem:[#allocation2 + $0x8] sm:$0xff]
        %v4948 = vld [vmem:[#allocation2 + $0x10] sm:$0xff]
        %v4949 = vld [vmem:[#allocation2 + $0x18] sm:$0xff]
        %v4950 = vld [vmem:[#allocation2 + $0x20] sm:$0xff]
        %4956 = vrot.lane.b32.xlu0 %v4946, 116
        %v4957 = vpop.permute.xlu0 %4956
        %4958 = vrot.lane.b32.xlu0 %v4947, 116
        %v4959 = vpop.permute.xlu0 %4958
        %4960 = vrot.lane.b32.xlu0 %v4948, 116
        %v4961 = vpop.permute.xlu0 %4960
        %4962 = vrot.lane.b32.xlu0 %v4949, 116
        %v4963 = vpop.permute.xlu0 %4962
        %4964 = vrot.lane.b32.xlu0 %v4950, 116
        %v4965 = vpop.permute.xlu0 %4964
        %v4966 = vsel %vm1168, %v4957, %v4959
        %v4967 = vsel %vm1168, %v4959, %v4961
        %v4968 = vsel %vm1168, %v4961, %v4963
        %v4969 = vsel %vm1168, %v4963, %v4965
        %4975 = vst [vmem:[#allocation3 + $0xc8] sm:$0xff] %v4966
        %4976 = vst [vmem:[#allocation3 + $0xd0] sm:$0xff] %v4967
        %4977 = vst [vmem:[#allocation3 + $0xd8] sm:$0xff] %v4968
        %4978 = vst [vmem:[#allocation3 + $0xe0] sm:$0xff] %v4969
        %4979 = vst.msk [vmem:[#allocation3 + $0xe8] sm:$0xff] %vm4808, %v4965
        %v4980 = vld [vmem:[#allocation2] sm:$0xff]
        %v4981 = vld [vmem:[#allocation2 + $0x8] sm:$0xff]
        %v4982 = vld [vmem:[#allocation2 + $0x10] sm:$0xff]
        %v4983 = vld [vmem:[#allocation2 + $0x18] sm:$0xff]
        %v4984 = vld [vmem:[#allocation2 + $0x20] sm:$0xff]
        %4990 = vrot.lane.b32.xlu0 %v4980, 108
        %v4991 = vpop.permute.xlu0 %4990
        %4992 = vrot.lane.b32.xlu0 %v4981, 108
        %v4993 = vpop.permute.xlu0 %4992
        %4994 = vrot.lane.b32.xlu0 %v4982, 108
        %v4995 = vpop.permute.xlu0 %4994
        %4996 = vrot.lane.b32.xlu0 %v4983, 108
        %v4997 = vpop.permute.xlu0 %4996
        %4998 = vrot.lane.b32.xlu0 %v4984, 108
        %v4999 = vpop.permute.xlu0 %4998
        %v5000 = vsel %vm1203, %v4991, %v4993
        %v5001 = vsel %vm1203, %v4993, %v4995
        %v5002 = vsel %vm1203, %v4995, %v4997
        %v5003 = vsel %vm1203, %v4997, %v4999
        %5009 = vst [vmem:[#allocation3 + $0xf0] sm:$0xff] %v5000
        %5010 = vst [vmem:[#allocation3 + $0xf8] sm:$0xff] %v5001
        %5011 = vst [vmem:[#allocation3 + $0x100] sm:$0xff] %v5002
        %5012 = vst [vmem:[#allocation3 + $0x108] sm:$0xff] %v5003
        %5013 = vst.msk [vmem:[#allocation3 + $0x110] sm:$0xff] %vm4808, %v4999
        %v5014 = vld [vmem:[#allocation2] sm:$0xff]
        %v5015 = vld [vmem:[#allocation2 + $0x8] sm:$0xff]
        %v5016 = vld [vmem:[#allocation2 + $0x10] sm:$0xff]
        %v5017 = vld [vmem:[#allocation2 + $0x18] sm:$0xff]
        %v5018 = vld [vmem:[#allocation2 + $0x20] sm:$0xff]
        %5024 = vrot.lane.b32.xlu0 %v5014, 107
        %v5025 = vpop.permute.xlu0 %5024
        %5026 = vrot.lane.b32.xlu0 %v5015, 107
        %v5027 = vpop.permute.xlu0 %5026
        %5028 = vrot.lane.b32.xlu0 %v5016, 107
        %v5029 = vpop.permute.xlu0 %5028
        %5030 = vrot.lane.b32.xlu0 %v5017, 107
        %v5031 = vpop.permute.xlu0 %5030
        %5032 = vrot.lane.b32.xlu0 %v5018, 107
        %v5033 = vpop.permute.xlu0 %5032
        %v5034 = vsel %vm1243, %v5025, %v5027
        %v5035 = vsel %vm1243, %v5027, %v5029
        %v5036 = vsel %vm1243, %v5029, %v5031
        %v5037 = vsel %vm1243, %v5031, %v5033
        %5043 = vst [vmem:[#allocation3 + $0x118] sm:$0xff] %v5034
        %5044 = vst [vmem:[#allocation3 + $0x120] sm:$0xff] %v5035
        %5045 = vst [vmem:[#allocation3 + $0x128] sm:$0xff] %v5036
        %5046 = vst [vmem:[#allocation3 + $0x130] sm:$0xff] %v5037
        %5047 = vst.msk [vmem:[#allocation3 + $0x138] sm:$0xff] %vm4808, %v5033
        %v5048 = vld [vmem:[#allocation2] sm:$0xff]
        %v5049 = vld [vmem:[#allocation2 + $0x8] sm:$0xff]
        %v5050 = vld [vmem:[#allocation2 + $0x10] sm:$0xff]
        %v5051 = vld [vmem:[#allocation2 + $0x18] sm:$0xff]
        %v5052 = vld [vmem:[#allocation2 + $0x20] sm:$0xff]
        %5058 = vrot.lane.b32.xlu0 %v5048, 106
        %v5059 = vpop.permute.xlu0 %5058
        %5060 = vrot.lane.b32.xlu0 %v5049, 106
        %v5061 = vpop.permute.xlu0 %5060
        %5062 = vrot.lane.b32.xlu0 %v5050, 106
        %v5063 = vpop.permute.xlu0 %5062
        %5064 = vrot.lane.b32.xlu0 %v5051, 106
        %v5065 = vpop.permute.xlu0 %5064
        %5066 = vrot.lane.b32.xlu0 %v5052, 106
        %v5067 = vpop.permute.xlu0 %5066
        %v5068 = vsel %vm1278, %v5059, %v5061
        %v5069 = vsel %vm1278, %v5061, %v5063
        %v5070 = vsel %vm1278, %v5063, %v5065
        %v5071 = vsel %vm1278, %v5065, %v5067
        %5077 = vst [vmem:[#allocation3 + $0x140] sm:$0xff] %v5068
        %5078 = vst [vmem:[#allocation3 + $0x148] sm:$0xff] %v5069
        %5079 = vst [vmem:[#allocation3 + $0x150] sm:$0xff] %v5070
        %5080 = vst [vmem:[#allocation3 + $0x158] sm:$0xff] %v5071
        %5081 = vst.msk [vmem:[#allocation3 + $0x160] sm:$0xff] %vm4808, %v5067
        %v5082 = vld [vmem:[#allocation9] sm:$0xff]
        %v5083 = vld [vmem:[#allocation3] sm:$0xff]
        %v5084 = vld [vmem:[#allocation3 + $0x8] sm:$0xff]
        %v5085 = vld [vmem:[#allocation3 + $0x10] sm:$0xff]
        %v5086 = vld [vmem:[#allocation3 + $0x18] sm:$0xff]
        %v5087 = vld [vmem:[#allocation3 + $0x20] sm:$0xff]
        %v5088 = vld [vmem:[#allocation3 + $0x28] sm:$0xff]
        %v5089 = vld [vmem:[#allocation3 + $0x30] sm:$0xff]
        %v5090 = vld [vmem:[#allocation3 + $0x38] sm:$0xff]
        %v5091 = vld [vmem:[#allocation3 + $0x40] sm:$0xff]
        %v5092 = vld [vmem:[#allocation3 + $0x48] sm:$0xff]
        %v5093 = vld [vmem:[#allocation3 + $0x50] sm:$0xff]
        %v5094 = vld [vmem:[#allocation3 + $0x58] sm:$0xff]
        %v5095 = vld [vmem:[#allocation3 + $0x60] sm:$0xff]
        %v5096 = vld [vmem:[#allocation3 + $0x68] sm:$0xff]
        %v5097 = vld [vmem:[#allocation3 + $0x70] sm:$0xff]
        %v5098 = vld [vmem:[#allocation3 + $0x78] sm:$0xff]
        %v5099 = vld [vmem:[#allocation3 + $0x80] sm:$0xff]
        %v5100 = vld [vmem:[#allocation3 + $0x88] sm:$0xff]
        %v5101 = vld [vmem:[#allocation3 + $0x90] sm:$0xff]
        %v5102 = vld [vmem:[#allocation3 + $0x98] sm:$0xff]
        %v5103 = vld [vmem:[#allocation3 + $0xa0] sm:$0xff]
        %v5104 = vld [vmem:[#allocation3 + $0xa8] sm:$0xff]
        %v5105 = vld [vmem:[#allocation3 + $0xb0] sm:$0xff]
        %v5106 = vld [vmem:[#allocation3 + $0xb8] sm:$0xff]
        %v5107 = vld [vmem:[#allocation3 + $0xc0] sm:$0xff]
        %v5108 = vld [vmem:[#allocation3 + $0xc8] sm:$0xff]
        %v5109 = vld [vmem:[#allocation3 + $0xd0] sm:$0xff]
        %v5110 = vld [vmem:[#allocation3 + $0xd8] sm:$0xff]
        %v5111 = vld [vmem:[#allocation3 + $0xe0] sm:$0xff]
        %v5112 = vld [vmem:[#allocation3 + $0xe8] sm:$0xff]
        %v5113 = vld [vmem:[#allocation3 + $0xf0] sm:$0xff]
        %v5114 = vld [vmem:[#allocation3 + $0xf8] sm:$0xff]
        %v5115 = vld [vmem:[#allocation3 + $0x100] sm:$0xff]
        %v5116 = vld [vmem:[#allocation3 + $0x108] sm:$0xff]
        %v5117 = vld [vmem:[#allocation3 + $0x110] sm:$0xff]
        %v5118 = vld [vmem:[#allocation3 + $0x118] sm:$0xff]
        %v5119 = vld [vmem:[#allocation3 + $0x120] sm:$0xff]
        %v5120 = vld [vmem:[#allocation3 + $0x128] sm:$0xff]
        %v5121 = vld [vmem:[#allocation3 + $0x130] sm:$0xff]
        %v5122 = vld [vmem:[#allocation3 + $0x138] sm:$0xff]
        %v5123 = vld [vmem:[#allocation3 + $0x140] sm:$0xff]
        %v5124 = vld [vmem:[#allocation3 + $0x148] sm:$0xff]
        %v5125 = vld [vmem:[#allocation3 + $0x150] sm:$0xff]
        %v5126 = vld [vmem:[#allocation3 + $0x158] sm:$0xff]
        %v5127 = vld [vmem:[#allocation3 + $0x160] sm:$0xff]
        %v5128 = vld [vmem:[#allocation2] sm:$0xff]
        %v5129 = vld [vmem:[#allocation2 + $0x8] sm:$0xff]
        %v5130 = vld [vmem:[#allocation2 + $0x10] sm:$0xff]
        %v5131 = vld [vmem:[#allocation2 + $0x18] sm:$0xff]
        %v5132 = vld [vmem:[#allocation2 + $0x20] sm:$0xff]
        %v5133 = vld [vmem:[#allocation2 + $0x28] sm:$0xff]
        %5140 = vrot.lane.b32.xlu0 %v5128, 28
        %v5141 = vpop.permute.xlu0 %5140
        %5142 = vrot.lane.b32.xlu0 %v5129, 28
        %v5143 = vpop.permute.xlu0 %5142
        %5144 = vrot.lane.b32.xlu0 %v5130, 28
        %v5145 = vpop.permute.xlu0 %5144
        %5146 = vrot.lane.b32.xlu0 %v5131, 28
        %v5147 = vpop.permute.xlu0 %5146
        %5148 = vrot.lane.b32.xlu0 %v5132, 28
        %v5149 = vpop.permute.xlu0 %5148
        %5150 = vrot.lane.b32.xlu0 %v5133, 28
        %v5151 = vpop.permute.xlu0 %5150
        %v5152 = vsel %vm1343, %v5141, %v5143
        %v5153 = vsel %vm1343, %v5143, %v5145
        %v5154 = vsel %vm1343, %v5145, %v5147
        %v5155 = vsel %vm1343, %v5147, %v5149
        %v5156 = vsel %vm1343, %v5149, %v5151
        %5162 = vst [vmem:[#allocation3] sm:$0xff] %v5152
        %5163 = vst [vmem:[#allocation3 + $0x8] sm:$0xff] %v5153
        %5164 = vst [vmem:[#allocation3 + $0x10] sm:$0xff] %v5154
        %5165 = vst [vmem:[#allocation3 + $0x18] sm:$0xff] %v5155
        %5166 = vst.msk [vmem:[#allocation3 + $0x20] sm:$0xff] %vm4808, %v5156
        %v5167 = vld [vmem:[#allocation2] sm:$0xff]
        %v5168 = vld [vmem:[#allocation2 + $0x8] sm:$0xff]
        %v5169 = vld [vmem:[#allocation2 + $0x10] sm:$0xff]
        %v5170 = vld [vmem:[#allocation2 + $0x18] sm:$0xff]
        %v5171 = vld [vmem:[#allocation2 + $0x20] sm:$0xff]
        %v5172 = vld [vmem:[#allocation2 + $0x28] sm:$0xff]
        %5179 = vrot.lane.b32.xlu0 %v5167, 27
        %v5180 = vpop.permute.xlu0 %5179
        %5181 = vrot.lane.b32.xlu0 %v5168, 27
        %v5182 = vpop.permute.xlu0 %5181
        %5183 = vrot.lane.b32.xlu0 %v5169, 27
        %v5184 = vpop.permute.xlu0 %5183
        %5185 = vrot.lane.b32.xlu0 %v5170, 27
        %v5186 = vpop.permute.xlu0 %5185
        %5187 = vrot.lane.b32.xlu0 %v5171, 27
        %v5188 = vpop.permute.xlu0 %5187
        %5189 = vrot.lane.b32.xlu0 %v5172, 27
        %v5190 = vpop.permute.xlu0 %5189
        %v5191 = vsel %vm1389, %v5180, %v5182
        %v5192 = vsel %vm1389, %v5182, %v5184
        %v5193 = vsel %vm1389, %v5184, %v5186
        %v5194 = vsel %vm1389, %v5186, %v5188
        %v5195 = vsel %vm1389, %v5188, %v5190
        %5201 = vst [vmem:[#allocation3 + $0x28] sm:$0xff] %v5191
        %5202 = vst [vmem:[#allocation3 + $0x30] sm:$0xff] %v5192
        %5203 = vst [vmem:[#allocation3 + $0x38] sm:$0xff] %v5193
        %5204 = vst [vmem:[#allocation3 + $0x40] sm:$0xff] %v5194
        %5205 = vst.msk [vmem:[#allocation3 + $0x48] sm:$0xff] %vm4808, %v5195
        %v5206 = vld [vmem:[#allocation2] sm:$0xff]
        %v5207 = vld [vmem:[#allocation2 + $0x8] sm:$0xff]
        %v5208 = vld [vmem:[#allocation2 + $0x10] sm:$0xff]
        %v5209 = vld [vmem:[#allocation2 + $0x18] sm:$0xff]
        %v5210 = vld [vmem:[#allocation2 + $0x20] sm:$0xff]
        %v5211 = vld [vmem:[#allocation2 + $0x28] sm:$0xff]
        %5218 = vrot.lane.b32.xlu0 %v5206, 26
        %v5219 = vpop.permute.xlu0 %5218
        %5220 = vrot.lane.b32.xlu0 %v5207, 26
        %v5221 = vpop.permute.xlu0 %5220
        %5222 = vrot.lane.b32.xlu0 %v5208, 26
        %v5223 = vpop.permute.xlu0 %5222
        %5224 = vrot.lane.b32.xlu0 %v5209, 26
        %v5225 = vpop.permute.xlu0 %5224
        %5226 = vrot.lane.b32.xlu0 %v5210, 26
        %v5227 = vpop.permute.xlu0 %5226
        %5228 = vrot.lane.b32.xlu0 %v5211, 26
        %v5229 = vpop.permute.xlu0 %5228
        %v5230 = vsel %vm1429, %v5219, %v5221
        %v5231 = vsel %vm1429, %v5221, %v5223
        %v5232 = vsel %vm1429, %v5223, %v5225
        %v5233 = vsel %vm1429, %v5225, %v5227
        %v5234 = vsel %vm1429, %v5227, %v5229
        %5240 = vst [vmem:[#allocation3 + $0x50] sm:$0xff] %v5230
        %5241 = vst [vmem:[#allocation3 + $0x58] sm:$0xff] %v5231
        %5242 = vst [vmem:[#allocation3 + $0x60] sm:$0xff] %v5232
        %5243 = vst [vmem:[#allocation3 + $0x68] sm:$0xff] %v5233
        %5244 = vst.msk [vmem:[#allocation3 + $0x70] sm:$0xff] %vm4808, %v5234
        %v5245 = vld [vmem:[#allocation2] sm:$0xff]
        %v5246 = vld [vmem:[#allocation2 + $0x8] sm:$0xff]
        %v5247 = vld [vmem:[#allocation2 + $0x10] sm:$0xff]
        %v5248 = vld [vmem:[#allocation2 + $0x18] sm:$0xff]
        %v5249 = vld [vmem:[#allocation2 + $0x20] sm:$0xff]
        %v5250 = vld [vmem:[#allocation2 + $0x28] sm:$0xff]
        %5257 = vrot.lane.b32.xlu0 %v5245, 18
        %v5258 = vpop.permute.xlu0 %5257
        %5259 = vrot.lane.b32.xlu0 %v5246, 18
        %v5260 = vpop.permute.xlu0 %5259
        %5261 = vrot.lane.b32.xlu0 %v5247, 18
        %v5262 = vpop.permute.xlu0 %5261
        %5263 = vrot.lane.b32.xlu0 %v5248, 18
        %v5264 = vpop.permute.xlu0 %5263
        %5265 = vrot.lane.b32.xlu0 %v5249, 18
        %v5266 = vpop.permute.xlu0 %5265
        %5267 = vrot.lane.b32.xlu0 %v5250, 18
        %v5268 = vpop.permute.xlu0 %5267
        %v5269 = vsel %vm1475, %v5258, %v5260
        %v5270 = vsel %vm1475, %v5260, %v5262
        %v5271 = vsel %vm1475, %v5262, %v5264
        %v5272 = vsel %vm1475, %v5264, %v5266
        %v5273 = vsel %vm1475, %v5266, %v5268
        %5279 = vst [vmem:[#allocation3 + $0x78] sm:$0xff] %v5269
        %5280 = vst [vmem:[#allocation3 + $0x80] sm:$0xff] %v5270
        %5281 = vst [vmem:[#allocation3 + $0x88] sm:$0xff] %v5271
        %5282 = vst [vmem:[#allocation3 + $0x90] sm:$0xff] %v5272
        %5283 = vst.msk [vmem:[#allocation3 + $0x98] sm:$0xff] %vm4808, %v5273
        %v5284 = vld [vmem:[#allocation2] sm:$0xff]
        %v5285 = vld [vmem:[#allocation2 + $0x8] sm:$0xff]
        %v5286 = vld [vmem:[#allocation2 + $0x10] sm:$0xff]
        %v5287 = vld [vmem:[#allocation2 + $0x18] sm:$0xff]
        %v5288 = vld [vmem:[#allocation2 + $0x20] sm:$0xff]
        %v5289 = vld [vmem:[#allocation2 + $0x28] sm:$0xff]
        %5296 = vrot.lane.b32.xlu0 %v5284, 17
        %v5297 = vpop.permute.xlu0 %5296
        %5298 = vrot.lane.b32.xlu0 %v5285, 17
        %v5299 = vpop.permute.xlu0 %5298
        %5300 = vrot.lane.b32.xlu0 %v5286, 17
        %v5301 = vpop.permute.xlu0 %5300
        %5302 = vrot.lane.b32.xlu0 %v5287, 17
        %v5303 = vpop.permute.xlu0 %5302
        %5304 = vrot.lane.b32.xlu0 %v5288, 17
        %v5305 = vpop.permute.xlu0 %5304
        %5306 = vrot.lane.b32.xlu0 %v5289, 17
        %v5307 = vpop.permute.xlu0 %5306
        %v5308 = vsel %vm1515, %v5297, %v5299
        %v5309 = vsel %vm1515, %v5299, %v5301
        %v5310 = vsel %vm1515, %v5301, %v5303
        %v5311 = vsel %vm1515, %v5303, %v5305
        %v5312 = vsel %vm1515, %v5305, %v5307
        %5318 = vst [vmem:[#allocation3 + $0xa0] sm:$0xff] %v5308
        %5319 = vst [vmem:[#allocation3 + $0xa8] sm:$0xff] %v5309
        %5320 = vst [vmem:[#allocation3 + $0xb0] sm:$0xff] %v5310
        %5321 = vst [vmem:[#allocation3 + $0xb8] sm:$0xff] %v5311
        %5322 = vst.msk [vmem:[#allocation3 + $0xc0] sm:$0xff] %vm4808, %v5312
        %v5323 = vld [vmem:[#allocation2] sm:$0xff]
        %v5324 = vld [vmem:[#allocation2 + $0x8] sm:$0xff]
        %v5325 = vld [vmem:[#allocation2 + $0x10] sm:$0xff]
        %v5326 = vld [vmem:[#allocation2 + $0x18] sm:$0xff]
        %v5327 = vld [vmem:[#allocation2 + $0x20] sm:$0xff]
        %v5328 = vld [vmem:[#allocation2 + $0x28] sm:$0xff]
        %5335 = vrot.lane.b32.xlu0 %v5323, 16
        %v5336 = vpop.permute.xlu0 %5335
        %5337 = vrot.lane.b32.xlu0 %v5324, 16
        %v5338 = vpop.permute.xlu0 %5337
        %5339 = vrot.lane.b32.xlu0 %v5325, 16
        %v5340 = vpop.permute.xlu0 %5339
        %5341 = vrot.lane.b32.xlu0 %v5326, 16
        %v5342 = vpop.permute.xlu0 %5341
        %5343 = vrot.lane.b32.xlu0 %v5327, 16
        %v5344 = vpop.permute.xlu0 %5343
        %5345 = vrot.lane.b32.xlu0 %v5328, 16
        %v5346 = vpop.permute.xlu0 %5345
        %v5347 = vsel %vm1561, %v5336, %v5338
        %v5348 = vsel %vm1561, %v5338, %v5340
        %v5349 = vsel %vm1561, %v5340, %v5342
        %v5350 = vsel %vm1561, %v5342, %v5344
        %v5351 = vsel %vm1561, %v5344, %v5346
        %5357 = vst [vmem:[#allocation3 + $0xc8] sm:$0xff] %v5347
        %5358 = vst [vmem:[#allocation3 + $0xd0] sm:$0xff] %v5348
        %5359 = vst [vmem:[#allocation3 + $0xd8] sm:$0xff] %v5349
        %5360 = vst [vmem:[#allocation3 + $0xe0] sm:$0xff] %v5350
        %5361 = vst.msk [vmem:[#allocation3 + $0xe8] sm:$0xff] %vm4808, %v5351
        %v5362 = vld [vmem:[#allocation2] sm:$0xff]
        %v5363 = vld [vmem:[#allocation2 + $0x8] sm:$0xff]
        %v5364 = vld [vmem:[#allocation2 + $0x10] sm:$0xff]
        %v5365 = vld [vmem:[#allocation2 + $0x18] sm:$0xff]
        %v5366 = vld [vmem:[#allocation2 + $0x20] sm:$0xff]
        %v5367 = vld [vmem:[#allocation2 + $0x28] sm:$0xff]
        %5374 = vrot.lane.b32.xlu0 %v5362, 8
        %v5375 = vpop.permute.xlu0 %5374
        %5376 = vrot.lane.b32.xlu0 %v5363, 8
        %v5377 = vpop.permute.xlu0 %5376
        %5378 = vrot.lane.b32.xlu0 %v5364, 8
        %v5379 = vpop.permute.xlu0 %5378
        %5380 = vrot.lane.b32.xlu0 %v5365, 8
        %v5381 = vpop.permute.xlu0 %5380
        %5382 = vrot.lane.b32.xlu0 %v5366, 8
        %v5383 = vpop.permute.xlu0 %5382
        %5384 = vrot.lane.b32.xlu0 %v5367, 8
        %v5385 = vpop.permute.xlu0 %5384
        %v5386 = vsel %vm1601, %v5375, %v5377
        %v5387 = vsel %vm1601, %v5377, %v5379
        %v5388 = vsel %vm1601, %v5379, %v5381
        %v5389 = vsel %vm1601, %v5381, %v5383
        %v5390 = vsel %vm1601, %v5383, %v5385
        %5396 = vst [vmem:[#allocation3 + $0xf0] sm:$0xff] %v5386
        %5397 = vst [vmem:[#allocation3 + $0xf8] sm:$0xff] %v5387
        %5398 = vst [vmem:[#allocation3 + $0x100] sm:$0xff] %v5388
        %5399 = vst [vmem:[#allocation3 + $0x108] sm:$0xff] %v5389
        %5400 = vst.msk [vmem:[#allocation3 + $0x110] sm:$0xff] %vm4808, %v5390
        %v5401 = vld [vmem:[#allocation2] sm:$0xff]
        %v5402 = vld [vmem:[#allocation2 + $0x8] sm:$0xff]
        %v5403 = vld [vmem:[#allocation2 + $0x10] sm:$0xff]
        %v5404 = vld [vmem:[#allocation2 + $0x18] sm:$0xff]
        %v5405 = vld [vmem:[#allocation2 + $0x20] sm:$0xff]
        %v5406 = vld [vmem:[#allocation2 + $0x28] sm:$0xff]
        %5413 = vrot.lane.b32.xlu0 %v5401, 7
        %v5414 = vpop.permute.xlu0 %5413
        %5415 = vrot.lane.b32.xlu0 %v5402, 7
        %v5416 = vpop.permute.xlu0 %5415
        %5417 = vrot.lane.b32.xlu0 %v5403, 7
        %v5418 = vpop.permute.xlu0 %5417
        %5419 = vrot.lane.b32.xlu0 %v5404, 7
        %v5420 = vpop.permute.xlu0 %5419
        %5421 = vrot.lane.b32.xlu0 %v5405, 7
        %v5422 = vpop.permute.xlu0 %5421
        %5423 = vrot.lane.b32.xlu0 %v5406, 7
        %v5424 = vpop.permute.xlu0 %5423
        %v5425 = vsel %vm1647, %v5414, %v5416
        %v5426 = vsel %vm1647, %v5416, %v5418
        %v5427 = vsel %vm1647, %v5418, %v5420
        %v5428 = vsel %vm1647, %v5420, %v5422
        %v5429 = vsel %vm1647, %v5422, %v5424
        %5435 = vst [vmem:[#allocation3 + $0x118] sm:$0xff] %v5425
        %5436 = vst [vmem:[#allocation3 + $0x120] sm:$0xff] %v5426
        %5437 = vst [vmem:[#allocation3 + $0x128] sm:$0xff] %v5427
        %5438 = vst [vmem:[#allocation3 + $0x130] sm:$0xff] %v5428
        %5439 = vst.msk [vmem:[#allocation3 + $0x138] sm:$0xff] %vm4808, %v5429
        %v5440 = vld [vmem:[#allocation2] sm:$0xff]
        %v5441 = vld [vmem:[#allocation2 + $0x8] sm:$0xff]
        %v5442 = vld [vmem:[#allocation2 + $0x10] sm:$0xff]
        %v5443 = vld [vmem:[#allocation2 + $0x18] sm:$0xff]
        %v5444 = vld [vmem:[#allocation2 + $0x20] sm:$0xff]
        %v5445 = vld [vmem:[#allocation2 + $0x28] sm:$0xff]
        %5452 = vrot.lane.b32.xlu0 %v5440, 6
        %v5453 = vpop.permute.xlu0 %5452
        %5454 = vrot.lane.b32.xlu0 %v5441, 6
        %v5455 = vpop.permute.xlu0 %5454
        %5456 = vrot.lane.b32.xlu0 %v5442, 6
        %v5457 = vpop.permute.xlu0 %5456
        %5458 = vrot.lane.b32.xlu0 %v5443, 6
        %v5459 = vpop.permute.xlu0 %5458
        %5460 = vrot.lane.b32.xlu0 %v5444, 6
        %v5461 = vpop.permute.xlu0 %5460
        %5462 = vrot.lane.b32.xlu0 %v5445, 6
        %v5463 = vpop.permute.xlu0 %5462
        %v5464 = vsel %vm1687, %v5453, %v5455
        %v5465 = vsel %vm1687, %v5455, %v5457
        %v5466 = vsel %vm1687, %v5457, %v5459
        %v5467 = vsel %vm1687, %v5459, %v5461
        %v5468 = vsel %vm1687, %v5461, %v5463
        %5474 = vst [vmem:[#allocation3 + $0x140] sm:$0xff] %v5464
        %5475 = vst [vmem:[#allocation3 + $0x148] sm:$0xff] %v5465
        %5476 = vst [vmem:[#allocation3 + $0x150] sm:$0xff] %v5466
        %5477 = vst [vmem:[#allocation3 + $0x158] sm:$0xff] %v5467
        %5478 = vst.msk [vmem:[#allocation3 + $0x160] sm:$0xff] %vm4808, %v5468
        %s5479 = scalar_lea.vmem [#allocation9], 8
        %v5480 = vld [vmem:[%s5479] sm:$0xff]
        %v5481 = vld [vmem:[#allocation3] sm:$0xff]
        %v5482 = vld [vmem:[#allocation3 + $0x8] sm:$0xff]
        %v5483 = vld [vmem:[#allocation3 + $0x10] sm:$0xff]
        %v5484 = vld [vmem:[#allocation3 + $0x18] sm:$0xff]
        %v5485 = vld [vmem:[#allocation3 + $0x20] sm:$0xff]
        %v5486 = vld [vmem:[#allocation3 + $0x28] sm:$0xff]
        %v5487 = vld [vmem:[#allocation3 + $0x30] sm:$0xff]
        %v5488 = vld [vmem:[#allocation3 + $0x38] sm:$0xff]
        %v5489 = vld [vmem:[#allocation3 + $0x40] sm:$0xff]
        %v5490 = vld [vmem:[#allocation3 + $0x48] sm:$0xff]
        %v5491 = vld [vmem:[#allocation3 + $0x50] sm:$0xff]
        %v5492 = vld [vmem:[#allocation3 + $0x58] sm:$0xff]
        %v5493 = vld [vmem:[#allocation3 + $0x60] sm:$0xff]
        %v5494 = vld [vmem:[#allocation3 + $0x68] sm:$0xff]
        %v5495 = vld [vmem:[#allocation3 + $0x70] sm:$0xff]
        %v5496 = vld [vmem:[#allocation3 + $0x78] sm:$0xff]
        %v5497 = vld [vmem:[#allocation3 + $0x80] sm:$0xff]
        %v5498 = vld [vmem:[#allocation3 + $0x88] sm:$0xff]
        %v5499 = vld [vmem:[#allocation3 + $0x90] sm:$0xff]
        %v5500 = vld [vmem:[#allocation3 + $0x98] sm:$0xff]
        %v5501 = vld [vmem:[#allocation3 + $0xa0] sm:$0xff]
        %v5502 = vld [vmem:[#allocation3 + $0xa8] sm:$0xff]
        %v5503 = vld [vmem:[#allocation3 + $0xb0] sm:$0xff]
        %v5504 = vld [vmem:[#allocation3 + $0xb8] sm:$0xff]
        %v5505 = vld [vmem:[#allocation3 + $0xc0] sm:$0xff]
        %v5506 = vld [vmem:[#allocation3 + $0xc8] sm:$0xff]
        %v5507 = vld [vmem:[#allocation3 + $0xd0] sm:$0xff]
        %v5508 = vld [vmem:[#allocation3 + $0xd8] sm:$0xff]
        %v5509 = vld [vmem:[#allocation3 + $0xe0] sm:$0xff]
        %v5510 = vld [vmem:[#allocation3 + $0xe8] sm:$0xff]
        %v5511 = vld [vmem:[#allocation3 + $0xf0] sm:$0xff]
        %v5512 = vld [vmem:[#allocation3 + $0xf8] sm:$0xff]
        %v5513 = vld [vmem:[#allocation3 + $0x100] sm:$0xff]
        %v5514 = vld [vmem:[#allocation3 + $0x108] sm:$0xff]
        %v5515 = vld [vmem:[#allocation3 + $0x110] sm:$0xff]
        %v5516 = vld [vmem:[#allocation3 + $0x118] sm:$0xff]
        %v5517 = vld [vmem:[#allocation3 + $0x120] sm:$0xff]
        %v5518 = vld [vmem:[#allocation3 + $0x128] sm:$0xff]
        %v5519 = vld [vmem:[#allocation3 + $0x130] sm:$0xff]
        %v5520 = vld [vmem:[#allocation3 + $0x138] sm:$0xff]
        %v5521 = vld [vmem:[#allocation3 + $0x140] sm:$0xff]
        %v5522 = vld [vmem:[#allocation3 + $0x148] sm:$0xff]
        %v5523 = vld [vmem:[#allocation3 + $0x150] sm:$0xff]
        %v5524 = vld [vmem:[#allocation3 + $0x158] sm:$0xff]
        %v5525 = vld [vmem:[#allocation3 + $0x160] sm:$0xff]
        %vm5526 = vcmask 588800
        %v5528 = vsel %vm5526, %v5480, 0
        %5530 = vmatprep.subr.mxu0 0.0
        %5531 = vmatpush1.msra.mxu0 0.0
        %5532 = vmatprep.subr.mxu0 0.0
        %5533 = vmatpush1.msra.mxu0 0.0
        %5534 = vmatprep.subr.mxu0 0.0
        %5535 = vmatpush1.msra.mxu0 0.0
        %5536 = vmatprep.subr.mxu0 0.0
        %5537 = vmatpush1.msra.mxu0 0.0
        %5538 = vmatprep.subr.mxu0 0.0
        %5539 = vmatpush1.msra.mxu0 0.0
        %5540 = vmatprep.subr.mxu0 0.0
        %5541 = vmatpush1.msra.mxu0 0.0
        %5542 = vmatprep.subr.mxu0 0.0
        %5543 = vmatpush1.msra.mxu0 0.0
        %5544 = vmatprep.subr.mxu0 %v5522
        %5545 = vmatpush1.msra.mxu0 %v5521
        %5546 = vmatprep.subr.mxu0 %v5517
        %5547 = vmatpush1.msra.mxu0 %v5516
        %5548 = vmatprep.subr.mxu0 %v5512
        %5549 = vmatpush1.msra.mxu0 %v5511
        %5550 = vmatprep.subr.mxu0 %v5507
        %5551 = vmatpush1.msra.mxu0 %v5506
        %5552 = vmatprep.subr.mxu0 %v5502
        %5553 = vmatpush1.msra.mxu0 %v5501
        %5554 = vmatprep.subr.mxu0 %v5497
        %5555 = vmatpush1.msra.mxu0 %v5496
        %5556 = vmatprep.subr.mxu0 %v5492
        %5557 = vmatpush1.msra.mxu0 %v5491
        %5558 = vmatprep.subr.mxu0 %v5487
        %5559 = vmatpush1.msra.mxu0 %v5486
        %5560 = vmatprep.subr.mxu0 %v5482
        %5561 = vmatpush1.msra.mxu0 %v5481
        %5562 = vmatprep.subr.mxu0 0.0
        %5563 = vmatpush2.msra.mxu0 0.0
        %5564 = vmatprep.subr.mxu0 0.0
        %5565 = vmatpush2.msra.mxu0 0.0
        %5566 = vmatprep.subr.mxu0 0.0
        %5567 = vmatpush2.msra.mxu0 0.0
        %5568 = vmatprep.subr.mxu0 0.0
        %5569 = vmatpush2.msra.mxu0 0.0
        %5570 = vmatprep.subr.mxu0 0.0
        %5571 = vmatpush2.msra.mxu0 0.0
        %5572 = vmatprep.subr.mxu0 0.0
        %5573 = vmatpush2.msra.mxu0 0.0
        %5574 = vmatprep.subr.mxu0 0.0
        %5575 = vmatpush2.msra.mxu0 0.0
        %5576 = vmatprep.subr.mxu0 0.0
        %5577 = vmatpush2.msra.mxu0 0.0
        %5578 = vmatprep.subr.mxu0 0.0
        %5579 = vmatpush2.msra.mxu0 0.0
        %5580 = vmatprep.subr.mxu0 0.0
        %5581 = vmatpush2.msra.mxu0 0.0
        %5582 = vmatprep.subr.mxu0 0.0
        %5583 = vmatpush2.msra.mxu0 0.0
        %5584 = vmatprep.subr.mxu0 0.0
        %5585 = vmatpush2.msra.mxu0 0.0
        %5586 = vmatprep.subr.mxu0 0.0
        %5587 = vmatpush2.msra.mxu0 0.0
        %5588 = vmatprep.subr.mxu0 0.0
        %5589 = vmatpush2.msra.mxu0 0.0
        %5590 = vmatprep.subr.mxu0 0.0
        %5591 = vmatpush2.msra.mxu0 0.0
        %5592 = vmatprep.subr.mxu0 0.0
        %5593 = vmatpush2.msra.mxu0 0.0
        %5594 = vmatprep.mubr.f32.mxu0 0.0
        %5595 = vmatmul.mubr.f32.gmra.mxu0 %v5528
        %v5596 = vpop.f32.mrf.mxu0
        %v5597 = vadd.f32 0.0, %v5596
        %v5598 = vpop.f32.mrf.mxu0
        %v5599 = vadd.f32 0.0, %v5598
        %5600 = vdwg.mxu0
        %5601 = vmatprep.subr.mxu0 0.0
        %5602 = vmatpush1.msra.mxu0 0.0
        %5603 = vmatprep.subr.mxu0 0.0
        %5604 = vmatpush1.msra.mxu0 0.0
        %5605 = vmatprep.subr.mxu0 0.0
        %5606 = vmatpush1.msra.mxu0 0.0
        %5607 = vmatprep.subr.mxu0 0.0
        %5608 = vmatpush1.msra.mxu0 0.0
        %5609 = vmatprep.subr.mxu0 0.0
        %5610 = vmatpush1.msra.mxu0 0.0
        %5611 = vmatprep.subr.mxu0 0.0
        %5612 = vmatpush1.msra.mxu0 0.0
        %5613 = vmatprep.subr.mxu0 0.0
        %5614 = vmatpush1.msra.mxu0 0.0
        %5615 = vmatprep.subr.mxu0 %v5524
        %5616 = vmatpush1.msra.mxu0 %v5523
        %5617 = vmatprep.subr.mxu0 %v5519
        %5618 = vmatpush1.msra.mxu0 %v5518
        %5619 = vmatprep.subr.mxu0 %v5514
        %5620 = vmatpush1.msra.mxu0 %v5513
        %5621 = vmatprep.subr.mxu0 %v5509
        %5622 = vmatpush1.msra.mxu0 %v5508
        %5623 = vmatprep.subr.mxu0 %v5504
        %5624 = vmatpush1.msra.mxu0 %v5503
        %5625 = vmatprep.subr.mxu0 %v5499
        %5626 = vmatpush1.msra.mxu0 %v5498
        %5627 = vmatprep.subr.mxu0 %v5494
        %5628 = vmatpush1.msra.mxu0 %v5493
        %5629 = vmatprep.subr.mxu0 %v5489
        %5630 = vmatpush1.msra.mxu0 %v5488
        %5631 = vmatprep.subr.mxu0 %v5484
        %5632 = vmatpush1.msra.mxu0 %v5483
        %5633 = vmatprep.subr.mxu0 0.0
        %5634 = vmatpush2.msra.mxu0 0.0
        %5635 = vmatprep.subr.mxu0 0.0
        %5636 = vmatpush2.msra.mxu0 0.0
        %5637 = vmatprep.subr.mxu0 0.0
        %5638 = vmatpush2.msra.mxu0 0.0
        %5639 = vmatprep.subr.mxu0 0.0
        %5640 = vmatpush2.msra.mxu0 0.0
        %5641 = vmatprep.subr.mxu0 0.0
        %5642 = vmatpush2.msra.mxu0 0.0
        %5643 = vmatprep.subr.mxu0 0.0
        %5644 = vmatpush2.msra.mxu0 0.0
        %5645 = vmatprep.subr.mxu0 0.0
        %5646 = vmatpush2.msra.mxu0 0.0
        %5647 = vmatprep.subr.mxu0 0.0
        %5648 = vmatpush2.msra.mxu0 0.0
        %5649 = vmatprep.subr.mxu0 0.0
        %5650 = vmatpush2.msra.mxu0 0.0
        %5651 = vmatprep.subr.mxu0 0.0
        %5652 = vmatpush2.msra.mxu0 0.0
        %5653 = vmatprep.subr.mxu0 0.0
        %5654 = vmatpush2.msra.mxu0 0.0
        %5655 = vmatprep.subr.mxu0 0.0
        %5656 = vmatpush2.msra.mxu0 0.0
        %5657 = vmatprep.subr.mxu0 0.0
        %5658 = vmatpush2.msra.mxu0 0.0
        %5659 = vmatprep.subr.mxu0 0.0
        %5660 = vmatpush2.msra.mxu0 0.0
        %5661 = vmatprep.subr.mxu0 0.0
        %5662 = vmatpush2.msra.mxu0 0.0
        %5663 = vmatprep.subr.mxu0 0.0
        %5664 = vmatpush2.msra.mxu0 0.0
        %5665 = vmatprep.mubr.f32.mxu0 0.0
        %5666 = vmatmul.mubr.f32.gmra.mxu0 %v5528
        %v5667 = vpop.f32.mrf.mxu0
        %v5668 = vadd.f32 0.0, %v5667
        %v5669 = vpop.f32.mrf.mxu0
        %v5670 = vadd.f32 0.0, %v5669
        %5671 = vdwg.mxu0
        %5672 = vmatprep.subr.mxu0 0.0
        %5673 = vmatpush1.msra.mxu0 0.0
        %5674 = vmatprep.subr.mxu0 0.0
        %5675 = vmatpush1.msra.mxu0 0.0
        %5676 = vmatprep.subr.mxu0 0.0
        %5677 = vmatpush1.msra.mxu0 0.0
        %5678 = vmatprep.subr.mxu0 0.0
        %5679 = vmatpush1.msra.mxu0 0.0
        %5680 = vmatprep.subr.mxu0 0.0
        %5681 = vmatpush1.msra.mxu0 0.0
        %5682 = vmatprep.subr.mxu0 0.0
        %5683 = vmatpush1.msra.mxu0 0.0
        %5684 = vmatprep.subr.mxu0 0.0
        %5685 = vmatpush1.msra.mxu0 0.0
        %5686 = vmatprep.subr.mxu0 0.0
        %5687 = vmatpush1.msra.mxu0 %v5525
        %5688 = vmatprep.subr.mxu0 0.0
        %5689 = vmatpush1.msra.mxu0 %v5520
        %5690 = vmatprep.subr.mxu0 0.0
        %5691 = vmatpush1.msra.mxu0 %v5515
        %5692 = vmatprep.subr.mxu0 0.0
        %5693 = vmatpush1.msra.mxu0 %v5510
        %5694 = vmatprep.subr.mxu0 0.0
        %5695 = vmatpush1.msra.mxu0 %v5505
        %5696 = vmatprep.subr.mxu0 0.0
        %5697 = vmatpush1.msra.mxu0 %v5500
        %5698 = vmatprep.subr.mxu0 0.0
        %5699 = vmatpush1.msra.mxu0 %v5495
        %5700 = vmatprep.subr.mxu0 0.0
        %5701 = vmatpush1.msra.mxu0 %v5490
        %5702 = vmatprep.subr.mxu0 0.0
        %5703 = vmatpush1.msra.mxu0 %v5485
        %5704 = vmatprep.subr.mxu0 0.0
        %5705 = vmatpush2.msra.mxu0 0.0
        %5706 = vmatprep.subr.mxu0 0.0
        %5707 = vmatpush2.msra.mxu0 0.0
        %5708 = vmatprep.subr.mxu0 0.0
        %5709 = vmatpush2.msra.mxu0 0.0
        %5710 = vmatprep.subr.mxu0 0.0
        %5711 = vmatpush2.msra.mxu0 0.0
        %5712 = vmatprep.subr.mxu0 0.0
        %5713 = vmatpush2.msra.mxu0 0.0
        %5714 = vmatprep.subr.mxu0 0.0
        %5715 = vmatpush2.msra.mxu0 0.0
        %5716 = vmatprep.subr.mxu0 0.0
        %5717 = vmatpush2.msra.mxu0 0.0
        %5718 = vmatprep.subr.mxu0 0.0
        %5719 = vmatpush2.msra.mxu0 0.0
        %5720 = vmatprep.subr.mxu0 0.0
        %5721 = vmatpush2.msra.mxu0 0.0
        %5722 = vmatprep.subr.mxu0 0.0
        %5723 = vmatpush2.msra.mxu0 0.0
        %5724 = vmatprep.subr.mxu0 0.0
        %5725 = vmatpush2.msra.mxu0 0.0
        %5726 = vmatprep.subr.mxu0 0.0
        %5727 = vmatpush2.msra.mxu0 0.0
        %5728 = vmatprep.subr.mxu0 0.0
        %5729 = vmatpush2.msra.mxu0 0.0
        %5730 = vmatprep.subr.mxu0 0.0
        %5731 = vmatpush2.msra.mxu0 0.0
        %5732 = vmatprep.subr.mxu0 0.0
        %5733 = vmatpush2.msra.mxu0 0.0
        %5734 = vmatprep.subr.mxu0 0.0
        %5735 = vmatpush2.msra.mxu0 0.0
        %5736 = vmatprep.mubr.f32.mxu0 0.0
        %5737 = vmatmul.mubr.f32.gmra.mxu0 %v5528
        %v5738 = vpop.f32.mrf.mxu0
        %v5739 = vadd.f32 0.0, %v5738
        %v5740 = vpop.f32.mrf.mxu0
        %5741 = vdwg.mxu0
        %v5743 = vsel %vm5526, %v5082, 0
        %5745 = vmatprep.subr.mxu0 0.0
        %5746 = vmatpush1.msra.mxu0 0.0
        %5747 = vmatprep.subr.mxu0 0.0
        %5748 = vmatpush1.msra.mxu0 0.0
        %5749 = vmatprep.subr.mxu0 0.0
        %5750 = vmatpush1.msra.mxu0 0.0
        %5751 = vmatprep.subr.mxu0 0.0
        %5752 = vmatpush1.msra.mxu0 0.0
        %5753 = vmatprep.subr.mxu0 0.0
        %5754 = vmatpush1.msra.mxu0 0.0
        %5755 = vmatprep.subr.mxu0 0.0
        %5756 = vmatpush1.msra.mxu0 0.0
        %5757 = vmatprep.subr.mxu0 0.0
        %5758 = vmatpush1.msra.mxu0 0.0
        %5759 = vmatprep.subr.mxu0 %v5124
        %5760 = vmatpush1.msra.mxu0 %v5123
        %5761 = vmatprep.subr.mxu0 %v5119
        %5762 = vmatpush1.msra.mxu0 %v5118
        %5763 = vmatprep.subr.mxu0 %v5114
        %5764 = vmatpush1.msra.mxu0 %v5113
        %5765 = vmatprep.subr.mxu0 %v5109
        %5766 = vmatpush1.msra.mxu0 %v5108
        %5767 = vmatprep.subr.mxu0 %v5104
        %5768 = vmatpush1.msra.mxu0 %v5103
        %5769 = vmatprep.subr.mxu0 %v5099
        %5770 = vmatpush1.msra.mxu0 %v5098
        %5771 = vmatprep.subr.mxu0 %v5094
        %5772 = vmatpush1.msra.mxu0 %v5093
        %5773 = vmatprep.subr.mxu0 %v5089
        %5774 = vmatpush1.msra.mxu0 %v5088
        %5775 = vmatprep.subr.mxu0 %v5084
        %5776 = vmatpush1.msra.mxu0 %v5083
        %5777 = vmatprep.subr.mxu0 0.0
        %5778 = vmatpush2.msra.mxu0 0.0
        %5779 = vmatprep.subr.mxu0 0.0
        %5780 = vmatpush2.msra.mxu0 0.0
        %5781 = vmatprep.subr.mxu0 0.0
        %5782 = vmatpush2.msra.mxu0 0.0
        %5783 = vmatprep.subr.mxu0 0.0
        %5784 = vmatpush2.msra.mxu0 0.0
        %5785 = vmatprep.subr.mxu0 0.0
        %5786 = vmatpush2.msra.mxu0 0.0
        %5787 = vmatprep.subr.mxu0 0.0
        %5788 = vmatpush2.msra.mxu0 0.0
        %5789 = vmatprep.subr.mxu0 0.0
        %5790 = vmatpush2.msra.mxu0 0.0
        %5791 = vmatprep.subr.mxu0 0.0
        %5792 = vmatpush2.msra.mxu0 0.0
        %5793 = vmatprep.subr.mxu0 0.0
        %5794 = vmatpush2.msra.mxu0 0.0
        %5795 = vmatprep.subr.mxu0 0.0
        %5796 = vmatpush2.msra.mxu0 0.0
        %5797 = vmatprep.subr.mxu0 0.0
        %5798 = vmatpush2.msra.mxu0 0.0
        %5799 = vmatprep.subr.mxu0 0.0
        %5800 = vmatpush2.msra.mxu0 0.0
        %5801 = vmatprep.subr.mxu0 0.0
        %5802 = vmatpush2.msra.mxu0 0.0
        %5803 = vmatprep.subr.mxu0 0.0
        %5804 = vmatpush2.msra.mxu0 0.0
        %5805 = vmatprep.subr.mxu0 0.0
        %5806 = vmatpush2.msra.mxu0 0.0
        %5807 = vmatprep.subr.mxu0 0.0
        %5808 = vmatpush2.msra.mxu0 0.0
        %5809 = vmatprep.mubr.f32.mxu0 0.0
        %5810 = vmatmul.mubr.f32.gmra.mxu0 %v5743
        %v5811 = vpop.f32.mrf.mxu0
        %v5812 = vadd.f32 %v5597, %v5811
        %v5813 = vpop.f32.mrf.mxu0
        %v5814 = vadd.f32 %v5599, %v5813
        %5815 = vdwg.mxu0
        %5816 = vmatprep.subr.mxu0 0.0
        %5817 = vmatpush1.msra.mxu0 0.0
        %5818 = vmatprep.subr.mxu0 0.0
        %5819 = vmatpush1.msra.mxu0 0.0
        %5820 = vmatprep.subr.mxu0 0.0
        %5821 = vmatpush1.msra.mxu0 0.0
        %5822 = vmatprep.subr.mxu0 0.0
        %5823 = vmatpush1.msra.mxu0 0.0
        %5824 = vmatprep.subr.mxu0 0.0
        %5825 = vmatpush1.msra.mxu0 0.0
        %5826 = vmatprep.subr.mxu0 0.0
        %5827 = vmatpush1.msra.mxu0 0.0
        %5828 = vmatprep.subr.mxu0 0.0
        %5829 = vmatpush1.msra.mxu0 0.0
        %5830 = vmatprep.subr.mxu0 %v5126
        %5831 = vmatpush1.msra.mxu0 %v5125
        %5832 = vmatprep.subr.mxu0 %v5121
        %5833 = vmatpush1.msra.mxu0 %v5120
        %5834 = vmatprep.subr.mxu0 %v5116
        %5835 = vmatpush1.msra.mxu0 %v5115
        %5836 = vmatprep.subr.mxu0 %v5111
        %5837 = vmatpush1.msra.mxu0 %v5110
        %5838 = vmatprep.subr.mxu0 %v5106
        %5839 = vmatpush1.msra.mxu0 %v5105
        %5840 = vmatprep.subr.mxu0 %v5101
        %5841 = vmatpush1.msra.mxu0 %v5100
        %5842 = vmatprep.subr.mxu0 %v5096
        %5843 = vmatpush1.msra.mxu0 %v5095
        %5844 = vmatprep.subr.mxu0 %v5091
        %5845 = vmatpush1.msra.mxu0 %v5090
        %5846 = vmatprep.subr.mxu0 %v5086
        %5847 = vmatpush1.msra.mxu0 %v5085
        %5848 = vmatprep.subr.mxu0 0.0
        %5849 = vmatpush2.msra.mxu0 0.0
        %5850 = vmatprep.subr.mxu0 0.0
        %5851 = vmatpush2.msra.mxu0 0.0
        %5852 = vmatprep.subr.mxu0 0.0
        %5853 = vmatpush2.msra.mxu0 0.0
        %5854 = vmatprep.subr.mxu0 0.0
        %5855 = vmatpush2.msra.mxu0 0.0
        %5856 = vmatprep.subr.mxu0 0.0
        %5857 = vmatpush2.msra.mxu0 0.0
        %5858 = vmatprep.subr.mxu0 0.0
        %5859 = vmatpush2.msra.mxu0 0.0
        %5860 = vmatprep.subr.mxu0 0.0
        %5861 = vmatpush2.msra.mxu0 0.0
        %5862 = vmatprep.subr.mxu0 0.0
        %5863 = vmatpush2.msra.mxu0 0.0
        %5864 = vmatprep.subr.mxu0 0.0
        %5865 = vmatpush2.msra.mxu0 0.0
        %5866 = vmatprep.subr.mxu0 0.0
        %5867 = vmatpush2.msra.mxu0 0.0
        %5868 = vmatprep.subr.mxu0 0.0
        %5869 = vmatpush2.msra.mxu0 0.0
        %5870 = vmatprep.subr.mxu0 0.0
        %5871 = vmatpush2.msra.mxu0 0.0
        %5872 = vmatprep.subr.mxu0 0.0
        %5873 = vmatpush2.msra.mxu0 0.0
        %5874 = vmatprep.subr.mxu0 0.0
        %5875 = vmatpush2.msra.mxu0 0.0
        %5876 = vmatprep.subr.mxu0 0.0
        %5877 = vmatpush2.msra.mxu0 0.0
        %5878 = vmatprep.subr.mxu0 0.0
        %5879 = vmatpush2.msra.mxu0 0.0
        %5880 = vmatprep.mubr.f32.mxu0 0.0
        %5881 = vmatmul.mubr.f32.gmra.mxu0 %v5743
        %v5882 = vpop.f32.mrf.mxu0
        %v5883 = vadd.f32 %v5668, %v5882
        %v5884 = vpop.f32.mrf.mxu0
        %v5885 = vadd.f32 %v5670, %v5884
        %5886 = vdwg.mxu0
        %5887 = vmatprep.subr.mxu0 0.0
        %5888 = vmatpush1.msra.mxu0 0.0
        %5889 = vmatprep.subr.mxu0 0.0
        %5890 = vmatpush1.msra.mxu0 0.0
        %5891 = vmatprep.subr.mxu0 0.0
        %5892 = vmatpush1.msra.mxu0 0.0
        %5893 = vmatprep.subr.mxu0 0.0
        %5894 = vmatpush1.msra.mxu0 0.0
        %5895 = vmatprep.subr.mxu0 0.0
        %5896 = vmatpush1.msra.mxu0 0.0
        %5897 = vmatprep.subr.mxu0 0.0
        %5898 = vmatpush1.msra.mxu0 0.0
        %5899 = vmatprep.subr.mxu0 0.0
        %5900 = vmatpush1.msra.mxu0 0.0
        %5901 = vmatprep.subr.mxu0 0.0
        %5902 = vmatpush1.msra.mxu0 %v5127
        %5903 = vmatprep.subr.mxu0 0.0
        %5904 = vmatpush1.msra.mxu0 %v5122
        %5905 = vmatprep.subr.mxu0 0.0
        %5906 = vmatpush1.msra.mxu0 %v5117
        %5907 = vmatprep.subr.mxu0 0.0
        %5908 = vmatpush1.msra.mxu0 %v5112
        %5909 = vmatprep.subr.mxu0 0.0
        %5910 = vmatpush1.msra.mxu0 %v5107
        %5911 = vmatprep.subr.mxu0 0.0
        %5912 = vmatpush1.msra.mxu0 %v5102
        %5913 = vmatprep.subr.mxu0 0.0
        %5914 = vmatpush1.msra.mxu0 %v5097
        %5915 = vmatprep.subr.mxu0 0.0
        %5916 = vmatpush1.msra.mxu0 %v5092
        %5917 = vmatprep.subr.mxu0 0.0
        %5918 = vmatpush1.msra.mxu0 %v5087
        %5919 = vmatprep.subr.mxu0 0.0
        %5920 = vmatpush2.msra.mxu0 0.0
        %5921 = vmatprep.subr.mxu0 0.0
        %5922 = vmatpush2.msra.mxu0 0.0
        %5923 = vmatprep.subr.mxu0 0.0
        %5924 = vmatpush2.msra.mxu0 0.0
        %5925 = vmatprep.subr.mxu0 0.0
        %5926 = vmatpush2.msra.mxu0 0.0
        %5927 = vmatprep.subr.mxu0 0.0
        %5928 = vmatpush2.msra.mxu0 0.0
        %5929 = vmatprep.subr.mxu0 0.0
        %5930 = vmatpush2.msra.mxu0 0.0
        %5931 = vmatprep.subr.mxu0 0.0
        %5932 = vmatpush2.msra.mxu0 0.0
        %5933 = vmatprep.subr.mxu0 0.0
        %5934 = vmatpush2.msra.mxu0 0.0
        %5935 = vmatprep.subr.mxu0 0.0
        %5936 = vmatpush2.msra.mxu0 0.0
        %5937 = vmatprep.subr.mxu0 0.0
        %5938 = vmatpush2.msra.mxu0 0.0
        %5939 = vmatprep.subr.mxu0 0.0
        %5940 = vmatpush2.msra.mxu0 0.0
        %5941 = vmatprep.subr.mxu0 0.0
        %5942 = vmatpush2.msra.mxu0 0.0
        %5943 = vmatprep.subr.mxu0 0.0
        %5944 = vmatpush2.msra.mxu0 0.0
        %5945 = vmatprep.subr.mxu0 0.0
        %5946 = vmatpush2.msra.mxu0 0.0
        %5947 = vmatprep.subr.mxu0 0.0
        %5948 = vmatpush2.msra.mxu0 0.0
        %5949 = vmatprep.subr.mxu0 0.0
        %5950 = vmatpush2.msra.mxu0 0.0
        %5951 = vmatprep.mubr.f32.mxu0 0.0
        %5952 = vmatmul.mubr.f32.gmra.mxu0 %v5743
        %v5953 = vpop.f32.mrf.mxu0
        %v5954 = vadd.f32 %v5739, %v5953
        %v5955 = vpop.f32.mrf.mxu0
        %5956 = vdwg.mxu0
        %v5957 = vld [vmem:[#allocation2 + $0x8] sm:$0xff]
        %v5958 = vld [vmem:[#allocation2 + $0x10] sm:$0xff]
        %v5959 = vld [vmem:[#allocation2 + $0x18] sm:$0xff]
        %v5960 = vld [vmem:[#allocation2 + $0x20] sm:$0xff]
        %v5961 = vld [vmem:[#allocation2 + $0x28] sm:$0xff]
        %v5962 = vld [vmem:[#allocation2 + $0x30] sm:$0xff]
        %5969 = vrot.lane.b32.xlu0 %v5957, 56
        %v5970 = vpop.permute.xlu0 %5969
        %5971 = vrot.lane.b32.xlu0 %v5958, 56
        %v5972 = vpop.permute.xlu0 %5971
        %5973 = vrot.lane.b32.xlu0 %v5959, 56
        %v5974 = vpop.permute.xlu0 %5973
        %5975 = vrot.lane.b32.xlu0 %v5960, 56
        %v5976 = vpop.permute.xlu0 %5975
        %5977 = vrot.lane.b32.xlu0 %v5961, 56
        %v5978 = vpop.permute.xlu0 %5977
        %5979 = vrot.lane.b32.xlu0 %v5962, 56
        %v5980 = vpop.permute.xlu0 %5979
        %v5981 = vsel %vm2216, %v5970, %v5972
        %v5982 = vsel %vm2216, %v5972, %v5974
        %v5983 = vsel %vm2216, %v5974, %v5976
        %v5984 = vsel %vm2216, %v5976, %v5978
        %v5985 = vsel %vm2216, %v5978, %v5980
        %5991 = vst [vmem:[#allocation3] sm:$0xff] %v5981
        %5992 = vst [vmem:[#allocation3 + $0x8] sm:$0xff] %v5982
        %5993 = vst [vmem:[#allocation3 + $0x10] sm:$0xff] %v5983
        %5994 = vst [vmem:[#allocation3 + $0x18] sm:$0xff] %v5984
        %5995 = vst.msk [vmem:[#allocation3 + $0x20] sm:$0xff] %vm4808, %v5985
        %v5996 = vld [vmem:[#allocation2 + $0x8] sm:$0xff]
        %v5997 = vld [vmem:[#allocation2 + $0x10] sm:$0xff]
        %v5998 = vld [vmem:[#allocation2 + $0x18] sm:$0xff]
        %v5999 = vld [vmem:[#allocation2 + $0x20] sm:$0xff]
        %v6000 = vld [vmem:[#allocation2 + $0x28] sm:$0xff]
        %v6001 = vld [vmem:[#allocation2 + $0x30] sm:$0xff]
        %6008 = vrot.lane.b32.xlu0 %v5996, 55
        %v6009 = vpop.permute.xlu0 %6008
        %6010 = vrot.lane.b32.xlu0 %v5997, 55
        %v6011 = vpop.permute.xlu0 %6010
        %6012 = vrot.lane.b32.xlu0 %v5998, 55
        %v6013 = vpop.permute.xlu0 %6012
        %6014 = vrot.lane.b32.xlu0 %v5999, 55
        %v6015 = vpop.permute.xlu0 %6014
        %6016 = vrot.lane.b32.xlu0 %v6000, 55
        %v6017 = vpop.permute.xlu0 %6016
        %6018 = vrot.lane.b32.xlu0 %v6001, 55
        %v6019 = vpop.permute.xlu0 %6018
        %v6020 = vsel %vm2262, %v6009, %v6011
        %v6021 = vsel %vm2262, %v6011, %v6013
        %v6022 = vsel %vm2262, %v6013, %v6015
        %v6023 = vsel %vm2262, %v6015, %v6017
        %v6024 = vsel %vm2262, %v6017, %v6019
        %6030 = vst [vmem:[#allocation3 + $0x28] sm:$0xff] %v6020
        %6031 = vst [vmem:[#allocation3 + $0x30] sm:$0xff] %v6021
        %6032 = vst [vmem:[#allocation3 + $0x38] sm:$0xff] %v6022
        %6033 = vst [vmem:[#allocation3 + $0x40] sm:$0xff] %v6023
        %6034 = vst.msk [vmem:[#allocation3 + $0x48] sm:$0xff] %vm4808, %v6024
        %v6035 = vld [vmem:[#allocation2 + $0x8] sm:$0xff]
        %v6036 = vld [vmem:[#allocation2 + $0x10] sm:$0xff]
        %v6037 = vld [vmem:[#allocation2 + $0x18] sm:$0xff]
        %v6038 = vld [vmem:[#allocation2 + $0x20] sm:$0xff]
        %v6039 = vld [vmem:[#allocation2 + $0x28] sm:$0xff]
        %v6040 = vld [vmem:[#allocation2 + $0x30] sm:$0xff]
        %6047 = vrot.lane.b32.xlu0 %v6035, 54
        %v6048 = vpop.permute.xlu0 %6047
        %6049 = vrot.lane.b32.xlu0 %v6036, 54
        %v6050 = vpop.permute.xlu0 %6049
        %6051 = vrot.lane.b32.xlu0 %v6037, 54
        %v6052 = vpop.permute.xlu0 %6051
        %6053 = vrot.lane.b32.xlu0 %v6038, 54
        %v6054 = vpop.permute.xlu0 %6053
        %6055 = vrot.lane.b32.xlu0 %v6039, 54
        %v6056 = vpop.permute.xlu0 %6055
        %6057 = vrot.lane.b32.xlu0 %v6040, 54
        %v6058 = vpop.permute.xlu0 %6057
        %v6059 = vsel %vm2302, %v6048, %v6050
        %v6060 = vsel %vm2302, %v6050, %v6052
        %v6061 = vsel %vm2302, %v6052, %v6054
        %v6062 = vsel %vm2302, %v6054, %v6056
        %v6063 = vsel %vm2302, %v6056, %v6058
        %6069 = vst [vmem:[#allocation3 + $0x50] sm:$0xff] %v6059
        %6070 = vst [vmem:[#allocation3 + $0x58] sm:$0xff] %v6060
        %6071 = vst [vmem:[#allocation3 + $0x60] sm:$0xff] %v6061
        %6072 = vst [vmem:[#allocation3 + $0x68] sm:$0xff] %v6062
        %6073 = vst.msk [vmem:[#allocation3 + $0x70] sm:$0xff] %vm4808, %v6063
        %v6074 = vld [vmem:[#allocation2 + $0x8] sm:$0xff]
        %v6075 = vld [vmem:[#allocation2 + $0x10] sm:$0xff]
        %v6076 = vld [vmem:[#allocation2 + $0x18] sm:$0xff]
        %v6077 = vld [vmem:[#allocation2 + $0x20] sm:$0xff]
        %v6078 = vld [vmem:[#allocation2 + $0x28] sm:$0xff]
        %v6079 = vld [vmem:[#allocation2 + $0x30] sm:$0xff]
        %6086 = vrot.lane.b32.xlu0 %v6074, 46
        %v6087 = vpop.permute.xlu0 %6086
        %6088 = vrot.lane.b32.xlu0 %v6075, 46
        %v6089 = vpop.permute.xlu0 %6088
        %6090 = vrot.lane.b32.xlu0 %v6076, 46
        %v6091 = vpop.permute.xlu0 %6090
        %6092 = vrot.lane.b32.xlu0 %v6077, 46
        %v6093 = vpop.permute.xlu0 %6092
        %6094 = vrot.lane.b32.xlu0 %v6078, 46
        %v6095 = vpop.permute.xlu0 %6094
        %6096 = vrot.lane.b32.xlu0 %v6079, 46
        %v6097 = vpop.permute.xlu0 %6096
        %v6098 = vsel %vm2348, %v6087, %v6089
        %v6099 = vsel %vm2348, %v6089, %v6091
        %v6100 = vsel %vm2348, %v6091, %v6093
        %v6101 = vsel %vm2348, %v6093, %v6095
        %v6102 = vsel %vm2348, %v6095, %v6097
        %6108 = vst [vmem:[#allocation3 + $0x78] sm:$0xff] %v6098
        %6109 = vst [vmem:[#allocation3 + $0x80] sm:$0xff] %v6099
        %6110 = vst [vmem:[#allocation3 + $0x88] sm:$0xff] %v6100
        %6111 = vst [vmem:[#allocation3 + $0x90] sm:$0xff] %v6101
        %6112 = vst.msk [vmem:[#allocation3 + $0x98] sm:$0xff] %vm4808, %v6102
        %v6113 = vld [vmem:[#allocation2 + $0x8] sm:$0xff]
        %v6114 = vld [vmem:[#allocation2 + $0x10] sm:$0xff]
        %v6115 = vld [vmem:[#allocation2 + $0x18] sm:$0xff]
        %v6116 = vld [vmem:[#allocation2 + $0x20] sm:$0xff]
        %v6117 = vld [vmem:[#allocation2 + $0x28] sm:$0xff]
        %v6118 = vld [vmem:[#allocation2 + $0x30] sm:$0xff]
        %6125 = vrot.lane.b32.xlu0 %v6113, 45
        %v6126 = vpop.permute.xlu0 %6125
        %6127 = vrot.lane.b32.xlu0 %v6114, 45
        %v6128 = vpop.permute.xlu0 %6127
        %6129 = vrot.lane.b32.xlu0 %v6115, 45
        %v6130 = vpop.permute.xlu0 %6129
        %6131 = vrot.lane.b32.xlu0 %v6116, 45
        %v6132 = vpop.permute.xlu0 %6131
        %6133 = vrot.lane.b32.xlu0 %v6117, 45
        %v6134 = vpop.permute.xlu0 %6133
        %6135 = vrot.lane.b32.xlu0 %v6118, 45
        %v6136 = vpop.permute.xlu0 %6135
        %v6137 = vsel %vm2388, %v6126, %v6128
        %v6138 = vsel %vm2388, %v6128, %v6130
        %v6139 = vsel %vm2388, %v6130, %v6132
        %v6140 = vsel %vm2388, %v6132, %v6134
        %v6141 = vsel %vm2388, %v6134, %v6136
        %6147 = vst [vmem:[#allocation3 + $0xa0] sm:$0xff] %v6137
        %6148 = vst [vmem:[#allocation3 + $0xa8] sm:$0xff] %v6138
        %6149 = vst [vmem:[#allocation3 + $0xb0] sm:$0xff] %v6139
        %6150 = vst [vmem:[#allocation3 + $0xb8] sm:$0xff] %v6140
        %6151 = vst.msk [vmem:[#allocation3 + $0xc0] sm:$0xff] %vm4808, %v6141
        %v6152 = vld [vmem:[#allocation2 + $0x8] sm:$0xff]
        %v6153 = vld [vmem:[#allocation2 + $0x10] sm:$0xff]
        %v6154 = vld [vmem:[#allocation2 + $0x18] sm:$0xff]
        %v6155 = vld [vmem:[#allocation2 + $0x20] sm:$0xff]
        %v6156 = vld [vmem:[#allocation2 + $0x28] sm:$0xff]
        %v6157 = vld [vmem:[#allocation2 + $0x30] sm:$0xff]
        %6164 = vrot.lane.b32.xlu0 %v6152, 44
        %v6165 = vpop.permute.xlu0 %6164
        %6166 = vrot.lane.b32.xlu0 %v6153, 44
        %v6167 = vpop.permute.xlu0 %6166
        %6168 = vrot.lane.b32.xlu0 %v6154, 44
        %v6169 = vpop.permute.xlu0 %6168
        %6170 = vrot.lane.b32.xlu0 %v6155, 44
        %v6171 = vpop.permute.xlu0 %6170
        %6172 = vrot.lane.b32.xlu0 %v6156, 44
        %v6173 = vpop.permute.xlu0 %6172
        %6174 = vrot.lane.b32.xlu0 %v6157, 44
        %v6175 = vpop.permute.xlu0 %6174
        %v6176 = vsel %vm2434, %v6165, %v6167
        %v6177 = vsel %vm2434, %v6167, %v6169
        %v6178 = vsel %vm2434, %v6169, %v6171
        %v6179 = vsel %vm2434, %v6171, %v6173
        %v6180 = vsel %vm2434, %v6173, %v6175
        %6186 = vst [vmem:[#allocation3 + $0xc8] sm:$0xff] %v6176
        %6187 = vst [vmem:[#allocation3 + $0xd0] sm:$0xff] %v6177
        %6188 = vst [vmem:[#allocation3 + $0xd8] sm:$0xff] %v6178
        %6189 = vst [vmem:[#allocation3 + $0xe0] sm:$0xff] %v6179
        %6190 = vst.msk [vmem:[#allocation3 + $0xe8] sm:$0xff] %vm4808, %v6180
        %v6191 = vld [vmem:[#allocation2 + $0x8] sm:$0xff]
        %v6192 = vld [vmem:[#allocation2 + $0x10] sm:$0xff]
        %v6193 = vld [vmem:[#allocation2 + $0x18] sm:$0xff]
        %v6194 = vld [vmem:[#allocation2 + $0x20] sm:$0xff]
        %v6195 = vld [vmem:[#allocation2 + $0x28] sm:$0xff]
        %v6196 = vld [vmem:[#allocation2 + $0x30] sm:$0xff]
        %6203 = vrot.lane.b32.xlu0 %v6191, 36
        %v6204 = vpop.permute.xlu0 %6203
        %6205 = vrot.lane.b32.xlu0 %v6192, 36
        %v6206 = vpop.permute.xlu0 %6205
        %6207 = vrot.lane.b32.xlu0 %v6193, 36
        %v6208 = vpop.permute.xlu0 %6207
        %6209 = vrot.lane.b32.xlu0 %v6194, 36
        %v6210 = vpop.permute.xlu0 %6209
        %6211 = vrot.lane.b32.xlu0 %v6195, 36
        %v6212 = vpop.permute.xlu0 %6211
        %6213 = vrot.lane.b32.xlu0 %v6196, 36
        %v6214 = vpop.permute.xlu0 %6213
        %v6215 = vsel %vm1730, %v6204, %v6206
        %v6216 = vsel %vm1730, %v6206, %v6208
        %v6217 = vsel %vm1730, %v6208, %v6210
        %v6218 = vsel %vm1730, %v6210, %v6212
        %v6219 = vsel %vm1730, %v6212, %v6214
        %6225 = vst [vmem:[#allocation3 + $0xf0] sm:$0xff] %v6215
        %6226 = vst [vmem:[#allocation3 + $0xf8] sm:$0xff] %v6216
        %6227 = vst [vmem:[#allocation3 + $0x100] sm:$0xff] %v6217
        %6228 = vst [vmem:[#allocation3 + $0x108] sm:$0xff] %v6218
        %6229 = vst.msk [vmem:[#allocation3 + $0x110] sm:$0xff] %vm4808, %v6219
        %v6230 = vld [vmem:[#allocation2 + $0x8] sm:$0xff]
        %v6231 = vld [vmem:[#allocation2 + $0x10] sm:$0xff]
        %v6232 = vld [vmem:[#allocation2 + $0x18] sm:$0xff]
        %v6233 = vld [vmem:[#allocation2 + $0x20] sm:$0xff]
        %v6234 = vld [vmem:[#allocation2 + $0x28] sm:$0xff]
        %v6235 = vld [vmem:[#allocation2 + $0x30] sm:$0xff]
        %6242 = vrot.lane.b32.xlu0 %v6230, 35
        %v6243 = vpop.permute.xlu0 %6242
        %6244 = vrot.lane.b32.xlu0 %v6231, 35
        %v6245 = vpop.permute.xlu0 %6244
        %6246 = vrot.lane.b32.xlu0 %v6232, 35
        %v6247 = vpop.permute.xlu0 %6246
        %6248 = vrot.lane.b32.xlu0 %v6233, 35
        %v6249 = vpop.permute.xlu0 %6248
        %6250 = vrot.lane.b32.xlu0 %v6234, 35
        %v6251 = vpop.permute.xlu0 %6250
        %6252 = vrot.lane.b32.xlu0 %v6235, 35
        %v6253 = vpop.permute.xlu0 %6252
        %v6254 = vsel %vm2519, %v6243, %v6245
        %v6255 = vsel %vm2519, %v6245, %v6247
        %v6256 = vsel %vm2519, %v6247, %v6249
        %v6257 = vsel %vm2519, %v6249, %v6251
        %v6258 = vsel %vm2519, %v6251, %v6253
        %6264 = vst [vmem:[#allocation3 + $0x118] sm:$0xff] %v6254
        %6265 = vst [vmem:[#allocation3 + $0x120] sm:$0xff] %v6255
        %6266 = vst [vmem:[#allocation3 + $0x128] sm:$0xff] %v6256
        %6267 = vst [vmem:[#allocation3 + $0x130] sm:$0xff] %v6257
        %6268 = vst.msk [vmem:[#allocation3 + $0x138] sm:$0xff] %vm4808, %v6258
        %v6269 = vld [vmem:[#allocation2 + $0x8] sm:$0xff]
        %v6270 = vld [vmem:[#allocation2 + $0x10] sm:$0xff]
        %v6271 = vld [vmem:[#allocation2 + $0x18] sm:$0xff]
        %v6272 = vld [vmem:[#allocation2 + $0x20] sm:$0xff]
        %v6273 = vld [vmem:[#allocation2 + $0x28] sm:$0xff]
        %v6274 = vld [vmem:[#allocation2 + $0x30] sm:$0xff]
        %6281 = vrot.lane.b32.xlu0 %v6269, 34
        %v6282 = vpop.permute.xlu0 %6281
        %6283 = vrot.lane.b32.xlu0 %v6270, 34
        %v6284 = vpop.permute.xlu0 %6283
        %6285 = vrot.lane.b32.xlu0 %v6271, 34
        %v6286 = vpop.permute.xlu0 %6285
        %6287 = vrot.lane.b32.xlu0 %v6272, 34
        %v6288 = vpop.permute.xlu0 %6287
        %6289 = vrot.lane.b32.xlu0 %v6273, 34
        %v6290 = vpop.permute.xlu0 %6289
        %6291 = vrot.lane.b32.xlu0 %v6274, 34
        %v6292 = vpop.permute.xlu0 %6291
        %v6293 = vsel %vm2559, %v6282, %v6284
        %v6294 = vsel %vm2559, %v6284, %v6286
        %v6295 = vsel %vm2559, %v6286, %v6288
        %v6296 = vsel %vm2559, %v6288, %v6290
        %v6297 = vsel %vm2559, %v6290, %v6292
        %6303 = vst [vmem:[#allocation3 + $0x140] sm:$0xff] %v6293
        %6304 = vst [vmem:[#allocation3 + $0x148] sm:$0xff] %v6294
        %6305 = vst [vmem:[#allocation3 + $0x150] sm:$0xff] %v6295
        %6306 = vst [vmem:[#allocation3 + $0x158] sm:$0xff] %v6296
        %6307 = vst.msk [vmem:[#allocation3 + $0x160] sm:$0xff] %vm4808, %v6297
        %s6308 = scalar_lea.vmem [#allocation9], 16
        %v6309 = vld [vmem:[%s6308] sm:$0xff]
        %v6310 = vld [vmem:[#allocation3] sm:$0xff]
        %v6311 = vld [vmem:[#allocation3 + $0x8] sm:$0xff]
        %v6312 = vld [vmem:[#allocation3 + $0x10] sm:$0xff]
        %v6313 = vld [vmem:[#allocation3 + $0x18] sm:$0xff]
        %v6314 = vld [vmem:[#allocation3 + $0x20] sm:$0xff]
        %v6315 = vld [vmem:[#allocation3 + $0x28] sm:$0xff]
        %v6316 = vld [vmem:[#allocation3 + $0x30] sm:$0xff]
        %v6317 = vld [vmem:[#allocation3 + $0x38] sm:$0xff]
        %v6318 = vld [vmem:[#allocation3 + $0x40] sm:$0xff]
        %v6319 = vld [vmem:[#allocation3 + $0x48] sm:$0xff]
        %v6320 = vld [vmem:[#allocation3 + $0x50] sm:$0xff]
        %v6321 = vld [vmem:[#allocation3 + $0x58] sm:$0xff]
        %v6322 = vld [vmem:[#allocation3 + $0x60] sm:$0xff]
        %v6323 = vld [vmem:[#allocation3 + $0x68] sm:$0xff]
        %v6324 = vld [vmem:[#allocation3 + $0x70] sm:$0xff]
        %v6325 = vld [vmem:[#allocation3 + $0x78] sm:$0xff]
        %v6326 = vld [vmem:[#allocation3 + $0x80] sm:$0xff]
        %v6327 = vld [vmem:[#allocation3 + $0x88] sm:$0xff]
        %v6328 = vld [vmem:[#allocation3 + $0x90] sm:$0xff]
        %v6329 = vld [vmem:[#allocation3 + $0x98] sm:$0xff]
        %v6330 = vld [vmem:[#allocation3 + $0xa0] sm:$0xff]
        %v6331 = vld [vmem:[#allocation3 + $0xa8] sm:$0xff]
        %v6332 = vld [vmem:[#allocation3 + $0xb0] sm:$0xff]
        %v6333 = vld [vmem:[#allocation3 + $0xb8] sm:$0xff]
        %v6334 = vld [vmem:[#allocation3 + $0xc0] sm:$0xff]
        %v6335 = vld [vmem:[#allocation3 + $0xc8] sm:$0xff]
        %v6336 = vld [vmem:[#allocation3 + $0xd0] sm:$0xff]
        %v6337 = vld [vmem:[#allocation3 + $0xd8] sm:$0xff]
        %v6338 = vld [vmem:[#allocation3 + $0xe0] sm:$0xff]
        %v6339 = vld [vmem:[#allocation3 + $0xe8] sm:$0xff]
        %v6340 = vld [vmem:[#allocation3 + $0xf0] sm:$0xff]
        %v6341 = vld [vmem:[#allocation3 + $0xf8] sm:$0xff]
        %v6342 = vld [vmem:[#allocation3 + $0x100] sm:$0xff]
        %v6343 = vld [vmem:[#allocation3 + $0x108] sm:$0xff]
        %v6344 = vld [vmem:[#allocation3 + $0x110] sm:$0xff]
        %v6345 = vld [vmem:[#allocation3 + $0x118] sm:$0xff]
        %v6346 = vld [vmem:[#allocation3 + $0x120] sm:$0xff]
        %v6347 = vld [vmem:[#allocation3 + $0x128] sm:$0xff]
        %v6348 = vld [vmem:[#allocation3 + $0x130] sm:$0xff]
        %v6349 = vld [vmem:[#allocation3 + $0x138] sm:$0xff]
        %v6350 = vld [vmem:[#allocation3 + $0x140] sm:$0xff]
        %v6351 = vld [vmem:[#allocation3 + $0x148] sm:$0xff]
        %v6352 = vld [vmem:[#allocation3 + $0x150] sm:$0xff]
        %v6353 = vld [vmem:[#allocation3 + $0x158] sm:$0xff]
        %v6354 = vld [vmem:[#allocation3 + $0x160] sm:$0xff]
        %v6356 = vsel %vm5526, %v6309, 0
        %6358 = vmatprep.subr.mxu0 0.0
        %6359 = vmatpush1.msra.mxu0 0.0
        %6360 = vmatprep.subr.mxu0 0.0
        %6361 = vmatpush1.msra.mxu0 0.0
        %6362 = vmatprep.subr.mxu0 0.0
        %6363 = vmatpush1.msra.mxu0 0.0
        %6364 = vmatprep.subr.mxu0 0.0
        %6365 = vmatpush1.msra.mxu0 0.0
        %6366 = vmatprep.subr.mxu0 0.0
        %6367 = vmatpush1.msra.mxu0 0.0
        %6368 = vmatprep.subr.mxu0 0.0
        %6369 = vmatpush1.msra.mxu0 0.0
        %6370 = vmatprep.subr.mxu0 0.0
        %6371 = vmatpush1.msra.mxu0 0.0
        %6372 = vmatprep.subr.mxu0 %v6351
        %6373 = vmatpush1.msra.mxu0 %v6350
        %6374 = vmatprep.subr.mxu0 %v6346
        %6375 = vmatpush1.msra.mxu0 %v6345
        %6376 = vmatprep.subr.mxu0 %v6341
        %6377 = vmatpush1.msra.mxu0 %v6340
        %6378 = vmatprep.subr.mxu0 %v6336
        %6379 = vmatpush1.msra.mxu0 %v6335
        %6380 = vmatprep.subr.mxu0 %v6331
        %6381 = vmatpush1.msra.mxu0 %v6330
        %6382 = vmatprep.subr.mxu0 %v6326
        %6383 = vmatpush1.msra.mxu0 %v6325
        %6384 = vmatprep.subr.mxu0 %v6321
        %6385 = vmatpush1.msra.mxu0 %v6320
        %6386 = vmatprep.subr.mxu0 %v6316
        %6387 = vmatpush1.msra.mxu0 %v6315
        %6388 = vmatprep.subr.mxu0 %v6311
        %6389 = vmatpush1.msra.mxu0 %v6310
        %6390 = vmatprep.subr.mxu0 0.0
        %6391 = vmatpush2.msra.mxu0 0.0
        %6392 = vmatprep.subr.mxu0 0.0
        %6393 = vmatpush2.msra.mxu0 0.0
        %6394 = vmatprep.subr.mxu0 0.0
        %6395 = vmatpush2.msra.mxu0 0.0
        %6396 = vmatprep.subr.mxu0 0.0
        %6397 = vmatpush2.msra.mxu0 0.0
        %6398 = vmatprep.subr.mxu0 0.0
        %6399 = vmatpush2.msra.mxu0 0.0
        %6400 = vmatprep.subr.mxu0 0.0
        %6401 = vmatpush2.msra.mxu0 0.0
        %6402 = vmatprep.subr.mxu0 0.0
        %6403 = vmatpush2.msra.mxu0 0.0
        %6404 = vmatprep.subr.mxu0 0.0
        %6405 = vmatpush2.msra.mxu0 0.0
        %6406 = vmatprep.subr.mxu0 0.0
        %6407 = vmatpush2.msra.mxu0 0.0
        %6408 = vmatprep.subr.mxu0 0.0
        %6409 = vmatpush2.msra.mxu0 0.0
        %6410 = vmatprep.subr.mxu0 0.0
        %6411 = vmatpush2.msra.mxu0 0.0
        %6412 = vmatprep.subr.mxu0 0.0
        %6413 = vmatpush2.msra.mxu0 0.0
        %6414 = vmatprep.subr.mxu0 0.0
        %6415 = vmatpush2.msra.mxu0 0.0
        %6416 = vmatprep.subr.mxu0 0.0
        %6417 = vmatpush2.msra.mxu0 0.0
        %6418 = vmatprep.subr.mxu0 0.0
        %6419 = vmatpush2.msra.mxu0 0.0
        %6420 = vmatprep.subr.mxu0 0.0
        %6421 = vmatpush2.msra.mxu0 0.0
        %6422 = vmatprep.mubr.f32.mxu0 0.0
        %6423 = vmatmul.mubr.f32.gmra.mxu0 %v6356
        %v6424 = vpop.f32.mrf.mxu0
        %v6425 = vadd.f32 0.0, %v6424
        %v6426 = vpop.f32.mrf.mxu0
        %v6427 = vadd.f32 0.0, %v6426
        %6428 = vdwg.mxu0
        %6429 = vmatprep.subr.mxu0 0.0
        %6430 = vmatpush1.msra.mxu0 0.0
        %6431 = vmatprep.subr.mxu0 0.0
        %6432 = vmatpush1.msra.mxu0 0.0
        %6433 = vmatprep.subr.mxu0 0.0
        %6434 = vmatpush1.msra.mxu0 0.0
        %6435 = vmatprep.subr.mxu0 0.0
        %6436 = vmatpush1.msra.mxu0 0.0
        %6437 = vmatprep.subr.mxu0 0.0
        %6438 = vmatpush1.msra.mxu0 0.0
        %6439 = vmatprep.subr.mxu0 0.0
        %6440 = vmatpush1.msra.mxu0 0.0
        %6441 = vmatprep.subr.mxu0 0.0
        %6442 = vmatpush1.msra.mxu0 0.0
        %6443 = vmatprep.subr.mxu0 %v6353
        %6444 = vmatpush1.msra.mxu0 %v6352
        %6445 = vmatprep.subr.mxu0 %v6348
        %6446 = vmatpush1.msra.mxu0 %v6347
        %6447 = vmatprep.subr.mxu0 %v6343
        %6448 = vmatpush1.msra.mxu0 %v6342
        %6449 = vmatprep.subr.mxu0 %v6338
        %6450 = vmatpush1.msra.mxu0 %v6337
        %6451 = vmatprep.subr.mxu0 %v6333
        %6452 = vmatpush1.msra.mxu0 %v6332
        %6453 = vmatprep.subr.mxu0 %v6328
        %6454 = vmatpush1.msra.mxu0 %v6327
        %6455 = vmatprep.subr.mxu0 %v6323
        %6456 = vmatpush1.msra.mxu0 %v6322
        %6457 = vmatprep.subr.mxu0 %v6318
        %6458 = vmatpush1.msra.mxu0 %v6317
        %6459 = vmatprep.subr.mxu0 %v6313
        %6460 = vmatpush1.msra.mxu0 %v6312
        %6461 = vmatprep.subr.mxu0 0.0
        %6462 = vmatpush2.msra.mxu0 0.0
        %6463 = vmatprep.subr.mxu0 0.0
        %6464 = vmatpush2.msra.mxu0 0.0
        %6465 = vmatprep.subr.mxu0 0.0
        %6466 = vmatpush2.msra.mxu0 0.0
        %6467 = vmatprep.subr.mxu0 0.0
        %6468 = vmatpush2.msra.mxu0 0.0
        %6469 = vmatprep.subr.mxu0 0.0
        %6470 = vmatpush2.msra.mxu0 0.0
        %6471 = vmatprep.subr.mxu0 0.0
        %6472 = vmatpush2.msra.mxu0 0.0
        %6473 = vmatprep.subr.mxu0 0.0
        %6474 = vmatpush2.msra.mxu0 0.0
        %6475 = vmatprep.subr.mxu0 0.0
        %6476 = vmatpush2.msra.mxu0 0.0
        %6477 = vmatprep.subr.mxu0 0.0
        %6478 = vmatpush2.msra.mxu0 0.0
        %6479 = vmatprep.subr.mxu0 0.0
        %6480 = vmatpush2.msra.mxu0 0.0
        %6481 = vmatprep.subr.mxu0 0.0
        %6482 = vmatpush2.msra.mxu0 0.0
        %6483 = vmatprep.subr.mxu0 0.0
        %6484 = vmatpush2.msra.mxu0 0.0
        %6485 = vmatprep.subr.mxu0 0.0
        %6486 = vmatpush2.msra.mxu0 0.0
        %6487 = vmatprep.subr.mxu0 0.0
        %6488 = vmatpush2.msra.mxu0 0.0
        %6489 = vmatprep.subr.mxu0 0.0
        %6490 = vmatpush2.msra.mxu0 0.0
        %6491 = vmatprep.subr.mxu0 0.0
        %6492 = vmatpush2.msra.mxu0 0.0
        %6493 = vmatprep.mubr.f32.mxu0 0.0
        %6494 = vmatmul.mubr.f32.gmra.mxu0 %v6356
        %v6495 = vpop.f32.mrf.mxu0
        %v6496 = vadd.f32 0.0, %v6495
        %v6497 = vpop.f32.mrf.mxu0
        %v6498 = vadd.f32 0.0, %v6497
        %6499 = vdwg.mxu0
        %6500 = vmatprep.subr.mxu0 0.0
        %6501 = vmatpush1.msra.mxu0 0.0
        %6502 = vmatprep.subr.mxu0 0.0
        %6503 = vmatpush1.msra.mxu0 0.0
        %6504 = vmatprep.subr.mxu0 0.0
        %6505 = vmatpush1.msra.mxu0 0.0
        %6506 = vmatprep.subr.mxu0 0.0
        %6507 = vmatpush1.msra.mxu0 0.0
        %6508 = vmatprep.subr.mxu0 0.0
        %6509 = vmatpush1.msra.mxu0 0.0
        %6510 = vmatprep.subr.mxu0 0.0
        %6511 = vmatpush1.msra.mxu0 0.0
        %6512 = vmatprep.subr.mxu0 0.0
        %6513 = vmatpush1.msra.mxu0 0.0
        %6514 = vmatprep.subr.mxu0 0.0
        %6515 = vmatpush1.msra.mxu0 %v6354
        %6516 = vmatprep.subr.mxu0 0.0
        %6517 = vmatpush1.msra.mxu0 %v6349
        %6518 = vmatprep.subr.mxu0 0.0
        %6519 = vmatpush1.msra.mxu0 %v6344
        %6520 = vmatprep.subr.mxu0 0.0
        %6521 = vmatpush1.msra.mxu0 %v6339
        %6522 = vmatprep.subr.mxu0 0.0
        %6523 = vmatpush1.msra.mxu0 %v6334
        %6524 = vmatprep.subr.mxu0 0.0
        %6525 = vmatpush1.msra.mxu0 %v6329
        %6526 = vmatprep.subr.mxu0 0.0
        %6527 = vmatpush1.msra.mxu0 %v6324
        %6528 = vmatprep.subr.mxu0 0.0
        %6529 = vmatpush1.msra.mxu0 %v6319
        %6530 = vmatprep.subr.mxu0 0.0
        %6531 = vmatpush1.msra.mxu0 %v6314
        %6532 = vmatprep.subr.mxu0 0.0
        %6533 = vmatpush2.msra.mxu0 0.0
        %6534 = vmatprep.subr.mxu0 0.0
        %6535 = vmatpush2.msra.mxu0 0.0
        %6536 = vmatprep.subr.mxu0 0.0
        %6537 = vmatpush2.msra.mxu0 0.0
        %6538 = vmatprep.subr.mxu0 0.0
        %6539 = vmatpush2.msra.mxu0 0.0
        %6540 = vmatprep.subr.mxu0 0.0
        %6541 = vmatpush2.msra.mxu0 0.0
        %6542 = vmatprep.subr.mxu0 0.0
        %6543 = vmatpush2.msra.mxu0 0.0
        %6544 = vmatprep.subr.mxu0 0.0
        %6545 = vmatpush2.msra.mxu0 0.0
        %6546 = vmatprep.subr.mxu0 0.0
        %6547 = vmatpush2.msra.mxu0 0.0
        %6548 = vmatprep.subr.mxu0 0.0
        %6549 = vmatpush2.msra.mxu0 0.0
        %6550 = vmatprep.subr.mxu0 0.0
        %6551 = vmatpush2.msra.mxu0 0.0
        %6552 = vmatprep.subr.mxu0 0.0
        %6553 = vmatpush2.msra.mxu0 0.0
        %6554 = vmatprep.subr.mxu0 0.0
        %6555 = vmatpush2.msra.mxu0 0.0
        %6556 = vmatprep.subr.mxu0 0.0
        %6557 = vmatpush2.msra.mxu0 0.0
        %6558 = vmatprep.subr.mxu0 0.0
        %6559 = vmatpush2.msra.mxu0 0.0
        %6560 = vmatprep.subr.mxu0 0.0
        %6561 = vmatpush2.msra.mxu0 0.0
        %6562 = vmatprep.subr.mxu0 0.0
        %6563 = vmatpush2.msra.mxu0 0.0
        %6564 = vmatprep.mubr.f32.mxu0 0.0
        %6565 = vmatmul.mubr.f32.gmra.mxu0 %v6356
        %v6566 = vpop.f32.mrf.mxu0
        %v6567 = vadd.f32 0.0, %v6566
        %v6568 = vpop.f32.mrf.mxu0
        %6569 = vdwg.mxu0
        %v6570 = vadd.f32 %v5812, %v6425
        %v6571 = vadd.f32 %v5814, %v6427
        %v6572 = vadd.f32 %v5883, %v6496
        %v6573 = vadd.f32 %v5885, %v6498
        %v6574 = vadd.f32 %v5954, %v6567
        %v6575 = vld [vmem:[%s6] sm:$0xff]
        %6577 = vset.pattern.permute.xlu0 0
        %6578 = vperm.xlu0 %6577, %v6575
        %v6579 = vpop.permute.xlu0 %6578
        %v6581 = vadd.f32 %v6570, %v6579
        %v6582 = vadd.f32 %v6571, %v6579
        %v6583 = vadd.f32 %v6572, %v6579
        %v6584 = vadd.f32 %v6573, %v6579
        %v6585 = vadd.f32 %v6574, %v6579
        %v6586 = vmax.f32 %v6581, 0.0
        %v6587 = vmax.f32 %v6582, 0.0
        %v6588 = vmax.f32 %v6583, 0.0
        %v6589 = vmax.f32 %v6584, 0.0
        %v6590 = vmax.f32 %v6585, 0.0
        %6591 = vst [vmem:[%s352] sm:$0xff] %v6586
        %6592 = vst [vmem:[%s352 + $0x8] sm:$0xff] %v6587
        %6593 = vst [vmem:[%s352 + $0x10] sm:$0xff] %v6588
        %6594 = vst [vmem:[%s352 + $0x18] sm:$0xff] %v6589
        %6595 = vst.msk [vmem:[%s352 + $0x20] sm:$0xff] %vm4808, %v6590
        %s6596 = sand.u32 %s207, 1
        %s6597 = scalar_lea.sflag [#allocation6], %s6596
        %s6598 = sand.u32 %s207, 1
        %s6599 = smul.addr %s6598, 40
        %s6600 = scalar_lea.vmem [#allocation10], %s6599
        // Predicated region
        $region65: #{tpu_custom_call.1} parent=51 // pred_check
          %p6601 = pneg %p217
        $region66: #{tpu_custom_call.1} parent=51 // pred_check_branch
          %6603 = sbr.rel (%p6601) target = $region68
        $region67: #{tpu_custom_call.1} parent=51 // pred_region
          %s6605 = ssub.s32 640, 640
          %6606 = vsyncadd %s6597, %s6605
          %s6607 = smul.addr %s26, 5
          %s6608 = smul.addr %s6607, 128
          %s6609 = scalar_lea.hbm %s8, %s6608
          %s6611 = sshll.u32 %s6600, 4
          %s6612 = int_to_ptr.vmem [resolvable:$true] %s6611
          %6614 = dma.vmem_to_hbm [thread:$0]  %s6612, 640, %s6609, %s6597
        $region68: #{tpu_custom_call.1} parent=51 // pred_fallthru
          _
      $region52: #{tpu_custom_call.1} parent=5 // pred_fallthru
        _
      %p6615 = scmp.le.s32.totalorder 2, %s21
      // Predicated region
      $region69: #{tpu_custom_call.1} parent=5 // pred_check
        %p6616 = pneg %p6615
      $region70: #{tpu_custom_call.1} parent=5 // pred_check_branch
        %6618 = sbr.rel (%p6616) target = $region72
      $region71: #{tpu_custom_call.1} parent=5 // pred_region
        %s6619 = ssub.s32 %s21, 2
        // Predicated region
        $region73: #{tpu_custom_call.1} parent=71 // pred_check
          %p6620 = pneg %p223
        $region74: #{tpu_custom_call.1} parent=71 // pred_check_branch
          %6622 = sbr.rel (%p6620) target = $region76
        $region75: #{tpu_custom_call.1} parent=71 // pred_region
          %s6623 = sand.u32 %s208, 1
          %s6624 = scalar_lea.sflag [#allocation6], %s6623
          %s6625 = sand.u32 %s208, 1
          %s6626 = smul.addr %s6625, 40
          %s6627 = scalar_lea.vmem [#allocation10], %s6626
          %6628 = dma.done %s6624, 640
        $region76: #{tpu_custom_call.1} parent=71 // pred_fallthru
          _
      $region72: #{tpu_custom_call.1} parent=5 // pred_fallthru
        _
    $region6: #{tpu_custom_call.1} parent=1 // loop_footer
      %s25 = sadd.s32 1, %s21
    $region7: #{tpu_custom_call.1} parent=1 // loop_footer_branch
      %20 = sbr.rel target = $region3
    $region8: #{tpu_custom_call.1} parent=1 // loop_exit
      _
    %6629 = vsyncpa [#allocation5], 1
    %s6630 = scalar_lea.sflag [#allocation5], 1
    %6631 = vsyncpa %s6630, 1
    %6632 = vsyncpa [#allocation8], 1
    %6633 = vsyncpa [#allocation6], 1
    %s6634 = scalar_lea.sflag [#allocation6], 1
    %6635 = vsyncpa %s6634, 1

</llo_original>
